<compile_context>
chip_gen: v5e
topology: v5e:2x2
jax: 0.10.0
libtpu: 0.0.40
codegen_flags: <defaults>
</compile_context>

<pallas_src>
import functools

import jax
import jax.numpy as jnp
from jax.experimental import pallas as pl
from jax.experimental.pallas import tpu as pltpu


def _mbconv_kernel(*refs, W, K, L, has_expand, skip, ew_dtype):
    """Fused MBConv over one lane block (B_blk images packed along lanes)."""
    if has_expand:
        (x_ref, we_ref, wm_ref, w1_ref, b1_ref, w2_ref, b2_ref, wr_ref,
         o_ref) = refs
    else:
        (x_ref, wm_ref, w1_ref, b1_ref, w2_ref, b2_ref, wr_ref, o_ref) = refs
        we_ref = None

    pad = (K - 1) // 2
    x_in = x_ref[...]                                          # (C_in, L) io dtype

    # ---- expand: 1x1 conv (no bias) + SiLU (Identity when expansion == 1) ----
    if has_expand:
        h32 = jnp.dot(we_ref[...], x_in.astype(ew_dtype),
                      preferred_element_type=jnp.float32)
        h = (h32 * jax.nn.sigmoid(h32)).astype(ew_dtype)       # SiLU, (C_exp, L)
    else:
        h = x_in.astype(ew_dtype)

    # ---- depthwise KxK conv (stride=1, zero padding) + SiLU ------------------
    # Tap at spatial offset (dh, dw) == cyclic lane roll by dh*W + dw over the packed
    # lane axis; wm_ref already fuses the per-tap validity mask (zero padding, row
    # wrap, image-boundary wrap) with the depthwise weight -> one FMA per tap.
    acc = None
    for k in range(K * K):
        ki, kj = divmod(k, K)
        off = (ki - pad) * W + (kj - pad)
        shift = (-off) % L
        shifted = h if shift == 0 else pltpu.roll(h, shift=shift, axis=1)
        term = shifted * wm_ref[k]
        acc = term if acc is None else acc + term
    acc32 = acc.astype(jnp.float32)
    h = (acc32 * jax.nn.sigmoid(acc32)).astype(ew_dtype)       # SiLU

    # ---- SE block (quirk preserved: the avg-pool "squeeze" is dead code) -----
    s = jnp.dot(w1_ref[...], h, preferred_element_type=jnp.float32) + b1_ref[...]
    s = s * jax.nn.sigmoid(s)                                  # SiLU, (Cr, L), f32

    cr = w2_ref.shape[1]
    if cr <= 8:
        # Cr is tiny (e.g. 2): broadcast FMAs on the VPU instead of an MXU dot.
        g = b2_ref[...] + w2_ref[:, 0:1] * s[0:1, :]
        for r in range(1, cr):
            g = g + w2_ref[:, r:r + 1] * s[r:r + 1, :]
    else:
        g = jnp.dot(w2_ref[...], s.astype(ew_dtype),
                    preferred_element_type=jnp.float32) + b2_ref[...]
    h = h * jax.nn.sigmoid(g).astype(ew_dtype)                 # sigmoid gate

    # ---- reduce: 1x1 conv (no bias), no activation ---------------------------
    out = jnp.dot(wr_ref[...], h, preferred_element_type=jnp.float32)

    # ---- skip connection ------------------------------------------------------
    if skip:
        out = out + x_in.astype(jnp.float32)

    o_ref[...] = out.astype(o_ref.dtype)


def mbconv_forward(x_nchw, we, wd, w1, b1, w2, b2, wr, *,
                   kernel_size=3, stride=1, lane_target=1024):
    """Fused MBConvN forward.  Weights use PyTorch Conv2d shapes:
       we: (C_exp, C_in, 1, 1) or None (expansion == 1), wd: (C_exp, 1, K, K),
       w1: (Cr, C_exp, 1, 1), b1: (Cr,), w2: (C_exp, Cr, 1, 1), b2: (C_exp,),
       wr: (C_out, C_exp, 1, 1)."""
    if stride != 1:
        raise NotImplementedError("fused MBConvN kernel supports stride == 1 only")

    N, C_in, H, W = x_nchw.shape
    K = kernel_size
    pad = (K - 1) // 2
    HW = H * W

    C_exp = wd.shape[0]
    Cr = w1.shape[0]
    C_out = wr.shape[0]
    has_expand = we is not None
    skip = (C_in == C_out) and (stride == 1)

    # Pick how many images to pack per lane block (must divide N, keep lanes %128==0).
    candidates = [b for b in range(1, N + 1)
                  if N % b == 0 and (b * HW) % 128 == 0]
    if not candidates:
        raise NotImplementedError("need B_blk*H*W to be a multiple of 128")
    fitting = [b for b in candidates if b * HW <= lane_target]
    B_blk = max(fitting) if fitting else min(candidates)
    L = B_blk * HW
    n_blocks = N // B_blk

    io_dtype = x_nchw.dtype
    # bf16 elementwise/MXU operands on bf16 inputs (v6e/v7x lever); f32 otherwise.
    ew_dtype = jnp.bfloat16 if io_dtype == jnp.bfloat16 else jnp.float32

    # NCHW -> (C_in, N*H*W): channels in sublanes, batch*spatial lane-dense.
    x_packed = jnp.transpose(x_nchw.reshape(N, C_in, HW), (1, 0, 2)).reshape(C_in, N * HW)

    # Per-tap validity masks (zero padding + row wrap + image-boundary wrap), tiled over
    # the B_blk packed images and pre-multiplied into the depthwise weights.
    hh = jnp.arange(H)[:, None]
    ww = jnp.arange(W)[None, :]
    masks = []
    for ki in range(K):
        for kj in range(K):
            dh, dw = ki - pad, kj - pad
            ok = ((hh + dh >= 0) & (hh + dh < H) & (ww + dw >= 0) & (ww + dw < W))
            masks.append(ok.reshape(-1))
    mask = jnp.tile(jnp.stack(masks).astype(ew_dtype), (1, B_blk))      # (K*K, L)
    wd2 = wd.reshape(C_exp, K * K).astype(ew_dtype)
    wm = (wd2.T[:, :, None] * mask[:, None, :]).astype(ew_dtype)        # (K*K, C_exp, L)

    w1_2 = w1.reshape(Cr, C_exp).astype(ew_dtype)
    b1_2 = b1.reshape(Cr, 1).astype(ew_dtype)
    w2_2 = w2.reshape(C_exp, Cr).astype(ew_dtype)
    b2_2 = b2.reshape(C_exp, 1).astype(ew_dtype)
    wr2 = wr.reshape(C_out, C_exp).astype(ew_dtype)

    args = [x_packed]
    in_specs = [pl.BlockSpec((C_in, L), lambda i: (0, i))]              # x (lane blocks)
    if has_expand:
        args.append(we.reshape(C_exp, C_in).astype(ew_dtype))
        in_specs.append(pl.BlockSpec((C_exp, C_in), lambda i: (0, 0)))  # expand W
    args += [wm, w1_2, b1_2, w2_2, b2_2, wr2]
    in_specs += [
        pl.BlockSpec((K * K, C_exp, L), lambda i: (0, 0, 0)),           # fused mask*Wdw
        pl.BlockSpec((Cr, C_exp), lambda i: (0, 0)),                    # SE conv1 W
        pl.BlockSpec((Cr, 1), lambda i: (0, 0)),                        # SE conv1 b
        pl.BlockSpec((C_exp, Cr), lambda i: (0, 0)),                    # SE conv2 W
        pl.BlockSpec((C_exp, 1), lambda i: (0, 0)),                     # SE conv2 b
        pl.BlockSpec((C_out, C_exp), lambda i: (0, 0)),                 # reduce W
    ]

    kernel = functools.partial(_mbconv_kernel, W=W, K=K, L=L,
                               has_expand=has_expand, skip=skip, ew_dtype=ew_dtype)

    out_packed = pl.pallas_call(
        kernel,
        out_shape=jax.ShapeDtypeStruct((C_out, N * HW), io_dtype),
        grid_spec=pltpu.PrefetchScalarGridSpec(
            num_scalar_prefetch=0,
            grid=(n_blocks,),                           # one lane block per grid step
            in_specs=in_specs,
            out_specs=pl.BlockSpec((C_out, L), lambda i: (0, i)),
        ),
        compiler_params=pltpu.CompilerParams(
            dimension_semantics=("parallel",),
            vmem_limit_bytes=32 * 1024 * 1024),
    )(*args)

    out = jnp.transpose(out_packed.reshape(C_out, N, HW), (1, 0, 2))
    return out.reshape(N, C_out, H, W)


def _reference(x, we, wd, w1, b1, w2, b2, wr, *, kernel_size=3):
    """Pure-JAX reference of MBConvN.forward (stride=1), including the SE quirk."""
    N, C_in, H, W = x.shape
    C_exp = wd.shape[0]
    K = kernel_size
    pad = (K - 1) // 2
    prec = jax.lax.Precision.HIGHEST
    x32 = x.astype(jnp.float32)

    if we is not None:
        h = jnp.einsum("oc,nchw->nohw", we.reshape(C_exp, C_in).astype(jnp.float32),
                       x32, precision=prec)
        h = h * jax.nn.sigmoid(h)
    else:
        h = x32

    hp = jnp.pad(h, ((0, 0), (0, 0), (pad, pad), (pad, pad)))
    wd3 = wd.reshape(C_exp, K, K).astype(jnp.float32)
    acc = jnp.zeros_like(h)
    for ki in range(K):
        for kj in range(K):
            acc = acc + hp[:, :, ki:ki + H, kj:kj + W] * wd3[None, :, ki, kj, None, None]
    h = acc * jax.nn.sigmoid(acc)

    Cr = w1.shape[0]
    s = jnp.einsum("rc,nchw->nrhw", w1.reshape(Cr, C_exp).astype(jnp.float32),
                   h, precision=prec)
    s = s + b1.astype(jnp.float32)[None, :, None, None]
    s = s * jax.nn.sigmoid(s)
    g = jnp.einsum("cr,nrhw->nchw", w2.reshape(C_exp, Cr).astype(jnp.float32),
                   s, precision=prec)
    g = g + b2.astype(jnp.float32)[None, :, None, None]
    h = h * jax.nn.sigmoid(g)

    C_out = wr.shape[0]
    out = jnp.einsum("oc,nchw->nohw", wr.reshape(C_out, C_exp).astype(jnp.float32),
                     h, precision=prec)
    if C_in == C_out:
        out = out + x32
    return out


if __name__ == "__main__":
    # MBConvN(in_channels=8, out_channels=8, expansion=6, kernel_size=3, stride=1,
    #         reduction=24) -> expanded=48, SE reduced channels=2, skip connection on.
    in_ch, out_ch, expansion, reduction = 8, 8, 6, 24
    ksize, stride = 3, 1
    N, H, W = 8, 16, 16                 # 8 images -> 2 grid steps of 4 packed images
    C_exp = in_ch * expansion
    Cr = C_exp // reduction

    keys = jax.random.split(jax.random.PRNGKey(0), 8)
    x = jax.random.normal(keys[0], (N, in_ch, H, W), dtype=jnp.float32)

    # PyTorch Conv2d weight shapes; small scales keep activations O(1).
    we = 0.3 * jax.random.normal(keys[1], (C_exp, in_ch, 1, 1), dtype=jnp.float32)
    wd = 0.3 * jax.random.normal(keys[2], (C_exp, 1, ksize, ksize), dtype=jnp.float32)
    w1 = 0.3 * jax.random.normal(keys[3], (Cr, C_exp, 1, 1), dtype=jnp.float32)
    b1 = 0.1 * jax.random.normal(keys[4], (Cr,), dtype=jnp.float32)
    w2 = 0.3 * jax.random.normal(keys[5], (C_exp, Cr, 1, 1), dtype=jnp.float32)
    b2 = 0.1 * jax.random.normal(keys[6], (C_exp,), dtype=jnp.float32)
    wr = 0.3 * jax.random.normal(keys[7], (out_ch, C_exp, 1, 1), dtype=jnp.float32)

    ref = _reference(x, we, wd, w1, b1, w2, b2, wr, kernel_size=ksize)

    # f32 path (exact semantics check).
    out = mbconv_forward(x, we, wd, w1, b1, w2, b2, wr,
                         kernel_size=ksize, stride=stride)
    out = jax.block_until_ready(out)
    assert out.shape == (N, out_ch, H, W)
    max_err = float(jnp.max(jnp.abs(out.astype(jnp.float32) - ref)))
    assert jnp.allclose(out.astype(jnp.float32), ref, atol=2e-3, rtol=2e-3), (
        f"f32 mismatch vs reference (max abs err={max_err:.3e})")

    # bf16 path (v6e/v7x elementwise/MXU lever) — loose tolerance smoke check.
    out_bf = mbconv_forward(x.astype(jnp.bfloat16), we, wd, w1, b1, w2, b2, wr,
                            kernel_size=ksize, stride=stride)
    out_bf = jax.block_until_ready(out_bf)
    out_bf32 = out_bf.astype(jnp.float32)
    assert bool(jnp.all(jnp.isfinite(out_bf32)))
    max_err_bf = float(jnp.max(jnp.abs(out_bf32 - ref)))
    assert jnp.allclose(out_bf32, ref, atol=0.5, rtol=0.1), (
        f"bf16 mismatch vs reference (max abs err={max_err_bf:.3e})")

    print("KERNEL_OK")
</pallas_src>

<mosaic_0001>
module attributes {stable_mosaic.version = 11 : i64} {
  func.func @_mbconv_kernel(%arg0: i32, %arg1: memref<8x1024xf32, #tpu.memory_space<vmem>>, %arg2: memref<48x8xf32, #tpu.memory_space<vmem>>, %arg3: memref<9x48x1024xf32, #tpu.memory_space<vmem>>, %arg4: memref<2x48xf32, #tpu.memory_space<vmem>>, %arg5: memref<2x1xf32, #tpu.memory_space<vmem>>, %arg6: memref<48x2xf32, #tpu.memory_space<vmem>>, %arg7: memref<48x1xf32, #tpu.memory_space<vmem>>, %arg8: memref<8x48xf32, #tpu.memory_space<vmem>>, %arg9: memref<8x1024xf32, #tpu.memory_space<vmem>>) attributes {dimension_semantics = [#tpu.dimension_semantics<parallel>], iteration_bounds = array<i64: 2>, scalar_prefetch = 0 : i64, scratch_operands = 0 : i64, tpu.core_type = #tpu.core_type<tc>, window_params = [{transform_indices = @transform_0, window_bounds = array<i64: 8, 1024>}, {pipeline_mode = #tpu.pipeline_mode<synchronous>, transform_indices = @transform_1, window_bounds = array<i64: 48, 8>}, {pipeline_mode = #tpu.pipeline_mode<synchronous>, transform_indices = @transform_2, window_bounds = array<i64: 9, 48, 1024>}, {pipeline_mode = #tpu.pipeline_mode<synchronous>, transform_indices = @transform_3, window_bounds = array<i64: 2, 48>}, {pipeline_mode = #tpu.pipeline_mode<synchronous>, transform_indices = @transform_4, window_bounds = array<i64: 2, 1>}, {pipeline_mode = #tpu.pipeline_mode<synchronous>, transform_indices = @transform_5, window_bounds = array<i64: 48, 2>}, {pipeline_mode = #tpu.pipeline_mode<synchronous>, transform_indices = @transform_6, window_bounds = array<i64: 48, 1>}, {pipeline_mode = #tpu.pipeline_mode<synchronous>, transform_indices = @transform_7, window_bounds = array<i64: 8, 48>}, {transform_indices = @transform_8, window_bounds = array<i64: 8, 1024>}]} {
    %c0 = arith.constant 0 : index
    %c0_0 = arith.constant 0 : index
    %0 = vector.load %arg1[%c0, %c0_0] : memref<8x1024xf32, #tpu.memory_space<vmem>>, vector<8x1024xf32>
    %c0_1 = arith.constant 0 : index
    %c0_2 = arith.constant 0 : index
    %1 = vector.load %arg2[%c0_1, %c0_2] : memref<48x8xf32, #tpu.memory_space<vmem>>, vector<48x8xf32>
    %cst = arith.constant dense<0.000000e+00> : vector<48x1024xf32>
    %2 = tpu.matmul %1, %0, %cst {dimension_numbers = #tpu.dot_dimension_numbers<[1], [0], [0], [1], [0, 0, 1, 1], [], []>} : vector<48x8xf32>, vector<8x1024xf32>, vector<48x1024xf32> -> vector<48x1024xf32>
    %3 = arith.negf %2 : vector<48x1024xf32>
    %4 = math.exp %3 : vector<48x1024xf32>
    %cst_3 = arith.constant 1.000000e+00 : f32
    %5 = vector.broadcast %cst_3 : f32 to vector<48x1024xf32>
    %6 = arith.addf %5, %4 : vector<48x1024xf32>
    %7 = arith.divf %5, %6 : vector<48x1024xf32>
    %8 = arith.mulf %2, %7 : vector<48x1024xf32>
    %c17_i32 = arith.constant 17 : i32
    %9 = tpu.dynamic_rotate %8 by %c17_i32 dim 1 : vector<48x1024xf32>, i32 -> vector<48x1024xf32>
    %c0_4 = arith.constant 0 : index
    %c0_5 = arith.constant 0 : index
    %c0_6 = arith.constant 0 : index
    %10 = vector.load %arg3[%c0_4, %c0_5, %c0_6] : memref<9x48x1024xf32, #tpu.memory_space<vmem>>, vector<1x48x1024xf32>
    %11 = vector.shape_cast %10 : vector<1x48x1024xf32> to vector<48x1024xf32>
    %12 = arith.mulf %9, %11 : vector<48x1024xf32>
    %c16_i32 = arith.constant 16 : i32
    %13 = tpu.dynamic_rotate %8 by %c16_i32 dim 1 : vector<48x1024xf32>, i32 -> vector<48x1024xf32>
    %c1 = arith.constant 1 : index
    %c0_7 = arith.constant 0 : index
    %c0_8 = arith.constant 0 : index
    %14 = vector.load %arg3[%c1, %c0_7, %c0_8] : memref<9x48x1024xf32, #tpu.memory_space<vmem>>, vector<1x48x1024xf32>
    %15 = vector.shape_cast %14 : vector<1x48x1024xf32> to vector<48x1024xf32>
    %16 = arith.mulf %13, %15 : vector<48x1024xf32>
    %17 = arith.addf %12, %16 : vector<48x1024xf32>
    %c15_i32 = arith.constant 15 : i32
    %18 = tpu.dynamic_rotate %8 by %c15_i32 dim 1 : vector<48x1024xf32>, i32 -> vector<48x1024xf32>
    %c2 = arith.constant 2 : index
    %c0_9 = arith.constant 0 : index
    %c0_10 = arith.constant 0 : index
    %19 = vector.load %arg3[%c2, %c0_9, %c0_10] : memref<9x48x1024xf32, #tpu.memory_space<vmem>>, vector<1x48x1024xf32>
    %20 = vector.shape_cast %19 : vector<1x48x1024xf32> to vector<48x1024xf32>
    %21 = arith.mulf %18, %20 : vector<48x1024xf32>
    %22 = arith.addf %17, %21 : vector<48x1024xf32>
    %c1_i32 = arith.constant 1 : i32
    %23 = tpu.dynamic_rotate %8 by %c1_i32 dim 1 : vector<48x1024xf32>, i32 -> vector<48x1024xf32>
    %c3 = arith.constant 3 : index
    %c0_11 = arith.constant 0 : index
    %c0_12 = arith.constant 0 : index
    %24 = vector.load %arg3[%c3, %c0_11, %c0_12] : memref<9x48x1024xf32, #tpu.memory_space<vmem>>, vector<1x48x1024xf32>
    %25 = vector.shape_cast %24 : vector<1x48x1024xf32> to vector<48x1024xf32>
    %26 = arith.mulf %23, %25 : vector<48x1024xf32>
    %27 = arith.addf %22, %26 : vector<48x1024xf32>
    %c4 = arith.constant 4 : index
    %c0_13 = arith.constant 0 : index
    %c0_14 = arith.constant 0 : index
    %28 = vector.load %arg3[%c4, %c0_13, %c0_14] : memref<9x48x1024xf32, #tpu.memory_space<vmem>>, vector<1x48x1024xf32>
    %29 = vector.shape_cast %28 : vector<1x48x1024xf32> to vector<48x1024xf32>
    %30 = arith.mulf %8, %29 : vector<48x1024xf32>
    %31 = arith.addf %27, %30 : vector<48x1024xf32>
    %c1023_i32 = arith.constant 1023 : i32
    %32 = tpu.dynamic_rotate %8 by %c1023_i32 dim 1 : vector<48x1024xf32>, i32 -> vector<48x1024xf32>
    %c5 = arith.constant 5 : index
    %c0_15 = arith.constant 0 : index
    %c0_16 = arith.constant 0 : index
    %33 = vector.load %arg3[%c5, %c0_15, %c0_16] : memref<9x48x1024xf32, #tpu.memory_space<vmem>>, vector<1x48x1024xf32>
    %34 = vector.shape_cast %33 : vector<1x48x1024xf32> to vector<48x1024xf32>
    %35 = arith.mulf %32, %34 : vector<48x1024xf32>
    %36 = arith.addf %31, %35 : vector<48x1024xf32>
    %c1009_i32 = arith.constant 1009 : i32
    %37 = tpu.dynamic_rotate %8 by %c1009_i32 dim 1 : vector<48x1024xf32>, i32 -> vector<48x1024xf32>
    %c6 = arith.constant 6 : index
    %c0_17 = arith.constant 0 : index
    %c0_18 = arith.constant 0 : index
    %38 = vector.load %arg3[%c6, %c0_17, %c0_18] : memref<9x48x1024xf32, #tpu.memory_space<vmem>>, vector<1x48x1024xf32>
    %39 = vector.shape_cast %38 : vector<1x48x1024xf32> to vector<48x1024xf32>
    %40 = arith.mulf %37, %39 : vector<48x1024xf32>
    %41 = arith.addf %36, %40 : vector<48x1024xf32>
    %c1008_i32 = arith.constant 1008 : i32
    %42 = tpu.dynamic_rotate %8 by %c1008_i32 dim 1 : vector<48x1024xf32>, i32 -> vector<48x1024xf32>
    %c7 = arith.constant 7 : index
    %c0_19 = arith.constant 0 : index
    %c0_20 = arith.constant 0 : index
    %43 = vector.load %arg3[%c7, %c0_19, %c0_20] : memref<9x48x1024xf32, #tpu.memory_space<vmem>>, vector<1x48x1024xf32>
    %44 = vector.shape_cast %43 : vector<1x48x1024xf32> to vector<48x1024xf32>
    %45 = arith.mulf %42, %44 : vector<48x1024xf32>
    %46 = arith.addf %41, %45 : vector<48x1024xf32>
    %c1007_i32 = arith.constant 1007 : i32
    %47 = tpu.dynamic_rotate %8 by %c1007_i32 dim 1 : vector<48x1024xf32>, i32 -> vector<48x1024xf32>
    %c8 = arith.constant 8 : index
    %c0_21 = arith.constant 0 : index
    %c0_22 = arith.constant 0 : index
    %48 = vector.load %arg3[%c8, %c0_21, %c0_22] : memref<9x48x1024xf32, #tpu.memory_space<vmem>>, vector<1x48x1024xf32>
    %49 = vector.shape_cast %48 : vector<1x48x1024xf32> to vector<48x1024xf32>
    %50 = arith.mulf %47, %49 : vector<48x1024xf32>
    %51 = arith.addf %46, %50 : vector<48x1024xf32>
    %52 = arith.negf %51 : vector<48x1024xf32>
    %53 = math.exp %52 : vector<48x1024xf32>
    %cst_23 = arith.constant 1.000000e+00 : f32
    %54 = vector.broadcast %cst_23 : f32 to vector<48x1024xf32>
    %55 = arith.addf %54, %53 : vector<48x1024xf32>
    %56 = arith.divf %54, %55 : vector<48x1024xf32>
    %57 = arith.mulf %51, %56 : vector<48x1024xf32>
    %c0_24 = arith.constant 0 : index
    %c0_25 = arith.constant 0 : index
    %58 = vector.load %arg4[%c0_24, %c0_25] : memref<2x48xf32, #tpu.memory_space<vmem>>, vector<2x48xf32>
    %cst_26 = arith.constant dense<0.000000e+00> : vector<2x1024xf32>
    %59 = tpu.matmul %58, %57, %cst_26 {dimension_numbers = #tpu.dot_dimension_numbers<[1], [0], [0], [1], [0, 0, 1, 1], [], []>} : vector<2x48xf32>, vector<48x1024xf32>, vector<2x1024xf32> -> vector<2x1024xf32>
    %c0_27 = arith.constant 0 : index
    %c0_28 = arith.constant 0 : index
    %60 = vector.load %arg5[%c0_27, %c0_28] : memref<2x1xf32, #tpu.memory_space<vmem>>, vector<2x1xf32>
    %61 = vector.broadcast %60 : vector<2x1xf32> to vector<2x1024xf32>
    %62 = arith.addf %59, %61 : vector<2x1024xf32>
    %63 = arith.negf %62 : vector<2x1024xf32>
    %64 = math.exp %63 : vector<2x1024xf32>
    %cst_29 = arith.constant 1.000000e+00 : f32
    %65 = vector.broadcast %cst_29 : f32 to vector<2x1024xf32>
    %66 = arith.addf %65, %64 : vector<2x1024xf32>
    %67 = arith.divf %65, %66 : vector<2x1024xf32>
    %68 = arith.mulf %62, %67 : vector<2x1024xf32>
    %c0_30 = arith.constant 0 : index
    %c0_31 = arith.constant 0 : index
    %69 = vector.load %arg7[%c0_30, %c0_31] : memref<48x1xf32, #tpu.memory_space<vmem>>, vector<48x1xf32>
    %c0_32 = arith.constant 0 : index
    %c0_33 = arith.constant 0 : index
    %70 = vector.load %arg6[%c0_32, %c0_33] : memref<48x2xf32, #tpu.memory_space<vmem>>, vector<48x1xf32>
    %71 = vector.extract_strided_slice %68 {offsets = [0, 0], sizes = [1, 1024], strides = [1, 1]} : vector<2x1024xf32> to vector<1x1024xf32>
    %72 = vector.broadcast %70 : vector<48x1xf32> to vector<48x1024xf32>
    %73 = vector.broadcast %71 : vector<1x1024xf32> to vector<48x1024xf32>
    %74 = arith.mulf %72, %73 : vector<48x1024xf32>
    %75 = vector.broadcast %69 : vector<48x1xf32> to vector<48x1024xf32>
    %76 = arith.addf %75, %74 : vector<48x1024xf32>
    %c0_34 = arith.constant 0 : index
    %c1_35 = arith.constant 1 : index
    %77 = vector.load %arg6[%c0_34, %c1_35] : memref<48x2xf32, #tpu.memory_space<vmem>>, vector<48x1xf32>
    %78 = vector.extract_strided_slice %68 {offsets = [1, 0], sizes = [1, 1024], strides = [1, 1]} : vector<2x1024xf32> to vector<1x1024xf32>
    %79 = vector.broadcast %77 : vector<48x1xf32> to vector<48x1024xf32>
    %80 = vector.broadcast %78 : vector<1x1024xf32> to vector<48x1024xf32>
    %81 = arith.mulf %79, %80 : vector<48x1024xf32>
    %82 = arith.addf %76, %81 : vector<48x1024xf32>
    %83 = arith.negf %82 : vector<48x1024xf32>
    %84 = math.exp %83 : vector<48x1024xf32>
    %cst_36 = arith.constant 1.000000e+00 : f32
    %85 = vector.broadcast %cst_36 : f32 to vector<48x1024xf32>
    %86 = arith.addf %85, %84 : vector<48x1024xf32>
    %87 = arith.divf %85, %86 : vector<48x1024xf32>
    %88 = arith.mulf %57, %87 : vector<48x1024xf32>
    %c0_37 = arith.constant 0 : index
    %c0_38 = arith.constant 0 : index
    %89 = vector.load %arg8[%c0_37, %c0_38] : memref<8x48xf32, #tpu.memory_space<vmem>>, vector<8x48xf32>
    %cst_39 = arith.constant dense<0.000000e+00> : vector<8x1024xf32>
    %90 = tpu.matmul %89, %88, %cst_39 {dimension_numbers = #tpu.dot_dimension_numbers<[1], [0], [0], [1], [0, 0, 1, 1], [], []>} : vector<8x48xf32>, vector<48x1024xf32>, vector<8x1024xf32> -> vector<8x1024xf32>
    %91 = arith.addf %90, %0 : vector<8x1024xf32>
    %c0_40 = arith.constant 0 : index
    %c0_41 = arith.constant 0 : index
    %92 = vector.load %arg9[%c0_40, %c0_41] : memref<8x1024xf32, #tpu.memory_space<vmem>>, vector<8x1024xf32>
    tpu.vector_store %arg9[%c0_40, %c0_41], %91 {strides = array<i32>} : memref<8x1024xf32, #tpu.memory_space<vmem>>, vector<8x1024xf32>,
    return
  }
  func.func @transform_0(%arg0: i32) -> (i32, i32) {
    %c0_i32 = arith.constant 0 : i32
    %c0_i32_0 = arith.constant 0 : i32
    return %c0_i32, %arg0 : i32, i32
  }
  func.func @transform_1(%arg0: i32) -> (i32, i32) {
    %c0_i32 = arith.constant 0 : i32
    %c0_i32_0 = arith.constant 0 : i32
    %c0_i32_1 = arith.constant 0 : i32
    return %c0_i32, %c0_i32_0 : i32, i32
  }
  func.func @transform_2(%arg0: i32) -> (i32, i32, i32) {
    %c0_i32 = arith.constant 0 : i32
    %c0_i32_0 = arith.constant 0 : i32
    %c0_i32_1 = arith.constant 0 : i32
    %c0_i32_2 = arith.constant 0 : i32
    return %c0_i32, %c0_i32_0, %c0_i32_1 : i32, i32, i32
  }
  func.func @transform_3(%arg0: i32) -> (i32, i32) {
    %c0_i32 = arith.constant 0 : i32
    %c0_i32_0 = arith.constant 0 : i32
    %c0_i32_1 = arith.constant 0 : i32
    return %c0_i32, %c0_i32_0 : i32, i32
  }
  func.func @transform_4(%arg0: i32) -> (i32, i32) {
    %c0_i32 = arith.constant 0 : i32
    %c0_i32_0 = arith.constant 0 : i32
    %c0_i32_1 = arith.constant 0 : i32
    return %c0_i32, %c0_i32_0 : i32, i32
  }
  func.func @transform_5(%arg0: i32) -> (i32, i32) {
    %c0_i32 = arith.constant 0 : i32
    %c0_i32_0 = arith.constant 0 : i32
    %c0_i32_1 = arith.constant 0 : i32
    return %c0_i32, %c0_i32_0 : i32, i32
  }
  func.func @transform_6(%arg0: i32) -> (i32, i32) {
    %c0_i32 = arith.constant 0 : i32
    %c0_i32_0 = arith.constant 0 : i32
    %c0_i32_1 = arith.constant 0 : i32
    return %c0_i32, %c0_i32_0 : i32, i32
  }
  func.func @transform_7(%arg0: i32) -> (i32, i32) {
    %c0_i32 = arith.constant 0 : i32
    %c0_i32_0 = arith.constant 0 : i32
    %c0_i32_1 = arith.constant 0 : i32
    return %c0_i32, %c0_i32_0 : i32, i32
  }
  func.func @transform_8(%arg0: i32) -> (i32, i32) {
    %c0_i32 = arith.constant 0 : i32
    %c0_i32_0 = arith.constant 0 : i32
    return %c0_i32, %arg0 : i32, i32
  }
}

</mosaic_0001>

<llo_original>
// kernel: tpu_custom_call.1
$region0: #{tpu_custom_call.1}
  #allocation0 [shape = 'u32[]', space=smem, size = 0x4, offset = 0x4, fixed_abs, tag = 'smem constant byte address 0x4 - core index']
  #allocation1 [shape = 'u32[72,128]{1,0:T(1,128)}', space=vmem, size = 0x9000, scoped, tag = 'internal scratch']
  %s0 = inlined_call_operand.hbm [shape: f32[8,2048], index: 0, kind: input, shape index: {}]
  %s1 = inlined_call_operand.vmem [shape: f32[48,8], index: 1, kind: input, shape index: {}]
  %s2 = inlined_call_operand.hbm [shape: f32[9,48,1024], index: 2, kind: input, shape index: {}]
  %s3 = inlined_call_operand.hbm [shape: f32[2,48], index: 3, kind: input, shape index: {}]
  %s4 = inlined_call_operand.vmem [shape: f32[2,1], index: 4, kind: input, shape index: {}]
  %s5 = inlined_call_operand.vmem [shape: f32[48,2], index: 5, kind: input, shape index: {}]
  %s6 = inlined_call_operand.vmem [shape: f32[48,1], index: 6, kind: input, shape index: {}]
  %s7 = inlined_call_operand.hbm [shape: f32[8,48], index: 7, kind: input, shape index: {}]
  %s8 = inlined_call_operand.hbm [shape: f32[8,2048], index: 8, kind: output, shape index: {}]
  %s9 = sld [smem:[#allocation0]]
  $region81: #{tpu_custom_call.1} parent=0
    _
  %s11 = ssub.s32 1, %s9
  %s12 = scalar_select 0, %s11, %s9
  $region1: #{tpu_custom_call.1} parent=0
    #allocation2 [shape = 'u8[65536]{0}', space=vmem, size = 0x10000, scoped, tag = 'input window, operand 0']
    #allocation3 [shape = 's32[2]{0}', space=sflag, size = 0x8, scoped, tag = 'scoped memory for tpu_custom_call.1']
    #allocation4 [shape = 's32[2]{0}', space=sflag, size = 0x8, scoped, tag = 'scoped memory for tpu_custom_call.1']
    #allocation5 [shape = 'u8[1769472]{0}', space=vmem, size = 0x1b0000, scoped, tag = 'input window, operand 2, single buffered']
    #allocation6 [shape = 's32[1]{0}', space=sflag, size = 0x4, scoped, tag = 'scoped memory for tpu_custom_call.1']
    #allocation7 [shape = 'u8[1024]{0}', space=vmem, size = 0x400, scoped, tag = 'input window, operand 3, single buffered']
    #allocation8 [shape = 'u8[4096]{0}', space=vmem, size = 0x1000, scoped, tag = 'input window, operand 7, single buffered']
    #allocation9 [shape = 's32[1]{0}', space=sflag, size = 0x4, scoped, tag = 'scoped memory for tpu_custom_call.1']
    #allocation10 [shape = 'u8[65536]{0}', space=vmem, size = 0x10000, scoped, tag = 'output window, operand 0']
    %13 = vsyncpa [#allocation3], 0
    %s14 = scalar_lea.sflag [#allocation3], 1
    %15 = vsyncpa %s14, 0
    %16 = vsyncpa [#allocation6], 0
    %17 = vsyncpa [#allocation9], 0
    %18 = vsyncpa [#allocation4], 0
    %s19 = scalar_lea.sflag [#allocation4], 1
    %20 = vsyncpa %s19, 0
    loop: start=0, step=1, limit=4
    $region2: #{tpu_custom_call.1} parent=1 // loop_pre_header
      _
    $region3: #{tpu_custom_call.1} parent=1 // loop_header
      %s22 = sphi 0, %s26
      %p23 = scmp.ge.s32.totalorder %s22, 4
      %s32 = sphi 0, %s34
      %s35 = sphi 0, %s32
      %s36 = sphi 0, %s35
      %s52 = sphi 0, %s36
      %s56 = sphi 0, %s56
      %s58 = sphi 0, %s56
      %s59 = sphi 0, %s58
      %s73 = sphi 0, %s59
      %s77 = sphi 0, %s77
      %s79 = sphi 0, %s77
      %s80 = sphi 0, %s79
      %s94 = sphi 0, %s80
      %s98 = sphi 0, %s98
      %s100 = sphi 0, %s98
      %s101 = sphi 0, %s100
      %s115 = sphi 0, %s101
      %s119 = sphi 0, %s119
      %s121 = sphi 0, %s119
      %s122 = sphi 0, %s121
      %s136 = sphi 0, %s122
      %s140 = sphi 0, %s140
      %s142 = sphi 0, %s140
      %s143 = sphi 0, %s142
      %s157 = sphi 0, %s143
      %s161 = sphi 0, %s161
      %s163 = sphi 0, %s161
      %s164 = sphi 0, %s163
      %s178 = sphi 0, %s164
      %s182 = sphi 0, %s182
      %s184 = sphi 0, %s182
      %s185 = sphi 0, %s184
      %s199 = sphi 0, %s185
      %s205 = sphi 0, %s207
      %s208 = sphi 0, %s205
      %s209 = sphi 0, %s208
      %s225 = sphi 0, %s209
    $region4: #{tpu_custom_call.1} parent=1 // loop_header_branch
      %25 = sbr.rel (%p23) target = $region8
    $region5: #{tpu_custom_call.1} parent=1 // loop_body
      %s27 = ssub.s32 %s22, 1
      %s28 = ssub.s32 %s22, 2
      %s29 = sadd.s32 %s22, 1
      %s30 = ssub.s32 %s22, %s29
      %p31 = scmp.eq.s32.totalorder %s30, 0
      %s33 = sadd.s32 %s32, 1
      %s34 = scalar_select %p31, %s32, %s33
      %p37 = pneg %p31
      %p38 = scmp.eq.s32.totalorder %s22, 1
      %p39 = por %p37, %p38
      %p40 = scmp.ne.s32.totalorder %s32, %s35
      %p41 = scmp.eq.s32.totalorder %s22, 0
      %p42 = por %p40, %p41
      %p43 = scmp.ne.s32.totalorder %s32, %s35
      %p44 = scmp.eq.s32.totalorder %s27, 1
      %p45 = por %p43, %p44
      %p46 = scmp.ne.s32.totalorder %s35, %s36
      %p47 = scmp.eq.s32.totalorder %s27, 0
      %p48 = por %p46, %p47
      %p49 = scmp.ne.s32.totalorder %s35, %s36
      %p50 = scmp.eq.s32.totalorder %s28, 1
      %p51 = por %p49, %p50
      %p53 = scmp.ne.s32.totalorder %s36, %s52
      %p54 = scmp.eq.s32.totalorder %s28, 0
      %p55 = por %p53, %p54
      %s57 = sadd.s32 %s56, 1
      %p60 = scmp.eq.s32.totalorder %s22, 1
      %p61 = scmp.ne.s32.totalorder %s56, %s58
      %p62 = scmp.eq.s32.totalorder %s22, 0
      %p63 = por %p61, %p62
      %p64 = scmp.ne.s32.totalorder %s56, %s58
      %p65 = scmp.eq.s32.totalorder %s27, 1
      %p66 = por %p64, %p65
      %p67 = scmp.ne.s32.totalorder %s58, %s59
      %p68 = scmp.eq.s32.totalorder %s27, 0
      %p69 = por %p67, %p68
      %p70 = scmp.ne.s32.totalorder %s58, %s59
      %p71 = scmp.eq.s32.totalorder %s28, 1
      %p72 = por %p70, %p71
      %p74 = scmp.ne.s32.totalorder %s59, %s73
      %p75 = scmp.eq.s32.totalorder %s28, 0
      %p76 = por %p74, %p75
      %s78 = sadd.s32 %s77, 1
      %p81 = scmp.eq.s32.totalorder %s22, 1
      %p82 = scmp.ne.s32.totalorder %s77, %s79
      %p83 = scmp.eq.s32.totalorder %s22, 0
      %p84 = por %p82, %p83
      %p85 = scmp.ne.s32.totalorder %s77, %s79
      %p86 = scmp.eq.s32.totalorder %s27, 1
      %p87 = por %p85, %p86
      %p88 = scmp.ne.s32.totalorder %s79, %s80
      %p89 = scmp.eq.s32.totalorder %s27, 0
      %p90 = por %p88, %p89
      %p91 = scmp.ne.s32.totalorder %s79, %s80
      %p92 = scmp.eq.s32.totalorder %s28, 1
      %p93 = por %p91, %p92
      %p95 = scmp.ne.s32.totalorder %s80, %s94
      %p96 = scmp.eq.s32.totalorder %s28, 0
      %p97 = por %p95, %p96
      %s99 = sadd.s32 %s98, 1
      %p102 = scmp.eq.s32.totalorder %s22, 1
      %p103 = scmp.ne.s32.totalorder %s98, %s100
      %p104 = scmp.eq.s32.totalorder %s22, 0
      %p105 = por %p103, %p104
      %p106 = scmp.ne.s32.totalorder %s98, %s100
      %p107 = scmp.eq.s32.totalorder %s27, 1
      %p108 = por %p106, %p107
      %p109 = scmp.ne.s32.totalorder %s100, %s101
      %p110 = scmp.eq.s32.totalorder %s27, 0
      %p111 = por %p109, %p110
      %p112 = scmp.ne.s32.totalorder %s100, %s101
      %p113 = scmp.eq.s32.totalorder %s28, 1
      %p114 = por %p112, %p113
      %p116 = scmp.ne.s32.totalorder %s101, %s115
      %p117 = scmp.eq.s32.totalorder %s28, 0
      %p118 = por %p116, %p117
      %s120 = sadd.s32 %s119, 1
      %p123 = scmp.eq.s32.totalorder %s22, 1
      %p124 = scmp.ne.s32.totalorder %s119, %s121
      %p125 = scmp.eq.s32.totalorder %s22, 0
      %p126 = por %p124, %p125
      %p127 = scmp.ne.s32.totalorder %s119, %s121
      %p128 = scmp.eq.s32.totalorder %s27, 1
      %p129 = por %p127, %p128
      %p130 = scmp.ne.s32.totalorder %s121, %s122
      %p131 = scmp.eq.s32.totalorder %s27, 0
      %p132 = por %p130, %p131
      %p133 = scmp.ne.s32.totalorder %s121, %s122
      %p134 = scmp.eq.s32.totalorder %s28, 1
      %p135 = por %p133, %p134
      %p137 = scmp.ne.s32.totalorder %s122, %s136
      %p138 = scmp.eq.s32.totalorder %s28, 0
      %p139 = por %p137, %p138
      %s141 = sadd.s32 %s140, 1
      %p144 = scmp.eq.s32.totalorder %s22, 1
      %p145 = scmp.ne.s32.totalorder %s140, %s142
      %p146 = scmp.eq.s32.totalorder %s22, 0
      %p147 = por %p145, %p146
      %p148 = scmp.ne.s32.totalorder %s140, %s142
      %p149 = scmp.eq.s32.totalorder %s27, 1
      %p150 = por %p148, %p149
      %p151 = scmp.ne.s32.totalorder %s142, %s143
      %p152 = scmp.eq.s32.totalorder %s27, 0
      %p153 = por %p151, %p152
      %p154 = scmp.ne.s32.totalorder %s142, %s143
      %p155 = scmp.eq.s32.totalorder %s28, 1
      %p156 = por %p154, %p155
      %p158 = scmp.ne.s32.totalorder %s143, %s157
      %p159 = scmp.eq.s32.totalorder %s28, 0
      %p160 = por %p158, %p159
      %s162 = sadd.s32 %s161, 1
      %p165 = scmp.eq.s32.totalorder %s22, 1
      %p166 = scmp.ne.s32.totalorder %s161, %s163
      %p167 = scmp.eq.s32.totalorder %s22, 0
      %p168 = por %p166, %p167
      %p169 = scmp.ne.s32.totalorder %s161, %s163
      %p170 = scmp.eq.s32.totalorder %s27, 1
      %p171 = por %p169, %p170
      %p172 = scmp.ne.s32.totalorder %s163, %s164
      %p173 = scmp.eq.s32.totalorder %s27, 0
      %p174 = por %p172, %p173
      %p175 = scmp.ne.s32.totalorder %s163, %s164
      %p176 = scmp.eq.s32.totalorder %s28, 1
      %p177 = por %p175, %p176
      %p179 = scmp.ne.s32.totalorder %s164, %s178
      %p180 = scmp.eq.s32.totalorder %s28, 0
      %p181 = por %p179, %p180
      %s183 = sadd.s32 %s182, 1
      %p186 = scmp.eq.s32.totalorder %s22, 1
      %p187 = scmp.ne.s32.totalorder %s182, %s184
      %p188 = scmp.eq.s32.totalorder %s22, 0
      %p189 = por %p187, %p188
      %p190 = scmp.ne.s32.totalorder %s182, %s184
      %p191 = scmp.eq.s32.totalorder %s27, 1
      %p192 = por %p190, %p191
      %p193 = scmp.ne.s32.totalorder %s184, %s185
      %p194 = scmp.eq.s32.totalorder %s27, 0
      %p195 = por %p193, %p194
      %p196 = scmp.ne.s32.totalorder %s184, %s185
      %p197 = scmp.eq.s32.totalorder %s28, 1
      %p198 = por %p196, %p197
      %p200 = scmp.ne.s32.totalorder %s185, %s199
      %p201 = scmp.eq.s32.totalorder %s28, 0
      %p202 = por %p200, %p201
      %s203 = ssub.s32 %s22, %s29
      %p204 = scmp.eq.s32.totalorder %s203, 0
      %s206 = sadd.s32 %s205, 1
      %s207 = scalar_select %p204, %s205, %s206
      %p210 = pneg %p204
      %p211 = scmp.eq.s32.totalorder %s22, 1
      %p212 = por %p210, %p211
      %p213 = scmp.ne.s32.totalorder %s205, %s208
      %p214 = scmp.eq.s32.totalorder %s22, 0
      %p215 = por %p213, %p214
      %p216 = scmp.ne.s32.totalorder %s205, %s208
      %p217 = scmp.eq.s32.totalorder %s27, 1
      %p218 = por %p216, %p217
      %p219 = scmp.ne.s32.totalorder %s208, %s209
      %p220 = scmp.eq.s32.totalorder %s27, 0
      %p221 = por %p219, %p220
      %p222 = scmp.ne.s32.totalorder %s208, %s209
      %p223 = scmp.eq.s32.totalorder %s28, 1
      %p224 = por %p222, %p223
      %p226 = scmp.ne.s32.totalorder %s209, %s225
      %p227 = scmp.eq.s32.totalorder %s28, 0
      %p228 = por %p226, %p227
      %p229 = scmp.le.s32.totalorder 1, %s22
      %p230 = scmp.lt.s32.totalorder %s22, 3
      %p231 = pnand %p229, %p230
      %p232 = pneg %p231
      // Predicated region
      $region9: #{tpu_custom_call.1} parent=5 // pred_check
        _
      $region10: #{tpu_custom_call.1} parent=5 // pred_check_branch
        %234 = sbr.rel (%p231) target = $region12
      $region11: #{tpu_custom_call.1} parent=5 // pred_region
        %s235 = ssub.s32 %s22, 1
        // Predicated region
        $region13: #{tpu_custom_call.1} parent=11 // pred_check
          %p236 = pneg %p69
        $region14: #{tpu_custom_call.1} parent=11 // pred_check_branch
          %238 = sbr.rel (%p236) target = $region16
        $region15: #{tpu_custom_call.1} parent=11 // pred_region
          _
        $region16: #{tpu_custom_call.1} parent=11 // pred_fallthru
          _
        // Predicated region
        $region17: #{tpu_custom_call.1} parent=11 // pred_check
          %p239 = pneg %p90
        $region18: #{tpu_custom_call.1} parent=11 // pred_check_branch
          %241 = sbr.rel (%p239) target = $region20
        $region19: #{tpu_custom_call.1} parent=11 // pred_region
          %243 = vsyncadd [#allocation6], 0
          %s244 = sshll.u32 %s2, 4
          %s245 = int_to_ptr.hbm [resolvable:$true] %s244
          %s246 = sshll.u32 [#allocation5], 4
          %s247 = int_to_ptr.vmem [resolvable:$true] %s246
          %252 = dma.hbm_to_vmem [thread:$0]  %s245, 55296, %s247, [#allocation6], 1024, 1024, 64
        $region20: #{tpu_custom_call.1} parent=11 // pred_fallthru
          _
        // Predicated region
        $region21: #{tpu_custom_call.1} parent=11 // pred_check
          %p253 = pneg %p111
        $region22: #{tpu_custom_call.1} parent=11 // pred_check_branch
          %255 = sbr.rel (%p253) target = $region24
        $region23: #{tpu_custom_call.1} parent=11 // pred_region
          %257 = vsyncadd [#allocation6], 0
          %s259 = sshll.u32 %s3, 4
          %s260 = int_to_ptr.hbm [resolvable:$true] %s259
          %s261 = sshll.u32 [#allocation7], 4
          %s262 = int_to_ptr.vmem [resolvable:$true] %s261
          %264 = dma.hbm_to_vmem [thread:$0]  %s260, 32, %s262, [#allocation6]
        $region24: #{tpu_custom_call.1} parent=11 // pred_fallthru
          _
        // Predicated region
        $region25: #{tpu_custom_call.1} parent=11 // pred_check
          %p265 = pneg %p132
        $region26: #{tpu_custom_call.1} parent=11 // pred_check_branch
          %267 = sbr.rel (%p265) target = $region28
        $region27: #{tpu_custom_call.1} parent=11 // pred_region
          _
        $region28: #{tpu_custom_call.1} parent=11 // pred_fallthru
          _
        // Predicated region
        $region29: #{tpu_custom_call.1} parent=11 // pred_check
          %p268 = pneg %p153
        $region30: #{tpu_custom_call.1} parent=11 // pred_check_branch
          %270 = sbr.rel (%p268) target = $region32
        $region31: #{tpu_custom_call.1} parent=11 // pred_region
          _
        $region32: #{tpu_custom_call.1} parent=11 // pred_fallthru
          _
        // Predicated region
        $region33: #{tpu_custom_call.1} parent=11 // pred_check
          %p271 = pneg %p174
        $region34: #{tpu_custom_call.1} parent=11 // pred_check_branch
          %273 = sbr.rel (%p271) target = $region36
        $region35: #{tpu_custom_call.1} parent=11 // pred_region
          _
        $region36: #{tpu_custom_call.1} parent=11 // pred_fallthru
          _
        // Predicated region
        $region37: #{tpu_custom_call.1} parent=11 // pred_check
          %p274 = pneg %p195
        $region38: #{tpu_custom_call.1} parent=11 // pred_check_branch
          %276 = sbr.rel (%p274) target = $region40
        $region39: #{tpu_custom_call.1} parent=11 // pred_region
          %278 = vsyncadd [#allocation9], 0
          %s280 = sshll.u32 %s7, 4
          %s281 = int_to_ptr.hbm [resolvable:$true] %s280
          %s282 = sshll.u32 [#allocation8], 4
          %s283 = int_to_ptr.vmem [resolvable:$true] %s282
          %285 = dma.hbm_to_vmem [thread:$0]  %s281, 128, %s283, [#allocation9]
        $region40: #{tpu_custom_call.1} parent=11 // pred_fallthru
          _
      $region12: #{tpu_custom_call.1} parent=5 // pred_fallthru
        _
      %p286 = scmp.lt.s32.totalorder %s22, 2
      // Predicated region
      $region41: #{tpu_custom_call.1} parent=5 // pred_check
        %p287 = pneg %p286
      $region42: #{tpu_custom_call.1} parent=5 // pred_check_branch
        %289 = sbr.rel (%p287) target = $region44
      $region43: #{tpu_custom_call.1} parent=5 // pred_region
        // Predicated region
        $region45: #{tpu_custom_call.1} parent=43 // pred_check
          %p290 = pneg %p42
        $region46: #{tpu_custom_call.1} parent=43 // pred_check_branch
          %292 = sbr.rel (%p290) target = $region48
        $region47: #{tpu_custom_call.1} parent=43 // pred_region
          %s293 = sand.u32 %s32, 1
          %s294 = scalar_lea.sflag [#allocation3], %s293
          %s295 = sand.u32 %s32, 1
          %s296 = smul.addr %s295, 64
          %s297 = scalar_lea.vmem [#allocation2], %s296
          %s298 = smul.u32 8, %s22
          %300 = vsyncadd %s294, 0
          %s301 = smul.addr %s298, 8
          %s302 = scalar_lea.hbm %s0, %s301
          %s304 = sshll.u32 %s302, 4
          %s305 = int_to_ptr.hbm [resolvable:$true] %s304
          %s306 = sshll.u32 %s297, 4
          %s307 = int_to_ptr.vmem [resolvable:$true] %s306
          %309 = dma.hbm_to_vmem [thread:$0]  %s305, 1024, %s307, %s294
        $region48: #{tpu_custom_call.1} parent=43 // pred_fallthru
          _
      $region44: #{tpu_custom_call.1} parent=5 // pred_fallthru
        _
      %p310 = scmp.le.s32.totalorder 1, %s22
      %p311 = scmp.lt.s32.totalorder %s22, 3
      %p312 = pnand %p310, %p311
      %p313 = pneg %p312
      // Predicated region
      $region49: #{tpu_custom_call.1} parent=5 // pred_check
        _
      $region50: #{tpu_custom_call.1} parent=5 // pred_check_branch
        %315 = sbr.rel (%p312) target = $region52
      $region51: #{tpu_custom_call.1} parent=5 // pred_region
        %s316 = ssub.s32 %s22, 1
        %s317 = sand.u32 %s35, 1
        %s318 = scalar_lea.sflag [#allocation3], %s317
        %s319 = sand.u32 %s35, 1
        %s320 = smul.addr %s319, 64
        %s321 = scalar_lea.vmem [#allocation2], %s320
        // Predicated region
        $region53: #{tpu_custom_call.1} parent=51 // pred_check
          %p322 = pneg %p48
        $region54: #{tpu_custom_call.1} parent=51 // pred_check_branch
          %324 = sbr.rel (%p322) target = $region56
        $region55: #{tpu_custom_call.1} parent=51 // pred_region
          %326 = dma.done %s318, 1024
        $region56: #{tpu_custom_call.1} parent=51 // pred_fallthru
          _
        // Predicated region
        $region57: #{tpu_custom_call.1} parent=51 // pred_check
          %p327 = pneg %p90
        $region58: #{tpu_custom_call.1} parent=51 // pred_check_branch
          %329 = sbr.rel (%p327) target = $region60
        $region59: #{tpu_custom_call.1} parent=51 // pred_region
          %331 = dma.done [#allocation6], 55296
        $region60: #{tpu_custom_call.1} parent=51 // pred_fallthru
          _
        // Predicated region
        $region61: #{tpu_custom_call.1} parent=51 // pred_check
          %p332 = pneg %p111
        $region62: #{tpu_custom_call.1} parent=51 // pred_check_branch
          %334 = sbr.rel (%p332) target = $region64
        $region63: #{tpu_custom_call.1} parent=51 // pred_region
          %336 = dma.done [#allocation6], 32
        $region64: #{tpu_custom_call.1} parent=51 // pred_fallthru
          _
        // Predicated region
        $region65: #{tpu_custom_call.1} parent=51 // pred_check
          %p337 = pneg %p195
        $region66: #{tpu_custom_call.1} parent=51 // pred_check_branch
          %339 = sbr.rel (%p337) target = $region68
        $region67: #{tpu_custom_call.1} parent=51 // pred_region
          %341 = dma.done [#allocation9], 128
        $region68: #{tpu_custom_call.1} parent=51 // pred_fallthru
          _
        %s342 = sand.u32 %s35, 1
        %s343 = scalar_lea.sflag [#allocation3], %s342
        %s344 = sand.u32 %s35, 1
        %s345 = smul.addr %s344, 64
        %s346 = scalar_lea.vmem [#allocation2], %s345
        %p347 = pneg %p48
        %p348 = pneg %p45
        %p349 = pneg %p69
        %p350 = pneg %p66
        %p351 = pneg %p90
        %p352 = pneg %p87
        %p353 = pneg %p111
        %p354 = pneg %p108
        %p355 = pneg %p132
        %p356 = pneg %p129
        %p357 = pneg %p153
        %p358 = pneg %p150
        %p359 = pneg %p174
        %p360 = pneg %p171
        %p361 = pneg %p195
        %p362 = pneg %p192
        %p363 = pneg %p221
        %p364 = pneg %p218
        %s365 = sand.u32 %s208, 1
        %s366 = scalar_lea.sflag [#allocation4], %s365
        %s367 = sand.u32 %s208, 1
        %s368 = smul.addr %s367, 64
        %s369 = scalar_lea.vmem [#allocation10], %s368
        %s370 = smul.u32 8, %s27
        %s371 = smul.u32 8, %s27
        %v372 = vld [vmem:[%s321] sm:$0xff]
        %v373 = vld [vmem:[%s321 + $0x8] sm:$0xff]
        %v374 = vld [vmem:[%s321 + $0x10] sm:$0xff]
        %v375 = vld [vmem:[%s321 + $0x18] sm:$0xff]
        %v376 = vld [vmem:[%s321 + $0x20] sm:$0xff]
        %v377 = vld [vmem:[%s321 + $0x28] sm:$0xff]
        %v378 = vld [vmem:[%s321 + $0x30] sm:$0xff]
        %v379 = vld [vmem:[%s321 + $0x38] sm:$0xff]
        %v380 = vld [vmem:[%s1] sm:$0xff]
        %v381 = vld [vmem:[%s1 + $0x8] sm:$0xff]
        %v382 = vld [vmem:[%s1 + $0x10] sm:$0xff]
        %v383 = vld [vmem:[%s1 + $0x18] sm:$0xff]
        %v384 = vld [vmem:[%s1 + $0x20] sm:$0xff]
        %v385 = vld [vmem:[%s1 + $0x28] sm:$0xff]
        %vm386 = vcmask 64512
        %v388 = vsel %vm386, %v380, 0
        %v391 = vsel %vm386, %v381, 0
        %v394 = vsel %vm386, %v382, 0
        %v397 = vsel %vm386, %v383, 0
        %v400 = vsel %vm386, %v384, 0
        %v403 = vsel %vm386, %v385, 0
        %405 = vmatpush.msra.mxu0 0.0
        %406 = vmatpush.msra.mxu0 0.0
        %407 = vmatpush.msra.mxu0 0.0
        %408 = vmatpush.msra.mxu0 0.0
        %409 = vmatpush.msra.mxu0 0.0
        %410 = vmatpush.msra.mxu0 0.0
        %411 = vmatpush.msra.mxu0 0.0
        %412 = vmatpush.msra.mxu0 0.0
        %413 = vmatpush.msra.mxu0 0.0
        %414 = vmatpush.msra.mxu0 0.0
        %415 = vmatpush.msra.mxu0 0.0
        %416 = vmatpush.msra.mxu0 0.0
        %417 = vmatpush.msra.mxu0 0.0
        %418 = vmatpush.msra.mxu0 0.0
        %419 = vmatpush.msra.mxu0 0.0
        %420 = vmatpush.msra.mxu0 %v372
        %421 = vmatmul.f32.gmra.mxu0 %v388
        %v422 = vpop.f32.mrf.mxu0
        %v423 = vadd.f32 0.0, %v422
        %424 = vmatmul.f32.gmra.mxu0 %v391
        %v425 = vpop.f32.mrf.mxu0
        %v426 = vadd.f32 0.0, %v425
        %427 = vmatmul.f32.gmra.mxu0 %v394
        %v428 = vpop.f32.mrf.mxu0
        %v429 = vadd.f32 0.0, %v428
        %430 = vmatmul.f32.gmra.mxu0 %v397
        %v431 = vpop.f32.mrf.mxu0
        %v432 = vadd.f32 0.0, %v431
        %433 = vmatmul.f32.gmra.mxu0 %v400
        %v434 = vpop.f32.mrf.mxu0
        %v435 = vadd.f32 0.0, %v434
        %436 = vmatmul.f32.gmra.mxu0 %v403
        %v437 = vpop.f32.mrf.mxu0
        %v438 = vadd.f32 0.0, %v437
        %439 = vdwg.mxu0
        %440 = vmatpush.msra.mxu0 0.0
        %441 = vmatpush.msra.mxu0 0.0
        %442 = vmatpush.msra.mxu0 0.0
        %443 = vmatpush.msra.mxu0 0.0
        %444 = vmatpush.msra.mxu0 0.0
        %445 = vmatpush.msra.mxu0 0.0
        %446 = vmatpush.msra.mxu0 0.0
        %447 = vmatpush.msra.mxu0 0.0
        %448 = vmatpush.msra.mxu0 0.0
        %449 = vmatpush.msra.mxu0 0.0
        %450 = vmatpush.msra.mxu0 0.0
        %451 = vmatpush.msra.mxu0 0.0
        %452 = vmatpush.msra.mxu0 0.0
        %453 = vmatpush.msra.mxu0 0.0
        %454 = vmatpush.msra.mxu0 0.0
        %455 = vmatpush.msra.mxu0 %v373
        %456 = vmatmul.f32.gmra.mxu0 %v388
        %v457 = vpop.f32.mrf.mxu0
        %v458 = vadd.f32 0.0, %v457
        %459 = vmatmul.f32.gmra.mxu0 %v391
        %v460 = vpop.f32.mrf.mxu0
        %v461 = vadd.f32 0.0, %v460
        %462 = vmatmul.f32.gmra.mxu0 %v394
        %v463 = vpop.f32.mrf.mxu0
        %v464 = vadd.f32 0.0, %v463
        %465 = vmatmul.f32.gmra.mxu0 %v397
        %v466 = vpop.f32.mrf.mxu0
        %v467 = vadd.f32 0.0, %v466
        %468 = vmatmul.f32.gmra.mxu0 %v400
        %v469 = vpop.f32.mrf.mxu0
        %v470 = vadd.f32 0.0, %v469
        %471 = vmatmul.f32.gmra.mxu0 %v403
        %v472 = vpop.f32.mrf.mxu0
        %v473 = vadd.f32 0.0, %v472
        %474 = vdwg.mxu0
        %475 = vmatpush.msra.mxu0 0.0
        %476 = vmatpush.msra.mxu0 0.0
        %477 = vmatpush.msra.mxu0 0.0
        %478 = vmatpush.msra.mxu0 0.0
        %479 = vmatpush.msra.mxu0 0.0
        %480 = vmatpush.msra.mxu0 0.0
        %481 = vmatpush.msra.mxu0 0.0
        %482 = vmatpush.msra.mxu0 0.0
        %483 = vmatpush.msra.mxu0 0.0
        %484 = vmatpush.msra.mxu0 0.0
        %485 = vmatpush.msra.mxu0 0.0
        %486 = vmatpush.msra.mxu0 0.0
        %487 = vmatpush.msra.mxu0 0.0
        %488 = vmatpush.msra.mxu0 0.0
        %489 = vmatpush.msra.mxu0 0.0
        %490 = vmatpush.msra.mxu0 %v374
        %491 = vmatmul.f32.gmra.mxu0 %v388
        %v492 = vpop.f32.mrf.mxu0
        %v493 = vadd.f32 0.0, %v492
        %494 = vmatmul.f32.gmra.mxu0 %v391
        %v495 = vpop.f32.mrf.mxu0
        %v496 = vadd.f32 0.0, %v495
        %497 = vmatmul.f32.gmra.mxu0 %v394
        %v498 = vpop.f32.mrf.mxu0
        %v499 = vadd.f32 0.0, %v498
        %500 = vmatmul.f32.gmra.mxu0 %v397
        %v501 = vpop.f32.mrf.mxu0
        %v502 = vadd.f32 0.0, %v501
        %503 = vmatmul.f32.gmra.mxu0 %v400
        %v504 = vpop.f32.mrf.mxu0
        %v505 = vadd.f32 0.0, %v504
        %506 = vmatmul.f32.gmra.mxu0 %v403
        %v507 = vpop.f32.mrf.mxu0
        %v508 = vadd.f32 0.0, %v507
        %509 = vdwg.mxu0
        %510 = vmatpush.msra.mxu0 0.0
        %511 = vmatpush.msra.mxu0 0.0
        %512 = vmatpush.msra.mxu0 0.0
        %513 = vmatpush.msra.mxu0 0.0
        %514 = vmatpush.msra.mxu0 0.0
        %515 = vmatpush.msra.mxu0 0.0
        %516 = vmatpush.msra.mxu0 0.0
        %517 = vmatpush.msra.mxu0 0.0
        %518 = vmatpush.msra.mxu0 0.0
        %519 = vmatpush.msra.mxu0 0.0
        %520 = vmatpush.msra.mxu0 0.0
        %521 = vmatpush.msra.mxu0 0.0
        %522 = vmatpush.msra.mxu0 0.0
        %523 = vmatpush.msra.mxu0 0.0
        %524 = vmatpush.msra.mxu0 0.0
        %525 = vmatpush.msra.mxu0 %v375
        %526 = vmatmul.f32.gmra.mxu0 %v388
        %v527 = vpop.f32.mrf.mxu0
        %v528 = vadd.f32 0.0, %v527
        %529 = vmatmul.f32.gmra.mxu0 %v391
        %v530 = vpop.f32.mrf.mxu0
        %v531 = vadd.f32 0.0, %v530
        %532 = vmatmul.f32.gmra.mxu0 %v394
        %v533 = vpop.f32.mrf.mxu0
        %v534 = vadd.f32 0.0, %v533
        %535 = vmatmul.f32.gmra.mxu0 %v397
        %v536 = vpop.f32.mrf.mxu0
        %v537 = vadd.f32 0.0, %v536
        %538 = vmatmul.f32.gmra.mxu0 %v400
        %v539 = vpop.f32.mrf.mxu0
        %v540 = vadd.f32 0.0, %v539
        %541 = vmatmul.f32.gmra.mxu0 %v403
        %v542 = vpop.f32.mrf.mxu0
        %v543 = vadd.f32 0.0, %v542
        %544 = vdwg.mxu0
        %545 = vmatpush.msra.mxu0 0.0
        %546 = vmatpush.msra.mxu0 0.0
        %547 = vmatpush.msra.mxu0 0.0
        %548 = vmatpush.msra.mxu0 0.0
        %549 = vmatpush.msra.mxu0 0.0
        %550 = vmatpush.msra.mxu0 0.0
        %551 = vmatpush.msra.mxu0 0.0
        %552 = vmatpush.msra.mxu0 0.0
        %553 = vmatpush.msra.mxu0 0.0
        %554 = vmatpush.msra.mxu0 0.0
        %555 = vmatpush.msra.mxu0 0.0
        %556 = vmatpush.msra.mxu0 0.0
        %557 = vmatpush.msra.mxu0 0.0
        %558 = vmatpush.msra.mxu0 0.0
        %559 = vmatpush.msra.mxu0 0.0
        %560 = vmatpush.msra.mxu0 %v376
        %561 = vmatmul.f32.gmra.mxu0 %v388
        %v562 = vpop.f32.mrf.mxu0
        %v563 = vadd.f32 0.0, %v562
        %564 = vmatmul.f32.gmra.mxu0 %v391
        %v565 = vpop.f32.mrf.mxu0
        %v566 = vadd.f32 0.0, %v565
        %567 = vmatmul.f32.gmra.mxu0 %v394
        %v568 = vpop.f32.mrf.mxu0
        %v569 = vadd.f32 0.0, %v568
        %570 = vmatmul.f32.gmra.mxu0 %v397
        %v571 = vpop.f32.mrf.mxu0
        %v572 = vadd.f32 0.0, %v571
        %573 = vmatmul.f32.gmra.mxu0 %v400
        %v574 = vpop.f32.mrf.mxu0
        %v575 = vadd.f32 0.0, %v574
        %576 = vmatmul.f32.gmra.mxu0 %v403
        %v577 = vpop.f32.mrf.mxu0
        %v578 = vadd.f32 0.0, %v577
        %579 = vdwg.mxu0
        %580 = vmatpush.msra.mxu0 0.0
        %581 = vmatpush.msra.mxu0 0.0
        %582 = vmatpush.msra.mxu0 0.0
        %583 = vmatpush.msra.mxu0 0.0
        %584 = vmatpush.msra.mxu0 0.0
        %585 = vmatpush.msra.mxu0 0.0
        %586 = vmatpush.msra.mxu0 0.0
        %587 = vmatpush.msra.mxu0 0.0
        %588 = vmatpush.msra.mxu0 0.0
        %589 = vmatpush.msra.mxu0 0.0
        %590 = vmatpush.msra.mxu0 0.0
        %591 = vmatpush.msra.mxu0 0.0
        %592 = vmatpush.msra.mxu0 0.0
        %593 = vmatpush.msra.mxu0 0.0
        %594 = vmatpush.msra.mxu0 0.0
        %595 = vmatpush.msra.mxu0 %v377
        %596 = vmatmul.f32.gmra.mxu0 %v388
        %v597 = vpop.f32.mrf.mxu0
        %v598 = vadd.f32 0.0, %v597
        %599 = vmatmul.f32.gmra.mxu0 %v391
        %v600 = vpop.f32.mrf.mxu0
        %v601 = vadd.f32 0.0, %v600
        %602 = vmatmul.f32.gmra.mxu0 %v394
        %v603 = vpop.f32.mrf.mxu0
        %v604 = vadd.f32 0.0, %v603
        %605 = vmatmul.f32.gmra.mxu0 %v397
        %v606 = vpop.f32.mrf.mxu0
        %v607 = vadd.f32 0.0, %v606
        %608 = vmatmul.f32.gmra.mxu0 %v400
        %v609 = vpop.f32.mrf.mxu0
        %v610 = vadd.f32 0.0, %v609
        %611 = vmatmul.f32.gmra.mxu0 %v403
        %v612 = vpop.f32.mrf.mxu0
        %v613 = vadd.f32 0.0, %v612
        %614 = vdwg.mxu0
        %615 = vmatpush.msra.mxu0 0.0
        %616 = vmatpush.msra.mxu0 0.0
        %617 = vmatpush.msra.mxu0 0.0
        %618 = vmatpush.msra.mxu0 0.0
        %619 = vmatpush.msra.mxu0 0.0
        %620 = vmatpush.msra.mxu0 0.0
        %621 = vmatpush.msra.mxu0 0.0
        %622 = vmatpush.msra.mxu0 0.0
        %623 = vmatpush.msra.mxu0 0.0
        %624 = vmatpush.msra.mxu0 0.0
        %625 = vmatpush.msra.mxu0 0.0
        %626 = vmatpush.msra.mxu0 0.0
        %627 = vmatpush.msra.mxu0 0.0
        %628 = vmatpush.msra.mxu0 0.0
        %629 = vmatpush.msra.mxu0 0.0
        %630 = vmatpush.msra.mxu0 %v378
        %631 = vmatmul.f32.gmra.mxu0 %v388
        %v632 = vpop.f32.mrf.mxu0
        %v633 = vadd.f32 0.0, %v632
        %634 = vmatmul.f32.gmra.mxu0 %v391
        %v635 = vpop.f32.mrf.mxu0
        %v636 = vadd.f32 0.0, %v635
        %637 = vmatmul.f32.gmra.mxu0 %v394
        %v638 = vpop.f32.mrf.mxu0
        %v639 = vadd.f32 0.0, %v638
        %640 = vmatmul.f32.gmra.mxu0 %v397
        %v641 = vpop.f32.mrf.mxu0
        %v642 = vadd.f32 0.0, %v641
        %643 = vmatmul.f32.gmra.mxu0 %v400
        %v644 = vpop.f32.mrf.mxu0
        %v645 = vadd.f32 0.0, %v644
        %646 = vmatmul.f32.gmra.mxu0 %v403
        %v647 = vpop.f32.mrf.mxu0
        %v648 = vadd.f32 0.0, %v647
        %649 = vdwg.mxu0
        %650 = vmatpush.msra.mxu0 0.0
        %651 = vmatpush.msra.mxu0 0.0
        %652 = vmatpush.msra.mxu0 0.0
        %653 = vmatpush.msra.mxu0 0.0
        %654 = vmatpush.msra.mxu0 0.0
        %655 = vmatpush.msra.mxu0 0.0
        %656 = vmatpush.msra.mxu0 0.0
        %657 = vmatpush.msra.mxu0 0.0
        %658 = vmatpush.msra.mxu0 0.0
        %659 = vmatpush.msra.mxu0 0.0
        %660 = vmatpush.msra.mxu0 0.0
        %661 = vmatpush.msra.mxu0 0.0
        %662 = vmatpush.msra.mxu0 0.0
        %663 = vmatpush.msra.mxu0 0.0
        %664 = vmatpush.msra.mxu0 0.0
        %665 = vmatpush.msra.mxu0 %v379
        %666 = vmatmul.f32.gmra.mxu0 %v388
        %v667 = vpop.f32.mrf.mxu0
        %v668 = vadd.f32 0.0, %v667
        %669 = vmatmul.f32.gmra.mxu0 %v391
        %v670 = vpop.f32.mrf.mxu0
        %v671 = vadd.f32 0.0, %v670
        %672 = vmatmul.f32.gmra.mxu0 %v394
        %v673 = vpop.f32.mrf.mxu0
        %v674 = vadd.f32 0.0, %v673
        %675 = vmatmul.f32.gmra.mxu0 %v397
        %v676 = vpop.f32.mrf.mxu0
        %v677 = vadd.f32 0.0, %v676
        %678 = vmatmul.f32.gmra.mxu0 %v400
        %v679 = vpop.f32.mrf.mxu0
        %v680 = vadd.f32 0.0, %v679
        %681 = vmatmul.f32.gmra.mxu0 %v403
        %v682 = vpop.f32.mrf.mxu0
        %v683 = vadd.f32 0.0, %v682
        %684 = vdwg.mxu0
        %v685 = vxor.u32 %v423, 2147483648
        %v686 = vxor.u32 %v458, 2147483648
        %v687 = vxor.u32 %v493, 2147483648
        %v688 = vxor.u32 %v528, 2147483648
        %v689 = vxor.u32 %v563, 2147483648
        %v690 = vxor.u32 %v598, 2147483648
        %v691 = vxor.u32 %v633, 2147483648
        %v692 = vxor.u32 %v668, 2147483648
        %v693 = vxor.u32 %v426, 2147483648
        %v694 = vxor.u32 %v461, 2147483648
        %v695 = vxor.u32 %v496, 2147483648
        %v696 = vxor.u32 %v531, 2147483648
        %v697 = vxor.u32 %v566, 2147483648
        %v698 = vxor.u32 %v601, 2147483648
        %v699 = vxor.u32 %v636, 2147483648
        %v700 = vxor.u32 %v671, 2147483648
        %v701 = vxor.u32 %v429, 2147483648
        %v702 = vxor.u32 %v464, 2147483648
        %v703 = vxor.u32 %v499, 2147483648
        %v704 = vxor.u32 %v534, 2147483648
        %v705 = vxor.u32 %v569, 2147483648
        %v706 = vxor.u32 %v604, 2147483648
        %v707 = vxor.u32 %v639, 2147483648
        %v708 = vxor.u32 %v674, 2147483648
        %v709 = vxor.u32 %v432, 2147483648
        %v710 = vxor.u32 %v467, 2147483648
        %v711 = vxor.u32 %v502, 2147483648
        %v712 = vxor.u32 %v537, 2147483648
        %v713 = vxor.u32 %v572, 2147483648
        %v714 = vxor.u32 %v607, 2147483648
        %v715 = vxor.u32 %v642, 2147483648
        %v716 = vxor.u32 %v677, 2147483648
        %v717 = vxor.u32 %v435, 2147483648
        %v718 = vxor.u32 %v470, 2147483648
        %v719 = vxor.u32 %v505, 2147483648
        %v720 = vxor.u32 %v540, 2147483648
        %v721 = vxor.u32 %v575, 2147483648
        %v722 = vxor.u32 %v610, 2147483648
        %v723 = vxor.u32 %v645, 2147483648
        %v724 = vxor.u32 %v680, 2147483648
        %v725 = vxor.u32 %v438, 2147483648
        %v726 = vxor.u32 %v473, 2147483648
        %v727 = vxor.u32 %v508, 2147483648
        %v728 = vxor.u32 %v543, 2147483648
        %v729 = vxor.u32 %v578, 2147483648
        %v730 = vxor.u32 %v613, 2147483648
        %v731 = vxor.u32 %v648, 2147483648
        %v732 = vxor.u32 %v683, 2147483648
        %v733 = vmul.f32 %v685, 1.442695
        %v734 = vpow.pop %v733
        %v735 = vmul.f32 %v686, 1.442695
        %v736 = vpow.pop %v735
        %v737 = vmul.f32 %v687, 1.442695
        %v738 = vpow.pop %v737
        %v739 = vmul.f32 %v688, 1.442695
        %v740 = vpow.pop %v739
        %v741 = vmul.f32 %v689, 1.442695
        %v742 = vpow.pop %v741
        %v743 = vmul.f32 %v690, 1.442695
        %v744 = vpow.pop %v743
        %v745 = vmul.f32 %v691, 1.442695
        %v746 = vpow.pop %v745
        %v747 = vmul.f32 %v692, 1.442695
        %v748 = vpow.pop %v747
        %v749 = vmul.f32 %v693, 1.442695
        %v750 = vpow.pop %v749
        %v751 = vmul.f32 %v694, 1.442695
        %v752 = vpow.pop %v751
        %v753 = vmul.f32 %v695, 1.442695
        %v754 = vpow.pop %v753
        %v755 = vmul.f32 %v696, 1.442695
        %v756 = vpow.pop %v755
        %v757 = vmul.f32 %v697, 1.442695
        %v758 = vpow.pop %v757
        %v759 = vmul.f32 %v698, 1.442695
        %v760 = vpow.pop %v759
        %v761 = vmul.f32 %v699, 1.442695
        %v762 = vpow.pop %v761
        %v763 = vmul.f32 %v700, 1.442695
        %v764 = vpow.pop %v763
        %v765 = vmul.f32 %v701, 1.442695
        %v766 = vpow.pop %v765
        %v767 = vmul.f32 %v702, 1.442695
        %v768 = vpow.pop %v767
        %v769 = vmul.f32 %v703, 1.442695
        %v770 = vpow.pop %v769
        %v771 = vmul.f32 %v704, 1.442695
        %v772 = vpow.pop %v771
        %v773 = vmul.f32 %v705, 1.442695
        %v774 = vpow.pop %v773
        %v775 = vmul.f32 %v706, 1.442695
        %v776 = vpow.pop %v775
        %v777 = vmul.f32 %v707, 1.442695
        %v778 = vpow.pop %v777
        %v779 = vmul.f32 %v708, 1.442695
        %v780 = vpow.pop %v779
        %v781 = vmul.f32 %v709, 1.442695
        %v782 = vpow.pop %v781
        %v783 = vmul.f32 %v710, 1.442695
        %v784 = vpow.pop %v783
        %v785 = vmul.f32 %v711, 1.442695
        %v786 = vpow.pop %v785
        %v787 = vmul.f32 %v712, 1.442695
        %v788 = vpow.pop %v787
        %v789 = vmul.f32 %v713, 1.442695
        %v790 = vpow.pop %v789
        %v791 = vmul.f32 %v714, 1.442695
        %v792 = vpow.pop %v791
        %v793 = vmul.f32 %v715, 1.442695
        %v794 = vpow.pop %v793
        %v795 = vmul.f32 %v716, 1.442695
        %v796 = vpow.pop %v795
        %v797 = vmul.f32 %v717, 1.442695
        %v798 = vpow.pop %v797
        %v799 = vmul.f32 %v718, 1.442695
        %v800 = vpow.pop %v799
        %v801 = vmul.f32 %v719, 1.442695
        %v802 = vpow.pop %v801
        %v803 = vmul.f32 %v720, 1.442695
        %v804 = vpow.pop %v803
        %v805 = vmul.f32 %v721, 1.442695
        %v806 = vpow.pop %v805
        %v807 = vmul.f32 %v722, 1.442695
        %v808 = vpow.pop %v807
        %v809 = vmul.f32 %v723, 1.442695
        %v810 = vpow.pop %v809
        %v811 = vmul.f32 %v724, 1.442695
        %v812 = vpow.pop %v811
        %v813 = vmul.f32 %v725, 1.442695
        %v814 = vpow.pop %v813
        %v815 = vmul.f32 %v726, 1.442695
        %v816 = vpow.pop %v815
        %v817 = vmul.f32 %v727, 1.442695
        %v818 = vpow.pop %v817
        %v819 = vmul.f32 %v728, 1.442695
        %v820 = vpow.pop %v819
        %v821 = vmul.f32 %v729, 1.442695
        %v822 = vpow.pop %v821
        %v823 = vmul.f32 %v730, 1.442695
        %v824 = vpow.pop %v823
        %v825 = vmul.f32 %v731, 1.442695
        %v826 = vpow.pop %v825
        %v827 = vmul.f32 %v732, 1.442695
        %v828 = vpow.pop %v827
        %v829 = vadd.f32 %v734, 1.0
        %v830 = vadd.f32 %v736, 1.0
        %v831 = vadd.f32 %v738, 1.0
        %v832 = vadd.f32 %v740, 1.0
        %v833 = vadd.f32 %v742, 1.0
        %v834 = vadd.f32 %v744, 1.0
        %v835 = vadd.f32 %v746, 1.0
        %v836 = vadd.f32 %v748, 1.0
        %v837 = vadd.f32 %v750, 1.0
        %v838 = vadd.f32 %v752, 1.0
        %v839 = vadd.f32 %v754, 1.0
        %v840 = vadd.f32 %v756, 1.0
        %v841 = vadd.f32 %v758, 1.0
        %v842 = vadd.f32 %v760, 1.0
        %v843 = vadd.f32 %v762, 1.0
        %v844 = vadd.f32 %v764, 1.0
        %v845 = vadd.f32 %v766, 1.0
        %v846 = vadd.f32 %v768, 1.0
        %v847 = vadd.f32 %v770, 1.0
        %v848 = vadd.f32 %v772, 1.0
        %v849 = vadd.f32 %v774, 1.0
        %v850 = vadd.f32 %v776, 1.0
        %v851 = vadd.f32 %v778, 1.0
        %v852 = vadd.f32 %v780, 1.0
        %v853 = vadd.f32 %v782, 1.0
        %v854 = vadd.f32 %v784, 1.0
        %v855 = vadd.f32 %v786, 1.0
        %v856 = vadd.f32 %v788, 1.0
        %v857 = vadd.f32 %v790, 1.0
        %v858 = vadd.f32 %v792, 1.0
        %v859 = vadd.f32 %v794, 1.0
        %v860 = vadd.f32 %v796, 1.0
        %v861 = vadd.f32 %v798, 1.0
        %v862 = vadd.f32 %v800, 1.0
        %v863 = vadd.f32 %v802, 1.0
        %v864 = vadd.f32 %v804, 1.0
        %v865 = vadd.f32 %v806, 1.0
        %v866 = vadd.f32 %v808, 1.0
        %v867 = vadd.f32 %v810, 1.0
        %v868 = vadd.f32 %v812, 1.0
        %v869 = vadd.f32 %v814, 1.0
        %v870 = vadd.f32 %v816, 1.0
        %v871 = vadd.f32 %v818, 1.0
        %v872 = vadd.f32 %v820, 1.0
        %v873 = vadd.f32 %v822, 1.0
        %v874 = vadd.f32 %v824, 1.0
        %v875 = vadd.f32 %v826, 1.0
        %v876 = vadd.f32 %v828, 1.0
        %v877 = vrcp.pop %v829
        %v878 = vmul.f32 %v829, %v877
        %v879 = vsub.f32 1.0, %v878
        %v880 = vmul.f32 %v877, %v879
        %v881 = vadd.f32 %v877, %v880
        %vm882 = vweird.f32 %v829
        %vm883 = vweird.f32 %v877
        %vm884 = vmor %vm882, %vm883
        %v885 = vsel %vm884, %v877, %v881
        %v886 = vand.u32 2147483647, %v829
        %vm887 = vcmp.eq.f32.partialorder %v886, 8.507059e+37
        %v888 = vand.u32 %v829, 2147483648
        %v889 = vor.u32 1.1754944e-38, %v888
        %v890 = vsel %vm887, %v889, %v885
        %v891 = vmul.f32 1.0, %v890
        %v892 = vrcp.pop %v830
        %v893 = vmul.f32 %v830, %v892
        %v894 = vsub.f32 1.0, %v893
        %v895 = vmul.f32 %v892, %v894
        %v896 = vadd.f32 %v892, %v895
        %vm897 = vweird.f32 %v830
        %vm898 = vweird.f32 %v892
        %vm899 = vmor %vm897, %vm898
        %v900 = vsel %vm899, %v892, %v896
        %v901 = vand.u32 2147483647, %v830
        %vm902 = vcmp.eq.f32.partialorder %v901, 8.507059e+37
        %v903 = vand.u32 %v830, 2147483648
        %v904 = vor.u32 1.1754944e-38, %v903
        %v905 = vsel %vm902, %v904, %v900
        %v906 = vmul.f32 1.0, %v905
        %v907 = vrcp.pop %v831
        %v908 = vmul.f32 %v831, %v907
        %v909 = vsub.f32 1.0, %v908
        %v910 = vmul.f32 %v907, %v909
        %v911 = vadd.f32 %v907, %v910
        %vm912 = vweird.f32 %v831
        %vm913 = vweird.f32 %v907
        %vm914 = vmor %vm912, %vm913
        %v915 = vsel %vm914, %v907, %v911
        %v916 = vand.u32 2147483647, %v831
        %vm917 = vcmp.eq.f32.partialorder %v916, 8.507059e+37
        %v918 = vand.u32 %v831, 2147483648
        %v919 = vor.u32 1.1754944e-38, %v918
        %v920 = vsel %vm917, %v919, %v915
        %v921 = vmul.f32 1.0, %v920
        %v922 = vrcp.pop %v832
        %v923 = vmul.f32 %v832, %v922
        %v924 = vsub.f32 1.0, %v923
        %v925 = vmul.f32 %v922, %v924
        %v926 = vadd.f32 %v922, %v925
        %vm927 = vweird.f32 %v832
        %vm928 = vweird.f32 %v922
        %vm929 = vmor %vm927, %vm928
        %v930 = vsel %vm929, %v922, %v926
        %v931 = vand.u32 2147483647, %v832
        %vm932 = vcmp.eq.f32.partialorder %v931, 8.507059e+37
        %v933 = vand.u32 %v832, 2147483648
        %v934 = vor.u32 1.1754944e-38, %v933
        %v935 = vsel %vm932, %v934, %v930
        %v936 = vmul.f32 1.0, %v935
        %v937 = vrcp.pop %v833
        %v938 = vmul.f32 %v833, %v937
        %v939 = vsub.f32 1.0, %v938
        %v940 = vmul.f32 %v937, %v939
        %v941 = vadd.f32 %v937, %v940
        %vm942 = vweird.f32 %v833
        %vm943 = vweird.f32 %v937
        %vm944 = vmor %vm942, %vm943
        %v945 = vsel %vm944, %v937, %v941
        %v946 = vand.u32 2147483647, %v833
        %vm947 = vcmp.eq.f32.partialorder %v946, 8.507059e+37
        %v948 = vand.u32 %v833, 2147483648
        %v949 = vor.u32 1.1754944e-38, %v948
        %v950 = vsel %vm947, %v949, %v945
        %v951 = vmul.f32 1.0, %v950
        %v952 = vrcp.pop %v834
        %v953 = vmul.f32 %v834, %v952
        %v954 = vsub.f32 1.0, %v953
        %v955 = vmul.f32 %v952, %v954
        %v956 = vadd.f32 %v952, %v955
        %vm957 = vweird.f32 %v834
        %vm958 = vweird.f32 %v952
        %vm959 = vmor %vm957, %vm958
        %v960 = vsel %vm959, %v952, %v956
        %v961 = vand.u32 2147483647, %v834
        %vm962 = vcmp.eq.f32.partialorder %v961, 8.507059e+37
        %v963 = vand.u32 %v834, 2147483648
        %v964 = vor.u32 1.1754944e-38, %v963
        %v965 = vsel %vm962, %v964, %v960
        %v966 = vmul.f32 1.0, %v965
        %v967 = vrcp.pop %v835
        %v968 = vmul.f32 %v835, %v967
        %v969 = vsub.f32 1.0, %v968
        %v970 = vmul.f32 %v967, %v969
        %v971 = vadd.f32 %v967, %v970
        %vm972 = vweird.f32 %v835
        %vm973 = vweird.f32 %v967
        %vm974 = vmor %vm972, %vm973
        %v975 = vsel %vm974, %v967, %v971
        %v976 = vand.u32 2147483647, %v835
        %vm977 = vcmp.eq.f32.partialorder %v976, 8.507059e+37
        %v978 = vand.u32 %v835, 2147483648
        %v979 = vor.u32 1.1754944e-38, %v978
        %v980 = vsel %vm977, %v979, %v975
        %v981 = vmul.f32 1.0, %v980
        %v982 = vrcp.pop %v836
        %v983 = vmul.f32 %v836, %v982
        %v984 = vsub.f32 1.0, %v983
        %v985 = vmul.f32 %v982, %v984
        %v986 = vadd.f32 %v982, %v985
        %vm987 = vweird.f32 %v836
        %vm988 = vweird.f32 %v982
        %vm989 = vmor %vm987, %vm988
        %v990 = vsel %vm989, %v982, %v986
        %v991 = vand.u32 2147483647, %v836
        %vm992 = vcmp.eq.f32.partialorder %v991, 8.507059e+37
        %v993 = vand.u32 %v836, 2147483648
        %v994 = vor.u32 1.1754944e-38, %v993
        %v995 = vsel %vm992, %v994, %v990
        %v996 = vmul.f32 1.0, %v995
        %v997 = vrcp.pop %v837
        %v998 = vmul.f32 %v837, %v997
        %v999 = vsub.f32 1.0, %v998
        %v1000 = vmul.f32 %v997, %v999
        %v1001 = vadd.f32 %v997, %v1000
        %vm1002 = vweird.f32 %v837
        %vm1003 = vweird.f32 %v997
        %vm1004 = vmor %vm1002, %vm1003
        %v1005 = vsel %vm1004, %v997, %v1001
        %v1006 = vand.u32 2147483647, %v837
        %vm1007 = vcmp.eq.f32.partialorder %v1006, 8.507059e+37
        %v1008 = vand.u32 %v837, 2147483648
        %v1009 = vor.u32 1.1754944e-38, %v1008
        %v1010 = vsel %vm1007, %v1009, %v1005
        %v1011 = vmul.f32 1.0, %v1010
        %v1012 = vrcp.pop %v838
        %v1013 = vmul.f32 %v838, %v1012
        %v1014 = vsub.f32 1.0, %v1013
        %v1015 = vmul.f32 %v1012, %v1014
        %v1016 = vadd.f32 %v1012, %v1015
        %vm1017 = vweird.f32 %v838
        %vm1018 = vweird.f32 %v1012
        %vm1019 = vmor %vm1017, %vm1018
        %v1020 = vsel %vm1019, %v1012, %v1016
        %v1021 = vand.u32 2147483647, %v838
        %vm1022 = vcmp.eq.f32.partialorder %v1021, 8.507059e+37
        %v1023 = vand.u32 %v838, 2147483648
        %v1024 = vor.u32 1.1754944e-38, %v1023
        %v1025 = vsel %vm1022, %v1024, %v1020
        %v1026 = vmul.f32 1.0, %v1025
        %v1027 = vrcp.pop %v839
        %v1028 = vmul.f32 %v839, %v1027
        %v1029 = vsub.f32 1.0, %v1028
        %v1030 = vmul.f32 %v1027, %v1029
        %v1031 = vadd.f32 %v1027, %v1030
        %vm1032 = vweird.f32 %v839
        %vm1033 = vweird.f32 %v1027
        %vm1034 = vmor %vm1032, %vm1033
        %v1035 = vsel %vm1034, %v1027, %v1031
        %v1036 = vand.u32 2147483647, %v839
        %vm1037 = vcmp.eq.f32.partialorder %v1036, 8.507059e+37
        %v1038 = vand.u32 %v839, 2147483648
        %v1039 = vor.u32 1.1754944e-38, %v1038
        %v1040 = vsel %vm1037, %v1039, %v1035
        %v1041 = vmul.f32 1.0, %v1040
        %v1042 = vrcp.pop %v840
        %v1043 = vmul.f32 %v840, %v1042
        %v1044 = vsub.f32 1.0, %v1043
        %v1045 = vmul.f32 %v1042, %v1044
        %v1046 = vadd.f32 %v1042, %v1045
        %vm1047 = vweird.f32 %v840
        %vm1048 = vweird.f32 %v1042
        %vm1049 = vmor %vm1047, %vm1048
        %v1050 = vsel %vm1049, %v1042, %v1046
        %v1051 = vand.u32 2147483647, %v840
        %vm1052 = vcmp.eq.f32.partialorder %v1051, 8.507059e+37
        %v1053 = vand.u32 %v840, 2147483648
        %v1054 = vor.u32 1.1754944e-38, %v1053
        %v1055 = vsel %vm1052, %v1054, %v1050
        %v1056 = vmul.f32 1.0, %v1055
        %v1057 = vrcp.pop %v841
        %v1058 = vmul.f32 %v841, %v1057
        %v1059 = vsub.f32 1.0, %v1058
        %v1060 = vmul.f32 %v1057, %v1059
        %v1061 = vadd.f32 %v1057, %v1060
        %vm1062 = vweird.f32 %v841
        %vm1063 = vweird.f32 %v1057
        %vm1064 = vmor %vm1062, %vm1063
        %v1065 = vsel %vm1064, %v1057, %v1061
        %v1066 = vand.u32 2147483647, %v841
        %vm1067 = vcmp.eq.f32.partialorder %v1066, 8.507059e+37
        %v1068 = vand.u32 %v841, 2147483648
        %v1069 = vor.u32 1.1754944e-38, %v1068
        %v1070 = vsel %vm1067, %v1069, %v1065
        %v1071 = vmul.f32 1.0, %v1070
        %v1072 = vrcp.pop %v842
        %v1073 = vmul.f32 %v842, %v1072
        %v1074 = vsub.f32 1.0, %v1073
        %v1075 = vmul.f32 %v1072, %v1074
        %v1076 = vadd.f32 %v1072, %v1075
        %vm1077 = vweird.f32 %v842
        %vm1078 = vweird.f32 %v1072
        %vm1079 = vmor %vm1077, %vm1078
        %v1080 = vsel %vm1079, %v1072, %v1076
        %v1081 = vand.u32 2147483647, %v842
        %vm1082 = vcmp.eq.f32.partialorder %v1081, 8.507059e+37
        %v1083 = vand.u32 %v842, 2147483648
        %v1084 = vor.u32 1.1754944e-38, %v1083
        %v1085 = vsel %vm1082, %v1084, %v1080
        %v1086 = vmul.f32 1.0, %v1085
        %v1087 = vrcp.pop %v843
        %v1088 = vmul.f32 %v843, %v1087
        %v1089 = vsub.f32 1.0, %v1088
        %v1090 = vmul.f32 %v1087, %v1089
        %v1091 = vadd.f32 %v1087, %v1090
        %vm1092 = vweird.f32 %v843
        %vm1093 = vweird.f32 %v1087
        %vm1094 = vmor %vm1092, %vm1093
        %v1095 = vsel %vm1094, %v1087, %v1091
        %v1096 = vand.u32 2147483647, %v843
        %vm1097 = vcmp.eq.f32.partialorder %v1096, 8.507059e+37
        %v1098 = vand.u32 %v843, 2147483648
        %v1099 = vor.u32 1.1754944e-38, %v1098
        %v1100 = vsel %vm1097, %v1099, %v1095
        %v1101 = vmul.f32 1.0, %v1100
        %v1102 = vrcp.pop %v844
        %v1103 = vmul.f32 %v844, %v1102
        %v1104 = vsub.f32 1.0, %v1103
        %v1105 = vmul.f32 %v1102, %v1104
        %v1106 = vadd.f32 %v1102, %v1105
        %vm1107 = vweird.f32 %v844
        %vm1108 = vweird.f32 %v1102
        %vm1109 = vmor %vm1107, %vm1108
        %v1110 = vsel %vm1109, %v1102, %v1106
        %v1111 = vand.u32 2147483647, %v844
        %vm1112 = vcmp.eq.f32.partialorder %v1111, 8.507059e+37
        %v1113 = vand.u32 %v844, 2147483648
        %v1114 = vor.u32 1.1754944e-38, %v1113
        %v1115 = vsel %vm1112, %v1114, %v1110
        %v1116 = vmul.f32 1.0, %v1115
        %v1117 = vrcp.pop %v845
        %v1118 = vmul.f32 %v845, %v1117
        %v1119 = vsub.f32 1.0, %v1118
        %v1120 = vmul.f32 %v1117, %v1119
        %v1121 = vadd.f32 %v1117, %v1120
        %vm1122 = vweird.f32 %v845
        %vm1123 = vweird.f32 %v1117
        %vm1124 = vmor %vm1122, %vm1123
        %v1125 = vsel %vm1124, %v1117, %v1121
        %v1126 = vand.u32 2147483647, %v845
        %vm1127 = vcmp.eq.f32.partialorder %v1126, 8.507059e+37
        %v1128 = vand.u32 %v845, 2147483648
        %v1129 = vor.u32 1.1754944e-38, %v1128
        %v1130 = vsel %vm1127, %v1129, %v1125
        %v1131 = vmul.f32 1.0, %v1130
        %v1132 = vrcp.pop %v846
        %v1133 = vmul.f32 %v846, %v1132
        %v1134 = vsub.f32 1.0, %v1133
        %v1135 = vmul.f32 %v1132, %v1134
        %v1136 = vadd.f32 %v1132, %v1135
        %vm1137 = vweird.f32 %v846
        %vm1138 = vweird.f32 %v1132
        %vm1139 = vmor %vm1137, %vm1138
        %v1140 = vsel %vm1139, %v1132, %v1136
        %v1141 = vand.u32 2147483647, %v846
        %vm1142 = vcmp.eq.f32.partialorder %v1141, 8.507059e+37
        %v1143 = vand.u32 %v846, 2147483648
        %v1144 = vor.u32 1.1754944e-38, %v1143
        %v1145 = vsel %vm1142, %v1144, %v1140
        %v1146 = vmul.f32 1.0, %v1145
        %v1147 = vrcp.pop %v847
        %v1148 = vmul.f32 %v847, %v1147
        %v1149 = vsub.f32 1.0, %v1148
        %v1150 = vmul.f32 %v1147, %v1149
        %v1151 = vadd.f32 %v1147, %v1150
        %vm1152 = vweird.f32 %v847
        %vm1153 = vweird.f32 %v1147
        %vm1154 = vmor %vm1152, %vm1153
        %v1155 = vsel %vm1154, %v1147, %v1151
        %v1156 = vand.u32 2147483647, %v847
        %vm1157 = vcmp.eq.f32.partialorder %v1156, 8.507059e+37
        %v1158 = vand.u32 %v847, 2147483648
        %v1159 = vor.u32 1.1754944e-38, %v1158
        %v1160 = vsel %vm1157, %v1159, %v1155
        %v1161 = vmul.f32 1.0, %v1160
        %v1162 = vrcp.pop %v848
        %v1163 = vmul.f32 %v848, %v1162
        %v1164 = vsub.f32 1.0, %v1163
        %v1165 = vmul.f32 %v1162, %v1164
        %v1166 = vadd.f32 %v1162, %v1165
        %vm1167 = vweird.f32 %v848
        %vm1168 = vweird.f32 %v1162
        %vm1169 = vmor %vm1167, %vm1168
        %v1170 = vsel %vm1169, %v1162, %v1166
        %v1171 = vand.u32 2147483647, %v848
        %vm1172 = vcmp.eq.f32.partialorder %v1171, 8.507059e+37
        %v1173 = vand.u32 %v848, 2147483648
        %v1174 = vor.u32 1.1754944e-38, %v1173
        %v1175 = vsel %vm1172, %v1174, %v1170
        %v1176 = vmul.f32 1.0, %v1175
        %v1177 = vrcp.pop %v849
        %v1178 = vmul.f32 %v849, %v1177
        %v1179 = vsub.f32 1.0, %v1178
        %v1180 = vmul.f32 %v1177, %v1179
        %v1181 = vadd.f32 %v1177, %v1180
        %vm1182 = vweird.f32 %v849
        %vm1183 = vweird.f32 %v1177
        %vm1184 = vmor %vm1182, %vm1183
        %v1185 = vsel %vm1184, %v1177, %v1181
        %v1186 = vand.u32 2147483647, %v849
        %vm1187 = vcmp.eq.f32.partialorder %v1186, 8.507059e+37
        %v1188 = vand.u32 %v849, 2147483648
        %v1189 = vor.u32 1.1754944e-38, %v1188
        %v1190 = vsel %vm1187, %v1189, %v1185
        %v1191 = vmul.f32 1.0, %v1190
        %v1192 = vrcp.pop %v850
        %v1193 = vmul.f32 %v850, %v1192
        %v1194 = vsub.f32 1.0, %v1193
        %v1195 = vmul.f32 %v1192, %v1194
        %v1196 = vadd.f32 %v1192, %v1195
        %vm1197 = vweird.f32 %v850
        %vm1198 = vweird.f32 %v1192
        %vm1199 = vmor %vm1197, %vm1198
        %v1200 = vsel %vm1199, %v1192, %v1196
        %v1201 = vand.u32 2147483647, %v850
        %vm1202 = vcmp.eq.f32.partialorder %v1201, 8.507059e+37
        %v1203 = vand.u32 %v850, 2147483648
        %v1204 = vor.u32 1.1754944e-38, %v1203
        %v1205 = vsel %vm1202, %v1204, %v1200
        %v1206 = vmul.f32 1.0, %v1205
        %v1207 = vrcp.pop %v851
        %v1208 = vmul.f32 %v851, %v1207
        %v1209 = vsub.f32 1.0, %v1208
        %v1210 = vmul.f32 %v1207, %v1209
        %v1211 = vadd.f32 %v1207, %v1210
        %vm1212 = vweird.f32 %v851
        %vm1213 = vweird.f32 %v1207
        %vm1214 = vmor %vm1212, %vm1213
        %v1215 = vsel %vm1214, %v1207, %v1211
        %v1216 = vand.u32 2147483647, %v851
        %vm1217 = vcmp.eq.f32.partialorder %v1216, 8.507059e+37
        %v1218 = vand.u32 %v851, 2147483648
        %v1219 = vor.u32 1.1754944e-38, %v1218
        %v1220 = vsel %vm1217, %v1219, %v1215
        %v1221 = vmul.f32 1.0, %v1220
        %v1222 = vrcp.pop %v852
        %v1223 = vmul.f32 %v852, %v1222
        %v1224 = vsub.f32 1.0, %v1223
        %v1225 = vmul.f32 %v1222, %v1224
        %v1226 = vadd.f32 %v1222, %v1225
        %vm1227 = vweird.f32 %v852
        %vm1228 = vweird.f32 %v1222
        %vm1229 = vmor %vm1227, %vm1228
        %v1230 = vsel %vm1229, %v1222, %v1226
        %v1231 = vand.u32 2147483647, %v852
        %vm1232 = vcmp.eq.f32.partialorder %v1231, 8.507059e+37
        %v1233 = vand.u32 %v852, 2147483648
        %v1234 = vor.u32 1.1754944e-38, %v1233
        %v1235 = vsel %vm1232, %v1234, %v1230
        %v1236 = vmul.f32 1.0, %v1235
        %v1237 = vrcp.pop %v853
        %v1238 = vmul.f32 %v853, %v1237
        %v1239 = vsub.f32 1.0, %v1238
        %v1240 = vmul.f32 %v1237, %v1239
        %v1241 = vadd.f32 %v1237, %v1240
        %vm1242 = vweird.f32 %v853
        %vm1243 = vweird.f32 %v1237
        %vm1244 = vmor %vm1242, %vm1243
        %v1245 = vsel %vm1244, %v1237, %v1241
        %v1246 = vand.u32 2147483647, %v853
        %vm1247 = vcmp.eq.f32.partialorder %v1246, 8.507059e+37
        %v1248 = vand.u32 %v853, 2147483648
        %v1249 = vor.u32 1.1754944e-38, %v1248
        %v1250 = vsel %vm1247, %v1249, %v1245
        %v1251 = vmul.f32 1.0, %v1250
        %v1252 = vrcp.pop %v854
        %v1253 = vmul.f32 %v854, %v1252
        %v1254 = vsub.f32 1.0, %v1253
        %v1255 = vmul.f32 %v1252, %v1254
        %v1256 = vadd.f32 %v1252, %v1255
        %vm1257 = vweird.f32 %v854
        %vm1258 = vweird.f32 %v1252
        %vm1259 = vmor %vm1257, %vm1258
        %v1260 = vsel %vm1259, %v1252, %v1256
        %v1261 = vand.u32 2147483647, %v854
        %vm1262 = vcmp.eq.f32.partialorder %v1261, 8.507059e+37
        %v1263 = vand.u32 %v854, 2147483648
        %v1264 = vor.u32 1.1754944e-38, %v1263
        %v1265 = vsel %vm1262, %v1264, %v1260
        %v1266 = vmul.f32 1.0, %v1265
        %v1267 = vrcp.pop %v855
        %v1268 = vmul.f32 %v855, %v1267
        %v1269 = vsub.f32 1.0, %v1268
        %v1270 = vmul.f32 %v1267, %v1269
        %v1271 = vadd.f32 %v1267, %v1270
        %vm1272 = vweird.f32 %v855
        %vm1273 = vweird.f32 %v1267
        %vm1274 = vmor %vm1272, %vm1273
        %v1275 = vsel %vm1274, %v1267, %v1271
        %v1276 = vand.u32 2147483647, %v855
        %vm1277 = vcmp.eq.f32.partialorder %v1276, 8.507059e+37
        %v1278 = vand.u32 %v855, 2147483648
        %v1279 = vor.u32 1.1754944e-38, %v1278
        %v1280 = vsel %vm1277, %v1279, %v1275
        %v1281 = vmul.f32 1.0, %v1280
        %v1282 = vrcp.pop %v856
        %v1283 = vmul.f32 %v856, %v1282
        %v1284 = vsub.f32 1.0, %v1283
        %v1285 = vmul.f32 %v1282, %v1284
        %v1286 = vadd.f32 %v1282, %v1285
        %vm1287 = vweird.f32 %v856
        %vm1288 = vweird.f32 %v1282
        %vm1289 = vmor %vm1287, %vm1288
        %v1290 = vsel %vm1289, %v1282, %v1286
        %v1291 = vand.u32 2147483647, %v856
        %vm1292 = vcmp.eq.f32.partialorder %v1291, 8.507059e+37
        %v1293 = vand.u32 %v856, 2147483648
        %v1294 = vor.u32 1.1754944e-38, %v1293
        %v1295 = vsel %vm1292, %v1294, %v1290
        %v1296 = vmul.f32 1.0, %v1295
        %v1297 = vrcp.pop %v857
        %v1298 = vmul.f32 %v857, %v1297
        %v1299 = vsub.f32 1.0, %v1298
        %v1300 = vmul.f32 %v1297, %v1299
        %v1301 = vadd.f32 %v1297, %v1300
        %vm1302 = vweird.f32 %v857
        %vm1303 = vweird.f32 %v1297
        %vm1304 = vmor %vm1302, %vm1303
        %v1305 = vsel %vm1304, %v1297, %v1301
        %v1306 = vand.u32 2147483647, %v857
        %vm1307 = vcmp.eq.f32.partialorder %v1306, 8.507059e+37
        %v1308 = vand.u32 %v857, 2147483648
        %v1309 = vor.u32 1.1754944e-38, %v1308
        %v1310 = vsel %vm1307, %v1309, %v1305
        %v1311 = vmul.f32 1.0, %v1310
        %v1312 = vrcp.pop %v858
        %v1313 = vmul.f32 %v858, %v1312
        %v1314 = vsub.f32 1.0, %v1313
        %v1315 = vmul.f32 %v1312, %v1314
        %v1316 = vadd.f32 %v1312, %v1315
        %vm1317 = vweird.f32 %v858
        %vm1318 = vweird.f32 %v1312
        %vm1319 = vmor %vm1317, %vm1318
        %v1320 = vsel %vm1319, %v1312, %v1316
        %v1321 = vand.u32 2147483647, %v858
        %vm1322 = vcmp.eq.f32.partialorder %v1321, 8.507059e+37
        %v1323 = vand.u32 %v858, 2147483648
        %v1324 = vor.u32 1.1754944e-38, %v1323
        %v1325 = vsel %vm1322, %v1324, %v1320
        %v1326 = vmul.f32 1.0, %v1325
        %v1327 = vrcp.pop %v859
        %v1328 = vmul.f32 %v859, %v1327
        %v1329 = vsub.f32 1.0, %v1328
        %v1330 = vmul.f32 %v1327, %v1329
        %v1331 = vadd.f32 %v1327, %v1330
        %vm1332 = vweird.f32 %v859
        %vm1333 = vweird.f32 %v1327
        %vm1334 = vmor %vm1332, %vm1333
        %v1335 = vsel %vm1334, %v1327, %v1331
        %v1336 = vand.u32 2147483647, %v859
        %vm1337 = vcmp.eq.f32.partialorder %v1336, 8.507059e+37
        %v1338 = vand.u32 %v859, 2147483648
        %v1339 = vor.u32 1.1754944e-38, %v1338
        %v1340 = vsel %vm1337, %v1339, %v1335
        %v1341 = vmul.f32 1.0, %v1340
        %v1342 = vrcp.pop %v860
        %v1343 = vmul.f32 %v860, %v1342
        %v1344 = vsub.f32 1.0, %v1343
        %v1345 = vmul.f32 %v1342, %v1344
        %v1346 = vadd.f32 %v1342, %v1345
        %vm1347 = vweird.f32 %v860
        %vm1348 = vweird.f32 %v1342
        %vm1349 = vmor %vm1347, %vm1348
        %v1350 = vsel %vm1349, %v1342, %v1346
        %v1351 = vand.u32 2147483647, %v860
        %vm1352 = vcmp.eq.f32.partialorder %v1351, 8.507059e+37
        %v1353 = vand.u32 %v860, 2147483648
        %v1354 = vor.u32 1.1754944e-38, %v1353
        %v1355 = vsel %vm1352, %v1354, %v1350
        %v1356 = vmul.f32 1.0, %v1355
        %v1357 = vrcp.pop %v861
        %v1358 = vmul.f32 %v861, %v1357
        %v1359 = vsub.f32 1.0, %v1358
        %v1360 = vmul.f32 %v1357, %v1359
        %v1361 = vadd.f32 %v1357, %v1360
        %vm1362 = vweird.f32 %v861
        %vm1363 = vweird.f32 %v1357
        %vm1364 = vmor %vm1362, %vm1363
        %v1365 = vsel %vm1364, %v1357, %v1361
        %v1366 = vand.u32 2147483647, %v861
        %vm1367 = vcmp.eq.f32.partialorder %v1366, 8.507059e+37
        %v1368 = vand.u32 %v861, 2147483648
        %v1369 = vor.u32 1.1754944e-38, %v1368
        %v1370 = vsel %vm1367, %v1369, %v1365
        %v1371 = vmul.f32 1.0, %v1370
        %v1372 = vrcp.pop %v862
        %v1373 = vmul.f32 %v862, %v1372
        %v1374 = vsub.f32 1.0, %v1373
        %v1375 = vmul.f32 %v1372, %v1374
        %v1376 = vadd.f32 %v1372, %v1375
        %vm1377 = vweird.f32 %v862
        %vm1378 = vweird.f32 %v1372
        %vm1379 = vmor %vm1377, %vm1378
        %v1380 = vsel %vm1379, %v1372, %v1376
        %v1381 = vand.u32 2147483647, %v862
        %vm1382 = vcmp.eq.f32.partialorder %v1381, 8.507059e+37
        %v1383 = vand.u32 %v862, 2147483648
        %v1384 = vor.u32 1.1754944e-38, %v1383
        %v1385 = vsel %vm1382, %v1384, %v1380
        %v1386 = vmul.f32 1.0, %v1385
        %v1387 = vrcp.pop %v863
        %v1388 = vmul.f32 %v863, %v1387
        %v1389 = vsub.f32 1.0, %v1388
        %v1390 = vmul.f32 %v1387, %v1389
        %v1391 = vadd.f32 %v1387, %v1390
        %vm1392 = vweird.f32 %v863
        %vm1393 = vweird.f32 %v1387
        %vm1394 = vmor %vm1392, %vm1393
        %v1395 = vsel %vm1394, %v1387, %v1391
        %v1396 = vand.u32 2147483647, %v863
        %vm1397 = vcmp.eq.f32.partialorder %v1396, 8.507059e+37
        %v1398 = vand.u32 %v863, 2147483648
        %v1399 = vor.u32 1.1754944e-38, %v1398
        %v1400 = vsel %vm1397, %v1399, %v1395
        %v1401 = vmul.f32 1.0, %v1400
        %v1402 = vrcp.pop %v864
        %v1403 = vmul.f32 %v864, %v1402
        %v1404 = vsub.f32 1.0, %v1403
        %v1405 = vmul.f32 %v1402, %v1404
        %v1406 = vadd.f32 %v1402, %v1405
        %vm1407 = vweird.f32 %v864
        %vm1408 = vweird.f32 %v1402
        %vm1409 = vmor %vm1407, %vm1408
        %v1410 = vsel %vm1409, %v1402, %v1406
        %v1411 = vand.u32 2147483647, %v864
        %vm1412 = vcmp.eq.f32.partialorder %v1411, 8.507059e+37
        %v1413 = vand.u32 %v864, 2147483648
        %v1414 = vor.u32 1.1754944e-38, %v1413
        %v1415 = vsel %vm1412, %v1414, %v1410
        %v1416 = vmul.f32 1.0, %v1415
        %v1417 = vrcp.pop %v865
        %v1418 = vmul.f32 %v865, %v1417
        %v1419 = vsub.f32 1.0, %v1418
        %v1420 = vmul.f32 %v1417, %v1419
        %v1421 = vadd.f32 %v1417, %v1420
        %vm1422 = vweird.f32 %v865
        %vm1423 = vweird.f32 %v1417
        %vm1424 = vmor %vm1422, %vm1423
        %v1425 = vsel %vm1424, %v1417, %v1421
        %v1426 = vand.u32 2147483647, %v865
        %vm1427 = vcmp.eq.f32.partialorder %v1426, 8.507059e+37
        %v1428 = vand.u32 %v865, 2147483648
        %v1429 = vor.u32 1.1754944e-38, %v1428
        %v1430 = vsel %vm1427, %v1429, %v1425
        %v1431 = vmul.f32 1.0, %v1430
        %v1432 = vrcp.pop %v866
        %v1433 = vmul.f32 %v866, %v1432
        %v1434 = vsub.f32 1.0, %v1433
        %v1435 = vmul.f32 %v1432, %v1434
        %v1436 = vadd.f32 %v1432, %v1435
        %vm1437 = vweird.f32 %v866
        %vm1438 = vweird.f32 %v1432
        %vm1439 = vmor %vm1437, %vm1438
        %v1440 = vsel %vm1439, %v1432, %v1436
        %v1441 = vand.u32 2147483647, %v866
        %vm1442 = vcmp.eq.f32.partialorder %v1441, 8.507059e+37
        %v1443 = vand.u32 %v866, 2147483648
        %v1444 = vor.u32 1.1754944e-38, %v1443
        %v1445 = vsel %vm1442, %v1444, %v1440
        %v1446 = vmul.f32 1.0, %v1445
        %v1447 = vrcp.pop %v867
        %v1448 = vmul.f32 %v867, %v1447
        %v1449 = vsub.f32 1.0, %v1448
        %v1450 = vmul.f32 %v1447, %v1449
        %v1451 = vadd.f32 %v1447, %v1450
        %vm1452 = vweird.f32 %v867
        %vm1453 = vweird.f32 %v1447
        %vm1454 = vmor %vm1452, %vm1453
        %v1455 = vsel %vm1454, %v1447, %v1451
        %v1456 = vand.u32 2147483647, %v867
        %vm1457 = vcmp.eq.f32.partialorder %v1456, 8.507059e+37
        %v1458 = vand.u32 %v867, 2147483648
        %v1459 = vor.u32 1.1754944e-38, %v1458
        %v1460 = vsel %vm1457, %v1459, %v1455
        %v1461 = vmul.f32 1.0, %v1460
        %v1462 = vrcp.pop %v868
        %v1463 = vmul.f32 %v868, %v1462
        %v1464 = vsub.f32 1.0, %v1463
        %v1465 = vmul.f32 %v1462, %v1464
        %v1466 = vadd.f32 %v1462, %v1465
        %vm1467 = vweird.f32 %v868
        %vm1468 = vweird.f32 %v1462
        %vm1469 = vmor %vm1467, %vm1468
        %v1470 = vsel %vm1469, %v1462, %v1466
        %v1471 = vand.u32 2147483647, %v868
        %vm1472 = vcmp.eq.f32.partialorder %v1471, 8.507059e+37
        %v1473 = vand.u32 %v868, 2147483648
        %v1474 = vor.u32 1.1754944e-38, %v1473
        %v1475 = vsel %vm1472, %v1474, %v1470
        %v1476 = vmul.f32 1.0, %v1475
        %v1477 = vrcp.pop %v869
        %v1478 = vmul.f32 %v869, %v1477
        %v1479 = vsub.f32 1.0, %v1478
        %v1480 = vmul.f32 %v1477, %v1479
        %v1481 = vadd.f32 %v1477, %v1480
        %vm1482 = vweird.f32 %v869
        %vm1483 = vweird.f32 %v1477
        %vm1484 = vmor %vm1482, %vm1483
        %v1485 = vsel %vm1484, %v1477, %v1481
        %v1486 = vand.u32 2147483647, %v869
        %vm1487 = vcmp.eq.f32.partialorder %v1486, 8.507059e+37
        %v1488 = vand.u32 %v869, 2147483648
        %v1489 = vor.u32 1.1754944e-38, %v1488
        %v1490 = vsel %vm1487, %v1489, %v1485
        %v1491 = vmul.f32 1.0, %v1490
        %v1492 = vrcp.pop %v870
        %v1493 = vmul.f32 %v870, %v1492
        %v1494 = vsub.f32 1.0, %v1493
        %v1495 = vmul.f32 %v1492, %v1494
        %v1496 = vadd.f32 %v1492, %v1495
        %vm1497 = vweird.f32 %v870
        %vm1498 = vweird.f32 %v1492
        %vm1499 = vmor %vm1497, %vm1498
        %v1500 = vsel %vm1499, %v1492, %v1496
        %v1501 = vand.u32 2147483647, %v870
        %vm1502 = vcmp.eq.f32.partialorder %v1501, 8.507059e+37
        %v1503 = vand.u32 %v870, 2147483648
        %v1504 = vor.u32 1.1754944e-38, %v1503
        %v1505 = vsel %vm1502, %v1504, %v1500
        %v1506 = vmul.f32 1.0, %v1505
        %v1507 = vrcp.pop %v871
        %v1508 = vmul.f32 %v871, %v1507
        %v1509 = vsub.f32 1.0, %v1508
        %v1510 = vmul.f32 %v1507, %v1509
        %v1511 = vadd.f32 %v1507, %v1510
        %vm1512 = vweird.f32 %v871
        %vm1513 = vweird.f32 %v1507
        %vm1514 = vmor %vm1512, %vm1513
        %v1515 = vsel %vm1514, %v1507, %v1511
        %v1516 = vand.u32 2147483647, %v871
        %vm1517 = vcmp.eq.f32.partialorder %v1516, 8.507059e+37
        %v1518 = vand.u32 %v871, 2147483648
        %v1519 = vor.u32 1.1754944e-38, %v1518
        %v1520 = vsel %vm1517, %v1519, %v1515
        %v1521 = vmul.f32 1.0, %v1520
        %v1522 = vrcp.pop %v872
        %v1523 = vmul.f32 %v872, %v1522
        %v1524 = vsub.f32 1.0, %v1523
        %v1525 = vmul.f32 %v1522, %v1524
        %v1526 = vadd.f32 %v1522, %v1525
        %vm1527 = vweird.f32 %v872
        %vm1528 = vweird.f32 %v1522
        %vm1529 = vmor %vm1527, %vm1528
        %v1530 = vsel %vm1529, %v1522, %v1526
        %v1531 = vand.u32 2147483647, %v872
        %vm1532 = vcmp.eq.f32.partialorder %v1531, 8.507059e+37
        %v1533 = vand.u32 %v872, 2147483648
        %v1534 = vor.u32 1.1754944e-38, %v1533
        %v1535 = vsel %vm1532, %v1534, %v1530
        %v1536 = vmul.f32 1.0, %v1535
        %v1537 = vrcp.pop %v873
        %v1538 = vmul.f32 %v873, %v1537
        %v1539 = vsub.f32 1.0, %v1538
        %v1540 = vmul.f32 %v1537, %v1539
        %v1541 = vadd.f32 %v1537, %v1540
        %vm1542 = vweird.f32 %v873
        %vm1543 = vweird.f32 %v1537
        %vm1544 = vmor %vm1542, %vm1543
        %v1545 = vsel %vm1544, %v1537, %v1541
        %v1546 = vand.u32 2147483647, %v873
        %vm1547 = vcmp.eq.f32.partialorder %v1546, 8.507059e+37
        %v1548 = vand.u32 %v873, 2147483648
        %v1549 = vor.u32 1.1754944e-38, %v1548
        %v1550 = vsel %vm1547, %v1549, %v1545
        %v1551 = vmul.f32 1.0, %v1550
        %v1552 = vrcp.pop %v874
        %v1553 = vmul.f32 %v874, %v1552
        %v1554 = vsub.f32 1.0, %v1553
        %v1555 = vmul.f32 %v1552, %v1554
        %v1556 = vadd.f32 %v1552, %v1555
        %vm1557 = vweird.f32 %v874
        %vm1558 = vweird.f32 %v1552
        %vm1559 = vmor %vm1557, %vm1558
        %v1560 = vsel %vm1559, %v1552, %v1556
        %v1561 = vand.u32 2147483647, %v874
        %vm1562 = vcmp.eq.f32.partialorder %v1561, 8.507059e+37
        %v1563 = vand.u32 %v874, 2147483648
        %v1564 = vor.u32 1.1754944e-38, %v1563
        %v1565 = vsel %vm1562, %v1564, %v1560
        %v1566 = vmul.f32 1.0, %v1565
        %v1567 = vrcp.pop %v875
        %v1568 = vmul.f32 %v875, %v1567
        %v1569 = vsub.f32 1.0, %v1568
        %v1570 = vmul.f32 %v1567, %v1569
        %v1571 = vadd.f32 %v1567, %v1570
        %vm1572 = vweird.f32 %v875
        %vm1573 = vweird.f32 %v1567
        %vm1574 = vmor %vm1572, %vm1573
        %v1575 = vsel %vm1574, %v1567, %v1571
        %v1576 = vand.u32 2147483647, %v875
        %vm1577 = vcmp.eq.f32.partialorder %v1576, 8.507059e+37
        %v1578 = vand.u32 %v875, 2147483648
        %v1579 = vor.u32 1.1754944e-38, %v1578
        %v1580 = vsel %vm1577, %v1579, %v1575
        %v1581 = vmul.f32 1.0, %v1580
        %v1582 = vrcp.pop %v876
        %v1583 = vmul.f32 %v876, %v1582
        %v1584 = vsub.f32 1.0, %v1583
        %v1585 = vmul.f32 %v1582, %v1584
        %v1586 = vadd.f32 %v1582, %v1585
        %vm1587 = vweird.f32 %v876
        %vm1588 = vweird.f32 %v1582
        %vm1589 = vmor %vm1587, %vm1588
        %v1590 = vsel %vm1589, %v1582, %v1586
        %v1591 = vand.u32 2147483647, %v876
        %vm1592 = vcmp.eq.f32.partialorder %v1591, 8.507059e+37
        %v1593 = vand.u32 %v876, 2147483648
        %v1594 = vor.u32 1.1754944e-38, %v1593
        %v1595 = vsel %vm1592, %v1594, %v1590
        %v1596 = vmul.f32 1.0, %v1595
        %v1597 = vmul.f32 %v423, %v891
        %v1598 = vmul.f32 %v458, %v906
        %v1599 = vmul.f32 %v493, %v921
        %v1600 = vmul.f32 %v528, %v936
        %v1601 = vmul.f32 %v563, %v951
        %v1602 = vmul.f32 %v598, %v966
        %v1603 = vmul.f32 %v633, %v981
        %v1604 = vmul.f32 %v668, %v996
        %v1605 = vmul.f32 %v426, %v1011
        %v1606 = vmul.f32 %v461, %v1026
        %v1607 = vmul.f32 %v496, %v1041
        %v1608 = vmul.f32 %v531, %v1056
        %v1609 = vmul.f32 %v566, %v1071
        %v1610 = vmul.f32 %v601, %v1086
        %v1611 = vmul.f32 %v636, %v1101
        %v1612 = vmul.f32 %v671, %v1116
        %v1613 = vmul.f32 %v429, %v1131
        %v1614 = vmul.f32 %v464, %v1146
        %v1615 = vmul.f32 %v499, %v1161
        %v1616 = vmul.f32 %v534, %v1176
        %v1617 = vmul.f32 %v569, %v1191
        %v1618 = vmul.f32 %v604, %v1206
        %v1619 = vmul.f32 %v639, %v1221
        %v1620 = vmul.f32 %v674, %v1236
        %v1621 = vmul.f32 %v432, %v1251
        %v1622 = vmul.f32 %v467, %v1266
        %v1623 = vmul.f32 %v502, %v1281
        %v1624 = vmul.f32 %v537, %v1296
        %v1625 = vmul.f32 %v572, %v1311
        %v1626 = vmul.f32 %v607, %v1326
        %v1627 = vmul.f32 %v642, %v1341
        %v1628 = vmul.f32 %v677, %v1356
        %v1629 = vmul.f32 %v435, %v1371
        %v1630 = vmul.f32 %v470, %v1386
        %v1631 = vmul.f32 %v505, %v1401
        %v1632 = vmul.f32 %v540, %v1416
        %v1633 = vmul.f32 %v575, %v1431
        %v1634 = vmul.f32 %v610, %v1446
        %v1635 = vmul.f32 %v645, %v1461
        %v1636 = vmul.f32 %v680, %v1476
        %v1637 = vmul.f32 %v438, %v1491
        %v1638 = vmul.f32 %v473, %v1506
        %v1639 = vmul.f32 %v508, %v1521
        %v1640 = vmul.f32 %v543, %v1536
        %v1641 = vmul.f32 %v578, %v1551
        %v1642 = vmul.f32 %v613, %v1566
        %v1643 = vmul.f32 %v648, %v1581
        %v1644 = vmul.f32 %v683, %v1596
        %1645 = vrot.lane.b32.xlu0 %v1597, 17
        %v1646 = vpop.permute.xlu0 %1645
        %1647 = vrot.lane.b32.xlu0 %v1605, 17
        %v1648 = vpop.permute.xlu0 %1647
        %1649 = vrot.lane.b32.xlu0 %v1613, 17
        %v1650 = vpop.permute.xlu0 %1649
        %1651 = vrot.lane.b32.xlu0 %v1621, 17
        %v1652 = vpop.permute.xlu0 %1651
        %1653 = vrot.lane.b32.xlu0 %v1629, 17
        %v1654 = vpop.permute.xlu0 %1653
        %1655 = vrot.lane.b32.xlu0 %v1637, 17
        %v1656 = vpop.permute.xlu0 %1655
        %1657 = vrot.lane.b32.xlu0 %v1598, 17
        %v1658 = vpop.permute.xlu0 %1657
        %1659 = vrot.lane.b32.xlu0 %v1606, 17
        %v1660 = vpop.permute.xlu0 %1659
        %1661 = vrot.lane.b32.xlu0 %v1614, 17
        %v1662 = vpop.permute.xlu0 %1661
        %1663 = vrot.lane.b32.xlu0 %v1622, 17
        %v1664 = vpop.permute.xlu0 %1663
        %1665 = vrot.lane.b32.xlu0 %v1630, 17
        %v1666 = vpop.permute.xlu0 %1665
        %1667 = vrot.lane.b32.xlu0 %v1638, 17
        %v1668 = vpop.permute.xlu0 %1667
        %1669 = vrot.lane.b32.xlu0 %v1599, 17
        %v1670 = vpop.permute.xlu0 %1669
        %1671 = vrot.lane.b32.xlu0 %v1607, 17
        %v1672 = vpop.permute.xlu0 %1671
        %1673 = vrot.lane.b32.xlu0 %v1615, 17
        %v1674 = vpop.permute.xlu0 %1673
        %1675 = vrot.lane.b32.xlu0 %v1623, 17
        %v1676 = vpop.permute.xlu0 %1675
        %1677 = vrot.lane.b32.xlu0 %v1631, 17
        %v1678 = vpop.permute.xlu0 %1677
        %1679 = vrot.lane.b32.xlu0 %v1639, 17
        %v1680 = vpop.permute.xlu0 %1679
        %1681 = vrot.lane.b32.xlu0 %v1600, 17
        %v1682 = vpop.permute.xlu0 %1681
        %1683 = vrot.lane.b32.xlu0 %v1608, 17
        %v1684 = vpop.permute.xlu0 %1683
        %1685 = vrot.lane.b32.xlu0 %v1616, 17
        %v1686 = vpop.permute.xlu0 %1685
        %1687 = vrot.lane.b32.xlu0 %v1624, 17
        %v1688 = vpop.permute.xlu0 %1687
        %1689 = vrot.lane.b32.xlu0 %v1632, 17
        %v1690 = vpop.permute.xlu0 %1689
        %1691 = vrot.lane.b32.xlu0 %v1640, 17
        %v1692 = vpop.permute.xlu0 %1691
        %1693 = vrot.lane.b32.xlu0 %v1601, 17
        %v1694 = vpop.permute.xlu0 %1693
        %1695 = vrot.lane.b32.xlu0 %v1609, 17
        %v1696 = vpop.permute.xlu0 %1695
        %1697 = vrot.lane.b32.xlu0 %v1617, 17
        %v1698 = vpop.permute.xlu0 %1697
        %1699 = vrot.lane.b32.xlu0 %v1625, 17
        %v1700 = vpop.permute.xlu0 %1699
        %1701 = vrot.lane.b32.xlu0 %v1633, 17
        %v1702 = vpop.permute.xlu0 %1701
        %1703 = vrot.lane.b32.xlu0 %v1641, 17
        %v1704 = vpop.permute.xlu0 %1703
        %1705 = vrot.lane.b32.xlu0 %v1602, 17
        %v1706 = vpop.permute.xlu0 %1705
        %1707 = vrot.lane.b32.xlu0 %v1610, 17
        %v1708 = vpop.permute.xlu0 %1707
        %1709 = vrot.lane.b32.xlu0 %v1618, 17
        %v1710 = vpop.permute.xlu0 %1709
        %1711 = vrot.lane.b32.xlu0 %v1626, 17
        %v1712 = vpop.permute.xlu0 %1711
        %1713 = vrot.lane.b32.xlu0 %v1634, 17
        %v1714 = vpop.permute.xlu0 %1713
        %1715 = vrot.lane.b32.xlu0 %v1642, 17
        %v1716 = vpop.permute.xlu0 %1715
        %1717 = vrot.lane.b32.xlu0 %v1603, 17
        %v1718 = vpop.permute.xlu0 %1717
        %1719 = vrot.lane.b32.xlu0 %v1611, 17
        %v1720 = vpop.permute.xlu0 %1719
        %1721 = vrot.lane.b32.xlu0 %v1619, 17
        %v1722 = vpop.permute.xlu0 %1721
        %1723 = vrot.lane.b32.xlu0 %v1627, 17
        %v1724 = vpop.permute.xlu0 %1723
        %1725 = vrot.lane.b32.xlu0 %v1635, 17
        %v1726 = vpop.permute.xlu0 %1725
        %1727 = vrot.lane.b32.xlu0 %v1643, 17
        %v1728 = vpop.permute.xlu0 %1727
        %1729 = vrot.lane.b32.xlu0 %v1604, 17
        %v1730 = vpop.permute.xlu0 %1729
        %1731 = vrot.lane.b32.xlu0 %v1612, 17
        %v1732 = vpop.permute.xlu0 %1731
        %1733 = vrot.lane.b32.xlu0 %v1620, 17
        %v1734 = vpop.permute.xlu0 %1733
        %1735 = vrot.lane.b32.xlu0 %v1628, 17
        %v1736 = vpop.permute.xlu0 %1735
        %1737 = vrot.lane.b32.xlu0 %v1636, 17
        %v1738 = vpop.permute.xlu0 %1737
        %1739 = vrot.lane.b32.xlu0 %v1644, 17
        %v1740 = vpop.permute.xlu0 %1739
        %v1741 = vlaneseq
        %v1742 = vand.u32 %v1741, 127
        %vm1743 = vcmp.lt.s32.totalorder %v1742, 17
        %v1744 = vsel %vm1743, %v1718, %v1730
        %v1745 = vsel %vm1743, %v1720, %v1732
        %v1746 = vsel %vm1743, %v1722, %v1734
        %v1747 = vsel %vm1743, %v1724, %v1736
        %v1748 = vsel %vm1743, %v1726, %v1738
        %v1749 = vsel %vm1743, %v1728, %v1740
        %v1750 = vsel %vm1743, %v1706, %v1718
        %v1751 = vsel %vm1743, %v1708, %v1720
        %v1752 = vsel %vm1743, %v1710, %v1722
        %v1753 = vsel %vm1743, %v1712, %v1724
        %v1754 = vsel %vm1743, %v1714, %v1726
        %v1755 = vsel %vm1743, %v1716, %v1728
        %v1756 = vsel %vm1743, %v1694, %v1706
        %v1757 = vsel %vm1743, %v1696, %v1708
        %v1758 = vsel %vm1743, %v1698, %v1710
        %v1759 = vsel %vm1743, %v1700, %v1712
        %v1760 = vsel %vm1743, %v1702, %v1714
        %v1761 = vsel %vm1743, %v1704, %v1716
        %v1762 = vsel %vm1743, %v1682, %v1694
        %v1763 = vsel %vm1743, %v1684, %v1696
        %v1764 = vsel %vm1743, %v1686, %v1698
        %v1765 = vsel %vm1743, %v1688, %v1700
        %v1766 = vsel %vm1743, %v1690, %v1702
        %v1767 = vsel %vm1743, %v1692, %v1704
        %v1768 = vsel %vm1743, %v1670, %v1682
        %v1769 = vsel %vm1743, %v1672, %v1684
        %v1770 = vsel %vm1743, %v1674, %v1686
        %v1771 = vsel %vm1743, %v1676, %v1688
        %v1772 = vsel %vm1743, %v1678, %v1690
        %v1773 = vsel %vm1743, %v1680, %v1692
        %v1774 = vsel %vm1743, %v1658, %v1670
        %v1775 = vsel %vm1743, %v1660, %v1672
        %v1776 = vsel %vm1743, %v1662, %v1674
        %v1777 = vsel %vm1743, %v1664, %v1676
        %v1778 = vsel %vm1743, %v1666, %v1678
        %v1779 = vsel %vm1743, %v1668, %v1680
        %v1780 = vsel %vm1743, %v1646, %v1658
        %v1781 = vsel %vm1743, %v1648, %v1660
        %v1782 = vsel %vm1743, %v1650, %v1662
        %v1783 = vsel %vm1743, %v1652, %v1664
        %v1784 = vsel %vm1743, %v1654, %v1666
        %v1785 = vsel %vm1743, %v1656, %v1668
        %v1786 = vsel %vm1743, %v1730, %v1646
        %v1787 = vsel %vm1743, %v1732, %v1648
        %v1788 = vsel %vm1743, %v1734, %v1650
        %v1789 = vsel %vm1743, %v1736, %v1652
        %v1790 = vsel %vm1743, %v1738, %v1654
        %v1791 = vsel %vm1743, %v1740, %v1656
        %v1792 = vld [vmem:[#allocation5] sm:$0xff]
        %v1793 = vld [vmem:[#allocation5 + $0x8] sm:$0xff]
        %v1794 = vld [vmem:[#allocation5 + $0x10] sm:$0xff]
        %v1795 = vld [vmem:[#allocation5 + $0x18] sm:$0xff]
        %v1796 = vld [vmem:[#allocation5 + $0x20] sm:$0xff]
        %v1797 = vld [vmem:[#allocation5 + $0x28] sm:$0xff]
        %v1798 = vld [vmem:[#allocation5 + $0x30] sm:$0xff]
        %v1799 = vld [vmem:[#allocation5 + $0x38] sm:$0xff]
        %v1800 = vld [vmem:[#allocation5 + $0x40] sm:$0xff]
        %v1801 = vld [vmem:[#allocation5 + $0x48] sm:$0xff]
        %v1802 = vld [vmem:[#allocation5 + $0x50] sm:$0xff]
        %v1803 = vld [vmem:[#allocation5 + $0x58] sm:$0xff]
        %v1804 = vld [vmem:[#allocation5 + $0x60] sm:$0xff]
        %v1805 = vld [vmem:[#allocation5 + $0x68] sm:$0xff]
        %v1806 = vld [vmem:[#allocation5 + $0x70] sm:$0xff]
        %v1807 = vld [vmem:[#allocation5 + $0x78] sm:$0xff]
        %v1808 = vld [vmem:[#allocation5 + $0x80] sm:$0xff]
        %v1809 = vld [vmem:[#allocation5 + $0x88] sm:$0xff]
        %v1810 = vld [vmem:[#allocation5 + $0x90] sm:$0xff]
        %v1811 = vld [vmem:[#allocation5 + $0x98] sm:$0xff]
        %v1812 = vld [vmem:[#allocation5 + $0xa0] sm:$0xff]
        %v1813 = vld [vmem:[#allocation5 + $0xa8] sm:$0xff]
        %v1814 = vld [vmem:[#allocation5 + $0xb0] sm:$0xff]
        %v1815 = vld [vmem:[#allocation5 + $0xb8] sm:$0xff]
        %v1816 = vld [vmem:[#allocation5 + $0xc0] sm:$0xff]
        %v1817 = vld [vmem:[#allocation5 + $0xc8] sm:$0xff]
        %v1818 = vld [vmem:[#allocation5 + $0xd0] sm:$0xff]
        %v1819 = vld [vmem:[#allocation5 + $0xd8] sm:$0xff]
        %v1820 = vld [vmem:[#allocation5 + $0xe0] sm:$0xff]
        %v1821 = vld [vmem:[#allocation5 + $0xe8] sm:$0xff]
        %v1822 = vld [vmem:[#allocation5 + $0xf0] sm:$0xff]
        %v1823 = vld [vmem:[#allocation5 + $0xf8] sm:$0xff]
        %v1824 = vld [vmem:[#allocation5 + $0x100] sm:$0xff]
        %v1825 = vld [vmem:[#allocation5 + $0x108] sm:$0xff]
        %v1826 = vld [vmem:[#allocation5 + $0x110] sm:$0xff]
        %v1827 = vld [vmem:[#allocation5 + $0x118] sm:$0xff]
        %v1828 = vld [vmem:[#allocation5 + $0x120] sm:$0xff]
        %v1829 = vld [vmem:[#allocation5 + $0x128] sm:$0xff]
        %v1830 = vld [vmem:[#allocation5 + $0x130] sm:$0xff]
        %v1831 = vld [vmem:[#allocation5 + $0x138] sm:$0xff]
        %v1832 = vld [vmem:[#allocation5 + $0x140] sm:$0xff]
        %v1833 = vld [vmem:[#allocation5 + $0x148] sm:$0xff]
        %v1834 = vld [vmem:[#allocation5 + $0x150] sm:$0xff]
        %v1835 = vld [vmem:[#allocation5 + $0x158] sm:$0xff]
        %v1836 = vld [vmem:[#allocation5 + $0x160] sm:$0xff]
        %v1837 = vld [vmem:[#allocation5 + $0x168] sm:$0xff]
        %v1838 = vld [vmem:[#allocation5 + $0x170] sm:$0xff]
        %v1839 = vld [vmem:[#allocation5 + $0x178] sm:$0xff]
        %v1840 = vmul.f32 %v1786, %v1792
        %v1841 = vmul.f32 %v1780, %v1793
        %v1842 = vmul.f32 %v1774, %v1794
        %v1843 = vmul.f32 %v1768, %v1795
        %v1844 = vmul.f32 %v1762, %v1796
        %v1845 = vmul.f32 %v1756, %v1797
        %v1846 = vmul.f32 %v1750, %v1798
        %v1847 = vmul.f32 %v1744, %v1799
        %v1848 = vmul.f32 %v1787, %v1800
        %v1849 = vmul.f32 %v1781, %v1801
        %v1850 = vmul.f32 %v1775, %v1802
        %v1851 = vmul.f32 %v1769, %v1803
        %v1852 = vmul.f32 %v1763, %v1804
        %v1853 = vmul.f32 %v1757, %v1805
        %v1854 = vmul.f32 %v1751, %v1806
        %v1855 = vmul.f32 %v1745, %v1807
        %v1856 = vmul.f32 %v1788, %v1808
        %v1857 = vmul.f32 %v1782, %v1809
        %v1858 = vmul.f32 %v1776, %v1810
        %v1859 = vmul.f32 %v1770, %v1811
        %v1860 = vmul.f32 %v1764, %v1812
        %v1861 = vmul.f32 %v1758, %v1813
        %v1862 = vmul.f32 %v1752, %v1814
        %v1863 = vmul.f32 %v1746, %v1815
        %v1864 = vmul.f32 %v1789, %v1816
        %v1865 = vmul.f32 %v1783, %v1817
        %v1866 = vmul.f32 %v1777, %v1818
        %v1867 = vmul.f32 %v1771, %v1819
        %v1868 = vmul.f32 %v1765, %v1820
        %v1869 = vmul.f32 %v1759, %v1821
        %v1870 = vmul.f32 %v1753, %v1822
        %v1871 = vmul.f32 %v1747, %v1823
        %v1872 = vmul.f32 %v1790, %v1824
        %v1873 = vmul.f32 %v1784, %v1825
        %v1874 = vmul.f32 %v1778, %v1826
        %v1875 = vmul.f32 %v1772, %v1827
        %v1876 = vmul.f32 %v1766, %v1828
        %v1877 = vmul.f32 %v1760, %v1829
        %v1878 = vmul.f32 %v1754, %v1830
        %v1879 = vmul.f32 %v1748, %v1831
        %v1880 = vmul.f32 %v1791, %v1832
        %v1881 = vmul.f32 %v1785, %v1833
        %v1882 = vmul.f32 %v1779, %v1834
        %v1883 = vmul.f32 %v1773, %v1835
        %v1884 = vmul.f32 %v1767, %v1836
        %v1885 = vmul.f32 %v1761, %v1837
        %v1886 = vmul.f32 %v1755, %v1838
        %v1887 = vmul.f32 %v1749, %v1839
        %1888 = vrot.lane.b32.xlu0 %v1597, 16
        %v1889 = vpop.permute.xlu0 %1888
        %1890 = vrot.lane.b32.xlu0 %v1605, 16
        %v1891 = vpop.permute.xlu0 %1890
        %1892 = vrot.lane.b32.xlu0 %v1613, 16
        %v1893 = vpop.permute.xlu0 %1892
        %1894 = vrot.lane.b32.xlu0 %v1621, 16
        %v1895 = vpop.permute.xlu0 %1894
        %1896 = vrot.lane.b32.xlu0 %v1629, 16
        %v1897 = vpop.permute.xlu0 %1896
        %1898 = vrot.lane.b32.xlu0 %v1637, 16
        %v1899 = vpop.permute.xlu0 %1898
        %1900 = vrot.lane.b32.xlu0 %v1598, 16
        %v1901 = vpop.permute.xlu0 %1900
        %1902 = vrot.lane.b32.xlu0 %v1606, 16
        %v1903 = vpop.permute.xlu0 %1902
        %1904 = vrot.lane.b32.xlu0 %v1614, 16
        %v1905 = vpop.permute.xlu0 %1904
        %1906 = vrot.lane.b32.xlu0 %v1622, 16
        %v1907 = vpop.permute.xlu0 %1906
        %1908 = vrot.lane.b32.xlu0 %v1630, 16
        %v1909 = vpop.permute.xlu0 %1908
        %1910 = vrot.lane.b32.xlu0 %v1638, 16
        %v1911 = vpop.permute.xlu0 %1910
        %1912 = vrot.lane.b32.xlu0 %v1599, 16
        %v1913 = vpop.permute.xlu0 %1912
        %1914 = vrot.lane.b32.xlu0 %v1607, 16
        %v1915 = vpop.permute.xlu0 %1914
        %1916 = vrot.lane.b32.xlu0 %v1615, 16
        %v1917 = vpop.permute.xlu0 %1916
        %1918 = vrot.lane.b32.xlu0 %v1623, 16
        %v1919 = vpop.permute.xlu0 %1918
        %1920 = vrot.lane.b32.xlu0 %v1631, 16
        %v1921 = vpop.permute.xlu0 %1920
        %1922 = vrot.lane.b32.xlu0 %v1639, 16
        %v1923 = vpop.permute.xlu0 %1922
        %1924 = vrot.lane.b32.xlu0 %v1600, 16
        %v1925 = vpop.permute.xlu0 %1924
        %1926 = vrot.lane.b32.xlu0 %v1608, 16
        %v1927 = vpop.permute.xlu0 %1926
        %1928 = vrot.lane.b32.xlu0 %v1616, 16
        %v1929 = vpop.permute.xlu0 %1928
        %1930 = vrot.lane.b32.xlu0 %v1624, 16
        %v1931 = vpop.permute.xlu0 %1930
        %1932 = vrot.lane.b32.xlu0 %v1632, 16
        %v1933 = vpop.permute.xlu0 %1932
        %1934 = vrot.lane.b32.xlu0 %v1640, 16
        %v1935 = vpop.permute.xlu0 %1934
        %1936 = vrot.lane.b32.xlu0 %v1601, 16
        %v1937 = vpop.permute.xlu0 %1936
        %1938 = vrot.lane.b32.xlu0 %v1609, 16
        %v1939 = vpop.permute.xlu0 %1938
        %1940 = vrot.lane.b32.xlu0 %v1617, 16
        %v1941 = vpop.permute.xlu0 %1940
        %1942 = vrot.lane.b32.xlu0 %v1625, 16
        %v1943 = vpop.permute.xlu0 %1942
        %1944 = vrot.lane.b32.xlu0 %v1633, 16
        %v1945 = vpop.permute.xlu0 %1944
        %1946 = vrot.lane.b32.xlu0 %v1641, 16
        %v1947 = vpop.permute.xlu0 %1946
        %1948 = vrot.lane.b32.xlu0 %v1602, 16
        %v1949 = vpop.permute.xlu0 %1948
        %1950 = vrot.lane.b32.xlu0 %v1610, 16
        %v1951 = vpop.permute.xlu0 %1950
        %1952 = vrot.lane.b32.xlu0 %v1618, 16
        %v1953 = vpop.permute.xlu0 %1952
        %1954 = vrot.lane.b32.xlu0 %v1626, 16
        %v1955 = vpop.permute.xlu0 %1954
        %1956 = vrot.lane.b32.xlu0 %v1634, 16
        %v1957 = vpop.permute.xlu0 %1956
        %1958 = vrot.lane.b32.xlu0 %v1642, 16
        %v1959 = vpop.permute.xlu0 %1958
        %1960 = vrot.lane.b32.xlu0 %v1603, 16
        %v1961 = vpop.permute.xlu0 %1960
        %1962 = vrot.lane.b32.xlu0 %v1611, 16
        %v1963 = vpop.permute.xlu0 %1962
        %1964 = vrot.lane.b32.xlu0 %v1619, 16
        %v1965 = vpop.permute.xlu0 %1964
        %1966 = vrot.lane.b32.xlu0 %v1627, 16
        %v1967 = vpop.permute.xlu0 %1966
        %1968 = vrot.lane.b32.xlu0 %v1635, 16
        %v1969 = vpop.permute.xlu0 %1968
        %1970 = vrot.lane.b32.xlu0 %v1643, 16
        %v1971 = vpop.permute.xlu0 %1970
        %1972 = vrot.lane.b32.xlu0 %v1604, 16
        %v1973 = vpop.permute.xlu0 %1972
        %1974 = vrot.lane.b32.xlu0 %v1612, 16
        %v1975 = vpop.permute.xlu0 %1974
        %1976 = vrot.lane.b32.xlu0 %v1620, 16
        %v1977 = vpop.permute.xlu0 %1976
        %1978 = vrot.lane.b32.xlu0 %v1628, 16
        %v1979 = vpop.permute.xlu0 %1978
        %1980 = vrot.lane.b32.xlu0 %v1636, 16
        %v1981 = vpop.permute.xlu0 %1980
        %1982 = vrot.lane.b32.xlu0 %v1644, 16
        %v1983 = vpop.permute.xlu0 %1982
        %vm1984 = vcmp.lt.s32.totalorder %v1742, 16
        %v1985 = vsel %vm1984, %v1961, %v1973
        %v1986 = vsel %vm1984, %v1963, %v1975
        %v1987 = vsel %vm1984, %v1965, %v1977
        %v1988 = vsel %vm1984, %v1967, %v1979
        %v1989 = vsel %vm1984, %v1969, %v1981
        %v1990 = vsel %vm1984, %v1971, %v1983
        %v1991 = vsel %vm1984, %v1949, %v1961
        %v1992 = vsel %vm1984, %v1951, %v1963
        %v1993 = vsel %vm1984, %v1953, %v1965
        %v1994 = vsel %vm1984, %v1955, %v1967
        %v1995 = vsel %vm1984, %v1957, %v1969
        %v1996 = vsel %vm1984, %v1959, %v1971
        %v1997 = vsel %vm1984, %v1937, %v1949
        %v1998 = vsel %vm1984, %v1939, %v1951
        %v1999 = vsel %vm1984, %v1941, %v1953
        %v2000 = vsel %vm1984, %v1943, %v1955
        %v2001 = vsel %vm1984, %v1945, %v1957
        %v2002 = vsel %vm1984, %v1947, %v1959
        %v2003 = vsel %vm1984, %v1925, %v1937
        %v2004 = vsel %vm1984, %v1927, %v1939
        %v2005 = vsel %vm1984, %v1929, %v1941
        %v2006 = vsel %vm1984, %v1931, %v1943
        %v2007 = vsel %vm1984, %v1933, %v1945
        %v2008 = vsel %vm1984, %v1935, %v1947
        %v2009 = vsel %vm1984, %v1913, %v1925
        %v2010 = vsel %vm1984, %v1915, %v1927
        %v2011 = vsel %vm1984, %v1917, %v1929
        %v2012 = vsel %vm1984, %v1919, %v1931
        %v2013 = vsel %vm1984, %v1921, %v1933
        %v2014 = vsel %vm1984, %v1923, %v1935
        %v2015 = vsel %vm1984, %v1901, %v1913
        %v2016 = vsel %vm1984, %v1903, %v1915
        %v2017 = vsel %vm1984, %v1905, %v1917
        %v2018 = vsel %vm1984, %v1907, %v1919
        %v2019 = vsel %vm1984, %v1909, %v1921
        %v2020 = vsel %vm1984, %v1911, %v1923
        %v2021 = vsel %vm1984, %v1889, %v1901
        %v2022 = vsel %vm1984, %v1891, %v1903
        %v2023 = vsel %vm1984, %v1893, %v1905
        %v2024 = vsel %vm1984, %v1895, %v1907
        %v2025 = vsel %vm1984, %v1897, %v1909
        %v2026 = vsel %vm1984, %v1899, %v1911
        %v2027 = vsel %vm1984, %v1973, %v1889
        %v2028 = vsel %vm1984, %v1975, %v1891
        %v2029 = vsel %vm1984, %v1977, %v1893
        %v2030 = vsel %vm1984, %v1979, %v1895
        %v2031 = vsel %vm1984, %v1981, %v1897
        %v2032 = vsel %vm1984, %v1983, %v1899
        %s2033 = scalar_lea.vmem [#allocation5], 384
        %v2034 = vld [vmem:[%s2033] sm:$0xff]
        %v2035 = vld [vmem:[%s2033 + $0x8] sm:$0xff]
        %v2036 = vld [vmem:[%s2033 + $0x10] sm:$0xff]
        %v2037 = vld [vmem:[%s2033 + $0x18] sm:$0xff]
        %v2038 = vld [vmem:[%s2033 + $0x20] sm:$0xff]
        %v2039 = vld [vmem:[%s2033 + $0x28] sm:$0xff]
        %v2040 = vld [vmem:[%s2033 + $0x30] sm:$0xff]
        %v2041 = vld [vmem:[%s2033 + $0x38] sm:$0xff]
        %v2042 = vld [vmem:[%s2033 + $0x40] sm:$0xff]
        %v2043 = vld [vmem:[%s2033 + $0x48] sm:$0xff]
        %v2044 = vld [vmem:[%s2033 + $0x50] sm:$0xff]
        %v2045 = vld [vmem:[%s2033 + $0x58] sm:$0xff]
        %v2046 = vld [vmem:[%s2033 + $0x60] sm:$0xff]
        %v2047 = vld [vmem:[%s2033 + $0x68] sm:$0xff]
        %v2048 = vld [vmem:[%s2033 + $0x70] sm:$0xff]
        %v2049 = vld [vmem:[%s2033 + $0x78] sm:$0xff]
        %v2050 = vld [vmem:[%s2033 + $0x80] sm:$0xff]
        %v2051 = vld [vmem:[%s2033 + $0x88] sm:$0xff]
        %v2052 = vld [vmem:[%s2033 + $0x90] sm:$0xff]
        %v2053 = vld [vmem:[%s2033 + $0x98] sm:$0xff]
        %v2054 = vld [vmem:[%s2033 + $0xa0] sm:$0xff]
        %v2055 = vld [vmem:[%s2033 + $0xa8] sm:$0xff]
        %v2056 = vld [vmem:[%s2033 + $0xb0] sm:$0xff]
        %v2057 = vld [vmem:[%s2033 + $0xb8] sm:$0xff]
        %v2058 = vld [vmem:[%s2033 + $0xc0] sm:$0xff]
        %v2059 = vld [vmem:[%s2033 + $0xc8] sm:$0xff]
        %v2060 = vld [vmem:[%s2033 + $0xd0] sm:$0xff]
        %v2061 = vld [vmem:[%s2033 + $0xd8] sm:$0xff]
        %v2062 = vld [vmem:[%s2033 + $0xe0] sm:$0xff]
        %v2063 = vld [vmem:[%s2033 + $0xe8] sm:$0xff]
        %v2064 = vld [vmem:[%s2033 + $0xf0] sm:$0xff]
        %v2065 = vld [vmem:[%s2033 + $0xf8] sm:$0xff]
        %v2066 = vld [vmem:[%s2033 + $0x100] sm:$0xff]
        %v2067 = vld [vmem:[%s2033 + $0x108] sm:$0xff]
        %v2068 = vld [vmem:[%s2033 + $0x110] sm:$0xff]
        %v2069 = vld [vmem:[%s2033 + $0x118] sm:$0xff]
        %v2070 = vld [vmem:[%s2033 + $0x120] sm:$0xff]
        %v2071 = vld [vmem:[%s2033 + $0x128] sm:$0xff]
        %v2072 = vld [vmem:[%s2033 + $0x130] sm:$0xff]
        %v2073 = vld [vmem:[%s2033 + $0x138] sm:$0xff]
        %v2074 = vld [vmem:[%s2033 + $0x140] sm:$0xff]
        %v2075 = vld [vmem:[%s2033 + $0x148] sm:$0xff]
        %v2076 = vld [vmem:[%s2033 + $0x150] sm:$0xff]
        %v2077 = vld [vmem:[%s2033 + $0x158] sm:$0xff]
        %v2078 = vld [vmem:[%s2033 + $0x160] sm:$0xff]
        %v2079 = vld [vmem:[%s2033 + $0x168] sm:$0xff]
        %v2080 = vld [vmem:[%s2033 + $0x170] sm:$0xff]
        %v2081 = vld [vmem:[%s2033 + $0x178] sm:$0xff]
        %v2082 = vmul.f32 %v2027, %v2034
        %v2083 = vmul.f32 %v2021, %v2035
        %v2084 = vmul.f32 %v2015, %v2036
        %v2085 = vmul.f32 %v2009, %v2037
        %v2086 = vmul.f32 %v2003, %v2038
        %v2087 = vmul.f32 %v1997, %v2039
        %v2088 = vmul.f32 %v1991, %v2040
        %v2089 = vmul.f32 %v1985, %v2041
        %v2090 = vmul.f32 %v2028, %v2042
        %v2091 = vmul.f32 %v2022, %v2043
        %v2092 = vmul.f32 %v2016, %v2044
        %v2093 = vmul.f32 %v2010, %v2045
        %v2094 = vmul.f32 %v2004, %v2046
        %v2095 = vmul.f32 %v1998, %v2047
        %v2096 = vmul.f32 %v1992, %v2048
        %v2097 = vmul.f32 %v1986, %v2049
        %v2098 = vmul.f32 %v2029, %v2050
        %v2099 = vmul.f32 %v2023, %v2051
        %v2100 = vmul.f32 %v2017, %v2052
        %v2101 = vmul.f32 %v2011, %v2053
        %v2102 = vmul.f32 %v2005, %v2054
        %v2103 = vmul.f32 %v1999, %v2055
        %v2104 = vmul.f32 %v1993, %v2056
        %v2105 = vmul.f32 %v1987, %v2057
        %v2106 = vmul.f32 %v2030, %v2058
        %v2107 = vmul.f32 %v2024, %v2059
        %v2108 = vmul.f32 %v2018, %v2060
        %v2109 = vmul.f32 %v2012, %v2061
        %v2110 = vmul.f32 %v2006, %v2062
        %v2111 = vmul.f32 %v2000, %v2063
        %v2112 = vmul.f32 %v1994, %v2064
        %v2113 = vmul.f32 %v1988, %v2065
        %v2114 = vmul.f32 %v2031, %v2066
        %v2115 = vmul.f32 %v2025, %v2067
        %v2116 = vmul.f32 %v2019, %v2068
        %v2117 = vmul.f32 %v2013, %v2069
        %v2118 = vmul.f32 %v2007, %v2070
        %v2119 = vmul.f32 %v2001, %v2071
        %v2120 = vmul.f32 %v1995, %v2072
        %v2121 = vmul.f32 %v1989, %v2073
        %v2122 = vmul.f32 %v2032, %v2074
        %v2123 = vmul.f32 %v2026, %v2075
        %v2124 = vmul.f32 %v2020, %v2076
        %v2125 = vmul.f32 %v2014, %v2077
        %v2126 = vmul.f32 %v2008, %v2078
        %v2127 = vmul.f32 %v2002, %v2079
        %v2128 = vmul.f32 %v1996, %v2080
        %v2129 = vmul.f32 %v1990, %v2081
        %v2130 = vadd.f32 %v1840, %v2082
        %v2131 = vadd.f32 %v1841, %v2083
        %v2132 = vadd.f32 %v1842, %v2084
        %v2133 = vadd.f32 %v1843, %v2085
        %v2134 = vadd.f32 %v1844, %v2086
        %v2135 = vadd.f32 %v1845, %v2087
        %v2136 = vadd.f32 %v1846, %v2088
        %v2137 = vadd.f32 %v1847, %v2089
        %v2138 = vadd.f32 %v1848, %v2090
        %v2139 = vadd.f32 %v1849, %v2091
        %v2140 = vadd.f32 %v1850, %v2092
        %v2141 = vadd.f32 %v1851, %v2093
        %v2142 = vadd.f32 %v1852, %v2094
        %v2143 = vadd.f32 %v1853, %v2095
        %v2144 = vadd.f32 %v1854, %v2096
        %v2145 = vadd.f32 %v1855, %v2097
        %v2146 = vadd.f32 %v1856, %v2098
        %v2147 = vadd.f32 %v1857, %v2099
        %v2148 = vadd.f32 %v1858, %v2100
        %v2149 = vadd.f32 %v1859, %v2101
        %v2150 = vadd.f32 %v1860, %v2102
        %v2151 = vadd.f32 %v1861, %v2103
        %v2152 = vadd.f32 %v1862, %v2104
        %v2153 = vadd.f32 %v1863, %v2105
        %v2154 = vadd.f32 %v1864, %v2106
        %v2155 = vadd.f32 %v1865, %v2107
        %v2156 = vadd.f32 %v1866, %v2108
        %v2157 = vadd.f32 %v1867, %v2109
        %v2158 = vadd.f32 %v1868, %v2110
        %v2159 = vadd.f32 %v1869, %v2111
        %v2160 = vadd.f32 %v1870, %v2112
        %v2161 = vadd.f32 %v1871, %v2113
        %v2162 = vadd.f32 %v1872, %v2114
        %v2163 = vadd.f32 %v1873, %v2115
        %v2164 = vadd.f32 %v1874, %v2116
        %v2165 = vadd.f32 %v1875, %v2117
        %v2166 = vadd.f32 %v1876, %v2118
        %v2167 = vadd.f32 %v1877, %v2119
        %v2168 = vadd.f32 %v1878, %v2120
        %v2169 = vadd.f32 %v1879, %v2121
        %v2170 = vadd.f32 %v1880, %v2122
        %v2171 = vadd.f32 %v1881, %v2123
        %v2172 = vadd.f32 %v1882, %v2124
        %v2173 = vadd.f32 %v1883, %v2125
        %v2174 = vadd.f32 %v1884, %v2126
        %v2175 = vadd.f32 %v1885, %v2127
        %v2176 = vadd.f32 %v1886, %v2128
        %v2177 = vadd.f32 %v1887, %v2129
        %2178 = vrot.lane.b32.xlu0 %v1597, 15
        %v2179 = vpop.permute.xlu0 %2178
        %2180 = vrot.lane.b32.xlu0 %v1605, 15
        %v2181 = vpop.permute.xlu0 %2180
        %2182 = vrot.lane.b32.xlu0 %v1613, 15
        %v2183 = vpop.permute.xlu0 %2182
        %2184 = vrot.lane.b32.xlu0 %v1621, 15
        %v2185 = vpop.permute.xlu0 %2184
        %2186 = vrot.lane.b32.xlu0 %v1629, 15
        %v2187 = vpop.permute.xlu0 %2186
        %2188 = vrot.lane.b32.xlu0 %v1637, 15
        %v2189 = vpop.permute.xlu0 %2188
        %2190 = vrot.lane.b32.xlu0 %v1598, 15
        %v2191 = vpop.permute.xlu0 %2190
        %2192 = vrot.lane.b32.xlu0 %v1606, 15
        %v2193 = vpop.permute.xlu0 %2192
        %2194 = vrot.lane.b32.xlu0 %v1614, 15
        %v2195 = vpop.permute.xlu0 %2194
        %2196 = vrot.lane.b32.xlu0 %v1622, 15
        %v2197 = vpop.permute.xlu0 %2196
        %2198 = vrot.lane.b32.xlu0 %v1630, 15
        %v2199 = vpop.permute.xlu0 %2198
        %2200 = vrot.lane.b32.xlu0 %v1638, 15
        %v2201 = vpop.permute.xlu0 %2200
        %2202 = vrot.lane.b32.xlu0 %v1599, 15
        %v2203 = vpop.permute.xlu0 %2202
        %2204 = vrot.lane.b32.xlu0 %v1607, 15
        %v2205 = vpop.permute.xlu0 %2204
        %2206 = vrot.lane.b32.xlu0 %v1615, 15
        %v2207 = vpop.permute.xlu0 %2206
        %2208 = vrot.lane.b32.xlu0 %v1623, 15
        %v2209 = vpop.permute.xlu0 %2208
        %2210 = vrot.lane.b32.xlu0 %v1631, 15
        %v2211 = vpop.permute.xlu0 %2210
        %2212 = vrot.lane.b32.xlu0 %v1639, 15
        %v2213 = vpop.permute.xlu0 %2212
        %2214 = vrot.lane.b32.xlu0 %v1600, 15
        %v2215 = vpop.permute.xlu0 %2214
        %2216 = vrot.lane.b32.xlu0 %v1608, 15
        %v2217 = vpop.permute.xlu0 %2216
        %2218 = vrot.lane.b32.xlu0 %v1616, 15
        %v2219 = vpop.permute.xlu0 %2218
        %2220 = vrot.lane.b32.xlu0 %v1624, 15
        %v2221 = vpop.permute.xlu0 %2220
        %2222 = vrot.lane.b32.xlu0 %v1632, 15
        %v2223 = vpop.permute.xlu0 %2222
        %2224 = vrot.lane.b32.xlu0 %v1640, 15
        %v2225 = vpop.permute.xlu0 %2224
        %2226 = vrot.lane.b32.xlu0 %v1601, 15
        %v2227 = vpop.permute.xlu0 %2226
        %2228 = vrot.lane.b32.xlu0 %v1609, 15
        %v2229 = vpop.permute.xlu0 %2228
        %2230 = vrot.lane.b32.xlu0 %v1617, 15
        %v2231 = vpop.permute.xlu0 %2230
        %2232 = vrot.lane.b32.xlu0 %v1625, 15
        %v2233 = vpop.permute.xlu0 %2232
        %2234 = vrot.lane.b32.xlu0 %v1633, 15
        %v2235 = vpop.permute.xlu0 %2234
        %2236 = vrot.lane.b32.xlu0 %v1641, 15
        %v2237 = vpop.permute.xlu0 %2236
        %2238 = vrot.lane.b32.xlu0 %v1602, 15
        %v2239 = vpop.permute.xlu0 %2238
        %2240 = vrot.lane.b32.xlu0 %v1610, 15
        %v2241 = vpop.permute.xlu0 %2240
        %2242 = vrot.lane.b32.xlu0 %v1618, 15
        %v2243 = vpop.permute.xlu0 %2242
        %2244 = vrot.lane.b32.xlu0 %v1626, 15
        %v2245 = vpop.permute.xlu0 %2244
        %2246 = vrot.lane.b32.xlu0 %v1634, 15
        %v2247 = vpop.permute.xlu0 %2246
        %2248 = vrot.lane.b32.xlu0 %v1642, 15
        %v2249 = vpop.permute.xlu0 %2248
        %2250 = vrot.lane.b32.xlu0 %v1603, 15
        %v2251 = vpop.permute.xlu0 %2250
        %2252 = vrot.lane.b32.xlu0 %v1611, 15
        %v2253 = vpop.permute.xlu0 %2252
        %2254 = vrot.lane.b32.xlu0 %v1619, 15
        %v2255 = vpop.permute.xlu0 %2254
        %2256 = vrot.lane.b32.xlu0 %v1627, 15
        %v2257 = vpop.permute.xlu0 %2256
        %2258 = vrot.lane.b32.xlu0 %v1635, 15
        %v2259 = vpop.permute.xlu0 %2258
        %2260 = vrot.lane.b32.xlu0 %v1643, 15
        %v2261 = vpop.permute.xlu0 %2260
        %2262 = vrot.lane.b32.xlu0 %v1604, 15
        %v2263 = vpop.permute.xlu0 %2262
        %2264 = vrot.lane.b32.xlu0 %v1612, 15
        %v2265 = vpop.permute.xlu0 %2264
        %2266 = vrot.lane.b32.xlu0 %v1620, 15
        %v2267 = vpop.permute.xlu0 %2266
        %2268 = vrot.lane.b32.xlu0 %v1628, 15
        %v2269 = vpop.permute.xlu0 %2268
        %2270 = vrot.lane.b32.xlu0 %v1636, 15
        %v2271 = vpop.permute.xlu0 %2270
        %2272 = vrot.lane.b32.xlu0 %v1644, 15
        %v2273 = vpop.permute.xlu0 %2272
        %vm2274 = vcmp.lt.s32.totalorder %v1742, 15
        %v2275 = vsel %vm2274, %v2251, %v2263
        %v2276 = vsel %vm2274, %v2253, %v2265
        %v2277 = vsel %vm2274, %v2255, %v2267
        %v2278 = vsel %vm2274, %v2257, %v2269
        %v2279 = vsel %vm2274, %v2259, %v2271
        %v2280 = vsel %vm2274, %v2261, %v2273
        %v2281 = vsel %vm2274, %v2239, %v2251
        %v2282 = vsel %vm2274, %v2241, %v2253
        %v2283 = vsel %vm2274, %v2243, %v2255
        %v2284 = vsel %vm2274, %v2245, %v2257
        %v2285 = vsel %vm2274, %v2247, %v2259
        %v2286 = vsel %vm2274, %v2249, %v2261
        %v2287 = vsel %vm2274, %v2227, %v2239
        %v2288 = vsel %vm2274, %v2229, %v2241
        %v2289 = vsel %vm2274, %v2231, %v2243
        %v2290 = vsel %vm2274, %v2233, %v2245
        %v2291 = vsel %vm2274, %v2235, %v2247
        %v2292 = vsel %vm2274, %v2237, %v2249
        %v2293 = vsel %vm2274, %v2215, %v2227
        %v2294 = vsel %vm2274, %v2217, %v2229
        %v2295 = vsel %vm2274, %v2219, %v2231
        %v2296 = vsel %vm2274, %v2221, %v2233
        %v2297 = vsel %vm2274, %v2223, %v2235
        %v2298 = vsel %vm2274, %v2225, %v2237
        %v2299 = vsel %vm2274, %v2203, %v2215
        %v2300 = vsel %vm2274, %v2205, %v2217
        %v2301 = vsel %vm2274, %v2207, %v2219
        %v2302 = vsel %vm2274, %v2209, %v2221
        %v2303 = vsel %vm2274, %v2211, %v2223
        %v2304 = vsel %vm2274, %v2213, %v2225
        %v2305 = vsel %vm2274, %v2191, %v2203
        %v2306 = vsel %vm2274, %v2193, %v2205
        %v2307 = vsel %vm2274, %v2195, %v2207
        %v2308 = vsel %vm2274, %v2197, %v2209
        %v2309 = vsel %vm2274, %v2199, %v2211
        %v2310 = vsel %vm2274, %v2201, %v2213
        %v2311 = vsel %vm2274, %v2179, %v2191
        %v2312 = vsel %vm2274, %v2181, %v2193
        %v2313 = vsel %vm2274, %v2183, %v2195
        %v2314 = vsel %vm2274, %v2185, %v2197
        %v2315 = vsel %vm2274, %v2187, %v2199
        %v2316 = vsel %vm2274, %v2189, %v2201
        %v2317 = vsel %vm2274, %v2263, %v2179
        %v2318 = vsel %vm2274, %v2265, %v2181
        %v2319 = vsel %vm2274, %v2267, %v2183
        %v2320 = vsel %vm2274, %v2269, %v2185
        %v2321 = vsel %vm2274, %v2271, %v2187
        %v2322 = vsel %vm2274, %v2273, %v2189
        %s2323 = scalar_lea.vmem [#allocation5], 768
        %v2324 = vld [vmem:[%s2323] sm:$0xff]
        %v2325 = vld [vmem:[%s2323 + $0x8] sm:$0xff]
        %v2326 = vld [vmem:[%s2323 + $0x10] sm:$0xff]
        %v2327 = vld [vmem:[%s2323 + $0x18] sm:$0xff]
        %v2328 = vld [vmem:[%s2323 + $0x20] sm:$0xff]
        %v2329 = vld [vmem:[%s2323 + $0x28] sm:$0xff]
        %v2330 = vld [vmem:[%s2323 + $0x30] sm:$0xff]
        %v2331 = vld [vmem:[%s2323 + $0x38] sm:$0xff]
        %v2332 = vld [vmem:[%s2323 + $0x40] sm:$0xff]
        %v2333 = vld [vmem:[%s2323 + $0x48] sm:$0xff]
        %v2334 = vld [vmem:[%s2323 + $0x50] sm:$0xff]
        %v2335 = vld [vmem:[%s2323 + $0x58] sm:$0xff]
        %v2336 = vld [vmem:[%s2323 + $0x60] sm:$0xff]
        %v2337 = vld [vmem:[%s2323 + $0x68] sm:$0xff]
        %v2338 = vld [vmem:[%s2323 + $0x70] sm:$0xff]
        %v2339 = vld [vmem:[%s2323 + $0x78] sm:$0xff]
        %v2340 = vld [vmem:[%s2323 + $0x80] sm:$0xff]
        %v2341 = vld [vmem:[%s2323 + $0x88] sm:$0xff]
        %v2342 = vld [vmem:[%s2323 + $0x90] sm:$0xff]
        %v2343 = vld [vmem:[%s2323 + $0x98] sm:$0xff]
        %v2344 = vld [vmem:[%s2323 + $0xa0] sm:$0xff]
        %v2345 = vld [vmem:[%s2323 + $0xa8] sm:$0xff]
        %v2346 = vld [vmem:[%s2323 + $0xb0] sm:$0xff]
        %v2347 = vld [vmem:[%s2323 + $0xb8] sm:$0xff]
        %v2348 = vld [vmem:[%s2323 + $0xc0] sm:$0xff]
        %v2349 = vld [vmem:[%s2323 + $0xc8] sm:$0xff]
        %v2350 = vld [vmem:[%s2323 + $0xd0] sm:$0xff]
        %v2351 = vld [vmem:[%s2323 + $0xd8] sm:$0xff]
        %v2352 = vld [vmem:[%s2323 + $0xe0] sm:$0xff]
        %v2353 = vld [vmem:[%s2323 + $0xe8] sm:$0xff]
        %v2354 = vld [vmem:[%s2323 + $0xf0] sm:$0xff]
        %v2355 = vld [vmem:[%s2323 + $0xf8] sm:$0xff]
        %v2356 = vld [vmem:[%s2323 + $0x100] sm:$0xff]
        %v2357 = vld [vmem:[%s2323 + $0x108] sm:$0xff]
        %v2358 = vld [vmem:[%s2323 + $0x110] sm:$0xff]
        %v2359 = vld [vmem:[%s2323 + $0x118] sm:$0xff]
        %v2360 = vld [vmem:[%s2323 + $0x120] sm:$0xff]
        %v2361 = vld [vmem:[%s2323 + $0x128] sm:$0xff]
        %v2362 = vld [vmem:[%s2323 + $0x130] sm:$0xff]
        %v2363 = vld [vmem:[%s2323 + $0x138] sm:$0xff]
        %v2364 = vld [vmem:[%s2323 + $0x140] sm:$0xff]
        %v2365 = vld [vmem:[%s2323 + $0x148] sm:$0xff]
        %v2366 = vld [vmem:[%s2323 + $0x150] sm:$0xff]
        %v2367 = vld [vmem:[%s2323 + $0x158] sm:$0xff]
        %v2368 = vld [vmem:[%s2323 + $0x160] sm:$0xff]
        %v2369 = vld [vmem:[%s2323 + $0x168] sm:$0xff]
        %v2370 = vld [vmem:[%s2323 + $0x170] sm:$0xff]
        %v2371 = vld [vmem:[%s2323 + $0x178] sm:$0xff]
        %v2372 = vmul.f32 %v2317, %v2324
        %v2373 = vmul.f32 %v2311, %v2325
        %v2374 = vmul.f32 %v2305, %v2326
        %v2375 = vmul.f32 %v2299, %v2327
        %v2376 = vmul.f32 %v2293, %v2328
        %v2377 = vmul.f32 %v2287, %v2329
        %v2378 = vmul.f32 %v2281, %v2330
        %v2379 = vmul.f32 %v2275, %v2331
        %v2380 = vmul.f32 %v2318, %v2332
        %v2381 = vmul.f32 %v2312, %v2333
        %v2382 = vmul.f32 %v2306, %v2334
        %v2383 = vmul.f32 %v2300, %v2335
        %v2384 = vmul.f32 %v2294, %v2336
        %v2385 = vmul.f32 %v2288, %v2337
        %v2386 = vmul.f32 %v2282, %v2338
        %v2387 = vmul.f32 %v2276, %v2339
        %v2388 = vmul.f32 %v2319, %v2340
        %v2389 = vmul.f32 %v2313, %v2341
        %v2390 = vmul.f32 %v2307, %v2342
        %v2391 = vmul.f32 %v2301, %v2343
        %v2392 = vmul.f32 %v2295, %v2344
        %v2393 = vmul.f32 %v2289, %v2345
        %v2394 = vmul.f32 %v2283, %v2346
        %v2395 = vmul.f32 %v2277, %v2347
        %v2396 = vmul.f32 %v2320, %v2348
        %v2397 = vmul.f32 %v2314, %v2349
        %v2398 = vmul.f32 %v2308, %v2350
        %v2399 = vmul.f32 %v2302, %v2351
        %v2400 = vmul.f32 %v2296, %v2352
        %v2401 = vmul.f32 %v2290, %v2353
        %v2402 = vmul.f32 %v2284, %v2354
        %v2403 = vmul.f32 %v2278, %v2355
        %v2404 = vmul.f32 %v2321, %v2356
        %v2405 = vmul.f32 %v2315, %v2357
        %v2406 = vmul.f32 %v2309, %v2358
        %v2407 = vmul.f32 %v2303, %v2359
        %v2408 = vmul.f32 %v2297, %v2360
        %v2409 = vmul.f32 %v2291, %v2361
        %v2410 = vmul.f32 %v2285, %v2362
        %v2411 = vmul.f32 %v2279, %v2363
        %v2412 = vmul.f32 %v2322, %v2364
        %v2413 = vmul.f32 %v2316, %v2365
        %v2414 = vmul.f32 %v2310, %v2366
        %v2415 = vmul.f32 %v2304, %v2367
        %v2416 = vmul.f32 %v2298, %v2368
        %v2417 = vmul.f32 %v2292, %v2369
        %v2418 = vmul.f32 %v2286, %v2370
        %v2419 = vmul.f32 %v2280, %v2371
        %v2420 = vadd.f32 %v2130, %v2372
        %v2421 = vadd.f32 %v2131, %v2373
        %v2422 = vadd.f32 %v2132, %v2374
        %v2423 = vadd.f32 %v2133, %v2375
        %v2424 = vadd.f32 %v2134, %v2376
        %v2425 = vadd.f32 %v2135, %v2377
        %v2426 = vadd.f32 %v2136, %v2378
        %v2427 = vadd.f32 %v2137, %v2379
        %v2428 = vadd.f32 %v2138, %v2380
        %v2429 = vadd.f32 %v2139, %v2381
        %v2430 = vadd.f32 %v2140, %v2382
        %v2431 = vadd.f32 %v2141, %v2383
        %v2432 = vadd.f32 %v2142, %v2384
        %v2433 = vadd.f32 %v2143, %v2385
        %v2434 = vadd.f32 %v2144, %v2386
        %v2435 = vadd.f32 %v2145, %v2387
        %v2436 = vadd.f32 %v2146, %v2388
        %v2437 = vadd.f32 %v2147, %v2389
        %v2438 = vadd.f32 %v2148, %v2390
        %v2439 = vadd.f32 %v2149, %v2391
        %v2440 = vadd.f32 %v2150, %v2392
        %v2441 = vadd.f32 %v2151, %v2393
        %v2442 = vadd.f32 %v2152, %v2394
        %v2443 = vadd.f32 %v2153, %v2395
        %v2444 = vadd.f32 %v2154, %v2396
        %v2445 = vadd.f32 %v2155, %v2397
        %v2446 = vadd.f32 %v2156, %v2398
        %v2447 = vadd.f32 %v2157, %v2399
        %v2448 = vadd.f32 %v2158, %v2400
        %v2449 = vadd.f32 %v2159, %v2401
        %v2450 = vadd.f32 %v2160, %v2402
        %v2451 = vadd.f32 %v2161, %v2403
        %v2452 = vadd.f32 %v2162, %v2404
        %v2453 = vadd.f32 %v2163, %v2405
        %v2454 = vadd.f32 %v2164, %v2406
        %v2455 = vadd.f32 %v2165, %v2407
        %v2456 = vadd.f32 %v2166, %v2408
        %v2457 = vadd.f32 %v2167, %v2409
        %v2458 = vadd.f32 %v2168, %v2410
        %v2459 = vadd.f32 %v2169, %v2411
        %v2460 = vadd.f32 %v2170, %v2412
        %v2461 = vadd.f32 %v2171, %v2413
        %v2462 = vadd.f32 %v2172, %v2414
        %v2463 = vadd.f32 %v2173, %v2415
        %v2464 = vadd.f32 %v2174, %v2416
        %v2465 = vadd.f32 %v2175, %v2417
        %v2466 = vadd.f32 %v2176, %v2418
        %v2467 = vadd.f32 %v2177, %v2419
        %2468 = vrot.lane.b32.xlu0 %v1597, 1
        %v2469 = vpop.permute.xlu0 %2468
        %2470 = vrot.lane.b32.xlu0 %v1605, 1
        %v2471 = vpop.permute.xlu0 %2470
        %2472 = vrot.lane.b32.xlu0 %v1613, 1
        %v2473 = vpop.permute.xlu0 %2472
        %2474 = vrot.lane.b32.xlu0 %v1621, 1
        %v2475 = vpop.permute.xlu0 %2474
        %2476 = vrot.lane.b32.xlu0 %v1629, 1
        %v2477 = vpop.permute.xlu0 %2476
        %2478 = vrot.lane.b32.xlu0 %v1637, 1
        %v2479 = vpop.permute.xlu0 %2478
        %2480 = vrot.lane.b32.xlu0 %v1598, 1
        %v2481 = vpop.permute.xlu0 %2480
        %2482 = vrot.lane.b32.xlu0 %v1606, 1
        %v2483 = vpop.permute.xlu0 %2482
        %2484 = vrot.lane.b32.xlu0 %v1614, 1
        %v2485 = vpop.permute.xlu0 %2484
        %2486 = vrot.lane.b32.xlu0 %v1622, 1
        %v2487 = vpop.permute.xlu0 %2486
        %2488 = vrot.lane.b32.xlu0 %v1630, 1
        %v2489 = vpop.permute.xlu0 %2488
        %2490 = vrot.lane.b32.xlu0 %v1638, 1
        %v2491 = vpop.permute.xlu0 %2490
        %2492 = vrot.lane.b32.xlu0 %v1599, 1
        %v2493 = vpop.permute.xlu0 %2492
        %2494 = vrot.lane.b32.xlu0 %v1607, 1
        %v2495 = vpop.permute.xlu0 %2494
        %2496 = vrot.lane.b32.xlu0 %v1615, 1
        %v2497 = vpop.permute.xlu0 %2496
        %2498 = vrot.lane.b32.xlu0 %v1623, 1
        %v2499 = vpop.permute.xlu0 %2498
        %2500 = vrot.lane.b32.xlu0 %v1631, 1
        %v2501 = vpop.permute.xlu0 %2500
        %2502 = vrot.lane.b32.xlu0 %v1639, 1
        %v2503 = vpop.permute.xlu0 %2502
        %2504 = vrot.lane.b32.xlu0 %v1600, 1
        %v2505 = vpop.permute.xlu0 %2504
        %2506 = vrot.lane.b32.xlu0 %v1608, 1
        %v2507 = vpop.permute.xlu0 %2506
        %2508 = vrot.lane.b32.xlu0 %v1616, 1
        %v2509 = vpop.permute.xlu0 %2508
        %2510 = vrot.lane.b32.xlu0 %v1624, 1
        %v2511 = vpop.permute.xlu0 %2510
        %2512 = vrot.lane.b32.xlu0 %v1632, 1
        %v2513 = vpop.permute.xlu0 %2512
        %2514 = vrot.lane.b32.xlu0 %v1640, 1
        %v2515 = vpop.permute.xlu0 %2514
        %2516 = vrot.lane.b32.xlu0 %v1601, 1
        %v2517 = vpop.permute.xlu0 %2516
        %2518 = vrot.lane.b32.xlu0 %v1609, 1
        %v2519 = vpop.permute.xlu0 %2518
        %2520 = vrot.lane.b32.xlu0 %v1617, 1
        %v2521 = vpop.permute.xlu0 %2520
        %2522 = vrot.lane.b32.xlu0 %v1625, 1
        %v2523 = vpop.permute.xlu0 %2522
        %2524 = vrot.lane.b32.xlu0 %v1633, 1
        %v2525 = vpop.permute.xlu0 %2524
        %2526 = vrot.lane.b32.xlu0 %v1641, 1
        %v2527 = vpop.permute.xlu0 %2526
        %2528 = vrot.lane.b32.xlu0 %v1602, 1
        %v2529 = vpop.permute.xlu0 %2528
        %2530 = vrot.lane.b32.xlu0 %v1610, 1
        %v2531 = vpop.permute.xlu0 %2530
        %2532 = vrot.lane.b32.xlu0 %v1618, 1
        %v2533 = vpop.permute.xlu0 %2532
        %2534 = vrot.lane.b32.xlu0 %v1626, 1
        %v2535 = vpop.permute.xlu0 %2534
        %2536 = vrot.lane.b32.xlu0 %v1634, 1
        %v2537 = vpop.permute.xlu0 %2536
        %2538 = vrot.lane.b32.xlu0 %v1642, 1
        %v2539 = vpop.permute.xlu0 %2538
        %2540 = vrot.lane.b32.xlu0 %v1603, 1
        %v2541 = vpop.permute.xlu0 %2540
        %2542 = vrot.lane.b32.xlu0 %v1611, 1
        %v2543 = vpop.permute.xlu0 %2542
        %2544 = vrot.lane.b32.xlu0 %v1619, 1
        %v2545 = vpop.permute.xlu0 %2544
        %2546 = vrot.lane.b32.xlu0 %v1627, 1
        %v2547 = vpop.permute.xlu0 %2546
        %2548 = vrot.lane.b32.xlu0 %v1635, 1
        %v2549 = vpop.permute.xlu0 %2548
        %2550 = vrot.lane.b32.xlu0 %v1643, 1
        %v2551 = vpop.permute.xlu0 %2550
        %2552 = vrot.lane.b32.xlu0 %v1604, 1
        %v2553 = vpop.permute.xlu0 %2552
        %2554 = vrot.lane.b32.xlu0 %v1612, 1
        %v2555 = vpop.permute.xlu0 %2554
        %2556 = vrot.lane.b32.xlu0 %v1620, 1
        %v2557 = vpop.permute.xlu0 %2556
        %2558 = vrot.lane.b32.xlu0 %v1628, 1
        %v2559 = vpop.permute.xlu0 %2558
        %2560 = vrot.lane.b32.xlu0 %v1636, 1
        %v2561 = vpop.permute.xlu0 %2560
        %2562 = vrot.lane.b32.xlu0 %v1644, 1
        %v2563 = vpop.permute.xlu0 %2562
        %vm2564 = vcmp.lt.s32.totalorder %v1742, 1
        %v2565 = vsel %vm2564, %v2541, %v2553
        %v2566 = vsel %vm2564, %v2543, %v2555
        %v2567 = vsel %vm2564, %v2545, %v2557
        %v2568 = vsel %vm2564, %v2547, %v2559
        %v2569 = vsel %vm2564, %v2549, %v2561
        %v2570 = vsel %vm2564, %v2551, %v2563
        %v2571 = vsel %vm2564, %v2529, %v2541
        %v2572 = vsel %vm2564, %v2531, %v2543
        %v2573 = vsel %vm2564, %v2533, %v2545
        %v2574 = vsel %vm2564, %v2535, %v2547
        %v2575 = vsel %vm2564, %v2537, %v2549
        %v2576 = vsel %vm2564, %v2539, %v2551
        %v2577 = vsel %vm2564, %v2517, %v2529
        %v2578 = vsel %vm2564, %v2519, %v2531
        %v2579 = vsel %vm2564, %v2521, %v2533
        %v2580 = vsel %vm2564, %v2523, %v2535
        %v2581 = vsel %vm2564, %v2525, %v2537
        %v2582 = vsel %vm2564, %v2527, %v2539
        %v2583 = vsel %vm2564, %v2505, %v2517
        %v2584 = vsel %vm2564, %v2507, %v2519
        %v2585 = vsel %vm2564, %v2509, %v2521
        %v2586 = vsel %vm2564, %v2511, %v2523
        %v2587 = vsel %vm2564, %v2513, %v2525
        %v2588 = vsel %vm2564, %v2515, %v2527
        %v2589 = vsel %vm2564, %v2493, %v2505
        %v2590 = vsel %vm2564, %v2495, %v2507
        %v2591 = vsel %vm2564, %v2497, %v2509
        %v2592 = vsel %vm2564, %v2499, %v2511
        %v2593 = vsel %vm2564, %v2501, %v2513
        %v2594 = vsel %vm2564, %v2503, %v2515
        %v2595 = vsel %vm2564, %v2481, %v2493
        %v2596 = vsel %vm2564, %v2483, %v2495
        %v2597 = vsel %vm2564, %v2485, %v2497
        %v2598 = vsel %vm2564, %v2487, %v2499
        %v2599 = vsel %vm2564, %v2489, %v2501
        %v2600 = vsel %vm2564, %v2491, %v2503
        %v2601 = vsel %vm2564, %v2469, %v2481
        %v2602 = vsel %vm2564, %v2471, %v2483
        %v2603 = vsel %vm2564, %v2473, %v2485
        %v2604 = vsel %vm2564, %v2475, %v2487
        %v2605 = vsel %vm2564, %v2477, %v2489
        %v2606 = vsel %vm2564, %v2479, %v2491
        %v2607 = vsel %vm2564, %v2553, %v2469
        %v2608 = vsel %vm2564, %v2555, %v2471
        %v2609 = vsel %vm2564, %v2557, %v2473
        %v2610 = vsel %vm2564, %v2559, %v2475
        %v2611 = vsel %vm2564, %v2561, %v2477
        %v2612 = vsel %vm2564, %v2563, %v2479
        %s2613 = scalar_lea.vmem [#allocation5], 1152
        %v2614 = vld [vmem:[%s2613] sm:$0xff]
        %v2615 = vld [vmem:[%s2613 + $0x8] sm:$0xff]
        %v2616 = vld [vmem:[%s2613 + $0x10] sm:$0xff]
        %v2617 = vld [vmem:[%s2613 + $0x18] sm:$0xff]
        %v2618 = vld [vmem:[%s2613 + $0x20] sm:$0xff]
        %v2619 = vld [vmem:[%s2613 + $0x28] sm:$0xff]
        %v2620 = vld [vmem:[%s2613 + $0x30] sm:$0xff]
        %v2621 = vld [vmem:[%s2613 + $0x38] sm:$0xff]
        %v2622 = vld [vmem:[%s2613 + $0x40] sm:$0xff]
        %v2623 = vld [vmem:[%s2613 + $0x48] sm:$0xff]
        %v2624 = vld [vmem:[%s2613 + $0x50] sm:$0xff]
        %v2625 = vld [vmem:[%s2613 + $0x58] sm:$0xff]
        %v2626 = vld [vmem:[%s2613 + $0x60] sm:$0xff]
        %v2627 = vld [vmem:[%s2613 + $0x68] sm:$0xff]
        %v2628 = vld [vmem:[%s2613 + $0x70] sm:$0xff]
        %v2629 = vld [vmem:[%s2613 + $0x78] sm:$0xff]
        %v2630 = vld [vmem:[%s2613 + $0x80] sm:$0xff]
        %v2631 = vld [vmem:[%s2613 + $0x88] sm:$0xff]
        %v2632 = vld [vmem:[%s2613 + $0x90] sm:$0xff]
        %v2633 = vld [vmem:[%s2613 + $0x98] sm:$0xff]
        %v2634 = vld [vmem:[%s2613 + $0xa0] sm:$0xff]
        %v2635 = vld [vmem:[%s2613 + $0xa8] sm:$0xff]
        %v2636 = vld [vmem:[%s2613 + $0xb0] sm:$0xff]
        %v2637 = vld [vmem:[%s2613 + $0xb8] sm:$0xff]
        %v2638 = vld [vmem:[%s2613 + $0xc0] sm:$0xff]
        %v2639 = vld [vmem:[%s2613 + $0xc8] sm:$0xff]
        %v2640 = vld [vmem:[%s2613 + $0xd0] sm:$0xff]
        %v2641 = vld [vmem:[%s2613 + $0xd8] sm:$0xff]
        %v2642 = vld [vmem:[%s2613 + $0xe0] sm:$0xff]
        %v2643 = vld [vmem:[%s2613 + $0xe8] sm:$0xff]
        %v2644 = vld [vmem:[%s2613 + $0xf0] sm:$0xff]
        %v2645 = vld [vmem:[%s2613 + $0xf8] sm:$0xff]
        %v2646 = vld [vmem:[%s2613 + $0x100] sm:$0xff]
        %v2647 = vld [vmem:[%s2613 + $0x108] sm:$0xff]
        %v2648 = vld [vmem:[%s2613 + $0x110] sm:$0xff]
        %v2649 = vld [vmem:[%s2613 + $0x118] sm:$0xff]
        %v2650 = vld [vmem:[%s2613 + $0x120] sm:$0xff]
        %v2651 = vld [vmem:[%s2613 + $0x128] sm:$0xff]
        %v2652 = vld [vmem:[%s2613 + $0x130] sm:$0xff]
        %v2653 = vld [vmem:[%s2613 + $0x138] sm:$0xff]
        %v2654 = vld [vmem:[%s2613 + $0x140] sm:$0xff]
        %v2655 = vld [vmem:[%s2613 + $0x148] sm:$0xff]
        %v2656 = vld [vmem:[%s2613 + $0x150] sm:$0xff]
        %v2657 = vld [vmem:[%s2613 + $0x158] sm:$0xff]
        %v2658 = vld [vmem:[%s2613 + $0x160] sm:$0xff]
        %v2659 = vld [vmem:[%s2613 + $0x168] sm:$0xff]
        %v2660 = vld [vmem:[%s2613 + $0x170] sm:$0xff]
        %v2661 = vld [vmem:[%s2613 + $0x178] sm:$0xff]
        %v2662 = vmul.f32 %v2607, %v2614
        %v2663 = vmul.f32 %v2601, %v2615
        %v2664 = vmul.f32 %v2595, %v2616
        %v2665 = vmul.f32 %v2589, %v2617
        %v2666 = vmul.f32 %v2583, %v2618
        %v2667 = vmul.f32 %v2577, %v2619
        %v2668 = vmul.f32 %v2571, %v2620
        %v2669 = vmul.f32 %v2565, %v2621
        %v2670 = vmul.f32 %v2608, %v2622
        %v2671 = vmul.f32 %v2602, %v2623
        %v2672 = vmul.f32 %v2596, %v2624
        %v2673 = vmul.f32 %v2590, %v2625
        %v2674 = vmul.f32 %v2584, %v2626
        %v2675 = vmul.f32 %v2578, %v2627
        %v2676 = vmul.f32 %v2572, %v2628
        %v2677 = vmul.f32 %v2566, %v2629
        %v2678 = vmul.f32 %v2609, %v2630
        %v2679 = vmul.f32 %v2603, %v2631
        %v2680 = vmul.f32 %v2597, %v2632
        %v2681 = vmul.f32 %v2591, %v2633
        %v2682 = vmul.f32 %v2585, %v2634
        %v2683 = vmul.f32 %v2579, %v2635
        %v2684 = vmul.f32 %v2573, %v2636
        %v2685 = vmul.f32 %v2567, %v2637
        %v2686 = vmul.f32 %v2610, %v2638
        %v2687 = vmul.f32 %v2604, %v2639
        %v2688 = vmul.f32 %v2598, %v2640
        %v2689 = vmul.f32 %v2592, %v2641
        %v2690 = vmul.f32 %v2586, %v2642
        %v2691 = vmul.f32 %v2580, %v2643
        %v2692 = vmul.f32 %v2574, %v2644
        %v2693 = vmul.f32 %v2568, %v2645
        %v2694 = vmul.f32 %v2611, %v2646
        %v2695 = vmul.f32 %v2605, %v2647
        %v2696 = vmul.f32 %v2599, %v2648
        %v2697 = vmul.f32 %v2593, %v2649
        %v2698 = vmul.f32 %v2587, %v2650
        %v2699 = vmul.f32 %v2581, %v2651
        %v2700 = vmul.f32 %v2575, %v2652
        %v2701 = vmul.f32 %v2569, %v2653
        %v2702 = vmul.f32 %v2612, %v2654
        %v2703 = vmul.f32 %v2606, %v2655
        %v2704 = vmul.f32 %v2600, %v2656
        %v2705 = vmul.f32 %v2594, %v2657
        %v2706 = vmul.f32 %v2588, %v2658
        %v2707 = vmul.f32 %v2582, %v2659
        %v2708 = vmul.f32 %v2576, %v2660
        %v2709 = vmul.f32 %v2570, %v2661
        %v2710 = vadd.f32 %v2420, %v2662
        %v2711 = vadd.f32 %v2421, %v2663
        %v2712 = vadd.f32 %v2422, %v2664
        %v2713 = vadd.f32 %v2423, %v2665
        %v2714 = vadd.f32 %v2424, %v2666
        %v2715 = vadd.f32 %v2425, %v2667
        %v2716 = vadd.f32 %v2426, %v2668
        %v2717 = vadd.f32 %v2427, %v2669
        %v2718 = vadd.f32 %v2428, %v2670
        %v2719 = vadd.f32 %v2429, %v2671
        %v2720 = vadd.f32 %v2430, %v2672
        %v2721 = vadd.f32 %v2431, %v2673
        %v2722 = vadd.f32 %v2432, %v2674
        %v2723 = vadd.f32 %v2433, %v2675
        %v2724 = vadd.f32 %v2434, %v2676
        %v2725 = vadd.f32 %v2435, %v2677
        %v2726 = vadd.f32 %v2436, %v2678
        %v2727 = vadd.f32 %v2437, %v2679
        %v2728 = vadd.f32 %v2438, %v2680
        %v2729 = vadd.f32 %v2439, %v2681
        %v2730 = vadd.f32 %v2440, %v2682
        %v2731 = vadd.f32 %v2441, %v2683
        %v2732 = vadd.f32 %v2442, %v2684
        %v2733 = vadd.f32 %v2443, %v2685
        %v2734 = vadd.f32 %v2444, %v2686
        %v2735 = vadd.f32 %v2445, %v2687
        %v2736 = vadd.f32 %v2446, %v2688
        %v2737 = vadd.f32 %v2447, %v2689
        %v2738 = vadd.f32 %v2448, %v2690
        %v2739 = vadd.f32 %v2449, %v2691
        %v2740 = vadd.f32 %v2450, %v2692
        %v2741 = vadd.f32 %v2451, %v2693
        %v2742 = vadd.f32 %v2452, %v2694
        %v2743 = vadd.f32 %v2453, %v2695
        %v2744 = vadd.f32 %v2454, %v2696
        %v2745 = vadd.f32 %v2455, %v2697
        %v2746 = vadd.f32 %v2456, %v2698
        %v2747 = vadd.f32 %v2457, %v2699
        %v2748 = vadd.f32 %v2458, %v2700
        %v2749 = vadd.f32 %v2459, %v2701
        %v2750 = vadd.f32 %v2460, %v2702
        %v2751 = vadd.f32 %v2461, %v2703
        %v2752 = vadd.f32 %v2462, %v2704
        %v2753 = vadd.f32 %v2463, %v2705
        %v2754 = vadd.f32 %v2464, %v2706
        %v2755 = vadd.f32 %v2465, %v2707
        %v2756 = vadd.f32 %v2466, %v2708
        %v2757 = vadd.f32 %v2467, %v2709
        %s2758 = scalar_lea.vmem [#allocation5], 1536
        %v2759 = vld [vmem:[%s2758] sm:$0xff]
        %v2760 = vld [vmem:[%s2758 + $0x8] sm:$0xff]
        %v2761 = vld [vmem:[%s2758 + $0x10] sm:$0xff]
        %v2762 = vld [vmem:[%s2758 + $0x18] sm:$0xff]
        %v2763 = vld [vmem:[%s2758 + $0x20] sm:$0xff]
        %v2764 = vld [vmem:[%s2758 + $0x28] sm:$0xff]
        %v2765 = vld [vmem:[%s2758 + $0x30] sm:$0xff]
        %v2766 = vld [vmem:[%s2758 + $0x38] sm:$0xff]
        %v2767 = vld [vmem:[%s2758 + $0x40] sm:$0xff]
        %v2768 = vld [vmem:[%s2758 + $0x48] sm:$0xff]
        %v2769 = vld [vmem:[%s2758 + $0x50] sm:$0xff]
        %v2770 = vld [vmem:[%s2758 + $0x58] sm:$0xff]
        %v2771 = vld [vmem:[%s2758 + $0x60] sm:$0xff]
        %v2772 = vld [vmem:[%s2758 + $0x68] sm:$0xff]
        %v2773 = vld [vmem:[%s2758 + $0x70] sm:$0xff]
        %v2774 = vld [vmem:[%s2758 + $0x78] sm:$0xff]
        %v2775 = vld [vmem:[%s2758 + $0x80] sm:$0xff]
        %v2776 = vld [vmem:[%s2758 + $0x88] sm:$0xff]
        %v2777 = vld [vmem:[%s2758 + $0x90] sm:$0xff]
        %v2778 = vld [vmem:[%s2758 + $0x98] sm:$0xff]
        %v2779 = vld [vmem:[%s2758 + $0xa0] sm:$0xff]
        %v2780 = vld [vmem:[%s2758 + $0xa8] sm:$0xff]
        %v2781 = vld [vmem:[%s2758 + $0xb0] sm:$0xff]
        %v2782 = vld [vmem:[%s2758 + $0xb8] sm:$0xff]
        %v2783 = vld [vmem:[%s2758 + $0xc0] sm:$0xff]
        %v2784 = vld [vmem:[%s2758 + $0xc8] sm:$0xff]
        %v2785 = vld [vmem:[%s2758 + $0xd0] sm:$0xff]
        %v2786 = vld [vmem:[%s2758 + $0xd8] sm:$0xff]
        %v2787 = vld [vmem:[%s2758 + $0xe0] sm:$0xff]
        %v2788 = vld [vmem:[%s2758 + $0xe8] sm:$0xff]
        %v2789 = vld [vmem:[%s2758 + $0xf0] sm:$0xff]
        %v2790 = vld [vmem:[%s2758 + $0xf8] sm:$0xff]
        %v2791 = vld [vmem:[%s2758 + $0x100] sm:$0xff]
        %v2792 = vld [vmem:[%s2758 + $0x108] sm:$0xff]
        %v2793 = vld [vmem:[%s2758 + $0x110] sm:$0xff]
        %v2794 = vld [vmem:[%s2758 + $0x118] sm:$0xff]
        %v2795 = vld [vmem:[%s2758 + $0x120] sm:$0xff]
        %v2796 = vld [vmem:[%s2758 + $0x128] sm:$0xff]
        %v2797 = vld [vmem:[%s2758 + $0x130] sm:$0xff]
        %v2798 = vld [vmem:[%s2758 + $0x138] sm:$0xff]
        %v2799 = vld [vmem:[%s2758 + $0x140] sm:$0xff]
        %v2800 = vld [vmem:[%s2758 + $0x148] sm:$0xff]
        %v2801 = vld [vmem:[%s2758 + $0x150] sm:$0xff]
        %v2802 = vld [vmem:[%s2758 + $0x158] sm:$0xff]
        %v2803 = vld [vmem:[%s2758 + $0x160] sm:$0xff]
        %v2804 = vld [vmem:[%s2758 + $0x168] sm:$0xff]
        %v2805 = vld [vmem:[%s2758 + $0x170] sm:$0xff]
        %v2806 = vld [vmem:[%s2758 + $0x178] sm:$0xff]
        %v2807 = vmul.f32 %v1597, %v2759
        %v2808 = vmul.f32 %v1598, %v2760
        %v2809 = vmul.f32 %v1599, %v2761
        %v2810 = vmul.f32 %v1600, %v2762
        %v2811 = vmul.f32 %v1601, %v2763
        %v2812 = vmul.f32 %v1602, %v2764
        %v2813 = vmul.f32 %v1603, %v2765
        %v2814 = vmul.f32 %v1604, %v2766
        %v2815 = vmul.f32 %v1605, %v2767
        %v2816 = vmul.f32 %v1606, %v2768
        %v2817 = vmul.f32 %v1607, %v2769
        %v2818 = vmul.f32 %v1608, %v2770
        %v2819 = vmul.f32 %v1609, %v2771
        %v2820 = vmul.f32 %v1610, %v2772
        %v2821 = vmul.f32 %v1611, %v2773
        %v2822 = vmul.f32 %v1612, %v2774
        %v2823 = vmul.f32 %v1613, %v2775
        %v2824 = vmul.f32 %v1614, %v2776
        %v2825 = vmul.f32 %v1615, %v2777
        %v2826 = vmul.f32 %v1616, %v2778
        %v2827 = vmul.f32 %v1617, %v2779
        %v2828 = vmul.f32 %v1618, %v2780
        %v2829 = vmul.f32 %v1619, %v2781
        %v2830 = vmul.f32 %v1620, %v2782
        %v2831 = vmul.f32 %v1621, %v2783
        %v2832 = vmul.f32 %v1622, %v2784
        %v2833 = vmul.f32 %v1623, %v2785
        %v2834 = vmul.f32 %v1624, %v2786
        %v2835 = vmul.f32 %v1625, %v2787
        %v2836 = vmul.f32 %v1626, %v2788
        %v2837 = vmul.f32 %v1627, %v2789
        %v2838 = vmul.f32 %v1628, %v2790
        %v2839 = vmul.f32 %v1629, %v2791
        %v2840 = vmul.f32 %v1630, %v2792
        %v2841 = vmul.f32 %v1631, %v2793
        %v2842 = vmul.f32 %v1632, %v2794
        %v2843 = vmul.f32 %v1633, %v2795
        %v2844 = vmul.f32 %v1634, %v2796
        %v2845 = vmul.f32 %v1635, %v2797
        %v2846 = vmul.f32 %v1636, %v2798
        %v2847 = vmul.f32 %v1637, %v2799
        %v2848 = vmul.f32 %v1638, %v2800
        %v2849 = vmul.f32 %v1639, %v2801
        %v2850 = vmul.f32 %v1640, %v2802
        %v2851 = vmul.f32 %v1641, %v2803
        %v2852 = vmul.f32 %v1642, %v2804
        %v2853 = vmul.f32 %v1643, %v2805
        %v2854 = vmul.f32 %v1644, %v2806
        %v2855 = vadd.f32 %v2710, %v2807
        %v2856 = vadd.f32 %v2711, %v2808
        %v2857 = vadd.f32 %v2712, %v2809
        %v2858 = vadd.f32 %v2713, %v2810
        %v2859 = vadd.f32 %v2714, %v2811
        %v2860 = vadd.f32 %v2715, %v2812
        %v2861 = vadd.f32 %v2716, %v2813
        %v2862 = vadd.f32 %v2717, %v2814
        %v2863 = vadd.f32 %v2718, %v2815
        %v2864 = vadd.f32 %v2719, %v2816
        %v2865 = vadd.f32 %v2720, %v2817
        %v2866 = vadd.f32 %v2721, %v2818
        %v2867 = vadd.f32 %v2722, %v2819
        %v2868 = vadd.f32 %v2723, %v2820
        %v2869 = vadd.f32 %v2724, %v2821
        %v2870 = vadd.f32 %v2725, %v2822
        %v2871 = vadd.f32 %v2726, %v2823
        %v2872 = vadd.f32 %v2727, %v2824
        %v2873 = vadd.f32 %v2728, %v2825
        %v2874 = vadd.f32 %v2729, %v2826
        %v2875 = vadd.f32 %v2730, %v2827
        %v2876 = vadd.f32 %v2731, %v2828
        %v2877 = vadd.f32 %v2732, %v2829
        %v2878 = vadd.f32 %v2733, %v2830
        %v2879 = vadd.f32 %v2734, %v2831
        %v2880 = vadd.f32 %v2735, %v2832
        %v2881 = vadd.f32 %v2736, %v2833
        %v2882 = vadd.f32 %v2737, %v2834
        %v2883 = vadd.f32 %v2738, %v2835
        %v2884 = vadd.f32 %v2739, %v2836
        %v2885 = vadd.f32 %v2740, %v2837
        %v2886 = vadd.f32 %v2741, %v2838
        %v2887 = vadd.f32 %v2742, %v2839
        %v2888 = vadd.f32 %v2743, %v2840
        %v2889 = vadd.f32 %v2744, %v2841
        %v2890 = vadd.f32 %v2745, %v2842
        %v2891 = vadd.f32 %v2746, %v2843
        %v2892 = vadd.f32 %v2747, %v2844
        %v2893 = vadd.f32 %v2748, %v2845
        %v2894 = vadd.f32 %v2749, %v2846
        %v2895 = vadd.f32 %v2750, %v2847
        %v2896 = vadd.f32 %v2751, %v2848
        %v2897 = vadd.f32 %v2752, %v2849
        %v2898 = vadd.f32 %v2753, %v2850
        %v2899 = vadd.f32 %v2754, %v2851
        %v2900 = vadd.f32 %v2755, %v2852
        %v2901 = vadd.f32 %v2756, %v2853
        %v2902 = vadd.f32 %v2757, %v2854
        %2903 = vrot.lane.b32.xlu0 %v1597, 127
        %v2904 = vpop.permute.xlu0 %2903
        %2905 = vrot.lane.b32.xlu0 %v1605, 127
        %v2906 = vpop.permute.xlu0 %2905
        %2907 = vrot.lane.b32.xlu0 %v1613, 127
        %v2908 = vpop.permute.xlu0 %2907
        %2909 = vrot.lane.b32.xlu0 %v1621, 127
        %v2910 = vpop.permute.xlu0 %2909
        %2911 = vrot.lane.b32.xlu0 %v1629, 127
        %v2912 = vpop.permute.xlu0 %2911
        %2913 = vrot.lane.b32.xlu0 %v1637, 127
        %v2914 = vpop.permute.xlu0 %2913
        %2915 = vrot.lane.b32.xlu0 %v1598, 127
        %v2916 = vpop.permute.xlu0 %2915
        %2917 = vrot.lane.b32.xlu0 %v1606, 127
        %v2918 = vpop.permute.xlu0 %2917
        %2919 = vrot.lane.b32.xlu0 %v1614, 127
        %v2920 = vpop.permute.xlu0 %2919
        %2921 = vrot.lane.b32.xlu0 %v1622, 127
        %v2922 = vpop.permute.xlu0 %2921
        %2923 = vrot.lane.b32.xlu0 %v1630, 127
        %v2924 = vpop.permute.xlu0 %2923
        %2925 = vrot.lane.b32.xlu0 %v1638, 127
        %v2926 = vpop.permute.xlu0 %2925
        %2927 = vrot.lane.b32.xlu0 %v1599, 127
        %v2928 = vpop.permute.xlu0 %2927
        %2929 = vrot.lane.b32.xlu0 %v1607, 127
        %v2930 = vpop.permute.xlu0 %2929
        %2931 = vrot.lane.b32.xlu0 %v1615, 127
        %v2932 = vpop.permute.xlu0 %2931
        %2933 = vrot.lane.b32.xlu0 %v1623, 127
        %v2934 = vpop.permute.xlu0 %2933
        %2935 = vrot.lane.b32.xlu0 %v1631, 127
        %v2936 = vpop.permute.xlu0 %2935
        %2937 = vrot.lane.b32.xlu0 %v1639, 127
        %v2938 = vpop.permute.xlu0 %2937
        %2939 = vrot.lane.b32.xlu0 %v1600, 127
        %v2940 = vpop.permute.xlu0 %2939
        %2941 = vrot.lane.b32.xlu0 %v1608, 127
        %v2942 = vpop.permute.xlu0 %2941
        %2943 = vrot.lane.b32.xlu0 %v1616, 127
        %v2944 = vpop.permute.xlu0 %2943
        %2945 = vrot.lane.b32.xlu0 %v1624, 127
        %v2946 = vpop.permute.xlu0 %2945
        %2947 = vrot.lane.b32.xlu0 %v1632, 127
        %v2948 = vpop.permute.xlu0 %2947
        %2949 = vrot.lane.b32.xlu0 %v1640, 127
        %v2950 = vpop.permute.xlu0 %2949
        %2951 = vrot.lane.b32.xlu0 %v1601, 127
        %v2952 = vpop.permute.xlu0 %2951
        %2953 = vrot.lane.b32.xlu0 %v1609, 127
        %v2954 = vpop.permute.xlu0 %2953
        %2955 = vrot.lane.b32.xlu0 %v1617, 127
        %v2956 = vpop.permute.xlu0 %2955
        %2957 = vrot.lane.b32.xlu0 %v1625, 127
        %v2958 = vpop.permute.xlu0 %2957
        %2959 = vrot.lane.b32.xlu0 %v1633, 127
        %v2960 = vpop.permute.xlu0 %2959
        %2961 = vrot.lane.b32.xlu0 %v1641, 127
        %v2962 = vpop.permute.xlu0 %2961
        %2963 = vrot.lane.b32.xlu0 %v1602, 127
        %v2964 = vpop.permute.xlu0 %2963
        %2965 = vrot.lane.b32.xlu0 %v1610, 127
        %v2966 = vpop.permute.xlu0 %2965
        %2967 = vrot.lane.b32.xlu0 %v1618, 127
        %v2968 = vpop.permute.xlu0 %2967
        %2969 = vrot.lane.b32.xlu0 %v1626, 127
        %v2970 = vpop.permute.xlu0 %2969
        %2971 = vrot.lane.b32.xlu0 %v1634, 127
        %v2972 = vpop.permute.xlu0 %2971
        %2973 = vrot.lane.b32.xlu0 %v1642, 127
        %v2974 = vpop.permute.xlu0 %2973
        %2975 = vrot.lane.b32.xlu0 %v1603, 127
        %v2976 = vpop.permute.xlu0 %2975
        %2977 = vrot.lane.b32.xlu0 %v1611, 127
        %v2978 = vpop.permute.xlu0 %2977
        %2979 = vrot.lane.b32.xlu0 %v1619, 127
        %v2980 = vpop.permute.xlu0 %2979
        %2981 = vrot.lane.b32.xlu0 %v1627, 127
        %v2982 = vpop.permute.xlu0 %2981
        %2983 = vrot.lane.b32.xlu0 %v1635, 127
        %v2984 = vpop.permute.xlu0 %2983
        %2985 = vrot.lane.b32.xlu0 %v1643, 127
        %v2986 = vpop.permute.xlu0 %2985
        %2987 = vrot.lane.b32.xlu0 %v1604, 127
        %v2988 = vpop.permute.xlu0 %2987
        %2989 = vrot.lane.b32.xlu0 %v1612, 127
        %v2990 = vpop.permute.xlu0 %2989
        %2991 = vrot.lane.b32.xlu0 %v1620, 127
        %v2992 = vpop.permute.xlu0 %2991
        %2993 = vrot.lane.b32.xlu0 %v1628, 127
        %v2994 = vpop.permute.xlu0 %2993
        %2995 = vrot.lane.b32.xlu0 %v1636, 127
        %v2996 = vpop.permute.xlu0 %2995
        %2997 = vrot.lane.b32.xlu0 %v1644, 127
        %v2998 = vpop.permute.xlu0 %2997
        %vm2999 = vcmp.lt.s32.totalorder %v1742, 127
        %v3000 = vsel %vm2999, %v2976, %v2988
        %v3001 = vsel %vm2999, %v2978, %v2990
        %v3002 = vsel %vm2999, %v2980, %v2992
        %v3003 = vsel %vm2999, %v2982, %v2994
        %v3004 = vsel %vm2999, %v2984, %v2996
        %v3005 = vsel %vm2999, %v2986, %v2998
        %v3006 = vsel %vm2999, %v2964, %v2976
        %v3007 = vsel %vm2999, %v2966, %v2978
        %v3008 = vsel %vm2999, %v2968, %v2980
        %v3009 = vsel %vm2999, %v2970, %v2982
        %v3010 = vsel %vm2999, %v2972, %v2984
        %v3011 = vsel %vm2999, %v2974, %v2986
        %v3012 = vsel %vm2999, %v2952, %v2964
        %v3013 = vsel %vm2999, %v2954, %v2966
        %v3014 = vsel %vm2999, %v2956, %v2968
        %v3015 = vsel %vm2999, %v2958, %v2970
        %v3016 = vsel %vm2999, %v2960, %v2972
        %v3017 = vsel %vm2999, %v2962, %v2974
        %v3018 = vsel %vm2999, %v2940, %v2952
        %v3019 = vsel %vm2999, %v2942, %v2954
        %v3020 = vsel %vm2999, %v2944, %v2956
        %v3021 = vsel %vm2999, %v2946, %v2958
        %v3022 = vsel %vm2999, %v2948, %v2960
        %v3023 = vsel %vm2999, %v2950, %v2962
        %v3024 = vsel %vm2999, %v2928, %v2940
        %v3025 = vsel %vm2999, %v2930, %v2942
        %v3026 = vsel %vm2999, %v2932, %v2944
        %v3027 = vsel %vm2999, %v2934, %v2946
        %v3028 = vsel %vm2999, %v2936, %v2948
        %v3029 = vsel %vm2999, %v2938, %v2950
        %v3030 = vsel %vm2999, %v2916, %v2928
        %v3031 = vsel %vm2999, %v2918, %v2930
        %v3032 = vsel %vm2999, %v2920, %v2932
        %v3033 = vsel %vm2999, %v2922, %v2934
        %v3034 = vsel %vm2999, %v2924, %v2936
        %v3035 = vsel %vm2999, %v2926, %v2938
        %v3036 = vsel %vm2999, %v2904, %v2916
        %v3037 = vsel %vm2999, %v2906, %v2918
        %v3038 = vsel %vm2999, %v2908, %v2920
        %v3039 = vsel %vm2999, %v2910, %v2922
        %v3040 = vsel %vm2999, %v2912, %v2924
        %v3041 = vsel %vm2999, %v2914, %v2926
        %v3042 = vsel %vm2999, %v2988, %v2904
        %v3043 = vsel %vm2999, %v2990, %v2906
        %v3044 = vsel %vm2999, %v2992, %v2908
        %v3045 = vsel %vm2999, %v2994, %v2910
        %v3046 = vsel %vm2999, %v2996, %v2912
        %v3047 = vsel %vm2999, %v2998, %v2914
        %s3048 = scalar_lea.vmem [#allocation5], 1920
        %v3049 = vld [vmem:[%s3048] sm:$0xff]
        %v3050 = vld [vmem:[%s3048 + $0x8] sm:$0xff]
        %v3051 = vld [vmem:[%s3048 + $0x10] sm:$0xff]
        %v3052 = vld [vmem:[%s3048 + $0x18] sm:$0xff]
        %v3053 = vld [vmem:[%s3048 + $0x20] sm:$0xff]
        %v3054 = vld [vmem:[%s3048 + $0x28] sm:$0xff]
        %v3055 = vld [vmem:[%s3048 + $0x30] sm:$0xff]
        %v3056 = vld [vmem:[%s3048 + $0x38] sm:$0xff]
        %v3057 = vld [vmem:[%s3048 + $0x40] sm:$0xff]
        %v3058 = vld [vmem:[%s3048 + $0x48] sm:$0xff]
        %v3059 = vld [vmem:[%s3048 + $0x50] sm:$0xff]
        %v3060 = vld [vmem:[%s3048 + $0x58] sm:$0xff]
        %v3061 = vld [vmem:[%s3048 + $0x60] sm:$0xff]
        %v3062 = vld [vmem:[%s3048 + $0x68] sm:$0xff]
        %v3063 = vld [vmem:[%s3048 + $0x70] sm:$0xff]
        %v3064 = vld [vmem:[%s3048 + $0x78] sm:$0xff]
        %v3065 = vld [vmem:[%s3048 + $0x80] sm:$0xff]
        %v3066 = vld [vmem:[%s3048 + $0x88] sm:$0xff]
        %v3067 = vld [vmem:[%s3048 + $0x90] sm:$0xff]
        %v3068 = vld [vmem:[%s3048 + $0x98] sm:$0xff]
        %v3069 = vld [vmem:[%s3048 + $0xa0] sm:$0xff]
        %v3070 = vld [vmem:[%s3048 + $0xa8] sm:$0xff]
        %v3071 = vld [vmem:[%s3048 + $0xb0] sm:$0xff]
        %v3072 = vld [vmem:[%s3048 + $0xb8] sm:$0xff]
        %v3073 = vld [vmem:[%s3048 + $0xc0] sm:$0xff]
        %v3074 = vld [vmem:[%s3048 + $0xc8] sm:$0xff]
        %v3075 = vld [vmem:[%s3048 + $0xd0] sm:$0xff]
        %v3076 = vld [vmem:[%s3048 + $0xd8] sm:$0xff]
        %v3077 = vld [vmem:[%s3048 + $0xe0] sm:$0xff]
        %v3078 = vld [vmem:[%s3048 + $0xe8] sm:$0xff]
        %v3079 = vld [vmem:[%s3048 + $0xf0] sm:$0xff]
        %v3080 = vld [vmem:[%s3048 + $0xf8] sm:$0xff]
        %v3081 = vld [vmem:[%s3048 + $0x100] sm:$0xff]
        %v3082 = vld [vmem:[%s3048 + $0x108] sm:$0xff]
        %v3083 = vld [vmem:[%s3048 + $0x110] sm:$0xff]
        %v3084 = vld [vmem:[%s3048 + $0x118] sm:$0xff]
        %v3085 = vld [vmem:[%s3048 + $0x120] sm:$0xff]
        %v3086 = vld [vmem:[%s3048 + $0x128] sm:$0xff]
        %v3087 = vld [vmem:[%s3048 + $0x130] sm:$0xff]
        %v3088 = vld [vmem:[%s3048 + $0x138] sm:$0xff]
        %v3089 = vld [vmem:[%s3048 + $0x140] sm:$0xff]
        %v3090 = vld [vmem:[%s3048 + $0x148] sm:$0xff]
        %v3091 = vld [vmem:[%s3048 + $0x150] sm:$0xff]
        %v3092 = vld [vmem:[%s3048 + $0x158] sm:$0xff]
        %v3093 = vld [vmem:[%s3048 + $0x160] sm:$0xff]
        %v3094 = vld [vmem:[%s3048 + $0x168] sm:$0xff]
        %v3095 = vld [vmem:[%s3048 + $0x170] sm:$0xff]
        %v3096 = vld [vmem:[%s3048 + $0x178] sm:$0xff]
        %v3097 = vmul.f32 %v3036, %v3049
        %v3098 = vmul.f32 %v3030, %v3050
        %v3099 = vmul.f32 %v3024, %v3051
        %v3100 = vmul.f32 %v3018, %v3052
        %v3101 = vmul.f32 %v3012, %v3053
        %v3102 = vmul.f32 %v3006, %v3054
        %v3103 = vmul.f32 %v3000, %v3055
        %v3104 = vmul.f32 %v3042, %v3056
        %v3105 = vmul.f32 %v3037, %v3057
        %v3106 = vmul.f32 %v3031, %v3058
        %v3107 = vmul.f32 %v3025, %v3059
        %v3108 = vmul.f32 %v3019, %v3060
        %v3109 = vmul.f32 %v3013, %v3061
        %v3110 = vmul.f32 %v3007, %v3062
        %v3111 = vmul.f32 %v3001, %v3063
        %v3112 = vmul.f32 %v3043, %v3064
        %v3113 = vmul.f32 %v3038, %v3065
        %v3114 = vmul.f32 %v3032, %v3066
        %v3115 = vmul.f32 %v3026, %v3067
        %v3116 = vmul.f32 %v3020, %v3068
        %v3117 = vmul.f32 %v3014, %v3069
        %v3118 = vmul.f32 %v3008, %v3070
        %v3119 = vmul.f32 %v3002, %v3071
        %v3120 = vmul.f32 %v3044, %v3072
        %v3121 = vmul.f32 %v3039, %v3073
        %v3122 = vmul.f32 %v3033, %v3074
        %v3123 = vmul.f32 %v3027, %v3075
        %v3124 = vmul.f32 %v3021, %v3076
        %v3125 = vmul.f32 %v3015, %v3077
        %v3126 = vmul.f32 %v3009, %v3078
        %v3127 = vmul.f32 %v3003, %v3079
        %v3128 = vmul.f32 %v3045, %v3080
        %v3129 = vmul.f32 %v3040, %v3081
        %v3130 = vmul.f32 %v3034, %v3082
        %v3131 = vmul.f32 %v3028, %v3083
        %v3132 = vmul.f32 %v3022, %v3084
        %v3133 = vmul.f32 %v3016, %v3085
        %v3134 = vmul.f32 %v3010, %v3086
        %v3135 = vmul.f32 %v3004, %v3087
        %v3136 = vmul.f32 %v3046, %v3088
        %v3137 = vmul.f32 %v3041, %v3089
        %v3138 = vmul.f32 %v3035, %v3090
        %v3139 = vmul.f32 %v3029, %v3091
        %v3140 = vmul.f32 %v3023, %v3092
        %v3141 = vmul.f32 %v3017, %v3093
        %v3142 = vmul.f32 %v3011, %v3094
        %v3143 = vmul.f32 %v3005, %v3095
        %v3144 = vmul.f32 %v3047, %v3096
        %v3145 = vadd.f32 %v2855, %v3097
        %v3146 = vadd.f32 %v2856, %v3098
        %v3147 = vadd.f32 %v2857, %v3099
        %v3148 = vadd.f32 %v2858, %v3100
        %v3149 = vadd.f32 %v2859, %v3101
        %v3150 = vadd.f32 %v2860, %v3102
        %v3151 = vadd.f32 %v2861, %v3103
        %v3152 = vadd.f32 %v2862, %v3104
        %v3153 = vadd.f32 %v2863, %v3105
        %v3154 = vadd.f32 %v2864, %v3106
        %v3155 = vadd.f32 %v2865, %v3107
        %v3156 = vadd.f32 %v2866, %v3108
        %v3157 = vadd.f32 %v2867, %v3109
        %v3158 = vadd.f32 %v2868, %v3110
        %v3159 = vadd.f32 %v2869, %v3111
        %v3160 = vadd.f32 %v2870, %v3112
        %v3161 = vadd.f32 %v2871, %v3113
        %v3162 = vadd.f32 %v2872, %v3114
        %v3163 = vadd.f32 %v2873, %v3115
        %v3164 = vadd.f32 %v2874, %v3116
        %v3165 = vadd.f32 %v2875, %v3117
        %v3166 = vadd.f32 %v2876, %v3118
        %v3167 = vadd.f32 %v2877, %v3119
        %v3168 = vadd.f32 %v2878, %v3120
        %v3169 = vadd.f32 %v2879, %v3121
        %v3170 = vadd.f32 %v2880, %v3122
        %v3171 = vadd.f32 %v2881, %v3123
        %v3172 = vadd.f32 %v2882, %v3124
        %v3173 = vadd.f32 %v2883, %v3125
        %v3174 = vadd.f32 %v2884, %v3126
        %v3175 = vadd.f32 %v2885, %v3127
        %v3176 = vadd.f32 %v2886, %v3128
        %v3177 = vadd.f32 %v2887, %v3129
        %v3178 = vadd.f32 %v2888, %v3130
        %v3179 = vadd.f32 %v2889, %v3131
        %v3180 = vadd.f32 %v2890, %v3132
        %v3181 = vadd.f32 %v2891, %v3133
        %v3182 = vadd.f32 %v2892, %v3134
        %v3183 = vadd.f32 %v2893, %v3135
        %v3184 = vadd.f32 %v2894, %v3136
        %v3185 = vadd.f32 %v2895, %v3137
        %v3186 = vadd.f32 %v2896, %v3138
        %v3187 = vadd.f32 %v2897, %v3139
        %v3188 = vadd.f32 %v2898, %v3140
        %v3189 = vadd.f32 %v2899, %v3141
        %v3190 = vadd.f32 %v2900, %v3142
        %v3191 = vadd.f32 %v2901, %v3143
        %v3192 = vadd.f32 %v2902, %v3144
        %3193 = vrot.lane.b32.xlu0 %v1597, 113
        %v3194 = vpop.permute.xlu0 %3193
        %3195 = vrot.lane.b32.xlu0 %v1605, 113
        %v3196 = vpop.permute.xlu0 %3195
        %3197 = vrot.lane.b32.xlu0 %v1613, 113
        %v3198 = vpop.permute.xlu0 %3197
        %3199 = vrot.lane.b32.xlu0 %v1621, 113
        %v3200 = vpop.permute.xlu0 %3199
        %3201 = vrot.lane.b32.xlu0 %v1629, 113
        %v3202 = vpop.permute.xlu0 %3201
        %3203 = vrot.lane.b32.xlu0 %v1637, 113
        %v3204 = vpop.permute.xlu0 %3203
        %3205 = vrot.lane.b32.xlu0 %v1598, 113
        %v3206 = vpop.permute.xlu0 %3205
        %3207 = vrot.lane.b32.xlu0 %v1606, 113
        %v3208 = vpop.permute.xlu0 %3207
        %3209 = vrot.lane.b32.xlu0 %v1614, 113
        %v3210 = vpop.permute.xlu0 %3209
        %3211 = vrot.lane.b32.xlu0 %v1622, 113
        %v3212 = vpop.permute.xlu0 %3211
        %3213 = vrot.lane.b32.xlu0 %v1630, 113
        %v3214 = vpop.permute.xlu0 %3213
        %3215 = vrot.lane.b32.xlu0 %v1638, 113
        %v3216 = vpop.permute.xlu0 %3215
        %3217 = vrot.lane.b32.xlu0 %v1599, 113
        %v3218 = vpop.permute.xlu0 %3217
        %3219 = vrot.lane.b32.xlu0 %v1607, 113
        %v3220 = vpop.permute.xlu0 %3219
        %3221 = vrot.lane.b32.xlu0 %v1615, 113
        %v3222 = vpop.permute.xlu0 %3221
        %3223 = vrot.lane.b32.xlu0 %v1623, 113
        %v3224 = vpop.permute.xlu0 %3223
        %3225 = vrot.lane.b32.xlu0 %v1631, 113
        %v3226 = vpop.permute.xlu0 %3225
        %3227 = vrot.lane.b32.xlu0 %v1639, 113
        %v3228 = vpop.permute.xlu0 %3227
        %3229 = vrot.lane.b32.xlu0 %v1600, 113
        %v3230 = vpop.permute.xlu0 %3229
        %3231 = vrot.lane.b32.xlu0 %v1608, 113
        %v3232 = vpop.permute.xlu0 %3231
        %3233 = vrot.lane.b32.xlu0 %v1616, 113
        %v3234 = vpop.permute.xlu0 %3233
        %3235 = vrot.lane.b32.xlu0 %v1624, 113
        %v3236 = vpop.permute.xlu0 %3235
        %3237 = vrot.lane.b32.xlu0 %v1632, 113
        %v3238 = vpop.permute.xlu0 %3237
        %3239 = vrot.lane.b32.xlu0 %v1640, 113
        %v3240 = vpop.permute.xlu0 %3239
        %3241 = vrot.lane.b32.xlu0 %v1601, 113
        %v3242 = vpop.permute.xlu0 %3241
        %3243 = vrot.lane.b32.xlu0 %v1609, 113
        %v3244 = vpop.permute.xlu0 %3243
        %3245 = vrot.lane.b32.xlu0 %v1617, 113
        %v3246 = vpop.permute.xlu0 %3245
        %3247 = vrot.lane.b32.xlu0 %v1625, 113
        %v3248 = vpop.permute.xlu0 %3247
        %3249 = vrot.lane.b32.xlu0 %v1633, 113
        %v3250 = vpop.permute.xlu0 %3249
        %3251 = vrot.lane.b32.xlu0 %v1641, 113
        %v3252 = vpop.permute.xlu0 %3251
        %3253 = vrot.lane.b32.xlu0 %v1602, 113
        %v3254 = vpop.permute.xlu0 %3253
        %3255 = vrot.lane.b32.xlu0 %v1610, 113
        %v3256 = vpop.permute.xlu0 %3255
        %3257 = vrot.lane.b32.xlu0 %v1618, 113
        %v3258 = vpop.permute.xlu0 %3257
        %3259 = vrot.lane.b32.xlu0 %v1626, 113
        %v3260 = vpop.permute.xlu0 %3259
        %3261 = vrot.lane.b32.xlu0 %v1634, 113
        %v3262 = vpop.permute.xlu0 %3261
        %3263 = vrot.lane.b32.xlu0 %v1642, 113
        %v3264 = vpop.permute.xlu0 %3263
        %3265 = vrot.lane.b32.xlu0 %v1603, 113
        %v3266 = vpop.permute.xlu0 %3265
        %3267 = vrot.lane.b32.xlu0 %v1611, 113
        %v3268 = vpop.permute.xlu0 %3267
        %3269 = vrot.lane.b32.xlu0 %v1619, 113
        %v3270 = vpop.permute.xlu0 %3269
        %3271 = vrot.lane.b32.xlu0 %v1627, 113
        %v3272 = vpop.permute.xlu0 %3271
        %3273 = vrot.lane.b32.xlu0 %v1635, 113
        %v3274 = vpop.permute.xlu0 %3273
        %3275 = vrot.lane.b32.xlu0 %v1643, 113
        %v3276 = vpop.permute.xlu0 %3275
        %3277 = vrot.lane.b32.xlu0 %v1604, 113
        %v3278 = vpop.permute.xlu0 %3277
        %3279 = vrot.lane.b32.xlu0 %v1612, 113
        %v3280 = vpop.permute.xlu0 %3279
        %3281 = vrot.lane.b32.xlu0 %v1620, 113
        %v3282 = vpop.permute.xlu0 %3281
        %3283 = vrot.lane.b32.xlu0 %v1628, 113
        %v3284 = vpop.permute.xlu0 %3283
        %3285 = vrot.lane.b32.xlu0 %v1636, 113
        %v3286 = vpop.permute.xlu0 %3285
        %3287 = vrot.lane.b32.xlu0 %v1644, 113
        %v3288 = vpop.permute.xlu0 %3287
        %vm3289 = vcmp.lt.s32.totalorder %v1742, 113
        %v3290 = vsel %vm3289, %v3266, %v3278
        %v3291 = vsel %vm3289, %v3268, %v3280
        %v3292 = vsel %vm3289, %v3270, %v3282
        %v3293 = vsel %vm3289, %v3272, %v3284
        %v3294 = vsel %vm3289, %v3274, %v3286
        %v3295 = vsel %vm3289, %v3276, %v3288
        %v3296 = vsel %vm3289, %v3254, %v3266
        %v3297 = vsel %vm3289, %v3256, %v3268
        %v3298 = vsel %vm3289, %v3258, %v3270
        %v3299 = vsel %vm3289, %v3260, %v3272
        %v3300 = vsel %vm3289, %v3262, %v3274
        %v3301 = vsel %vm3289, %v3264, %v3276
        %v3302 = vsel %vm3289, %v3242, %v3254
        %v3303 = vsel %vm3289, %v3244, %v3256
        %v3304 = vsel %vm3289, %v3246, %v3258
        %v3305 = vsel %vm3289, %v3248, %v3260
        %v3306 = vsel %vm3289, %v3250, %v3262
        %v3307 = vsel %vm3289, %v3252, %v3264
        %v3308 = vsel %vm3289, %v3230, %v3242
        %v3309 = vsel %vm3289, %v3232, %v3244
        %v3310 = vsel %vm3289, %v3234, %v3246
        %v3311 = vsel %vm3289, %v3236, %v3248
        %v3312 = vsel %vm3289, %v3238, %v3250
        %v3313 = vsel %vm3289, %v3240, %v3252
        %v3314 = vsel %vm3289, %v3218, %v3230
        %v3315 = vsel %vm3289, %v3220, %v3232
        %v3316 = vsel %vm3289, %v3222, %v3234
        %v3317 = vsel %vm3289, %v3224, %v3236
        %v3318 = vsel %vm3289, %v3226, %v3238
        %v3319 = vsel %vm3289, %v3228, %v3240
        %v3320 = vsel %vm3289, %v3206, %v3218
        %v3321 = vsel %vm3289, %v3208, %v3220
        %v3322 = vsel %vm3289, %v3210, %v3222
        %v3323 = vsel %vm3289, %v3212, %v3224
        %v3324 = vsel %vm3289, %v3214, %v3226
        %v3325 = vsel %vm3289, %v3216, %v3228
        %v3326 = vsel %vm3289, %v3194, %v3206
        %v3327 = vsel %vm3289, %v3196, %v3208
        %v3328 = vsel %vm3289, %v3198, %v3210
        %v3329 = vsel %vm3289, %v3200, %v3212
        %v3330 = vsel %vm3289, %v3202, %v3214
        %v3331 = vsel %vm3289, %v3204, %v3216
        %v3332 = vsel %vm3289, %v3278, %v3194
        %v3333 = vsel %vm3289, %v3280, %v3196
        %v3334 = vsel %vm3289, %v3282, %v3198
        %v3335 = vsel %vm3289, %v3284, %v3200
        %v3336 = vsel %vm3289, %v3286, %v3202
        %v3337 = vsel %vm3289, %v3288, %v3204
        %s3338 = scalar_lea.vmem [#allocation5], 2304
        %v3339 = vld [vmem:[%s3338] sm:$0xff]
        %v3340 = vld [vmem:[%s3338 + $0x8] sm:$0xff]
        %v3341 = vld [vmem:[%s3338 + $0x10] sm:$0xff]
        %v3342 = vld [vmem:[%s3338 + $0x18] sm:$0xff]
        %v3343 = vld [vmem:[%s3338 + $0x20] sm:$0xff]
        %v3344 = vld [vmem:[%s3338 + $0x28] sm:$0xff]
        %v3345 = vld [vmem:[%s3338 + $0x30] sm:$0xff]
        %v3346 = vld [vmem:[%s3338 + $0x38] sm:$0xff]
        %v3347 = vld [vmem:[%s3338 + $0x40] sm:$0xff]
        %v3348 = vld [vmem:[%s3338 + $0x48] sm:$0xff]
        %v3349 = vld [vmem:[%s3338 + $0x50] sm:$0xff]
        %v3350 = vld [vmem:[%s3338 + $0x58] sm:$0xff]
        %v3351 = vld [vmem:[%s3338 + $0x60] sm:$0xff]
        %v3352 = vld [vmem:[%s3338 + $0x68] sm:$0xff]
        %v3353 = vld [vmem:[%s3338 + $0x70] sm:$0xff]
        %v3354 = vld [vmem:[%s3338 + $0x78] sm:$0xff]
        %v3355 = vld [vmem:[%s3338 + $0x80] sm:$0xff]
        %v3356 = vld [vmem:[%s3338 + $0x88] sm:$0xff]
        %v3357 = vld [vmem:[%s3338 + $0x90] sm:$0xff]
        %v3358 = vld [vmem:[%s3338 + $0x98] sm:$0xff]
        %v3359 = vld [vmem:[%s3338 + $0xa0] sm:$0xff]
        %v3360 = vld [vmem:[%s3338 + $0xa8] sm:$0xff]
        %v3361 = vld [vmem:[%s3338 + $0xb0] sm:$0xff]
        %v3362 = vld [vmem:[%s3338 + $0xb8] sm:$0xff]
        %v3363 = vld [vmem:[%s3338 + $0xc0] sm:$0xff]
        %v3364 = vld [vmem:[%s3338 + $0xc8] sm:$0xff]
        %v3365 = vld [vmem:[%s3338 + $0xd0] sm:$0xff]
        %v3366 = vld [vmem:[%s3338 + $0xd8] sm:$0xff]
        %v3367 = vld [vmem:[%s3338 + $0xe0] sm:$0xff]
        %v3368 = vld [vmem:[%s3338 + $0xe8] sm:$0xff]
        %v3369 = vld [vmem:[%s3338 + $0xf0] sm:$0xff]
        %v3370 = vld [vmem:[%s3338 + $0xf8] sm:$0xff]
        %v3371 = vld [vmem:[%s3338 + $0x100] sm:$0xff]
        %v3372 = vld [vmem:[%s3338 + $0x108] sm:$0xff]
        %v3373 = vld [vmem:[%s3338 + $0x110] sm:$0xff]
        %v3374 = vld [vmem:[%s3338 + $0x118] sm:$0xff]
        %v3375 = vld [vmem:[%s3338 + $0x120] sm:$0xff]
        %v3376 = vld [vmem:[%s3338 + $0x128] sm:$0xff]
        %v3377 = vld [vmem:[%s3338 + $0x130] sm:$0xff]
        %v3378 = vld [vmem:[%s3338 + $0x138] sm:$0xff]
        %v3379 = vld [vmem:[%s3338 + $0x140] sm:$0xff]
        %v3380 = vld [vmem:[%s3338 + $0x148] sm:$0xff]
        %v3381 = vld [vmem:[%s3338 + $0x150] sm:$0xff]
        %v3382 = vld [vmem:[%s3338 + $0x158] sm:$0xff]
        %v3383 = vld [vmem:[%s3338 + $0x160] sm:$0xff]
        %v3384 = vld [vmem:[%s3338 + $0x168] sm:$0xff]
        %v3385 = vld [vmem:[%s3338 + $0x170] sm:$0xff]
        %v3386 = vld [vmem:[%s3338 + $0x178] sm:$0xff]
        %v3387 = vmul.f32 %v3326, %v3339
        %v3388 = vmul.f32 %v3320, %v3340
        %v3389 = vmul.f32 %v3314, %v3341
        %v3390 = vmul.f32 %v3308, %v3342
        %v3391 = vmul.f32 %v3302, %v3343
        %v3392 = vmul.f32 %v3296, %v3344
        %v3393 = vmul.f32 %v3290, %v3345
        %v3394 = vmul.f32 %v3332, %v3346
        %v3395 = vmul.f32 %v3327, %v3347
        %v3396 = vmul.f32 %v3321, %v3348
        %v3397 = vmul.f32 %v3315, %v3349
        %v3398 = vmul.f32 %v3309, %v3350
        %v3399 = vmul.f32 %v3303, %v3351
        %v3400 = vmul.f32 %v3297, %v3352
        %v3401 = vmul.f32 %v3291, %v3353
        %v3402 = vmul.f32 %v3333, %v3354
        %v3403 = vmul.f32 %v3328, %v3355
        %v3404 = vmul.f32 %v3322, %v3356
        %v3405 = vmul.f32 %v3316, %v3357
        %v3406 = vmul.f32 %v3310, %v3358
        %v3407 = vmul.f32 %v3304, %v3359
        %v3408 = vmul.f32 %v3298, %v3360
        %v3409 = vmul.f32 %v3292, %v3361
        %v3410 = vmul.f32 %v3334, %v3362
        %v3411 = vmul.f32 %v3329, %v3363
        %v3412 = vmul.f32 %v3323, %v3364
        %v3413 = vmul.f32 %v3317, %v3365
        %v3414 = vmul.f32 %v3311, %v3366
        %v3415 = vmul.f32 %v3305, %v3367
        %v3416 = vmul.f32 %v3299, %v3368
        %v3417 = vmul.f32 %v3293, %v3369
        %v3418 = vmul.f32 %v3335, %v3370
        %v3419 = vmul.f32 %v3330, %v3371
        %v3420 = vmul.f32 %v3324, %v3372
        %v3421 = vmul.f32 %v3318, %v3373
        %v3422 = vmul.f32 %v3312, %v3374
        %v3423 = vmul.f32 %v3306, %v3375
        %v3424 = vmul.f32 %v3300, %v3376
        %v3425 = vmul.f32 %v3294, %v3377
        %v3426 = vmul.f32 %v3336, %v3378
        %v3427 = vmul.f32 %v3331, %v3379
        %v3428 = vmul.f32 %v3325, %v3380
        %v3429 = vmul.f32 %v3319, %v3381
        %v3430 = vmul.f32 %v3313, %v3382
        %v3431 = vmul.f32 %v3307, %v3383
        %v3432 = vmul.f32 %v3301, %v3384
        %v3433 = vmul.f32 %v3295, %v3385
        %v3434 = vmul.f32 %v3337, %v3386
        %v3435 = vadd.f32 %v3145, %v3387
        %v3436 = vadd.f32 %v3146, %v3388
        %v3437 = vadd.f32 %v3147, %v3389
        %v3438 = vadd.f32 %v3148, %v3390
        %v3439 = vadd.f32 %v3149, %v3391
        %v3440 = vadd.f32 %v3150, %v3392
        %v3441 = vadd.f32 %v3151, %v3393
        %v3442 = vadd.f32 %v3152, %v3394
        %v3443 = vadd.f32 %v3153, %v3395
        %v3444 = vadd.f32 %v3154, %v3396
        %v3445 = vadd.f32 %v3155, %v3397
        %v3446 = vadd.f32 %v3156, %v3398
        %v3447 = vadd.f32 %v3157, %v3399
        %v3448 = vadd.f32 %v3158, %v3400
        %v3449 = vadd.f32 %v3159, %v3401
        %v3450 = vadd.f32 %v3160, %v3402
        %v3451 = vadd.f32 %v3161, %v3403
        %v3452 = vadd.f32 %v3162, %v3404
        %v3453 = vadd.f32 %v3163, %v3405
        %v3454 = vadd.f32 %v3164, %v3406
        %v3455 = vadd.f32 %v3165, %v3407
        %v3456 = vadd.f32 %v3166, %v3408
        %v3457 = vadd.f32 %v3167, %v3409
        %v3458 = vadd.f32 %v3168, %v3410
        %v3459 = vadd.f32 %v3169, %v3411
        %v3460 = vadd.f32 %v3170, %v3412
        %v3461 = vadd.f32 %v3171, %v3413
        %v3462 = vadd.f32 %v3172, %v3414
        %v3463 = vadd.f32 %v3173, %v3415
        %v3464 = vadd.f32 %v3174, %v3416
        %v3465 = vadd.f32 %v3175, %v3417
        %v3466 = vadd.f32 %v3176, %v3418
        %v3467 = vadd.f32 %v3177, %v3419
        %v3468 = vadd.f32 %v3178, %v3420
        %v3469 = vadd.f32 %v3179, %v3421
        %v3470 = vadd.f32 %v3180, %v3422
        %v3471 = vadd.f32 %v3181, %v3423
        %v3472 = vadd.f32 %v3182, %v3424
        %v3473 = vadd.f32 %v3183, %v3425
        %v3474 = vadd.f32 %v3184, %v3426
        %v3475 = vadd.f32 %v3185, %v3427
        %v3476 = vadd.f32 %v3186, %v3428
        %v3477 = vadd.f32 %v3187, %v3429
        %v3478 = vadd.f32 %v3188, %v3430
        %v3479 = vadd.f32 %v3189, %v3431
        %v3480 = vadd.f32 %v3190, %v3432
        %v3481 = vadd.f32 %v3191, %v3433
        %v3482 = vadd.f32 %v3192, %v3434
        %3483 = vrot.lane.b32.xlu0 %v1597, 112
        %v3484 = vpop.permute.xlu0 %3483
        %3485 = vrot.lane.b32.xlu0 %v1605, 112
        %v3486 = vpop.permute.xlu0 %3485
        %3487 = vrot.lane.b32.xlu0 %v1613, 112
        %v3488 = vpop.permute.xlu0 %3487
        %3489 = vrot.lane.b32.xlu0 %v1621, 112
        %v3490 = vpop.permute.xlu0 %3489
        %3491 = vrot.lane.b32.xlu0 %v1629, 112
        %v3492 = vpop.permute.xlu0 %3491
        %3493 = vrot.lane.b32.xlu0 %v1637, 112
        %v3494 = vpop.permute.xlu0 %3493
        %3495 = vrot.lane.b32.xlu0 %v1598, 112
        %v3496 = vpop.permute.xlu0 %3495
        %3497 = vrot.lane.b32.xlu0 %v1606, 112
        %v3498 = vpop.permute.xlu0 %3497
        %3499 = vrot.lane.b32.xlu0 %v1614, 112
        %v3500 = vpop.permute.xlu0 %3499
        %3501 = vrot.lane.b32.xlu0 %v1622, 112
        %v3502 = vpop.permute.xlu0 %3501
        %3503 = vrot.lane.b32.xlu0 %v1630, 112
        %v3504 = vpop.permute.xlu0 %3503
        %3505 = vrot.lane.b32.xlu0 %v1638, 112
        %v3506 = vpop.permute.xlu0 %3505
        %3507 = vrot.lane.b32.xlu0 %v1599, 112
        %v3508 = vpop.permute.xlu0 %3507
        %3509 = vrot.lane.b32.xlu0 %v1607, 112
        %v3510 = vpop.permute.xlu0 %3509
        %3511 = vrot.lane.b32.xlu0 %v1615, 112
        %v3512 = vpop.permute.xlu0 %3511
        %3513 = vrot.lane.b32.xlu0 %v1623, 112
        %v3514 = vpop.permute.xlu0 %3513
        %3515 = vrot.lane.b32.xlu0 %v1631, 112
        %v3516 = vpop.permute.xlu0 %3515
        %3517 = vrot.lane.b32.xlu0 %v1639, 112
        %v3518 = vpop.permute.xlu0 %3517
        %3519 = vrot.lane.b32.xlu0 %v1600, 112
        %v3520 = vpop.permute.xlu0 %3519
        %3521 = vrot.lane.b32.xlu0 %v1608, 112
        %v3522 = vpop.permute.xlu0 %3521
        %3523 = vrot.lane.b32.xlu0 %v1616, 112
        %v3524 = vpop.permute.xlu0 %3523
        %3525 = vrot.lane.b32.xlu0 %v1624, 112
        %v3526 = vpop.permute.xlu0 %3525
        %3527 = vrot.lane.b32.xlu0 %v1632, 112
        %v3528 = vpop.permute.xlu0 %3527
        %3529 = vrot.lane.b32.xlu0 %v1640, 112
        %v3530 = vpop.permute.xlu0 %3529
        %3531 = vrot.lane.b32.xlu0 %v1601, 112
        %v3532 = vpop.permute.xlu0 %3531
        %3533 = vrot.lane.b32.xlu0 %v1609, 112
        %v3534 = vpop.permute.xlu0 %3533
        %3535 = vrot.lane.b32.xlu0 %v1617, 112
        %v3536 = vpop.permute.xlu0 %3535
        %3537 = vrot.lane.b32.xlu0 %v1625, 112
        %v3538 = vpop.permute.xlu0 %3537
        %3539 = vrot.lane.b32.xlu0 %v1633, 112
        %v3540 = vpop.permute.xlu0 %3539
        %3541 = vrot.lane.b32.xlu0 %v1641, 112
        %v3542 = vpop.permute.xlu0 %3541
        %3543 = vrot.lane.b32.xlu0 %v1602, 112
        %v3544 = vpop.permute.xlu0 %3543
        %3545 = vrot.lane.b32.xlu0 %v1610, 112
        %v3546 = vpop.permute.xlu0 %3545
        %3547 = vrot.lane.b32.xlu0 %v1618, 112
        %v3548 = vpop.permute.xlu0 %3547
        %3549 = vrot.lane.b32.xlu0 %v1626, 112
        %v3550 = vpop.permute.xlu0 %3549
        %3551 = vrot.lane.b32.xlu0 %v1634, 112
        %v3552 = vpop.permute.xlu0 %3551
        %3553 = vrot.lane.b32.xlu0 %v1642, 112
        %v3554 = vpop.permute.xlu0 %3553
        %3555 = vrot.lane.b32.xlu0 %v1603, 112
        %v3556 = vpop.permute.xlu0 %3555
        %3557 = vrot.lane.b32.xlu0 %v1611, 112
        %v3558 = vpop.permute.xlu0 %3557
        %3559 = vrot.lane.b32.xlu0 %v1619, 112
        %v3560 = vpop.permute.xlu0 %3559
        %3561 = vrot.lane.b32.xlu0 %v1627, 112
        %v3562 = vpop.permute.xlu0 %3561
        %3563 = vrot.lane.b32.xlu0 %v1635, 112
        %v3564 = vpop.permute.xlu0 %3563
        %3565 = vrot.lane.b32.xlu0 %v1643, 112
        %v3566 = vpop.permute.xlu0 %3565
        %3567 = vrot.lane.b32.xlu0 %v1604, 112
        %v3568 = vpop.permute.xlu0 %3567
        %3569 = vrot.lane.b32.xlu0 %v1612, 112
        %v3570 = vpop.permute.xlu0 %3569
        %3571 = vrot.lane.b32.xlu0 %v1620, 112
        %v3572 = vpop.permute.xlu0 %3571
        %3573 = vrot.lane.b32.xlu0 %v1628, 112
        %v3574 = vpop.permute.xlu0 %3573
        %3575 = vrot.lane.b32.xlu0 %v1636, 112
        %v3576 = vpop.permute.xlu0 %3575
        %3577 = vrot.lane.b32.xlu0 %v1644, 112
        %v3578 = vpop.permute.xlu0 %3577
        %vm3579 = vcmp.lt.s32.totalorder %v1742, 112
        %v3580 = vsel %vm3579, %v3556, %v3568
        %v3581 = vsel %vm3579, %v3558, %v3570
        %v3582 = vsel %vm3579, %v3560, %v3572
        %v3583 = vsel %vm3579, %v3562, %v3574
        %v3584 = vsel %vm3579, %v3564, %v3576
        %v3585 = vsel %vm3579, %v3566, %v3578
        %v3586 = vsel %vm3579, %v3544, %v3556
        %v3587 = vsel %vm3579, %v3546, %v3558
        %v3588 = vsel %vm3579, %v3548, %v3560
        %v3589 = vsel %vm3579, %v3550, %v3562
        %v3590 = vsel %vm3579, %v3552, %v3564
        %v3591 = vsel %vm3579, %v3554, %v3566
        %v3592 = vsel %vm3579, %v3532, %v3544
        %v3593 = vsel %vm3579, %v3534, %v3546
        %v3594 = vsel %vm3579, %v3536, %v3548
        %v3595 = vsel %vm3579, %v3538, %v3550
        %v3596 = vsel %vm3579, %v3540, %v3552
        %v3597 = vsel %vm3579, %v3542, %v3554
        %v3598 = vsel %vm3579, %v3520, %v3532
        %v3599 = vsel %vm3579, %v3522, %v3534
        %v3600 = vsel %vm3579, %v3524, %v3536
        %v3601 = vsel %vm3579, %v3526, %v3538
        %v3602 = vsel %vm3579, %v3528, %v3540
        %v3603 = vsel %vm3579, %v3530, %v3542
        %v3604 = vsel %vm3579, %v3508, %v3520
        %v3605 = vsel %vm3579, %v3510, %v3522
        %v3606 = vsel %vm3579, %v3512, %v3524
        %v3607 = vsel %vm3579, %v3514, %v3526
        %v3608 = vsel %vm3579, %v3516, %v3528
        %v3609 = vsel %vm3579, %v3518, %v3530
        %v3610 = vsel %vm3579, %v3496, %v3508
        %v3611 = vsel %vm3579, %v3498, %v3510
        %v3612 = vsel %vm3579, %v3500, %v3512
        %v3613 = vsel %vm3579, %v3502, %v3514
        %v3614 = vsel %vm3579, %v3504, %v3516
        %v3615 = vsel %vm3579, %v3506, %v3518
        %v3616 = vsel %vm3579, %v3484, %v3496
        %v3617 = vsel %vm3579, %v3486, %v3498
        %v3618 = vsel %vm3579, %v3488, %v3500
        %v3619 = vsel %vm3579, %v3490, %v3502
        %v3620 = vsel %vm3579, %v3492, %v3504
        %v3621 = vsel %vm3579, %v3494, %v3506
        %v3622 = vsel %vm3579, %v3568, %v3484
        %v3623 = vsel %vm3579, %v3570, %v3486
        %v3624 = vsel %vm3579, %v3572, %v3488
        %v3625 = vsel %vm3579, %v3574, %v3490
        %v3626 = vsel %vm3579, %v3576, %v3492
        %v3627 = vsel %vm3579, %v3578, %v3494
        %s3628 = scalar_lea.vmem [#allocation5], 2688
        %v3629 = vld [vmem:[%s3628] sm:$0xff]
        %v3630 = vld [vmem:[%s3628 + $0x8] sm:$0xff]
        %v3631 = vld [vmem:[%s3628 + $0x10] sm:$0xff]
        %v3632 = vld [vmem:[%s3628 + $0x18] sm:$0xff]
        %v3633 = vld [vmem:[%s3628 + $0x20] sm:$0xff]
        %v3634 = vld [vmem:[%s3628 + $0x28] sm:$0xff]
        %v3635 = vld [vmem:[%s3628 + $0x30] sm:$0xff]
        %v3636 = vld [vmem:[%s3628 + $0x38] sm:$0xff]
        %v3637 = vld [vmem:[%s3628 + $0x40] sm:$0xff]
        %v3638 = vld [vmem:[%s3628 + $0x48] sm:$0xff]
        %v3639 = vld [vmem:[%s3628 + $0x50] sm:$0xff]
        %v3640 = vld [vmem:[%s3628 + $0x58] sm:$0xff]
        %v3641 = vld [vmem:[%s3628 + $0x60] sm:$0xff]
        %v3642 = vld [vmem:[%s3628 + $0x68] sm:$0xff]
        %v3643 = vld [vmem:[%s3628 + $0x70] sm:$0xff]
        %v3644 = vld [vmem:[%s3628 + $0x78] sm:$0xff]
        %v3645 = vld [vmem:[%s3628 + $0x80] sm:$0xff]
        %v3646 = vld [vmem:[%s3628 + $0x88] sm:$0xff]
        %v3647 = vld [vmem:[%s3628 + $0x90] sm:$0xff]
        %v3648 = vld [vmem:[%s3628 + $0x98] sm:$0xff]
        %v3649 = vld [vmem:[%s3628 + $0xa0] sm:$0xff]
        %v3650 = vld [vmem:[%s3628 + $0xa8] sm:$0xff]
        %v3651 = vld [vmem:[%s3628 + $0xb0] sm:$0xff]
        %v3652 = vld [vmem:[%s3628 + $0xb8] sm:$0xff]
        %v3653 = vld [vmem:[%s3628 + $0xc0] sm:$0xff]
        %v3654 = vld [vmem:[%s3628 + $0xc8] sm:$0xff]
        %v3655 = vld [vmem:[%s3628 + $0xd0] sm:$0xff]
        %v3656 = vld [vmem:[%s3628 + $0xd8] sm:$0xff]
        %v3657 = vld [vmem:[%s3628 + $0xe0] sm:$0xff]
        %v3658 = vld [vmem:[%s3628 + $0xe8] sm:$0xff]
        %v3659 = vld [vmem:[%s3628 + $0xf0] sm:$0xff]
        %v3660 = vld [vmem:[%s3628 + $0xf8] sm:$0xff]
        %v3661 = vld [vmem:[%s3628 + $0x100] sm:$0xff]
        %v3662 = vld [vmem:[%s3628 + $0x108] sm:$0xff]
        %v3663 = vld [vmem:[%s3628 + $0x110] sm:$0xff]
        %v3664 = vld [vmem:[%s3628 + $0x118] sm:$0xff]
        %v3665 = vld [vmem:[%s3628 + $0x120] sm:$0xff]
        %v3666 = vld [vmem:[%s3628 + $0x128] sm:$0xff]
        %v3667 = vld [vmem:[%s3628 + $0x130] sm:$0xff]
        %v3668 = vld [vmem:[%s3628 + $0x138] sm:$0xff]
        %v3669 = vld [vmem:[%s3628 + $0x140] sm:$0xff]
        %v3670 = vld [vmem:[%s3628 + $0x148] sm:$0xff]
        %v3671 = vld [vmem:[%s3628 + $0x150] sm:$0xff]
        %v3672 = vld [vmem:[%s3628 + $0x158] sm:$0xff]
        %v3673 = vld [vmem:[%s3628 + $0x160] sm:$0xff]
        %v3674 = vld [vmem:[%s3628 + $0x168] sm:$0xff]
        %v3675 = vld [vmem:[%s3628 + $0x170] sm:$0xff]
        %v3676 = vld [vmem:[%s3628 + $0x178] sm:$0xff]
        %v3677 = vmul.f32 %v3616, %v3629
        %v3678 = vmul.f32 %v3610, %v3630
        %v3679 = vmul.f32 %v3604, %v3631
        %v3680 = vmul.f32 %v3598, %v3632
        %v3681 = vmul.f32 %v3592, %v3633
        %v3682 = vmul.f32 %v3586, %v3634
        %v3683 = vmul.f32 %v3580, %v3635
        %v3684 = vmul.f32 %v3622, %v3636
        %v3685 = vmul.f32 %v3617, %v3637
        %v3686 = vmul.f32 %v3611, %v3638
        %v3687 = vmul.f32 %v3605, %v3639
        %v3688 = vmul.f32 %v3599, %v3640
        %v3689 = vmul.f32 %v3593, %v3641
        %v3690 = vmul.f32 %v3587, %v3642
        %v3691 = vmul.f32 %v3581, %v3643
        %v3692 = vmul.f32 %v3623, %v3644
        %v3693 = vmul.f32 %v3618, %v3645
        %v3694 = vmul.f32 %v3612, %v3646
        %v3695 = vmul.f32 %v3606, %v3647
        %v3696 = vmul.f32 %v3600, %v3648
        %v3697 = vmul.f32 %v3594, %v3649
        %v3698 = vmul.f32 %v3588, %v3650
        %v3699 = vmul.f32 %v3582, %v3651
        %v3700 = vmul.f32 %v3624, %v3652
        %v3701 = vmul.f32 %v3619, %v3653
        %v3702 = vmul.f32 %v3613, %v3654
        %v3703 = vmul.f32 %v3607, %v3655
        %v3704 = vmul.f32 %v3601, %v3656
        %v3705 = vmul.f32 %v3595, %v3657
        %v3706 = vmul.f32 %v3589, %v3658
        %v3707 = vmul.f32 %v3583, %v3659
        %v3708 = vmul.f32 %v3625, %v3660
        %v3709 = vmul.f32 %v3620, %v3661
        %v3710 = vmul.f32 %v3614, %v3662
        %v3711 = vmul.f32 %v3608, %v3663
        %v3712 = vmul.f32 %v3602, %v3664
        %v3713 = vmul.f32 %v3596, %v3665
        %v3714 = vmul.f32 %v3590, %v3666
        %v3715 = vmul.f32 %v3584, %v3667
        %v3716 = vmul.f32 %v3626, %v3668
        %v3717 = vmul.f32 %v3621, %v3669
        %v3718 = vmul.f32 %v3615, %v3670
        %v3719 = vmul.f32 %v3609, %v3671
        %v3720 = vmul.f32 %v3603, %v3672
        %v3721 = vmul.f32 %v3597, %v3673
        %v3722 = vmul.f32 %v3591, %v3674
        %v3723 = vmul.f32 %v3585, %v3675
        %v3724 = vmul.f32 %v3627, %v3676
        %v3725 = vadd.f32 %v3435, %v3677
        %v3726 = vadd.f32 %v3436, %v3678
        %v3727 = vadd.f32 %v3437, %v3679
        %v3728 = vadd.f32 %v3438, %v3680
        %v3729 = vadd.f32 %v3439, %v3681
        %v3730 = vadd.f32 %v3440, %v3682
        %v3731 = vadd.f32 %v3441, %v3683
        %v3732 = vadd.f32 %v3442, %v3684
        %v3733 = vadd.f32 %v3443, %v3685
        %v3734 = vadd.f32 %v3444, %v3686
        %v3735 = vadd.f32 %v3445, %v3687
        %v3736 = vadd.f32 %v3446, %v3688
        %v3737 = vadd.f32 %v3447, %v3689
        %v3738 = vadd.f32 %v3448, %v3690
        %v3739 = vadd.f32 %v3449, %v3691
        %v3740 = vadd.f32 %v3450, %v3692
        %v3741 = vadd.f32 %v3451, %v3693
        %v3742 = vadd.f32 %v3452, %v3694
        %v3743 = vadd.f32 %v3453, %v3695
        %v3744 = vadd.f32 %v3454, %v3696
        %v3745 = vadd.f32 %v3455, %v3697
        %v3746 = vadd.f32 %v3456, %v3698
        %v3747 = vadd.f32 %v3457, %v3699
        %v3748 = vadd.f32 %v3458, %v3700
        %v3749 = vadd.f32 %v3459, %v3701
        %v3750 = vadd.f32 %v3460, %v3702
        %v3751 = vadd.f32 %v3461, %v3703
        %v3752 = vadd.f32 %v3462, %v3704
        %v3753 = vadd.f32 %v3463, %v3705
        %v3754 = vadd.f32 %v3464, %v3706
        %v3755 = vadd.f32 %v3465, %v3707
        %v3756 = vadd.f32 %v3466, %v3708
        %v3757 = vadd.f32 %v3467, %v3709
        %v3758 = vadd.f32 %v3468, %v3710
        %v3759 = vadd.f32 %v3469, %v3711
        %v3760 = vadd.f32 %v3470, %v3712
        %v3761 = vadd.f32 %v3471, %v3713
        %v3762 = vadd.f32 %v3472, %v3714
        %v3763 = vadd.f32 %v3473, %v3715
        %v3764 = vadd.f32 %v3474, %v3716
        %v3765 = vadd.f32 %v3475, %v3717
        %v3766 = vadd.f32 %v3476, %v3718
        %v3767 = vadd.f32 %v3477, %v3719
        %v3768 = vadd.f32 %v3478, %v3720
        %v3769 = vadd.f32 %v3479, %v3721
        %v3770 = vadd.f32 %v3480, %v3722
        %v3771 = vadd.f32 %v3481, %v3723
        %v3772 = vadd.f32 %v3482, %v3724
        %3773 = vrot.lane.b32.xlu0 %v1597, 111
        %v3774 = vpop.permute.xlu0 %3773
        %3775 = vrot.lane.b32.xlu0 %v1605, 111
        %v3776 = vpop.permute.xlu0 %3775
        %3777 = vrot.lane.b32.xlu0 %v1613, 111
        %v3778 = vpop.permute.xlu0 %3777
        %3779 = vrot.lane.b32.xlu0 %v1621, 111
        %v3780 = vpop.permute.xlu0 %3779
        %3781 = vrot.lane.b32.xlu0 %v1629, 111
        %v3782 = vpop.permute.xlu0 %3781
        %3783 = vrot.lane.b32.xlu0 %v1637, 111
        %v3784 = vpop.permute.xlu0 %3783
        %3785 = vrot.lane.b32.xlu0 %v1598, 111
        %v3786 = vpop.permute.xlu0 %3785
        %3787 = vrot.lane.b32.xlu0 %v1606, 111
        %v3788 = vpop.permute.xlu0 %3787
        %3789 = vrot.lane.b32.xlu0 %v1614, 111
        %v3790 = vpop.permute.xlu0 %3789
        %3791 = vrot.lane.b32.xlu0 %v1622, 111
        %v3792 = vpop.permute.xlu0 %3791
        %3793 = vrot.lane.b32.xlu0 %v1630, 111
        %v3794 = vpop.permute.xlu0 %3793
        %3795 = vrot.lane.b32.xlu0 %v1638, 111
        %v3796 = vpop.permute.xlu0 %3795
        %3797 = vrot.lane.b32.xlu0 %v1599, 111
        %v3798 = vpop.permute.xlu0 %3797
        %3799 = vrot.lane.b32.xlu0 %v1607, 111
        %v3800 = vpop.permute.xlu0 %3799
        %3801 = vrot.lane.b32.xlu0 %v1615, 111
        %v3802 = vpop.permute.xlu0 %3801
        %3803 = vrot.lane.b32.xlu0 %v1623, 111
        %v3804 = vpop.permute.xlu0 %3803
        %3805 = vrot.lane.b32.xlu0 %v1631, 111
        %v3806 = vpop.permute.xlu0 %3805
        %3807 = vrot.lane.b32.xlu0 %v1639, 111
        %v3808 = vpop.permute.xlu0 %3807
        %3809 = vrot.lane.b32.xlu0 %v1600, 111
        %v3810 = vpop.permute.xlu0 %3809
        %3811 = vrot.lane.b32.xlu0 %v1608, 111
        %v3812 = vpop.permute.xlu0 %3811
        %3813 = vrot.lane.b32.xlu0 %v1616, 111
        %v3814 = vpop.permute.xlu0 %3813
        %3815 = vrot.lane.b32.xlu0 %v1624, 111
        %v3816 = vpop.permute.xlu0 %3815
        %3817 = vrot.lane.b32.xlu0 %v1632, 111
        %v3818 = vpop.permute.xlu0 %3817
        %3819 = vrot.lane.b32.xlu0 %v1640, 111
        %v3820 = vpop.permute.xlu0 %3819
        %3821 = vrot.lane.b32.xlu0 %v1601, 111
        %v3822 = vpop.permute.xlu0 %3821
        %3823 = vrot.lane.b32.xlu0 %v1609, 111
        %v3824 = vpop.permute.xlu0 %3823
        %3825 = vrot.lane.b32.xlu0 %v1617, 111
        %v3826 = vpop.permute.xlu0 %3825
        %3827 = vrot.lane.b32.xlu0 %v1625, 111
        %v3828 = vpop.permute.xlu0 %3827
        %3829 = vrot.lane.b32.xlu0 %v1633, 111
        %v3830 = vpop.permute.xlu0 %3829
        %3831 = vrot.lane.b32.xlu0 %v1641, 111
        %v3832 = vpop.permute.xlu0 %3831
        %3833 = vrot.lane.b32.xlu0 %v1602, 111
        %v3834 = vpop.permute.xlu0 %3833
        %3835 = vrot.lane.b32.xlu0 %v1610, 111
        %v3836 = vpop.permute.xlu0 %3835
        %3837 = vrot.lane.b32.xlu0 %v1618, 111
        %v3838 = vpop.permute.xlu0 %3837
        %3839 = vrot.lane.b32.xlu0 %v1626, 111
        %v3840 = vpop.permute.xlu0 %3839
        %3841 = vrot.lane.b32.xlu0 %v1634, 111
        %v3842 = vpop.permute.xlu0 %3841
        %3843 = vrot.lane.b32.xlu0 %v1642, 111
        %v3844 = vpop.permute.xlu0 %3843
        %3845 = vrot.lane.b32.xlu0 %v1603, 111
        %v3846 = vpop.permute.xlu0 %3845
        %3847 = vrot.lane.b32.xlu0 %v1611, 111
        %v3848 = vpop.permute.xlu0 %3847
        %3849 = vrot.lane.b32.xlu0 %v1619, 111
        %v3850 = vpop.permute.xlu0 %3849
        %3851 = vrot.lane.b32.xlu0 %v1627, 111
        %v3852 = vpop.permute.xlu0 %3851
        %3853 = vrot.lane.b32.xlu0 %v1635, 111
        %v3854 = vpop.permute.xlu0 %3853
        %3855 = vrot.lane.b32.xlu0 %v1643, 111
        %v3856 = vpop.permute.xlu0 %3855
        %3857 = vrot.lane.b32.xlu0 %v1604, 111
        %v3858 = vpop.permute.xlu0 %3857
        %3859 = vrot.lane.b32.xlu0 %v1612, 111
        %v3860 = vpop.permute.xlu0 %3859
        %3861 = vrot.lane.b32.xlu0 %v1620, 111
        %v3862 = vpop.permute.xlu0 %3861
        %3863 = vrot.lane.b32.xlu0 %v1628, 111
        %v3864 = vpop.permute.xlu0 %3863
        %3865 = vrot.lane.b32.xlu0 %v1636, 111
        %v3866 = vpop.permute.xlu0 %3865
        %3867 = vrot.lane.b32.xlu0 %v1644, 111
        %v3868 = vpop.permute.xlu0 %3867
        %vm3869 = vcmp.lt.s32.totalorder %v1742, 111
        %v3870 = vsel %vm3869, %v3846, %v3858
        %v3871 = vsel %vm3869, %v3848, %v3860
        %v3872 = vsel %vm3869, %v3850, %v3862
        %v3873 = vsel %vm3869, %v3852, %v3864
        %v3874 = vsel %vm3869, %v3854, %v3866
        %v3875 = vsel %vm3869, %v3856, %v3868
        %v3876 = vsel %vm3869, %v3834, %v3846
        %v3877 = vsel %vm3869, %v3836, %v3848
        %v3878 = vsel %vm3869, %v3838, %v3850
        %v3879 = vsel %vm3869, %v3840, %v3852
        %v3880 = vsel %vm3869, %v3842, %v3854
        %v3881 = vsel %vm3869, %v3844, %v3856
        %v3882 = vsel %vm3869, %v3822, %v3834
        %v3883 = vsel %vm3869, %v3824, %v3836
        %v3884 = vsel %vm3869, %v3826, %v3838
        %v3885 = vsel %vm3869, %v3828, %v3840
        %v3886 = vsel %vm3869, %v3830, %v3842
        %v3887 = vsel %vm3869, %v3832, %v3844
        %v3888 = vsel %vm3869, %v3810, %v3822
        %v3889 = vsel %vm3869, %v3812, %v3824
        %v3890 = vsel %vm3869, %v3814, %v3826
        %v3891 = vsel %vm3869, %v3816, %v3828
        %v3892 = vsel %vm3869, %v3818, %v3830
        %v3893 = vsel %vm3869, %v3820, %v3832
        %v3894 = vsel %vm3869, %v3798, %v3810
        %v3895 = vsel %vm3869, %v3800, %v3812
        %v3896 = vsel %vm3869, %v3802, %v3814
        %v3897 = vsel %vm3869, %v3804, %v3816
        %v3898 = vsel %vm3869, %v3806, %v3818
        %v3899 = vsel %vm3869, %v3808, %v3820
        %v3900 = vsel %vm3869, %v3786, %v3798
        %v3901 = vsel %vm3869, %v3788, %v3800
        %v3902 = vsel %vm3869, %v3790, %v3802
        %v3903 = vsel %vm3869, %v3792, %v3804
        %v3904 = vsel %vm3869, %v3794, %v3806
        %v3905 = vsel %vm3869, %v3796, %v3808
        %v3906 = vsel %vm3869, %v3774, %v3786
        %v3907 = vsel %vm3869, %v3776, %v3788
        %v3908 = vsel %vm3869, %v3778, %v3790
        %v3909 = vsel %vm3869, %v3780, %v3792
        %v3910 = vsel %vm3869, %v3782, %v3794
        %v3911 = vsel %vm3869, %v3784, %v3796
        %v3912 = vsel %vm3869, %v3858, %v3774
        %v3913 = vsel %vm3869, %v3860, %v3776
        %v3914 = vsel %vm3869, %v3862, %v3778
        %v3915 = vsel %vm3869, %v3864, %v3780
        %v3916 = vsel %vm3869, %v3866, %v3782
        %v3917 = vsel %vm3869, %v3868, %v3784
        %s3918 = scalar_lea.vmem [#allocation5], 3072
        %v3919 = vld [vmem:[%s3918] sm:$0xff]
        %v3920 = vld [vmem:[%s3918 + $0x8] sm:$0xff]
        %v3921 = vld [vmem:[%s3918 + $0x10] sm:$0xff]
        %v3922 = vld [vmem:[%s3918 + $0x18] sm:$0xff]
        %v3923 = vld [vmem:[%s3918 + $0x20] sm:$0xff]
        %v3924 = vld [vmem:[%s3918 + $0x28] sm:$0xff]
        %v3925 = vld [vmem:[%s3918 + $0x30] sm:$0xff]
        %v3926 = vld [vmem:[%s3918 + $0x38] sm:$0xff]
        %v3927 = vld [vmem:[%s3918 + $0x40] sm:$0xff]
        %v3928 = vld [vmem:[%s3918 + $0x48] sm:$0xff]
        %v3929 = vld [vmem:[%s3918 + $0x50] sm:$0xff]
        %v3930 = vld [vmem:[%s3918 + $0x58] sm:$0xff]
        %v3931 = vld [vmem:[%s3918 + $0x60] sm:$0xff]
        %v3932 = vld [vmem:[%s3918 + $0x68] sm:$0xff]
        %v3933 = vld [vmem:[%s3918 + $0x70] sm:$0xff]
        %v3934 = vld [vmem:[%s3918 + $0x78] sm:$0xff]
        %v3935 = vld [vmem:[%s3918 + $0x80] sm:$0xff]
        %v3936 = vld [vmem:[%s3918 + $0x88] sm:$0xff]
        %v3937 = vld [vmem:[%s3918 + $0x90] sm:$0xff]
        %v3938 = vld [vmem:[%s3918 + $0x98] sm:$0xff]
        %v3939 = vld [vmem:[%s3918 + $0xa0] sm:$0xff]
        %v3940 = vld [vmem:[%s3918 + $0xa8] sm:$0xff]
        %v3941 = vld [vmem:[%s3918 + $0xb0] sm:$0xff]
        %v3942 = vld [vmem:[%s3918 + $0xb8] sm:$0xff]
        %v3943 = vld [vmem:[%s3918 + $0xc0] sm:$0xff]
        %v3944 = vld [vmem:[%s3918 + $0xc8] sm:$0xff]
        %v3945 = vld [vmem:[%s3918 + $0xd0] sm:$0xff]
        %v3946 = vld [vmem:[%s3918 + $0xd8] sm:$0xff]
        %v3947 = vld [vmem:[%s3918 + $0xe0] sm:$0xff]
        %v3948 = vld [vmem:[%s3918 + $0xe8] sm:$0xff]
        %v3949 = vld [vmem:[%s3918 + $0xf0] sm:$0xff]
        %v3950 = vld [vmem:[%s3918 + $0xf8] sm:$0xff]
        %v3951 = vld [vmem:[%s3918 + $0x100] sm:$0xff]
        %v3952 = vld [vmem:[%s3918 + $0x108] sm:$0xff]
        %v3953 = vld [vmem:[%s3918 + $0x110] sm:$0xff]
        %v3954 = vld [vmem:[%s3918 + $0x118] sm:$0xff]
        %v3955 = vld [vmem:[%s3918 + $0x120] sm:$0xff]
        %v3956 = vld [vmem:[%s3918 + $0x128] sm:$0xff]
        %v3957 = vld [vmem:[%s3918 + $0x130] sm:$0xff]
        %v3958 = vld [vmem:[%s3918 + $0x138] sm:$0xff]
        %v3959 = vld [vmem:[%s3918 + $0x140] sm:$0xff]
        %v3960 = vld [vmem:[%s3918 + $0x148] sm:$0xff]
        %v3961 = vld [vmem:[%s3918 + $0x150] sm:$0xff]
        %v3962 = vld [vmem:[%s3918 + $0x158] sm:$0xff]
        %v3963 = vld [vmem:[%s3918 + $0x160] sm:$0xff]
        %v3964 = vld [vmem:[%s3918 + $0x168] sm:$0xff]
        %v3965 = vld [vmem:[%s3918 + $0x170] sm:$0xff]
        %v3966 = vld [vmem:[%s3918 + $0x178] sm:$0xff]
        %v3967 = vmul.f32 %v3906, %v3919
        %v3968 = vmul.f32 %v3900, %v3920
        %v3969 = vmul.f32 %v3894, %v3921
        %v3970 = vmul.f32 %v3888, %v3922
        %v3971 = vmul.f32 %v3882, %v3923
        %v3972 = vmul.f32 %v3876, %v3924
        %v3973 = vmul.f32 %v3870, %v3925
        %v3974 = vmul.f32 %v3912, %v3926
        %v3975 = vmul.f32 %v3907, %v3927
        %v3976 = vmul.f32 %v3901, %v3928
        %v3977 = vmul.f32 %v3895, %v3929
        %v3978 = vmul.f32 %v3889, %v3930
        %v3979 = vmul.f32 %v3883, %v3931
        %v3980 = vmul.f32 %v3877, %v3932
        %v3981 = vmul.f32 %v3871, %v3933
        %v3982 = vmul.f32 %v3913, %v3934
        %v3983 = vmul.f32 %v3908, %v3935
        %v3984 = vmul.f32 %v3902, %v3936
        %v3985 = vmul.f32 %v3896, %v3937
        %v3986 = vmul.f32 %v3890, %v3938
        %v3987 = vmul.f32 %v3884, %v3939
        %v3988 = vmul.f32 %v3878, %v3940
        %v3989 = vmul.f32 %v3872, %v3941
        %v3990 = vmul.f32 %v3914, %v3942
        %v3991 = vmul.f32 %v3909, %v3943
        %v3992 = vmul.f32 %v3903, %v3944
        %v3993 = vmul.f32 %v3897, %v3945
        %v3994 = vmul.f32 %v3891, %v3946
        %v3995 = vmul.f32 %v3885, %v3947
        %v3996 = vmul.f32 %v3879, %v3948
        %v3997 = vmul.f32 %v3873, %v3949
        %v3998 = vmul.f32 %v3915, %v3950
        %v3999 = vmul.f32 %v3910, %v3951
        %v4000 = vmul.f32 %v3904, %v3952
        %v4001 = vmul.f32 %v3898, %v3953
        %v4002 = vmul.f32 %v3892, %v3954
        %v4003 = vmul.f32 %v3886, %v3955
        %v4004 = vmul.f32 %v3880, %v3956
        %v4005 = vmul.f32 %v3874, %v3957
        %v4006 = vmul.f32 %v3916, %v3958
        %v4007 = vmul.f32 %v3911, %v3959
        %v4008 = vmul.f32 %v3905, %v3960
        %v4009 = vmul.f32 %v3899, %v3961
        %v4010 = vmul.f32 %v3893, %v3962
        %v4011 = vmul.f32 %v3887, %v3963
        %v4012 = vmul.f32 %v3881, %v3964
        %v4013 = vmul.f32 %v3875, %v3965
        %v4014 = vmul.f32 %v3917, %v3966
        %v4015 = vadd.f32 %v3725, %v3967
        %v4016 = vadd.f32 %v3726, %v3968
        %v4017 = vadd.f32 %v3727, %v3969
        %v4018 = vadd.f32 %v3728, %v3970
        %v4019 = vadd.f32 %v3729, %v3971
        %v4020 = vadd.f32 %v3730, %v3972
        %v4021 = vadd.f32 %v3731, %v3973
        %v4022 = vadd.f32 %v3732, %v3974
        %v4023 = vadd.f32 %v3733, %v3975
        %v4024 = vadd.f32 %v3734, %v3976
        %v4025 = vadd.f32 %v3735, %v3977
        %v4026 = vadd.f32 %v3736, %v3978
        %v4027 = vadd.f32 %v3737, %v3979
        %v4028 = vadd.f32 %v3738, %v3980
        %v4029 = vadd.f32 %v3739, %v3981
        %v4030 = vadd.f32 %v3740, %v3982
        %v4031 = vadd.f32 %v3741, %v3983
        %v4032 = vadd.f32 %v3742, %v3984
        %v4033 = vadd.f32 %v3743, %v3985
        %v4034 = vadd.f32 %v3744, %v3986
        %v4035 = vadd.f32 %v3745, %v3987
        %v4036 = vadd.f32 %v3746, %v3988
        %v4037 = vadd.f32 %v3747, %v3989
        %v4038 = vadd.f32 %v3748, %v3990
        %v4039 = vadd.f32 %v3749, %v3991
        %v4040 = vadd.f32 %v3750, %v3992
        %v4041 = vadd.f32 %v3751, %v3993
        %v4042 = vadd.f32 %v3752, %v3994
        %v4043 = vadd.f32 %v3753, %v3995
        %v4044 = vadd.f32 %v3754, %v3996
        %v4045 = vadd.f32 %v3755, %v3997
        %v4046 = vadd.f32 %v3756, %v3998
        %v4047 = vadd.f32 %v3757, %v3999
        %v4048 = vadd.f32 %v3758, %v4000
        %v4049 = vadd.f32 %v3759, %v4001
        %v4050 = vadd.f32 %v3760, %v4002
        %v4051 = vadd.f32 %v3761, %v4003
        %v4052 = vadd.f32 %v3762, %v4004
        %v4053 = vadd.f32 %v3763, %v4005
        %v4054 = vadd.f32 %v3764, %v4006
        %v4055 = vadd.f32 %v3765, %v4007
        %v4056 = vadd.f32 %v3766, %v4008
        %v4057 = vadd.f32 %v3767, %v4009
        %v4058 = vadd.f32 %v3768, %v4010
        %v4059 = vadd.f32 %v3769, %v4011
        %v4060 = vadd.f32 %v3770, %v4012
        %v4061 = vadd.f32 %v3771, %v4013
        %v4062 = vadd.f32 %v3772, %v4014
        %v4063 = vxor.u32 %v4015, 2147483648
        %v4064 = vxor.u32 %v4016, 2147483648
        %v4065 = vxor.u32 %v4017, 2147483648
        %v4066 = vxor.u32 %v4018, 2147483648
        %v4067 = vxor.u32 %v4019, 2147483648
        %v4068 = vxor.u32 %v4020, 2147483648
        %v4069 = vxor.u32 %v4021, 2147483648
        %v4070 = vxor.u32 %v4022, 2147483648
        %v4071 = vxor.u32 %v4023, 2147483648
        %v4072 = vxor.u32 %v4024, 2147483648
        %v4073 = vxor.u32 %v4025, 2147483648
        %v4074 = vxor.u32 %v4026, 2147483648
        %v4075 = vxor.u32 %v4027, 2147483648
        %v4076 = vxor.u32 %v4028, 2147483648
        %v4077 = vxor.u32 %v4029, 2147483648
        %v4078 = vxor.u32 %v4030, 2147483648
        %v4079 = vxor.u32 %v4031, 2147483648
        %v4080 = vxor.u32 %v4032, 2147483648
        %v4081 = vxor.u32 %v4033, 2147483648
        %v4082 = vxor.u32 %v4034, 2147483648
        %v4083 = vxor.u32 %v4035, 2147483648
        %v4084 = vxor.u32 %v4036, 2147483648
        %v4085 = vxor.u32 %v4037, 2147483648
        %v4086 = vxor.u32 %v4038, 2147483648
        %v4087 = vxor.u32 %v4039, 2147483648
        %v4088 = vxor.u32 %v4040, 2147483648
        %v4089 = vxor.u32 %v4041, 2147483648
        %v4090 = vxor.u32 %v4042, 2147483648
        %v4091 = vxor.u32 %v4043, 2147483648
        %v4092 = vxor.u32 %v4044, 2147483648
        %v4093 = vxor.u32 %v4045, 2147483648
        %v4094 = vxor.u32 %v4046, 2147483648
        %v4095 = vxor.u32 %v4047, 2147483648
        %v4096 = vxor.u32 %v4048, 2147483648
        %v4097 = vxor.u32 %v4049, 2147483648
        %v4098 = vxor.u32 %v4050, 2147483648
        %v4099 = vxor.u32 %v4051, 2147483648
        %v4100 = vxor.u32 %v4052, 2147483648
        %v4101 = vxor.u32 %v4053, 2147483648
        %v4102 = vxor.u32 %v4054, 2147483648
        %v4103 = vxor.u32 %v4055, 2147483648
        %v4104 = vxor.u32 %v4056, 2147483648
        %v4105 = vxor.u32 %v4057, 2147483648
        %v4106 = vxor.u32 %v4058, 2147483648
        %v4107 = vxor.u32 %v4059, 2147483648
        %v4108 = vxor.u32 %v4060, 2147483648
        %v4109 = vxor.u32 %v4061, 2147483648
        %v4110 = vxor.u32 %v4062, 2147483648
        %v4111 = vmul.f32 %v4063, 1.442695
        %v4112 = vpow.pop %v4111
        %v4113 = vmul.f32 %v4064, 1.442695
        %v4114 = vpow.pop %v4113
        %v4115 = vmul.f32 %v4065, 1.442695
        %v4116 = vpow.pop %v4115
        %v4117 = vmul.f32 %v4066, 1.442695
        %v4118 = vpow.pop %v4117
        %v4119 = vmul.f32 %v4067, 1.442695
        %v4120 = vpow.pop %v4119
        %v4121 = vmul.f32 %v4068, 1.442695
        %v4122 = vpow.pop %v4121
        %v4123 = vmul.f32 %v4069, 1.442695
        %v4124 = vpow.pop %v4123
        %v4125 = vmul.f32 %v4070, 1.442695
        %v4126 = vpow.pop %v4125
        %v4127 = vmul.f32 %v4071, 1.442695
        %v4128 = vpow.pop %v4127
        %v4129 = vmul.f32 %v4072, 1.442695
        %v4130 = vpow.pop %v4129
        %v4131 = vmul.f32 %v4073, 1.442695
        %v4132 = vpow.pop %v4131
        %v4133 = vmul.f32 %v4074, 1.442695
        %v4134 = vpow.pop %v4133
        %v4135 = vmul.f32 %v4075, 1.442695
        %v4136 = vpow.pop %v4135
        %v4137 = vmul.f32 %v4076, 1.442695
        %v4138 = vpow.pop %v4137
        %v4139 = vmul.f32 %v4077, 1.442695
        %v4140 = vpow.pop %v4139
        %v4141 = vmul.f32 %v4078, 1.442695
        %v4142 = vpow.pop %v4141
        %v4143 = vmul.f32 %v4079, 1.442695
        %v4144 = vpow.pop %v4143
        %v4145 = vmul.f32 %v4080, 1.442695
        %v4146 = vpow.pop %v4145
        %v4147 = vmul.f32 %v4081, 1.442695
        %v4148 = vpow.pop %v4147
        %v4149 = vmul.f32 %v4082, 1.442695
        %v4150 = vpow.pop %v4149
        %v4151 = vmul.f32 %v4083, 1.442695
        %v4152 = vpow.pop %v4151
        %v4153 = vmul.f32 %v4084, 1.442695
        %v4154 = vpow.pop %v4153
        %v4155 = vmul.f32 %v4085, 1.442695
        %v4156 = vpow.pop %v4155
        %v4157 = vmul.f32 %v4086, 1.442695
        %v4158 = vpow.pop %v4157
        %v4159 = vmul.f32 %v4087, 1.442695
        %v4160 = vpow.pop %v4159
        %v4161 = vmul.f32 %v4088, 1.442695
        %v4162 = vpow.pop %v4161
        %v4163 = vmul.f32 %v4089, 1.442695
        %v4164 = vpow.pop %v4163
        %v4165 = vmul.f32 %v4090, 1.442695
        %v4166 = vpow.pop %v4165
        %v4167 = vmul.f32 %v4091, 1.442695
        %v4168 = vpow.pop %v4167
        %v4169 = vmul.f32 %v4092, 1.442695
        %v4170 = vpow.pop %v4169
        %v4171 = vmul.f32 %v4093, 1.442695
        %v4172 = vpow.pop %v4171
        %v4173 = vmul.f32 %v4094, 1.442695
        %v4174 = vpow.pop %v4173
        %v4175 = vmul.f32 %v4095, 1.442695
        %v4176 = vpow.pop %v4175
        %v4177 = vmul.f32 %v4096, 1.442695
        %v4178 = vpow.pop %v4177
        %v4179 = vmul.f32 %v4097, 1.442695
        %v4180 = vpow.pop %v4179
        %v4181 = vmul.f32 %v4098, 1.442695
        %v4182 = vpow.pop %v4181
        %v4183 = vmul.f32 %v4099, 1.442695
        %v4184 = vpow.pop %v4183
        %v4185 = vmul.f32 %v4100, 1.442695
        %v4186 = vpow.pop %v4185
        %v4187 = vmul.f32 %v4101, 1.442695
        %v4188 = vpow.pop %v4187
        %v4189 = vmul.f32 %v4102, 1.442695
        %v4190 = vpow.pop %v4189
        %v4191 = vmul.f32 %v4103, 1.442695
        %v4192 = vpow.pop %v4191
        %v4193 = vmul.f32 %v4104, 1.442695
        %v4194 = vpow.pop %v4193
        %v4195 = vmul.f32 %v4105, 1.442695
        %v4196 = vpow.pop %v4195
        %v4197 = vmul.f32 %v4106, 1.442695
        %v4198 = vpow.pop %v4197
        %v4199 = vmul.f32 %v4107, 1.442695
        %v4200 = vpow.pop %v4199
        %v4201 = vmul.f32 %v4108, 1.442695
        %v4202 = vpow.pop %v4201
        %v4203 = vmul.f32 %v4109, 1.442695
        %v4204 = vpow.pop %v4203
        %v4205 = vmul.f32 %v4110, 1.442695
        %v4206 = vpow.pop %v4205
        %v4207 = vadd.f32 %v4112, 1.0
        %v4208 = vadd.f32 %v4114, 1.0
        %v4209 = vadd.f32 %v4116, 1.0
        %v4210 = vadd.f32 %v4118, 1.0
        %v4211 = vadd.f32 %v4120, 1.0
        %v4212 = vadd.f32 %v4122, 1.0
        %v4213 = vadd.f32 %v4124, 1.0
        %v4214 = vadd.f32 %v4126, 1.0
        %v4215 = vadd.f32 %v4128, 1.0
        %v4216 = vadd.f32 %v4130, 1.0
        %v4217 = vadd.f32 %v4132, 1.0
        %v4218 = vadd.f32 %v4134, 1.0
        %v4219 = vadd.f32 %v4136, 1.0
        %v4220 = vadd.f32 %v4138, 1.0
        %v4221 = vadd.f32 %v4140, 1.0
        %v4222 = vadd.f32 %v4142, 1.0
        %v4223 = vadd.f32 %v4144, 1.0
        %v4224 = vadd.f32 %v4146, 1.0
        %v4225 = vadd.f32 %v4148, 1.0
        %v4226 = vadd.f32 %v4150, 1.0
        %v4227 = vadd.f32 %v4152, 1.0
        %v4228 = vadd.f32 %v4154, 1.0
        %v4229 = vadd.f32 %v4156, 1.0
        %v4230 = vadd.f32 %v4158, 1.0
        %v4231 = vadd.f32 %v4160, 1.0
        %v4232 = vadd.f32 %v4162, 1.0
        %v4233 = vadd.f32 %v4164, 1.0
        %v4234 = vadd.f32 %v4166, 1.0
        %v4235 = vadd.f32 %v4168, 1.0
        %v4236 = vadd.f32 %v4170, 1.0
        %v4237 = vadd.f32 %v4172, 1.0
        %v4238 = vadd.f32 %v4174, 1.0
        %v4239 = vadd.f32 %v4176, 1.0
        %v4240 = vadd.f32 %v4178, 1.0
        %v4241 = vadd.f32 %v4180, 1.0
        %v4242 = vadd.f32 %v4182, 1.0
        %v4243 = vadd.f32 %v4184, 1.0
        %v4244 = vadd.f32 %v4186, 1.0
        %v4245 = vadd.f32 %v4188, 1.0
        %v4246 = vadd.f32 %v4190, 1.0
        %v4247 = vadd.f32 %v4192, 1.0
        %v4248 = vadd.f32 %v4194, 1.0
        %v4249 = vadd.f32 %v4196, 1.0
        %v4250 = vadd.f32 %v4198, 1.0
        %v4251 = vadd.f32 %v4200, 1.0
        %v4252 = vadd.f32 %v4202, 1.0
        %v4253 = vadd.f32 %v4204, 1.0
        %v4254 = vadd.f32 %v4206, 1.0
        %v4255 = vrcp.pop %v4207
        %v4256 = vmul.f32 %v4207, %v4255
        %v4257 = vsub.f32 1.0, %v4256
        %v4258 = vmul.f32 %v4255, %v4257
        %v4259 = vadd.f32 %v4255, %v4258
        %vm4260 = vweird.f32 %v4207
        %vm4261 = vweird.f32 %v4255
        %vm4262 = vmor %vm4260, %vm4261
        %v4263 = vsel %vm4262, %v4255, %v4259
        %v4264 = vand.u32 2147483647, %v4207
        %vm4265 = vcmp.eq.f32.partialorder %v4264, 8.507059e+37
        %v4266 = vand.u32 %v4207, 2147483648
        %v4267 = vor.u32 1.1754944e-38, %v4266
        %v4268 = vsel %vm4265, %v4267, %v4263
        %v4269 = vmul.f32 1.0, %v4268
        %v4270 = vrcp.pop %v4208
        %v4271 = vmul.f32 %v4208, %v4270
        %v4272 = vsub.f32 1.0, %v4271
        %v4273 = vmul.f32 %v4270, %v4272
        %v4274 = vadd.f32 %v4270, %v4273
        %vm4275 = vweird.f32 %v4208
        %vm4276 = vweird.f32 %v4270
        %vm4277 = vmor %vm4275, %vm4276
        %v4278 = vsel %vm4277, %v4270, %v4274
        %v4279 = vand.u32 2147483647, %v4208
        %vm4280 = vcmp.eq.f32.partialorder %v4279, 8.507059e+37
        %v4281 = vand.u32 %v4208, 2147483648
        %v4282 = vor.u32 1.1754944e-38, %v4281
        %v4283 = vsel %vm4280, %v4282, %v4278
        %v4284 = vmul.f32 1.0, %v4283
        %v4285 = vrcp.pop %v4209
        %v4286 = vmul.f32 %v4209, %v4285
        %v4287 = vsub.f32 1.0, %v4286
        %v4288 = vmul.f32 %v4285, %v4287
        %v4289 = vadd.f32 %v4285, %v4288
        %vm4290 = vweird.f32 %v4209
        %vm4291 = vweird.f32 %v4285
        %vm4292 = vmor %vm4290, %vm4291
        %v4293 = vsel %vm4292, %v4285, %v4289
        %v4294 = vand.u32 2147483647, %v4209
        %vm4295 = vcmp.eq.f32.partialorder %v4294, 8.507059e+37
        %v4296 = vand.u32 %v4209, 2147483648
        %v4297 = vor.u32 1.1754944e-38, %v4296
        %v4298 = vsel %vm4295, %v4297, %v4293
        %v4299 = vmul.f32 1.0, %v4298
        %v4300 = vrcp.pop %v4210
        %v4301 = vmul.f32 %v4210, %v4300
        %v4302 = vsub.f32 1.0, %v4301
        %v4303 = vmul.f32 %v4300, %v4302
        %v4304 = vadd.f32 %v4300, %v4303
        %vm4305 = vweird.f32 %v4210
        %vm4306 = vweird.f32 %v4300
        %vm4307 = vmor %vm4305, %vm4306
        %v4308 = vsel %vm4307, %v4300, %v4304
        %v4309 = vand.u32 2147483647, %v4210
        %vm4310 = vcmp.eq.f32.partialorder %v4309, 8.507059e+37
        %v4311 = vand.u32 %v4210, 2147483648
        %v4312 = vor.u32 1.1754944e-38, %v4311
        %v4313 = vsel %vm4310, %v4312, %v4308
        %v4314 = vmul.f32 1.0, %v4313
        %v4315 = vrcp.pop %v4211
        %v4316 = vmul.f32 %v4211, %v4315
        %v4317 = vsub.f32 1.0, %v4316
        %v4318 = vmul.f32 %v4315, %v4317
        %v4319 = vadd.f32 %v4315, %v4318
        %vm4320 = vweird.f32 %v4211
        %vm4321 = vweird.f32 %v4315
        %vm4322 = vmor %vm4320, %vm4321
        %v4323 = vsel %vm4322, %v4315, %v4319
        %v4324 = vand.u32 2147483647, %v4211
        %vm4325 = vcmp.eq.f32.partialorder %v4324, 8.507059e+37
        %v4326 = vand.u32 %v4211, 2147483648
        %v4327 = vor.u32 1.1754944e-38, %v4326
        %v4328 = vsel %vm4325, %v4327, %v4323
        %v4329 = vmul.f32 1.0, %v4328
        %v4330 = vrcp.pop %v4212
        %v4331 = vmul.f32 %v4212, %v4330
        %v4332 = vsub.f32 1.0, %v4331
        %v4333 = vmul.f32 %v4330, %v4332
        %v4334 = vadd.f32 %v4330, %v4333
        %vm4335 = vweird.f32 %v4212
        %vm4336 = vweird.f32 %v4330
        %vm4337 = vmor %vm4335, %vm4336
        %v4338 = vsel %vm4337, %v4330, %v4334
        %v4339 = vand.u32 2147483647, %v4212
        %vm4340 = vcmp.eq.f32.partialorder %v4339, 8.507059e+37
        %v4341 = vand.u32 %v4212, 2147483648
        %v4342 = vor.u32 1.1754944e-38, %v4341
        %v4343 = vsel %vm4340, %v4342, %v4338
        %v4344 = vmul.f32 1.0, %v4343
        %v4345 = vrcp.pop %v4213
        %v4346 = vmul.f32 %v4213, %v4345
        %v4347 = vsub.f32 1.0, %v4346
        %v4348 = vmul.f32 %v4345, %v4347
        %v4349 = vadd.f32 %v4345, %v4348
        %vm4350 = vweird.f32 %v4213
        %vm4351 = vweird.f32 %v4345
        %vm4352 = vmor %vm4350, %vm4351
        %v4353 = vsel %vm4352, %v4345, %v4349
        %v4354 = vand.u32 2147483647, %v4213
        %vm4355 = vcmp.eq.f32.partialorder %v4354, 8.507059e+37
        %v4356 = vand.u32 %v4213, 2147483648
        %v4357 = vor.u32 1.1754944e-38, %v4356
        %v4358 = vsel %vm4355, %v4357, %v4353
        %v4359 = vmul.f32 1.0, %v4358
        %v4360 = vrcp.pop %v4214
        %v4361 = vmul.f32 %v4214, %v4360
        %v4362 = vsub.f32 1.0, %v4361
        %v4363 = vmul.f32 %v4360, %v4362
        %v4364 = vadd.f32 %v4360, %v4363
        %vm4365 = vweird.f32 %v4214
        %vm4366 = vweird.f32 %v4360
        %vm4367 = vmor %vm4365, %vm4366
        %v4368 = vsel %vm4367, %v4360, %v4364
        %v4369 = vand.u32 2147483647, %v4214
        %vm4370 = vcmp.eq.f32.partialorder %v4369, 8.507059e+37
        %v4371 = vand.u32 %v4214, 2147483648
        %v4372 = vor.u32 1.1754944e-38, %v4371
        %v4373 = vsel %vm4370, %v4372, %v4368
        %v4374 = vmul.f32 1.0, %v4373
        %v4375 = vrcp.pop %v4215
        %v4376 = vmul.f32 %v4215, %v4375
        %v4377 = vsub.f32 1.0, %v4376
        %v4378 = vmul.f32 %v4375, %v4377
        %v4379 = vadd.f32 %v4375, %v4378
        %vm4380 = vweird.f32 %v4215
        %vm4381 = vweird.f32 %v4375
        %vm4382 = vmor %vm4380, %vm4381
        %v4383 = vsel %vm4382, %v4375, %v4379
        %v4384 = vand.u32 2147483647, %v4215
        %vm4385 = vcmp.eq.f32.partialorder %v4384, 8.507059e+37
        %v4386 = vand.u32 %v4215, 2147483648
        %v4387 = vor.u32 1.1754944e-38, %v4386
        %v4388 = vsel %vm4385, %v4387, %v4383
        %v4389 = vmul.f32 1.0, %v4388
        %v4390 = vrcp.pop %v4216
        %v4391 = vmul.f32 %v4216, %v4390
        %v4392 = vsub.f32 1.0, %v4391
        %v4393 = vmul.f32 %v4390, %v4392
        %v4394 = vadd.f32 %v4390, %v4393
        %vm4395 = vweird.f32 %v4216
        %vm4396 = vweird.f32 %v4390
        %vm4397 = vmor %vm4395, %vm4396
        %v4398 = vsel %vm4397, %v4390, %v4394
        %v4399 = vand.u32 2147483647, %v4216
        %vm4400 = vcmp.eq.f32.partialorder %v4399, 8.507059e+37
        %v4401 = vand.u32 %v4216, 2147483648
        %v4402 = vor.u32 1.1754944e-38, %v4401
        %v4403 = vsel %vm4400, %v4402, %v4398
        %v4404 = vmul.f32 1.0, %v4403
        %v4405 = vrcp.pop %v4217
        %v4406 = vmul.f32 %v4217, %v4405
        %v4407 = vsub.f32 1.0, %v4406
        %v4408 = vmul.f32 %v4405, %v4407
        %v4409 = vadd.f32 %v4405, %v4408
        %vm4410 = vweird.f32 %v4217
        %vm4411 = vweird.f32 %v4405
        %vm4412 = vmor %vm4410, %vm4411
        %v4413 = vsel %vm4412, %v4405, %v4409
        %v4414 = vand.u32 2147483647, %v4217
        %vm4415 = vcmp.eq.f32.partialorder %v4414, 8.507059e+37
        %v4416 = vand.u32 %v4217, 2147483648
        %v4417 = vor.u32 1.1754944e-38, %v4416
        %v4418 = vsel %vm4415, %v4417, %v4413
        %v4419 = vmul.f32 1.0, %v4418
        %v4420 = vrcp.pop %v4218
        %v4421 = vmul.f32 %v4218, %v4420
        %v4422 = vsub.f32 1.0, %v4421
        %v4423 = vmul.f32 %v4420, %v4422
        %v4424 = vadd.f32 %v4420, %v4423
        %vm4425 = vweird.f32 %v4218
        %vm4426 = vweird.f32 %v4420
        %vm4427 = vmor %vm4425, %vm4426
        %v4428 = vsel %vm4427, %v4420, %v4424
        %v4429 = vand.u32 2147483647, %v4218
        %vm4430 = vcmp.eq.f32.partialorder %v4429, 8.507059e+37
        %v4431 = vand.u32 %v4218, 2147483648
        %v4432 = vor.u32 1.1754944e-38, %v4431
        %v4433 = vsel %vm4430, %v4432, %v4428
        %v4434 = vmul.f32 1.0, %v4433
        %v4435 = vrcp.pop %v4219
        %v4436 = vmul.f32 %v4219, %v4435
        %v4437 = vsub.f32 1.0, %v4436
        %v4438 = vmul.f32 %v4435, %v4437
        %v4439 = vadd.f32 %v4435, %v4438
        %vm4440 = vweird.f32 %v4219
        %vm4441 = vweird.f32 %v4435
        %vm4442 = vmor %vm4440, %vm4441
        %v4443 = vsel %vm4442, %v4435, %v4439
        %v4444 = vand.u32 2147483647, %v4219
        %vm4445 = vcmp.eq.f32.partialorder %v4444, 8.507059e+37
        %v4446 = vand.u32 %v4219, 2147483648
        %v4447 = vor.u32 1.1754944e-38, %v4446
        %v4448 = vsel %vm4445, %v4447, %v4443
        %v4449 = vmul.f32 1.0, %v4448
        %v4450 = vrcp.pop %v4220
        %v4451 = vmul.f32 %v4220, %v4450
        %v4452 = vsub.f32 1.0, %v4451
        %v4453 = vmul.f32 %v4450, %v4452
        %v4454 = vadd.f32 %v4450, %v4453
        %vm4455 = vweird.f32 %v4220
        %vm4456 = vweird.f32 %v4450
        %vm4457 = vmor %vm4455, %vm4456
        %v4458 = vsel %vm4457, %v4450, %v4454
        %v4459 = vand.u32 2147483647, %v4220
        %vm4460 = vcmp.eq.f32.partialorder %v4459, 8.507059e+37
        %v4461 = vand.u32 %v4220, 2147483648
        %v4462 = vor.u32 1.1754944e-38, %v4461
        %v4463 = vsel %vm4460, %v4462, %v4458
        %v4464 = vmul.f32 1.0, %v4463
        %v4465 = vrcp.pop %v4221
        %v4466 = vmul.f32 %v4221, %v4465
        %v4467 = vsub.f32 1.0, %v4466
        %v4468 = vmul.f32 %v4465, %v4467
        %v4469 = vadd.f32 %v4465, %v4468
        %vm4470 = vweird.f32 %v4221
        %vm4471 = vweird.f32 %v4465
        %vm4472 = vmor %vm4470, %vm4471
        %v4473 = vsel %vm4472, %v4465, %v4469
        %v4474 = vand.u32 2147483647, %v4221
        %vm4475 = vcmp.eq.f32.partialorder %v4474, 8.507059e+37
        %v4476 = vand.u32 %v4221, 2147483648
        %v4477 = vor.u32 1.1754944e-38, %v4476
        %v4478 = vsel %vm4475, %v4477, %v4473
        %v4479 = vmul.f32 1.0, %v4478
        %v4480 = vrcp.pop %v4222
        %v4481 = vmul.f32 %v4222, %v4480
        %v4482 = vsub.f32 1.0, %v4481
        %v4483 = vmul.f32 %v4480, %v4482
        %v4484 = vadd.f32 %v4480, %v4483
        %vm4485 = vweird.f32 %v4222
        %vm4486 = vweird.f32 %v4480
        %vm4487 = vmor %vm4485, %vm4486
        %v4488 = vsel %vm4487, %v4480, %v4484
        %v4489 = vand.u32 2147483647, %v4222
        %vm4490 = vcmp.eq.f32.partialorder %v4489, 8.507059e+37
        %v4491 = vand.u32 %v4222, 2147483648
        %v4492 = vor.u32 1.1754944e-38, %v4491
        %v4493 = vsel %vm4490, %v4492, %v4488
        %v4494 = vmul.f32 1.0, %v4493
        %v4495 = vrcp.pop %v4223
        %v4496 = vmul.f32 %v4223, %v4495
        %v4497 = vsub.f32 1.0, %v4496
        %v4498 = vmul.f32 %v4495, %v4497
        %v4499 = vadd.f32 %v4495, %v4498
        %vm4500 = vweird.f32 %v4223
        %vm4501 = vweird.f32 %v4495
        %vm4502 = vmor %vm4500, %vm4501
        %v4503 = vsel %vm4502, %v4495, %v4499
        %v4504 = vand.u32 2147483647, %v4223
        %vm4505 = vcmp.eq.f32.partialorder %v4504, 8.507059e+37
        %v4506 = vand.u32 %v4223, 2147483648
        %v4507 = vor.u32 1.1754944e-38, %v4506
        %v4508 = vsel %vm4505, %v4507, %v4503
        %v4509 = vmul.f32 1.0, %v4508
        %v4510 = vrcp.pop %v4224
        %v4511 = vmul.f32 %v4224, %v4510
        %v4512 = vsub.f32 1.0, %v4511
        %v4513 = vmul.f32 %v4510, %v4512
        %v4514 = vadd.f32 %v4510, %v4513
        %vm4515 = vweird.f32 %v4224
        %vm4516 = vweird.f32 %v4510
        %vm4517 = vmor %vm4515, %vm4516
        %v4518 = vsel %vm4517, %v4510, %v4514
        %v4519 = vand.u32 2147483647, %v4224
        %vm4520 = vcmp.eq.f32.partialorder %v4519, 8.507059e+37
        %v4521 = vand.u32 %v4224, 2147483648
        %v4522 = vor.u32 1.1754944e-38, %v4521
        %v4523 = vsel %vm4520, %v4522, %v4518
        %v4524 = vmul.f32 1.0, %v4523
        %v4525 = vrcp.pop %v4225
        %v4526 = vmul.f32 %v4225, %v4525
        %v4527 = vsub.f32 1.0, %v4526
        %v4528 = vmul.f32 %v4525, %v4527
        %v4529 = vadd.f32 %v4525, %v4528
        %vm4530 = vweird.f32 %v4225
        %vm4531 = vweird.f32 %v4525
        %vm4532 = vmor %vm4530, %vm4531
        %v4533 = vsel %vm4532, %v4525, %v4529
        %v4534 = vand.u32 2147483647, %v4225
        %vm4535 = vcmp.eq.f32.partialorder %v4534, 8.507059e+37
        %v4536 = vand.u32 %v4225, 2147483648
        %v4537 = vor.u32 1.1754944e-38, %v4536
        %v4538 = vsel %vm4535, %v4537, %v4533
        %v4539 = vmul.f32 1.0, %v4538
        %v4540 = vrcp.pop %v4226
        %v4541 = vmul.f32 %v4226, %v4540
        %v4542 = vsub.f32 1.0, %v4541
        %v4543 = vmul.f32 %v4540, %v4542
        %v4544 = vadd.f32 %v4540, %v4543
        %vm4545 = vweird.f32 %v4226
        %vm4546 = vweird.f32 %v4540
        %vm4547 = vmor %vm4545, %vm4546
        %v4548 = vsel %vm4547, %v4540, %v4544
        %v4549 = vand.u32 2147483647, %v4226
        %vm4550 = vcmp.eq.f32.partialorder %v4549, 8.507059e+37
        %v4551 = vand.u32 %v4226, 2147483648
        %v4552 = vor.u32 1.1754944e-38, %v4551
        %v4553 = vsel %vm4550, %v4552, %v4548
        %v4554 = vmul.f32 1.0, %v4553
        %v4555 = vrcp.pop %v4227
        %v4556 = vmul.f32 %v4227, %v4555
        %v4557 = vsub.f32 1.0, %v4556
        %v4558 = vmul.f32 %v4555, %v4557
        %v4559 = vadd.f32 %v4555, %v4558
        %vm4560 = vweird.f32 %v4227
        %vm4561 = vweird.f32 %v4555
        %vm4562 = vmor %vm4560, %vm4561
        %v4563 = vsel %vm4562, %v4555, %v4559
        %v4564 = vand.u32 2147483647, %v4227
        %vm4565 = vcmp.eq.f32.partialorder %v4564, 8.507059e+37
        %v4566 = vand.u32 %v4227, 2147483648
        %v4567 = vor.u32 1.1754944e-38, %v4566
        %v4568 = vsel %vm4565, %v4567, %v4563
        %v4569 = vmul.f32 1.0, %v4568
        %v4570 = vrcp.pop %v4228
        %v4571 = vmul.f32 %v4228, %v4570
        %v4572 = vsub.f32 1.0, %v4571
        %v4573 = vmul.f32 %v4570, %v4572
        %v4574 = vadd.f32 %v4570, %v4573
        %vm4575 = vweird.f32 %v4228
        %vm4576 = vweird.f32 %v4570
        %vm4577 = vmor %vm4575, %vm4576
        %v4578 = vsel %vm4577, %v4570, %v4574
        %v4579 = vand.u32 2147483647, %v4228
        %vm4580 = vcmp.eq.f32.partialorder %v4579, 8.507059e+37
        %v4581 = vand.u32 %v4228, 2147483648
        %v4582 = vor.u32 1.1754944e-38, %v4581
        %v4583 = vsel %vm4580, %v4582, %v4578
        %v4584 = vmul.f32 1.0, %v4583
        %v4585 = vrcp.pop %v4229
        %v4586 = vmul.f32 %v4229, %v4585
        %v4587 = vsub.f32 1.0, %v4586
        %v4588 = vmul.f32 %v4585, %v4587
        %v4589 = vadd.f32 %v4585, %v4588
        %vm4590 = vweird.f32 %v4229
        %vm4591 = vweird.f32 %v4585
        %vm4592 = vmor %vm4590, %vm4591
        %v4593 = vsel %vm4592, %v4585, %v4589
        %v4594 = vand.u32 2147483647, %v4229
        %vm4595 = vcmp.eq.f32.partialorder %v4594, 8.507059e+37
        %v4596 = vand.u32 %v4229, 2147483648
        %v4597 = vor.u32 1.1754944e-38, %v4596
        %v4598 = vsel %vm4595, %v4597, %v4593
        %v4599 = vmul.f32 1.0, %v4598
        %v4600 = vrcp.pop %v4230
        %v4601 = vmul.f32 %v4230, %v4600
        %v4602 = vsub.f32 1.0, %v4601
        %v4603 = vmul.f32 %v4600, %v4602
        %v4604 = vadd.f32 %v4600, %v4603
        %vm4605 = vweird.f32 %v4230
        %vm4606 = vweird.f32 %v4600
        %vm4607 = vmor %vm4605, %vm4606
        %v4608 = vsel %vm4607, %v4600, %v4604
        %v4609 = vand.u32 2147483647, %v4230
        %vm4610 = vcmp.eq.f32.partialorder %v4609, 8.507059e+37
        %v4611 = vand.u32 %v4230, 2147483648
        %v4612 = vor.u32 1.1754944e-38, %v4611
        %v4613 = vsel %vm4610, %v4612, %v4608
        %v4614 = vmul.f32 1.0, %v4613
        %v4615 = vrcp.pop %v4231
        %v4616 = vmul.f32 %v4231, %v4615
        %v4617 = vsub.f32 1.0, %v4616
        %v4618 = vmul.f32 %v4615, %v4617
        %v4619 = vadd.f32 %v4615, %v4618
        %vm4620 = vweird.f32 %v4231
        %vm4621 = vweird.f32 %v4615
        %vm4622 = vmor %vm4620, %vm4621
        %v4623 = vsel %vm4622, %v4615, %v4619
        %v4624 = vand.u32 2147483647, %v4231
        %vm4625 = vcmp.eq.f32.partialorder %v4624, 8.507059e+37
        %v4626 = vand.u32 %v4231, 2147483648
        %v4627 = vor.u32 1.1754944e-38, %v4626
        %v4628 = vsel %vm4625, %v4627, %v4623
        %v4629 = vmul.f32 1.0, %v4628
        %v4630 = vrcp.pop %v4232
        %v4631 = vmul.f32 %v4232, %v4630
        %v4632 = vsub.f32 1.0, %v4631
        %v4633 = vmul.f32 %v4630, %v4632
        %v4634 = vadd.f32 %v4630, %v4633
        %vm4635 = vweird.f32 %v4232
        %vm4636 = vweird.f32 %v4630
        %vm4637 = vmor %vm4635, %vm4636
        %v4638 = vsel %vm4637, %v4630, %v4634
        %v4639 = vand.u32 2147483647, %v4232
        %vm4640 = vcmp.eq.f32.partialorder %v4639, 8.507059e+37
        %v4641 = vand.u32 %v4232, 2147483648
        %v4642 = vor.u32 1.1754944e-38, %v4641
        %v4643 = vsel %vm4640, %v4642, %v4638
        %v4644 = vmul.f32 1.0, %v4643
        %v4645 = vrcp.pop %v4233
        %v4646 = vmul.f32 %v4233, %v4645
        %v4647 = vsub.f32 1.0, %v4646
        %v4648 = vmul.f32 %v4645, %v4647
        %v4649 = vadd.f32 %v4645, %v4648
        %vm4650 = vweird.f32 %v4233
        %vm4651 = vweird.f32 %v4645
        %vm4652 = vmor %vm4650, %vm4651
        %v4653 = vsel %vm4652, %v4645, %v4649
        %v4654 = vand.u32 2147483647, %v4233
        %vm4655 = vcmp.eq.f32.partialorder %v4654, 8.507059e+37
        %v4656 = vand.u32 %v4233, 2147483648
        %v4657 = vor.u32 1.1754944e-38, %v4656
        %v4658 = vsel %vm4655, %v4657, %v4653
        %v4659 = vmul.f32 1.0, %v4658
        %v4660 = vrcp.pop %v4234
        %v4661 = vmul.f32 %v4234, %v4660
        %v4662 = vsub.f32 1.0, %v4661
        %v4663 = vmul.f32 %v4660, %v4662
        %v4664 = vadd.f32 %v4660, %v4663
        %vm4665 = vweird.f32 %v4234
        %vm4666 = vweird.f32 %v4660
        %vm4667 = vmor %vm4665, %vm4666
        %v4668 = vsel %vm4667, %v4660, %v4664
        %v4669 = vand.u32 2147483647, %v4234
        %vm4670 = vcmp.eq.f32.partialorder %v4669, 8.507059e+37
        %v4671 = vand.u32 %v4234, 2147483648
        %v4672 = vor.u32 1.1754944e-38, %v4671
        %v4673 = vsel %vm4670, %v4672, %v4668
        %v4674 = vmul.f32 1.0, %v4673
        %v4675 = vrcp.pop %v4235
        %v4676 = vmul.f32 %v4235, %v4675
        %v4677 = vsub.f32 1.0, %v4676
        %v4678 = vmul.f32 %v4675, %v4677
        %v4679 = vadd.f32 %v4675, %v4678
        %vm4680 = vweird.f32 %v4235
        %vm4681 = vweird.f32 %v4675
        %vm4682 = vmor %vm4680, %vm4681
        %v4683 = vsel %vm4682, %v4675, %v4679
        %v4684 = vand.u32 2147483647, %v4235
        %vm4685 = vcmp.eq.f32.partialorder %v4684, 8.507059e+37
        %v4686 = vand.u32 %v4235, 2147483648
        %v4687 = vor.u32 1.1754944e-38, %v4686
        %v4688 = vsel %vm4685, %v4687, %v4683
        %v4689 = vmul.f32 1.0, %v4688
        %v4690 = vrcp.pop %v4236
        %v4691 = vmul.f32 %v4236, %v4690
        %v4692 = vsub.f32 1.0, %v4691
        %v4693 = vmul.f32 %v4690, %v4692
        %v4694 = vadd.f32 %v4690, %v4693
        %vm4695 = vweird.f32 %v4236
        %vm4696 = vweird.f32 %v4690
        %vm4697 = vmor %vm4695, %vm4696
        %v4698 = vsel %vm4697, %v4690, %v4694
        %v4699 = vand.u32 2147483647, %v4236
        %vm4700 = vcmp.eq.f32.partialorder %v4699, 8.507059e+37
        %v4701 = vand.u32 %v4236, 2147483648
        %v4702 = vor.u32 1.1754944e-38, %v4701
        %v4703 = vsel %vm4700, %v4702, %v4698
        %v4704 = vmul.f32 1.0, %v4703
        %v4705 = vrcp.pop %v4237
        %v4706 = vmul.f32 %v4237, %v4705
        %v4707 = vsub.f32 1.0, %v4706
        %v4708 = vmul.f32 %v4705, %v4707
        %v4709 = vadd.f32 %v4705, %v4708
        %vm4710 = vweird.f32 %v4237
        %vm4711 = vweird.f32 %v4705
        %vm4712 = vmor %vm4710, %vm4711
        %v4713 = vsel %vm4712, %v4705, %v4709
        %v4714 = vand.u32 2147483647, %v4237
        %vm4715 = vcmp.eq.f32.partialorder %v4714, 8.507059e+37
        %v4716 = vand.u32 %v4237, 2147483648
        %v4717 = vor.u32 1.1754944e-38, %v4716
        %v4718 = vsel %vm4715, %v4717, %v4713
        %v4719 = vmul.f32 1.0, %v4718
        %v4720 = vrcp.pop %v4238
        %v4721 = vmul.f32 %v4238, %v4720
        %v4722 = vsub.f32 1.0, %v4721
        %v4723 = vmul.f32 %v4720, %v4722
        %v4724 = vadd.f32 %v4720, %v4723
        %vm4725 = vweird.f32 %v4238
        %vm4726 = vweird.f32 %v4720
        %vm4727 = vmor %vm4725, %vm4726
        %v4728 = vsel %vm4727, %v4720, %v4724
        %v4729 = vand.u32 2147483647, %v4238
        %vm4730 = vcmp.eq.f32.partialorder %v4729, 8.507059e+37
        %v4731 = vand.u32 %v4238, 2147483648
        %v4732 = vor.u32 1.1754944e-38, %v4731
        %v4733 = vsel %vm4730, %v4732, %v4728
        %v4734 = vmul.f32 1.0, %v4733
        %v4735 = vrcp.pop %v4239
        %v4736 = vmul.f32 %v4239, %v4735
        %v4737 = vsub.f32 1.0, %v4736
        %v4738 = vmul.f32 %v4735, %v4737
        %v4739 = vadd.f32 %v4735, %v4738
        %vm4740 = vweird.f32 %v4239
        %vm4741 = vweird.f32 %v4735
        %vm4742 = vmor %vm4740, %vm4741
        %v4743 = vsel %vm4742, %v4735, %v4739
        %v4744 = vand.u32 2147483647, %v4239
        %vm4745 = vcmp.eq.f32.partialorder %v4744, 8.507059e+37
        %v4746 = vand.u32 %v4239, 2147483648
        %v4747 = vor.u32 1.1754944e-38, %v4746
        %v4748 = vsel %vm4745, %v4747, %v4743
        %v4749 = vmul.f32 1.0, %v4748
        %v4750 = vrcp.pop %v4240
        %v4751 = vmul.f32 %v4240, %v4750
        %v4752 = vsub.f32 1.0, %v4751
        %v4753 = vmul.f32 %v4750, %v4752
        %v4754 = vadd.f32 %v4750, %v4753
        %vm4755 = vweird.f32 %v4240
        %vm4756 = vweird.f32 %v4750
        %vm4757 = vmor %vm4755, %vm4756
        %v4758 = vsel %vm4757, %v4750, %v4754
        %v4759 = vand.u32 2147483647, %v4240
        %vm4760 = vcmp.eq.f32.partialorder %v4759, 8.507059e+37
        %v4761 = vand.u32 %v4240, 2147483648
        %v4762 = vor.u32 1.1754944e-38, %v4761
        %v4763 = vsel %vm4760, %v4762, %v4758
        %v4764 = vmul.f32 1.0, %v4763
        %v4765 = vrcp.pop %v4241
        %v4766 = vmul.f32 %v4241, %v4765
        %v4767 = vsub.f32 1.0, %v4766
        %v4768 = vmul.f32 %v4765, %v4767
        %v4769 = vadd.f32 %v4765, %v4768
        %vm4770 = vweird.f32 %v4241
        %vm4771 = vweird.f32 %v4765
        %vm4772 = vmor %vm4770, %vm4771
        %v4773 = vsel %vm4772, %v4765, %v4769
        %v4774 = vand.u32 2147483647, %v4241
        %vm4775 = vcmp.eq.f32.partialorder %v4774, 8.507059e+37
        %v4776 = vand.u32 %v4241, 2147483648
        %v4777 = vor.u32 1.1754944e-38, %v4776
        %v4778 = vsel %vm4775, %v4777, %v4773
        %v4779 = vmul.f32 1.0, %v4778
        %v4780 = vrcp.pop %v4242
        %v4781 = vmul.f32 %v4242, %v4780
        %v4782 = vsub.f32 1.0, %v4781
        %v4783 = vmul.f32 %v4780, %v4782
        %v4784 = vadd.f32 %v4780, %v4783
        %vm4785 = vweird.f32 %v4242
        %vm4786 = vweird.f32 %v4780
        %vm4787 = vmor %vm4785, %vm4786
        %v4788 = vsel %vm4787, %v4780, %v4784
        %v4789 = vand.u32 2147483647, %v4242
        %vm4790 = vcmp.eq.f32.partialorder %v4789, 8.507059e+37
        %v4791 = vand.u32 %v4242, 2147483648
        %v4792 = vor.u32 1.1754944e-38, %v4791
        %v4793 = vsel %vm4790, %v4792, %v4788
        %v4794 = vmul.f32 1.0, %v4793
        %v4795 = vrcp.pop %v4243
        %v4796 = vmul.f32 %v4243, %v4795
        %v4797 = vsub.f32 1.0, %v4796
        %v4798 = vmul.f32 %v4795, %v4797
        %v4799 = vadd.f32 %v4795, %v4798
        %vm4800 = vweird.f32 %v4243
        %vm4801 = vweird.f32 %v4795
        %vm4802 = vmor %vm4800, %vm4801
        %v4803 = vsel %vm4802, %v4795, %v4799
        %v4804 = vand.u32 2147483647, %v4243
        %vm4805 = vcmp.eq.f32.partialorder %v4804, 8.507059e+37
        %v4806 = vand.u32 %v4243, 2147483648
        %v4807 = vor.u32 1.1754944e-38, %v4806
        %v4808 = vsel %vm4805, %v4807, %v4803
        %v4809 = vmul.f32 1.0, %v4808
        %v4810 = vrcp.pop %v4244
        %v4811 = vmul.f32 %v4244, %v4810
        %v4812 = vsub.f32 1.0, %v4811
        %v4813 = vmul.f32 %v4810, %v4812
        %v4814 = vadd.f32 %v4810, %v4813
        %vm4815 = vweird.f32 %v4244
        %vm4816 = vweird.f32 %v4810
        %vm4817 = vmor %vm4815, %vm4816
        %v4818 = vsel %vm4817, %v4810, %v4814
        %v4819 = vand.u32 2147483647, %v4244
        %vm4820 = vcmp.eq.f32.partialorder %v4819, 8.507059e+37
        %v4821 = vand.u32 %v4244, 2147483648
        %v4822 = vor.u32 1.1754944e-38, %v4821
        %v4823 = vsel %vm4820, %v4822, %v4818
        %v4824 = vmul.f32 1.0, %v4823
        %v4825 = vrcp.pop %v4245
        %v4826 = vmul.f32 %v4245, %v4825
        %v4827 = vsub.f32 1.0, %v4826
        %v4828 = vmul.f32 %v4825, %v4827
        %v4829 = vadd.f32 %v4825, %v4828
        %vm4830 = vweird.f32 %v4245
        %vm4831 = vweird.f32 %v4825
        %vm4832 = vmor %vm4830, %vm4831
        %v4833 = vsel %vm4832, %v4825, %v4829
        %v4834 = vand.u32 2147483647, %v4245
        %vm4835 = vcmp.eq.f32.partialorder %v4834, 8.507059e+37
        %v4836 = vand.u32 %v4245, 2147483648
        %v4837 = vor.u32 1.1754944e-38, %v4836
        %v4838 = vsel %vm4835, %v4837, %v4833
        %v4839 = vmul.f32 1.0, %v4838
        %v4840 = vrcp.pop %v4246
        %v4841 = vmul.f32 %v4246, %v4840
        %v4842 = vsub.f32 1.0, %v4841
        %v4843 = vmul.f32 %v4840, %v4842
        %v4844 = vadd.f32 %v4840, %v4843
        %vm4845 = vweird.f32 %v4246
        %vm4846 = vweird.f32 %v4840
        %vm4847 = vmor %vm4845, %vm4846
        %v4848 = vsel %vm4847, %v4840, %v4844
        %v4849 = vand.u32 2147483647, %v4246
        %vm4850 = vcmp.eq.f32.partialorder %v4849, 8.507059e+37
        %v4851 = vand.u32 %v4246, 2147483648
        %v4852 = vor.u32 1.1754944e-38, %v4851
        %v4853 = vsel %vm4850, %v4852, %v4848
        %v4854 = vmul.f32 1.0, %v4853
        %v4855 = vrcp.pop %v4247
        %v4856 = vmul.f32 %v4247, %v4855
        %v4857 = vsub.f32 1.0, %v4856
        %v4858 = vmul.f32 %v4855, %v4857
        %v4859 = vadd.f32 %v4855, %v4858
        %vm4860 = vweird.f32 %v4247
        %vm4861 = vweird.f32 %v4855
        %vm4862 = vmor %vm4860, %vm4861
        %v4863 = vsel %vm4862, %v4855, %v4859
        %v4864 = vand.u32 2147483647, %v4247
        %vm4865 = vcmp.eq.f32.partialorder %v4864, 8.507059e+37
        %v4866 = vand.u32 %v4247, 2147483648
        %v4867 = vor.u32 1.1754944e-38, %v4866
        %v4868 = vsel %vm4865, %v4867, %v4863
        %v4869 = vmul.f32 1.0, %v4868
        %v4870 = vrcp.pop %v4248
        %v4871 = vmul.f32 %v4248, %v4870
        %v4872 = vsub.f32 1.0, %v4871
        %v4873 = vmul.f32 %v4870, %v4872
        %v4874 = vadd.f32 %v4870, %v4873
        %vm4875 = vweird.f32 %v4248
        %vm4876 = vweird.f32 %v4870
        %vm4877 = vmor %vm4875, %vm4876
        %v4878 = vsel %vm4877, %v4870, %v4874
        %v4879 = vand.u32 2147483647, %v4248
        %vm4880 = vcmp.eq.f32.partialorder %v4879, 8.507059e+37
        %v4881 = vand.u32 %v4248, 2147483648
        %v4882 = vor.u32 1.1754944e-38, %v4881
        %v4883 = vsel %vm4880, %v4882, %v4878
        %v4884 = vmul.f32 1.0, %v4883
        %v4885 = vrcp.pop %v4249
        %v4886 = vmul.f32 %v4249, %v4885
        %v4887 = vsub.f32 1.0, %v4886
        %v4888 = vmul.f32 %v4885, %v4887
        %v4889 = vadd.f32 %v4885, %v4888
        %vm4890 = vweird.f32 %v4249
        %vm4891 = vweird.f32 %v4885
        %vm4892 = vmor %vm4890, %vm4891
        %v4893 = vsel %vm4892, %v4885, %v4889
        %v4894 = vand.u32 2147483647, %v4249
        %vm4895 = vcmp.eq.f32.partialorder %v4894, 8.507059e+37
        %v4896 = vand.u32 %v4249, 2147483648
        %v4897 = vor.u32 1.1754944e-38, %v4896
        %v4898 = vsel %vm4895, %v4897, %v4893
        %v4899 = vmul.f32 1.0, %v4898
        %v4900 = vrcp.pop %v4250
        %v4901 = vmul.f32 %v4250, %v4900
        %v4902 = vsub.f32 1.0, %v4901
        %v4903 = vmul.f32 %v4900, %v4902
        %v4904 = vadd.f32 %v4900, %v4903
        %vm4905 = vweird.f32 %v4250
        %vm4906 = vweird.f32 %v4900
        %vm4907 = vmor %vm4905, %vm4906
        %v4908 = vsel %vm4907, %v4900, %v4904
        %v4909 = vand.u32 2147483647, %v4250
        %vm4910 = vcmp.eq.f32.partialorder %v4909, 8.507059e+37
        %v4911 = vand.u32 %v4250, 2147483648
        %v4912 = vor.u32 1.1754944e-38, %v4911
        %v4913 = vsel %vm4910, %v4912, %v4908
        %v4914 = vmul.f32 1.0, %v4913
        %v4915 = vrcp.pop %v4251
        %v4916 = vmul.f32 %v4251, %v4915
        %v4917 = vsub.f32 1.0, %v4916
        %v4918 = vmul.f32 %v4915, %v4917
        %v4919 = vadd.f32 %v4915, %v4918
        %vm4920 = vweird.f32 %v4251
        %vm4921 = vweird.f32 %v4915
        %vm4922 = vmor %vm4920, %vm4921
        %v4923 = vsel %vm4922, %v4915, %v4919
        %v4924 = vand.u32 2147483647, %v4251
        %vm4925 = vcmp.eq.f32.partialorder %v4924, 8.507059e+37
        %v4926 = vand.u32 %v4251, 2147483648
        %v4927 = vor.u32 1.1754944e-38, %v4926
        %v4928 = vsel %vm4925, %v4927, %v4923
        %v4929 = vmul.f32 1.0, %v4928
        %v4930 = vrcp.pop %v4252
        %v4931 = vmul.f32 %v4252, %v4930
        %v4932 = vsub.f32 1.0, %v4931
        %v4933 = vmul.f32 %v4930, %v4932
        %v4934 = vadd.f32 %v4930, %v4933
        %vm4935 = vweird.f32 %v4252
        %vm4936 = vweird.f32 %v4930
        %vm4937 = vmor %vm4935, %vm4936
        %v4938 = vsel %vm4937, %v4930, %v4934
        %v4939 = vand.u32 2147483647, %v4252
        %vm4940 = vcmp.eq.f32.partialorder %v4939, 8.507059e+37
        %v4941 = vand.u32 %v4252, 2147483648
        %v4942 = vor.u32 1.1754944e-38, %v4941
        %v4943 = vsel %vm4940, %v4942, %v4938
        %v4944 = vmul.f32 1.0, %v4943
        %v4945 = vrcp.pop %v4253
        %v4946 = vmul.f32 %v4253, %v4945
        %v4947 = vsub.f32 1.0, %v4946
        %v4948 = vmul.f32 %v4945, %v4947
        %v4949 = vadd.f32 %v4945, %v4948
        %vm4950 = vweird.f32 %v4253
        %vm4951 = vweird.f32 %v4945
        %vm4952 = vmor %vm4950, %vm4951
        %v4953 = vsel %vm4952, %v4945, %v4949
        %v4954 = vand.u32 2147483647, %v4253
        %vm4955 = vcmp.eq.f32.partialorder %v4954, 8.507059e+37
        %v4956 = vand.u32 %v4253, 2147483648
        %v4957 = vor.u32 1.1754944e-38, %v4956
        %v4958 = vsel %vm4955, %v4957, %v4953
        %v4959 = vmul.f32 1.0, %v4958
        %v4960 = vrcp.pop %v4254
        %v4961 = vmul.f32 %v4254, %v4960
        %v4962 = vsub.f32 1.0, %v4961
        %v4963 = vmul.f32 %v4960, %v4962
        %v4964 = vadd.f32 %v4960, %v4963
        %vm4965 = vweird.f32 %v4254
        %vm4966 = vweird.f32 %v4960
        %vm4967 = vmor %vm4965, %vm4966
        %v4968 = vsel %vm4967, %v4960, %v4964
        %v4969 = vand.u32 2147483647, %v4254
        %vm4970 = vcmp.eq.f32.partialorder %v4969, 8.507059e+37
        %v4971 = vand.u32 %v4254, 2147483648
        %v4972 = vor.u32 1.1754944e-38, %v4971
        %v4973 = vsel %vm4970, %v4972, %v4968
        %v4974 = vmul.f32 1.0, %v4973
        %v4975 = vmul.f32 %v4015, %v4269
        %v4976 = vmul.f32 %v4016, %v4284
        %v4977 = vmul.f32 %v4017, %v4299
        %v4978 = vmul.f32 %v4018, %v4314
        %v4979 = vmul.f32 %v4019, %v4329
        %v4980 = vmul.f32 %v4020, %v4344
        %v4981 = vmul.f32 %v4021, %v4359
        %v4982 = vmul.f32 %v4022, %v4374
        %v4983 = vmul.f32 %v4023, %v4389
        %v4984 = vmul.f32 %v4024, %v4404
        %v4985 = vmul.f32 %v4025, %v4419
        %v4986 = vmul.f32 %v4026, %v4434
        %v4987 = vmul.f32 %v4027, %v4449
        %v4988 = vmul.f32 %v4028, %v4464
        %v4989 = vmul.f32 %v4029, %v4479
        %v4990 = vmul.f32 %v4030, %v4494
        %v4991 = vmul.f32 %v4031, %v4509
        %v4992 = vmul.f32 %v4032, %v4524
        %v4993 = vmul.f32 %v4033, %v4539
        %v4994 = vmul.f32 %v4034, %v4554
        %v4995 = vmul.f32 %v4035, %v4569
        %v4996 = vmul.f32 %v4036, %v4584
        %v4997 = vmul.f32 %v4037, %v4599
        %v4998 = vmul.f32 %v4038, %v4614
        %v4999 = vmul.f32 %v4039, %v4629
        %v5000 = vmul.f32 %v4040, %v4644
        %v5001 = vmul.f32 %v4041, %v4659
        %v5002 = vmul.f32 %v4042, %v4674
        %v5003 = vmul.f32 %v4043, %v4689
        %v5004 = vmul.f32 %v4044, %v4704
        %v5005 = vmul.f32 %v4045, %v4719
        %v5006 = vmul.f32 %v4046, %v4734
        %v5007 = vmul.f32 %v4047, %v4749
        %v5008 = vmul.f32 %v4048, %v4764
        %v5009 = vmul.f32 %v4049, %v4779
        %v5010 = vmul.f32 %v4050, %v4794
        %v5011 = vmul.f32 %v4051, %v4809
        %v5012 = vmul.f32 %v4052, %v4824
        %v5013 = vmul.f32 %v4053, %v4839
        %v5014 = vmul.f32 %v4054, %v4854
        %v5015 = vmul.f32 %v4055, %v4869
        %v5016 = vmul.f32 %v4056, %v4884
        %v5017 = vmul.f32 %v4057, %v4899
        %v5018 = vmul.f32 %v4058, %v4914
        %v5019 = vmul.f32 %v4059, %v4929
        %v5020 = vmul.f32 %v4060, %v4944
        %v5021 = vmul.f32 %v4061, %v4959
        %v5022 = vmul.f32 %v4062, %v4974
        %v5023 = vld [vmem:[#allocation7] sm:$0x3]
        %v5024 = vld [vmem:[%s4] sm:$0x3]
        %5026 = vset.pattern.permute.xlu0 0
        %5027 = vperm.xlu0 %5026, %v5024
        %v5028 = vpop.permute.xlu0 %5027
        %vm5030 = vcmask 392192
        %v5032 = vsel %vm5030, %v5023, 0
        %5034 = vmatpush.msra.mxu0 0.0
        %5035 = vmatpush.msra.mxu0 0.0
        %5036 = vmatpush.msra.mxu0 0.0
        %5037 = vmatpush.msra.mxu0 0.0
        %5038 = vmatpush.msra.mxu0 0.0
        %5039 = vmatpush.msra.mxu0 0.0
        %5040 = vmatpush.msra.mxu0 0.0
        %5041 = vmatpush.msra.mxu0 0.0
        %5042 = vmatpush.msra.mxu0 0.0
        %5043 = vmatpush.msra.mxu0 0.0
        %5044 = vmatpush.msra.mxu0 %v5015
        %5045 = vmatpush.msra.mxu0 %v5007
        %5046 = vmatpush.msra.mxu0 %v4999
        %5047 = vmatpush.msra.mxu0 %v4991
        %5048 = vmatpush.msra.mxu0 %v4983
        %5049 = vmatpush.msra.mxu0 %v4975
        %5050 = vmatmul.f32.gmra.mxu0 %v5032
        %v5051 = vpop.f32.mrf.mxu0
        %v5052 = vadd.f32 %v5028, %v5051
        %5053 = vdwg.mxu0
        %5054 = vmatpush.msra.mxu0 0.0
        %5055 = vmatpush.msra.mxu0 0.0
        %5056 = vmatpush.msra.mxu0 0.0
        %5057 = vmatpush.msra.mxu0 0.0
        %5058 = vmatpush.msra.mxu0 0.0
        %5059 = vmatpush.msra.mxu0 0.0
        %5060 = vmatpush.msra.mxu0 0.0
        %5061 = vmatpush.msra.mxu0 0.0
        %5062 = vmatpush.msra.mxu0 0.0
        %5063 = vmatpush.msra.mxu0 0.0
        %5064 = vmatpush.msra.mxu0 %v5016
        %5065 = vmatpush.msra.mxu0 %v5008
        %5066 = vmatpush.msra.mxu0 %v5000
        %5067 = vmatpush.msra.mxu0 %v4992
        %5068 = vmatpush.msra.mxu0 %v4984
        %5069 = vmatpush.msra.mxu0 %v4976
        %5070 = vmatmul.f32.gmra.mxu0 %v5032
        %v5071 = vpop.f32.mrf.mxu0
        %v5072 = vadd.f32 %v5028, %v5071
        %5073 = vdwg.mxu0
        %5074 = vmatpush.msra.mxu0 0.0
        %5075 = vmatpush.msra.mxu0 0.0
        %5076 = vmatpush.msra.mxu0 0.0
        %5077 = vmatpush.msra.mxu0 0.0
        %5078 = vmatpush.msra.mxu0 0.0
        %5079 = vmatpush.msra.mxu0 0.0
        %5080 = vmatpush.msra.mxu0 0.0
        %5081 = vmatpush.msra.mxu0 0.0
        %5082 = vmatpush.msra.mxu0 0.0
        %5083 = vmatpush.msra.mxu0 0.0
        %5084 = vmatpush.msra.mxu0 %v5017
        %5085 = vmatpush.msra.mxu0 %v5009
        %5086 = vmatpush.msra.mxu0 %v5001
        %5087 = vmatpush.msra.mxu0 %v4993
        %5088 = vmatpush.msra.mxu0 %v4985
        %5089 = vmatpush.msra.mxu0 %v4977
        %5090 = vmatmul.f32.gmra.mxu0 %v5032
        %v5091 = vpop.f32.mrf.mxu0
        %v5092 = vadd.f32 %v5028, %v5091
        %5093 = vdwg.mxu0
        %5094 = vmatpush.msra.mxu0 0.0
        %5095 = vmatpush.msra.mxu0 0.0
        %5096 = vmatpush.msra.mxu0 0.0
        %5097 = vmatpush.msra.mxu0 0.0
        %5098 = vmatpush.msra.mxu0 0.0
        %5099 = vmatpush.msra.mxu0 0.0
        %5100 = vmatpush.msra.mxu0 0.0
        %5101 = vmatpush.msra.mxu0 0.0
        %5102 = vmatpush.msra.mxu0 0.0
        %5103 = vmatpush.msra.mxu0 0.0
        %5104 = vmatpush.msra.mxu0 %v5018
        %5105 = vmatpush.msra.mxu0 %v5010
        %5106 = vmatpush.msra.mxu0 %v5002
        %5107 = vmatpush.msra.mxu0 %v4994
        %5108 = vmatpush.msra.mxu0 %v4986
        %5109 = vmatpush.msra.mxu0 %v4978
        %5110 = vmatmul.f32.gmra.mxu0 %v5032
        %v5111 = vpop.f32.mrf.mxu0
        %v5112 = vadd.f32 %v5028, %v5111
        %5113 = vdwg.mxu0
        %5114 = vmatpush.msra.mxu0 0.0
        %5115 = vmatpush.msra.mxu0 0.0
        %5116 = vmatpush.msra.mxu0 0.0
        %5117 = vmatpush.msra.mxu0 0.0
        %5118 = vmatpush.msra.mxu0 0.0
        %5119 = vmatpush.msra.mxu0 0.0
        %5120 = vmatpush.msra.mxu0 0.0
        %5121 = vmatpush.msra.mxu0 0.0
        %5122 = vmatpush.msra.mxu0 0.0
        %5123 = vmatpush.msra.mxu0 0.0
        %5124 = vmatpush.msra.mxu0 %v5019
        %5125 = vmatpush.msra.mxu0 %v5011
        %5126 = vmatpush.msra.mxu0 %v5003
        %5127 = vmatpush.msra.mxu0 %v4995
        %5128 = vmatpush.msra.mxu0 %v4987
        %5129 = vmatpush.msra.mxu0 %v4979
        %5130 = vmatmul.f32.gmra.mxu0 %v5032
        %v5131 = vpop.f32.mrf.mxu0
        %v5132 = vadd.f32 %v5028, %v5131
        %5133 = vdwg.mxu0
        %5134 = vmatpush.msra.mxu0 0.0
        %5135 = vmatpush.msra.mxu0 0.0
        %5136 = vmatpush.msra.mxu0 0.0
        %5137 = vmatpush.msra.mxu0 0.0
        %5138 = vmatpush.msra.mxu0 0.0
        %5139 = vmatpush.msra.mxu0 0.0
        %5140 = vmatpush.msra.mxu0 0.0
        %5141 = vmatpush.msra.mxu0 0.0
        %5142 = vmatpush.msra.mxu0 0.0
        %5143 = vmatpush.msra.mxu0 0.0
        %5144 = vmatpush.msra.mxu0 %v5020
        %5145 = vmatpush.msra.mxu0 %v5012
        %5146 = vmatpush.msra.mxu0 %v5004
        %5147 = vmatpush.msra.mxu0 %v4996
        %5148 = vmatpush.msra.mxu0 %v4988
        %5149 = vmatpush.msra.mxu0 %v4980
        %5150 = vmatmul.f32.gmra.mxu0 %v5032
        %v5151 = vpop.f32.mrf.mxu0
        %v5152 = vadd.f32 %v5028, %v5151
        %5153 = vdwg.mxu0
        %5154 = vmatpush.msra.mxu0 0.0
        %5155 = vmatpush.msra.mxu0 0.0
        %5156 = vmatpush.msra.mxu0 0.0
        %5157 = vmatpush.msra.mxu0 0.0
        %5158 = vmatpush.msra.mxu0 0.0
        %5159 = vmatpush.msra.mxu0 0.0
        %5160 = vmatpush.msra.mxu0 0.0
        %5161 = vmatpush.msra.mxu0 0.0
        %5162 = vmatpush.msra.mxu0 0.0
        %5163 = vmatpush.msra.mxu0 0.0
        %5164 = vmatpush.msra.mxu0 %v5021
        %5165 = vmatpush.msra.mxu0 %v5013
        %5166 = vmatpush.msra.mxu0 %v5005
        %5167 = vmatpush.msra.mxu0 %v4997
        %5168 = vmatpush.msra.mxu0 %v4989
        %5169 = vmatpush.msra.mxu0 %v4981
        %5170 = vmatmul.f32.gmra.mxu0 %v5032
        %v5171 = vpop.f32.mrf.mxu0
        %v5172 = vadd.f32 %v5028, %v5171
        %5173 = vdwg.mxu0
        %5174 = vmatpush.msra.mxu0 0.0
        %5175 = vmatpush.msra.mxu0 0.0
        %5176 = vmatpush.msra.mxu0 0.0
        %5177 = vmatpush.msra.mxu0 0.0
        %5178 = vmatpush.msra.mxu0 0.0
        %5179 = vmatpush.msra.mxu0 0.0
        %5180 = vmatpush.msra.mxu0 0.0
        %5181 = vmatpush.msra.mxu0 0.0
        %5182 = vmatpush.msra.mxu0 0.0
        %5183 = vmatpush.msra.mxu0 0.0
        %5184 = vmatpush.msra.mxu0 %v5022
        %5185 = vmatpush.msra.mxu0 %v5014
        %5186 = vmatpush.msra.mxu0 %v5006
        %5187 = vmatpush.msra.mxu0 %v4998
        %5188 = vmatpush.msra.mxu0 %v4990
        %5189 = vmatpush.msra.mxu0 %v4982
        %5190 = vmatmul.f32.gmra.mxu0 %v5032
        %v5191 = vpop.f32.mrf.mxu0
        %v5192 = vadd.f32 %v5028, %v5191
        %5193 = vdwg.mxu0
        %v5194 = vxor.u32 %v5052, 2147483648
        %v5195 = vxor.u32 %v5072, 2147483648
        %v5196 = vxor.u32 %v5092, 2147483648
        %v5197 = vxor.u32 %v5112, 2147483648
        %v5198 = vxor.u32 %v5132, 2147483648
        %v5199 = vxor.u32 %v5152, 2147483648
        %v5200 = vxor.u32 %v5172, 2147483648
        %v5201 = vxor.u32 %v5192, 2147483648
        %v5202 = vmul.f32 %v5194, 1.442695
        %v5203 = vpow.pop %v5202
        %v5204 = vmul.f32 %v5195, 1.442695
        %v5205 = vpow.pop %v5204
        %v5206 = vmul.f32 %v5196, 1.442695
        %v5207 = vpow.pop %v5206
        %v5208 = vmul.f32 %v5197, 1.442695
        %v5209 = vpow.pop %v5208
        %v5210 = vmul.f32 %v5198, 1.442695
        %v5211 = vpow.pop %v5210
        %v5212 = vmul.f32 %v5199, 1.442695
        %v5213 = vpow.pop %v5212
        %v5214 = vmul.f32 %v5200, 1.442695
        %v5215 = vpow.pop %v5214
        %v5216 = vmul.f32 %v5201, 1.442695
        %v5217 = vpow.pop %v5216
        %v5218 = vadd.f32 %v5203, 1.0
        %v5219 = vadd.f32 %v5205, 1.0
        %v5220 = vadd.f32 %v5207, 1.0
        %v5221 = vadd.f32 %v5209, 1.0
        %v5222 = vadd.f32 %v5211, 1.0
        %v5223 = vadd.f32 %v5213, 1.0
        %v5224 = vadd.f32 %v5215, 1.0
        %v5225 = vadd.f32 %v5217, 1.0
        %v5226 = vrcp.pop %v5218
        %v5227 = vmul.f32 %v5218, %v5226
        %v5228 = vsub.f32 1.0, %v5227
        %v5229 = vmul.f32 %v5226, %v5228
        %v5230 = vadd.f32 %v5226, %v5229
        %vm5231 = vweird.f32 %v5218
        %vm5232 = vweird.f32 %v5226
        %vm5233 = vmor %vm5231, %vm5232
        %v5234 = vsel %vm5233, %v5226, %v5230
        %v5235 = vand.u32 2147483647, %v5218
        %vm5236 = vcmp.eq.f32.partialorder %v5235, 8.507059e+37
        %v5237 = vand.u32 %v5218, 2147483648
        %v5238 = vor.u32 1.1754944e-38, %v5237
        %v5239 = vsel %vm5236, %v5238, %v5234
        %v5240 = vmul.f32 1.0, %v5239
        %v5241 = vrcp.pop %v5219
        %v5242 = vmul.f32 %v5219, %v5241
        %v5243 = vsub.f32 1.0, %v5242
        %v5244 = vmul.f32 %v5241, %v5243
        %v5245 = vadd.f32 %v5241, %v5244
        %vm5246 = vweird.f32 %v5219
        %vm5247 = vweird.f32 %v5241
        %vm5248 = vmor %vm5246, %vm5247
        %v5249 = vsel %vm5248, %v5241, %v5245
        %v5250 = vand.u32 2147483647, %v5219
        %vm5251 = vcmp.eq.f32.partialorder %v5250, 8.507059e+37
        %v5252 = vand.u32 %v5219, 2147483648
        %v5253 = vor.u32 1.1754944e-38, %v5252
        %v5254 = vsel %vm5251, %v5253, %v5249
        %v5255 = vmul.f32 1.0, %v5254
        %v5256 = vrcp.pop %v5220
        %v5257 = vmul.f32 %v5220, %v5256
        %v5258 = vsub.f32 1.0, %v5257
        %v5259 = vmul.f32 %v5256, %v5258
        %v5260 = vadd.f32 %v5256, %v5259
        %vm5261 = vweird.f32 %v5220
        %vm5262 = vweird.f32 %v5256
        %vm5263 = vmor %vm5261, %vm5262
        %v5264 = vsel %vm5263, %v5256, %v5260
        %v5265 = vand.u32 2147483647, %v5220
        %vm5266 = vcmp.eq.f32.partialorder %v5265, 8.507059e+37
        %v5267 = vand.u32 %v5220, 2147483648
        %v5268 = vor.u32 1.1754944e-38, %v5267
        %v5269 = vsel %vm5266, %v5268, %v5264
        %v5270 = vmul.f32 1.0, %v5269
        %v5271 = vrcp.pop %v5221
        %v5272 = vmul.f32 %v5221, %v5271
        %v5273 = vsub.f32 1.0, %v5272
        %v5274 = vmul.f32 %v5271, %v5273
        %v5275 = vadd.f32 %v5271, %v5274
        %vm5276 = vweird.f32 %v5221
        %vm5277 = vweird.f32 %v5271
        %vm5278 = vmor %vm5276, %vm5277
        %v5279 = vsel %vm5278, %v5271, %v5275
        %v5280 = vand.u32 2147483647, %v5221
        %vm5281 = vcmp.eq.f32.partialorder %v5280, 8.507059e+37
        %v5282 = vand.u32 %v5221, 2147483648
        %v5283 = vor.u32 1.1754944e-38, %v5282
        %v5284 = vsel %vm5281, %v5283, %v5279
        %v5285 = vmul.f32 1.0, %v5284
        %v5286 = vrcp.pop %v5222
        %v5287 = vmul.f32 %v5222, %v5286
        %v5288 = vsub.f32 1.0, %v5287
        %v5289 = vmul.f32 %v5286, %v5288
        %v5290 = vadd.f32 %v5286, %v5289
        %vm5291 = vweird.f32 %v5222
        %vm5292 = vweird.f32 %v5286
        %vm5293 = vmor %vm5291, %vm5292
        %v5294 = vsel %vm5293, %v5286, %v5290
        %v5295 = vand.u32 2147483647, %v5222
        %vm5296 = vcmp.eq.f32.partialorder %v5295, 8.507059e+37
        %v5297 = vand.u32 %v5222, 2147483648
        %v5298 = vor.u32 1.1754944e-38, %v5297
        %v5299 = vsel %vm5296, %v5298, %v5294
        %v5300 = vmul.f32 1.0, %v5299
        %v5301 = vrcp.pop %v5223
        %v5302 = vmul.f32 %v5223, %v5301
        %v5303 = vsub.f32 1.0, %v5302
        %v5304 = vmul.f32 %v5301, %v5303
        %v5305 = vadd.f32 %v5301, %v5304
        %vm5306 = vweird.f32 %v5223
        %vm5307 = vweird.f32 %v5301
        %vm5308 = vmor %vm5306, %vm5307
        %v5309 = vsel %vm5308, %v5301, %v5305
        %v5310 = vand.u32 2147483647, %v5223
        %vm5311 = vcmp.eq.f32.partialorder %v5310, 8.507059e+37
        %v5312 = vand.u32 %v5223, 2147483648
        %v5313 = vor.u32 1.1754944e-38, %v5312
        %v5314 = vsel %vm5311, %v5313, %v5309
        %v5315 = vmul.f32 1.0, %v5314
        %v5316 = vrcp.pop %v5224
        %v5317 = vmul.f32 %v5224, %v5316
        %v5318 = vsub.f32 1.0, %v5317
        %v5319 = vmul.f32 %v5316, %v5318
        %v5320 = vadd.f32 %v5316, %v5319
        %vm5321 = vweird.f32 %v5224
        %vm5322 = vweird.f32 %v5316
        %vm5323 = vmor %vm5321, %vm5322
        %v5324 = vsel %vm5323, %v5316, %v5320
        %v5325 = vand.u32 2147483647, %v5224
        %vm5326 = vcmp.eq.f32.partialorder %v5325, 8.507059e+37
        %v5327 = vand.u32 %v5224, 2147483648
        %v5328 = vor.u32 1.1754944e-38, %v5327
        %v5329 = vsel %vm5326, %v5328, %v5324
        %v5330 = vmul.f32 1.0, %v5329
        %v5331 = vrcp.pop %v5225
        %v5332 = vmul.f32 %v5225, %v5331
        %v5333 = vsub.f32 1.0, %v5332
        %v5334 = vmul.f32 %v5331, %v5333
        %v5335 = vadd.f32 %v5331, %v5334
        %vm5336 = vweird.f32 %v5225
        %vm5337 = vweird.f32 %v5331
        %vm5338 = vmor %vm5336, %vm5337
        %v5339 = vsel %vm5338, %v5331, %v5335
        %v5340 = vand.u32 2147483647, %v5225
        %vm5341 = vcmp.eq.f32.partialorder %v5340, 8.507059e+37
        %v5342 = vand.u32 %v5225, 2147483648
        %v5343 = vor.u32 1.1754944e-38, %v5342
        %v5344 = vsel %vm5341, %v5343, %v5339
        %v5345 = vmul.f32 1.0, %v5344
        %v5346 = vmul.f32 %v5052, %v5240
        %v5347 = vmul.f32 %v5072, %v5255
        %v5348 = vmul.f32 %v5092, %v5270
        %v5349 = vmul.f32 %v5112, %v5285
        %v5350 = vmul.f32 %v5132, %v5300
        %v5351 = vmul.f32 %v5152, %v5315
        %v5352 = vmul.f32 %v5172, %v5330
        %v5353 = vmul.f32 %v5192, %v5345
        %v5354 = vld [vmem:[%s6] sm:$0xff]
        %v5355 = vld [vmem:[%s6 + $0x8] sm:$0xff]
        %v5356 = vld [vmem:[%s6 + $0x10] sm:$0xff]
        %v5357 = vld [vmem:[%s6 + $0x18] sm:$0xff]
        %v5358 = vld [vmem:[%s6 + $0x20] sm:$0xff]
        %v5359 = vld [vmem:[%s6 + $0x28] sm:$0xff]
        %v5360 = vld [vmem:[%s5] sm:$0xff]
        %v5361 = vld [vmem:[%s5 + $0x8] sm:$0xff]
        %v5362 = vld [vmem:[%s5 + $0x10] sm:$0xff]
        %v5363 = vld [vmem:[%s5 + $0x18] sm:$0xff]
        %v5364 = vld [vmem:[%s5 + $0x20] sm:$0xff]
        %v5365 = vld [vmem:[%s5 + $0x28] sm:$0xff]
        %5367 = vset.pattern.permute.xlu0 0
        %5368 = vperm.xlu0 %5367, %v5360
        %v5369 = vpop.permute.xlu0 %5368
        %5372 = vset.pattern.permute.xlu0 0
        %5373 = vperm.xlu0 %5372, %v5361
        %v5374 = vpop.permute.xlu0 %5373
        %5377 = vset.pattern.permute.xlu0 0
        %5378 = vperm.xlu0 %5377, %v5362
        %v5379 = vpop.permute.xlu0 %5378
        %5382 = vset.pattern.permute.xlu0 0
        %5383 = vperm.xlu0 %5382, %v5363
        %v5384 = vpop.permute.xlu0 %5383
        %5387 = vset.pattern.permute.xlu0 0
        %5388 = vperm.xlu0 %5387, %v5364
        %v5389 = vpop.permute.xlu0 %5388
        %5392 = vset.pattern.permute.xlu0 0
        %5393 = vperm.xlu0 %5392, %v5365
        %v5394 = vpop.permute.xlu0 %5393
        %v5396 = vperm.slane %v5346, 0
        %v5397 = vperm.slane %v5347, 0
        %v5398 = vperm.slane %v5348, 0
        %v5399 = vperm.slane %v5349, 0
        %v5400 = vperm.slane %v5350, 0
        %v5401 = vperm.slane %v5351, 0
        %v5402 = vperm.slane %v5352, 0
        %v5403 = vperm.slane %v5353, 0
        %v5404 = vmul.f32 %v5369, %v5396
        %v5405 = vmul.f32 %v5369, %v5397
        %v5406 = vmul.f32 %v5369, %v5398
        %v5407 = vmul.f32 %v5369, %v5399
        %v5408 = vmul.f32 %v5369, %v5400
        %v5409 = vmul.f32 %v5369, %v5401
        %v5410 = vmul.f32 %v5369, %v5402
        %v5411 = vmul.f32 %v5369, %v5403
        %v5412 = vmul.f32 %v5374, %v5396
        %v5413 = vmul.f32 %v5374, %v5397
        %v5414 = vmul.f32 %v5374, %v5398
        %v5415 = vmul.f32 %v5374, %v5399
        %v5416 = vmul.f32 %v5374, %v5400
        %v5417 = vmul.f32 %v5374, %v5401
        %v5418 = vmul.f32 %v5374, %v5402
        %v5419 = vmul.f32 %v5374, %v5403
        %v5420 = vmul.f32 %v5379, %v5396
        %v5421 = vmul.f32 %v5379, %v5397
        %v5422 = vmul.f32 %v5379, %v5398
        %v5423 = vmul.f32 %v5379, %v5399
        %v5424 = vmul.f32 %v5379, %v5400
        %v5425 = vmul.f32 %v5379, %v5401
        %v5426 = vmul.f32 %v5379, %v5402
        %v5427 = vmul.f32 %v5379, %v5403
        %v5428 = vmul.f32 %v5384, %v5396
        %v5429 = vmul.f32 %v5384, %v5397
        %v5430 = vmul.f32 %v5384, %v5398
        %v5431 = vmul.f32 %v5384, %v5399
        %v5432 = vmul.f32 %v5384, %v5400
        %v5433 = vmul.f32 %v5384, %v5401
        %v5434 = vmul.f32 %v5384, %v5402
        %v5435 = vmul.f32 %v5384, %v5403
        %v5436 = vmul.f32 %v5389, %v5396
        %v5437 = vmul.f32 %v5389, %v5397
        %v5438 = vmul.f32 %v5389, %v5398
        %v5439 = vmul.f32 %v5389, %v5399
        %v5440 = vmul.f32 %v5389, %v5400
        %v5441 = vmul.f32 %v5389, %v5401
        %v5442 = vmul.f32 %v5389, %v5402
        %v5443 = vmul.f32 %v5389, %v5403
        %v5444 = vmul.f32 %v5394, %v5396
        %v5445 = vmul.f32 %v5394, %v5397
        %v5446 = vmul.f32 %v5394, %v5398
        %v5447 = vmul.f32 %v5394, %v5399
        %v5448 = vmul.f32 %v5394, %v5400
        %v5449 = vmul.f32 %v5394, %v5401
        %v5450 = vmul.f32 %v5394, %v5402
        %v5451 = vmul.f32 %v5394, %v5403
        %5453 = vset.pattern.permute.xlu0 0
        %5454 = vperm.xlu0 %5453, %v5354
        %v5455 = vpop.permute.xlu0 %5454
        %5458 = vset.pattern.permute.xlu0 0
        %5459 = vperm.xlu0 %5458, %v5355
        %v5460 = vpop.permute.xlu0 %5459
        %5463 = vset.pattern.permute.xlu0 0
        %5464 = vperm.xlu0 %5463, %v5356
        %v5465 = vpop.permute.xlu0 %5464
        %5468 = vset.pattern.permute.xlu0 0
        %5469 = vperm.xlu0 %5468, %v5357
        %v5470 = vpop.permute.xlu0 %5469
        %5473 = vset.pattern.permute.xlu0 0
        %5474 = vperm.xlu0 %5473, %v5358
        %v5475 = vpop.permute.xlu0 %5474
        %5478 = vset.pattern.permute.xlu0 0
        %5479 = vperm.xlu0 %5478, %v5359
        %v5480 = vpop.permute.xlu0 %5479
        %v5482 = vadd.f32 %v5455, %v5404
        %v5483 = vadd.f32 %v5455, %v5405
        %v5484 = vadd.f32 %v5455, %v5406
        %v5485 = vadd.f32 %v5455, %v5407
        %v5486 = vadd.f32 %v5455, %v5408
        %v5487 = vadd.f32 %v5455, %v5409
        %v5488 = vadd.f32 %v5455, %v5410
        %v5489 = vadd.f32 %v5455, %v5411
        %v5490 = vadd.f32 %v5460, %v5412
        %v5491 = vadd.f32 %v5460, %v5413
        %v5492 = vadd.f32 %v5460, %v5414
        %v5493 = vadd.f32 %v5460, %v5415
        %v5494 = vadd.f32 %v5460, %v5416
        %v5495 = vadd.f32 %v5460, %v5417
        %v5496 = vadd.f32 %v5460, %v5418
        %v5497 = vadd.f32 %v5460, %v5419
        %v5498 = vadd.f32 %v5465, %v5420
        %v5499 = vadd.f32 %v5465, %v5421
        %v5500 = vadd.f32 %v5465, %v5422
        %v5501 = vadd.f32 %v5465, %v5423
        %v5502 = vadd.f32 %v5465, %v5424
        %v5503 = vadd.f32 %v5465, %v5425
        %v5504 = vadd.f32 %v5465, %v5426
        %v5505 = vadd.f32 %v5465, %v5427
        %v5506 = vadd.f32 %v5470, %v5428
        %v5507 = vadd.f32 %v5470, %v5429
        %v5508 = vadd.f32 %v5470, %v5430
        %v5509 = vadd.f32 %v5470, %v5431
        %v5510 = vadd.f32 %v5470, %v5432
        %v5511 = vadd.f32 %v5470, %v5433
        %v5512 = vadd.f32 %v5470, %v5434
        %v5513 = vadd.f32 %v5470, %v5435
        %v5514 = vadd.f32 %v5475, %v5436
        %v5515 = vadd.f32 %v5475, %v5437
        %v5516 = vadd.f32 %v5475, %v5438
        %v5517 = vadd.f32 %v5475, %v5439
        %v5518 = vadd.f32 %v5475, %v5440
        %v5519 = vadd.f32 %v5475, %v5441
        %v5520 = vadd.f32 %v5475, %v5442
        %v5521 = vadd.f32 %v5475, %v5443
        %v5522 = vadd.f32 %v5480, %v5444
        %v5523 = vadd.f32 %v5480, %v5445
        %v5524 = vadd.f32 %v5480, %v5446
        %v5525 = vadd.f32 %v5480, %v5447
        %v5526 = vadd.f32 %v5480, %v5448
        %v5527 = vadd.f32 %v5480, %v5449
        %v5528 = vadd.f32 %v5480, %v5450
        %v5529 = vadd.f32 %v5480, %v5451
        %5530 = vset.pattern.permute.xlu0 1
        %5531 = vperm.xlu0 %5530, %v5360
        %v5532 = vpop.permute.xlu0 %5531
        %5534 = vset.pattern.permute.xlu0 1
        %5535 = vperm.xlu0 %5534, %v5361
        %v5536 = vpop.permute.xlu0 %5535
        %5538 = vset.pattern.permute.xlu0 1
        %5539 = vperm.xlu0 %5538, %v5362
        %v5540 = vpop.permute.xlu0 %5539
        %5542 = vset.pattern.permute.xlu0 1
        %5543 = vperm.xlu0 %5542, %v5363
        %v5544 = vpop.permute.xlu0 %5543
        %5546 = vset.pattern.permute.xlu0 1
        %5547 = vperm.xlu0 %5546, %v5364
        %v5548 = vpop.permute.xlu0 %5547
        %5550 = vset.pattern.permute.xlu0 1
        %5551 = vperm.xlu0 %5550, %v5365
        %v5552 = vpop.permute.xlu0 %5551
        %v5554 = vperm.slane %v5346, 1
        %v5555 = vperm.slane %v5347, 1
        %v5556 = vperm.slane %v5348, 1
        %v5557 = vperm.slane %v5349, 1
        %v5558 = vperm.slane %v5350, 1
        %v5559 = vperm.slane %v5351, 1
        %v5560 = vperm.slane %v5352, 1
        %v5561 = vperm.slane %v5353, 1
        %v5562 = vmul.f32 %v5532, %v5554
        %v5563 = vmul.f32 %v5532, %v5555
        %v5564 = vmul.f32 %v5532, %v5556
        %v5565 = vmul.f32 %v5532, %v5557
        %v5566 = vmul.f32 %v5532, %v5558
        %v5567 = vmul.f32 %v5532, %v5559
        %v5568 = vmul.f32 %v5532, %v5560
        %v5569 = vmul.f32 %v5532, %v5561
        %v5570 = vmul.f32 %v5536, %v5554
        %v5571 = vmul.f32 %v5536, %v5555
        %v5572 = vmul.f32 %v5536, %v5556
        %v5573 = vmul.f32 %v5536, %v5557
        %v5574 = vmul.f32 %v5536, %v5558
        %v5575 = vmul.f32 %v5536, %v5559
        %v5576 = vmul.f32 %v5536, %v5560
        %v5577 = vmul.f32 %v5536, %v5561
        %v5578 = vmul.f32 %v5540, %v5554
        %v5579 = vmul.f32 %v5540, %v5555
        %v5580 = vmul.f32 %v5540, %v5556
        %v5581 = vmul.f32 %v5540, %v5557
        %v5582 = vmul.f32 %v5540, %v5558
        %v5583 = vmul.f32 %v5540, %v5559
        %v5584 = vmul.f32 %v5540, %v5560
        %v5585 = vmul.f32 %v5540, %v5561
        %v5586 = vmul.f32 %v5544, %v5554
        %v5587 = vmul.f32 %v5544, %v5555
        %v5588 = vmul.f32 %v5544, %v5556
        %v5589 = vmul.f32 %v5544, %v5557
        %v5590 = vmul.f32 %v5544, %v5558
        %v5591 = vmul.f32 %v5544, %v5559
        %v5592 = vmul.f32 %v5544, %v5560
        %v5593 = vmul.f32 %v5544, %v5561
        %v5594 = vmul.f32 %v5548, %v5554
        %v5595 = vmul.f32 %v5548, %v5555
        %v5596 = vmul.f32 %v5548, %v5556
        %v5597 = vmul.f32 %v5548, %v5557
        %v5598 = vmul.f32 %v5548, %v5558
        %v5599 = vmul.f32 %v5548, %v5559
        %v5600 = vmul.f32 %v5548, %v5560
        %v5601 = vmul.f32 %v5548, %v5561
        %v5602 = vmul.f32 %v5552, %v5554
        %v5603 = vmul.f32 %v5552, %v5555
        %v5604 = vmul.f32 %v5552, %v5556
        %v5605 = vmul.f32 %v5552, %v5557
        %v5606 = vmul.f32 %v5552, %v5558
        %v5607 = vmul.f32 %v5552, %v5559
        %v5608 = vmul.f32 %v5552, %v5560
        %v5609 = vmul.f32 %v5552, %v5561
        %v5610 = vadd.f32 %v5482, %v5562
        %v5611 = vadd.f32 %v5483, %v5563
        %v5612 = vadd.f32 %v5484, %v5564
        %v5613 = vadd.f32 %v5485, %v5565
        %v5614 = vadd.f32 %v5486, %v5566
        %v5615 = vadd.f32 %v5487, %v5567
        %v5616 = vadd.f32 %v5488, %v5568
        %v5617 = vadd.f32 %v5489, %v5569
        %v5618 = vadd.f32 %v5490, %v5570
        %v5619 = vadd.f32 %v5491, %v5571
        %v5620 = vadd.f32 %v5492, %v5572
        %v5621 = vadd.f32 %v5493, %v5573
        %v5622 = vadd.f32 %v5494, %v5574
        %v5623 = vadd.f32 %v5495, %v5575
        %v5624 = vadd.f32 %v5496, %v5576
        %v5625 = vadd.f32 %v5497, %v5577
        %v5626 = vadd.f32 %v5498, %v5578
        %v5627 = vadd.f32 %v5499, %v5579
        %v5628 = vadd.f32 %v5500, %v5580
        %v5629 = vadd.f32 %v5501, %v5581
        %v5630 = vadd.f32 %v5502, %v5582
        %v5631 = vadd.f32 %v5503, %v5583
        %v5632 = vadd.f32 %v5504, %v5584
        %v5633 = vadd.f32 %v5505, %v5585
        %v5634 = vadd.f32 %v5506, %v5586
        %v5635 = vadd.f32 %v5507, %v5587
        %v5636 = vadd.f32 %v5508, %v5588
        %v5637 = vadd.f32 %v5509, %v5589
        %v5638 = vadd.f32 %v5510, %v5590
        %v5639 = vadd.f32 %v5511, %v5591
        %v5640 = vadd.f32 %v5512, %v5592
        %v5641 = vadd.f32 %v5513, %v5593
        %v5642 = vadd.f32 %v5514, %v5594
        %v5643 = vadd.f32 %v5515, %v5595
        %v5644 = vadd.f32 %v5516, %v5596
        %v5645 = vadd.f32 %v5517, %v5597
        %v5646 = vadd.f32 %v5518, %v5598
        %v5647 = vadd.f32 %v5519, %v5599
        %v5648 = vadd.f32 %v5520, %v5600
        %v5649 = vadd.f32 %v5521, %v5601
        %v5650 = vadd.f32 %v5522, %v5602
        %v5651 = vadd.f32 %v5523, %v5603
        %v5652 = vadd.f32 %v5524, %v5604
        %v5653 = vadd.f32 %v5525, %v5605
        %v5654 = vadd.f32 %v5526, %v5606
        %v5655 = vadd.f32 %v5527, %v5607
        %v5656 = vadd.f32 %v5528, %v5608
        %v5657 = vadd.f32 %v5529, %v5609
        %v5658 = vxor.u32 %v5610, 2147483648
        %v5659 = vxor.u32 %v5611, 2147483648
        %v5660 = vxor.u32 %v5612, 2147483648
        %v5661 = vxor.u32 %v5613, 2147483648
        %v5662 = vxor.u32 %v5614, 2147483648
        %v5663 = vxor.u32 %v5615, 2147483648
        %v5664 = vxor.u32 %v5616, 2147483648
        %v5665 = vxor.u32 %v5617, 2147483648
        %v5666 = vxor.u32 %v5618, 2147483648
        %v5667 = vxor.u32 %v5619, 2147483648
        %v5668 = vxor.u32 %v5620, 2147483648
        %v5669 = vxor.u32 %v5621, 2147483648
        %v5670 = vxor.u32 %v5622, 2147483648
        %v5671 = vxor.u32 %v5623, 2147483648
        %v5672 = vxor.u32 %v5624, 2147483648
        %v5673 = vxor.u32 %v5625, 2147483648
        %v5674 = vxor.u32 %v5626, 2147483648
        %v5675 = vxor.u32 %v5627, 2147483648
        %v5676 = vxor.u32 %v5628, 2147483648
        %v5677 = vxor.u32 %v5629, 2147483648
        %v5678 = vxor.u32 %v5630, 2147483648
        %v5679 = vxor.u32 %v5631, 2147483648
        %v5680 = vxor.u32 %v5632, 2147483648
        %v5681 = vxor.u32 %v5633, 2147483648
        %v5682 = vxor.u32 %v5634, 2147483648
        %v5683 = vxor.u32 %v5635, 2147483648
        %v5684 = vxor.u32 %v5636, 2147483648
        %v5685 = vxor.u32 %v5637, 2147483648
        %v5686 = vxor.u32 %v5638, 2147483648
        %v5687 = vxor.u32 %v5639, 2147483648
        %v5688 = vxor.u32 %v5640, 2147483648
        %v5689 = vxor.u32 %v5641, 2147483648
        %v5690 = vxor.u32 %v5642, 2147483648
        %v5691 = vxor.u32 %v5643, 2147483648
        %v5692 = vxor.u32 %v5644, 2147483648
        %v5693 = vxor.u32 %v5645, 2147483648
        %v5694 = vxor.u32 %v5646, 2147483648
        %v5695 = vxor.u32 %v5647, 2147483648
        %v5696 = vxor.u32 %v5648, 2147483648
        %v5697 = vxor.u32 %v5649, 2147483648
        %v5698 = vxor.u32 %v5650, 2147483648
        %v5699 = vxor.u32 %v5651, 2147483648
        %v5700 = vxor.u32 %v5652, 2147483648
        %v5701 = vxor.u32 %v5653, 2147483648
        %v5702 = vxor.u32 %v5654, 2147483648
        %v5703 = vxor.u32 %v5655, 2147483648
        %v5704 = vxor.u32 %v5656, 2147483648
        %v5705 = vxor.u32 %v5657, 2147483648
        %v5706 = vmul.f32 %v5658, 1.442695
        %v5707 = vpow.pop %v5706
        %v5708 = vmul.f32 %v5659, 1.442695
        %v5709 = vpow.pop %v5708
        %v5710 = vmul.f32 %v5660, 1.442695
        %v5711 = vpow.pop %v5710
        %v5712 = vmul.f32 %v5661, 1.442695
        %v5713 = vpow.pop %v5712
        %v5714 = vmul.f32 %v5662, 1.442695
        %v5715 = vpow.pop %v5714
        %v5716 = vmul.f32 %v5663, 1.442695
        %v5717 = vpow.pop %v5716
        %v5718 = vmul.f32 %v5664, 1.442695
        %v5719 = vpow.pop %v5718
        %v5720 = vmul.f32 %v5665, 1.442695
        %v5721 = vpow.pop %v5720
        %v5722 = vmul.f32 %v5666, 1.442695
        %v5723 = vpow.pop %v5722
        %v5724 = vmul.f32 %v5667, 1.442695
        %v5725 = vpow.pop %v5724
        %v5726 = vmul.f32 %v5668, 1.442695
        %v5727 = vpow.pop %v5726
        %v5728 = vmul.f32 %v5669, 1.442695
        %v5729 = vpow.pop %v5728
        %v5730 = vmul.f32 %v5670, 1.442695
        %v5731 = vpow.pop %v5730
        %v5732 = vmul.f32 %v5671, 1.442695
        %v5733 = vpow.pop %v5732
        %v5734 = vmul.f32 %v5672, 1.442695
        %v5735 = vpow.pop %v5734
        %v5736 = vmul.f32 %v5673, 1.442695
        %v5737 = vpow.pop %v5736
        %v5738 = vmul.f32 %v5674, 1.442695
        %v5739 = vpow.pop %v5738
        %v5740 = vmul.f32 %v5675, 1.442695
        %v5741 = vpow.pop %v5740
        %v5742 = vmul.f32 %v5676, 1.442695
        %v5743 = vpow.pop %v5742
        %v5744 = vmul.f32 %v5677, 1.442695
        %v5745 = vpow.pop %v5744
        %v5746 = vmul.f32 %v5678, 1.442695
        %v5747 = vpow.pop %v5746
        %v5748 = vmul.f32 %v5679, 1.442695
        %v5749 = vpow.pop %v5748
        %v5750 = vmul.f32 %v5680, 1.442695
        %v5751 = vpow.pop %v5750
        %v5752 = vmul.f32 %v5681, 1.442695
        %v5753 = vpow.pop %v5752
        %v5754 = vmul.f32 %v5682, 1.442695
        %v5755 = vpow.pop %v5754
        %v5756 = vmul.f32 %v5683, 1.442695
        %v5757 = vpow.pop %v5756
        %v5758 = vmul.f32 %v5684, 1.442695
        %v5759 = vpow.pop %v5758
        %v5760 = vmul.f32 %v5685, 1.442695
        %v5761 = vpow.pop %v5760
        %v5762 = vmul.f32 %v5686, 1.442695
        %v5763 = vpow.pop %v5762
        %v5764 = vmul.f32 %v5687, 1.442695
        %v5765 = vpow.pop %v5764
        %v5766 = vmul.f32 %v5688, 1.442695
        %v5767 = vpow.pop %v5766
        %v5768 = vmul.f32 %v5689, 1.442695
        %v5769 = vpow.pop %v5768
        %v5770 = vmul.f32 %v5690, 1.442695
        %v5771 = vpow.pop %v5770
        %v5772 = vmul.f32 %v5691, 1.442695
        %v5773 = vpow.pop %v5772
        %v5774 = vmul.f32 %v5692, 1.442695
        %v5775 = vpow.pop %v5774
        %v5776 = vmul.f32 %v5693, 1.442695
        %v5777 = vpow.pop %v5776
        %v5778 = vmul.f32 %v5694, 1.442695
        %v5779 = vpow.pop %v5778
        %v5780 = vmul.f32 %v5695, 1.442695
        %v5781 = vpow.pop %v5780
        %v5782 = vmul.f32 %v5696, 1.442695
        %v5783 = vpow.pop %v5782
        %v5784 = vmul.f32 %v5697, 1.442695
        %v5785 = vpow.pop %v5784
        %v5786 = vmul.f32 %v5698, 1.442695
        %v5787 = vpow.pop %v5786
        %v5788 = vmul.f32 %v5699, 1.442695
        %v5789 = vpow.pop %v5788
        %v5790 = vmul.f32 %v5700, 1.442695
        %v5791 = vpow.pop %v5790
        %v5792 = vmul.f32 %v5701, 1.442695
        %v5793 = vpow.pop %v5792
        %v5794 = vmul.f32 %v5702, 1.442695
        %v5795 = vpow.pop %v5794
        %v5796 = vmul.f32 %v5703, 1.442695
        %v5797 = vpow.pop %v5796
        %v5798 = vmul.f32 %v5704, 1.442695
        %v5799 = vpow.pop %v5798
        %v5800 = vmul.f32 %v5705, 1.442695
        %v5801 = vpow.pop %v5800
        %v5802 = vadd.f32 %v5707, 1.0
        %v5803 = vadd.f32 %v5709, 1.0
        %v5804 = vadd.f32 %v5711, 1.0
        %v5805 = vadd.f32 %v5713, 1.0
        %v5806 = vadd.f32 %v5715, 1.0
        %v5807 = vadd.f32 %v5717, 1.0
        %v5808 = vadd.f32 %v5719, 1.0
        %v5809 = vadd.f32 %v5721, 1.0
        %v5810 = vadd.f32 %v5723, 1.0
        %v5811 = vadd.f32 %v5725, 1.0
        %v5812 = vadd.f32 %v5727, 1.0
        %v5813 = vadd.f32 %v5729, 1.0
        %v5814 = vadd.f32 %v5731, 1.0
        %v5815 = vadd.f32 %v5733, 1.0
        %v5816 = vadd.f32 %v5735, 1.0
        %v5817 = vadd.f32 %v5737, 1.0
        %v5818 = vadd.f32 %v5739, 1.0
        %v5819 = vadd.f32 %v5741, 1.0
        %v5820 = vadd.f32 %v5743, 1.0
        %v5821 = vadd.f32 %v5745, 1.0
        %v5822 = vadd.f32 %v5747, 1.0
        %v5823 = vadd.f32 %v5749, 1.0
        %v5824 = vadd.f32 %v5751, 1.0
        %v5825 = vadd.f32 %v5753, 1.0
        %v5826 = vadd.f32 %v5755, 1.0
        %v5827 = vadd.f32 %v5757, 1.0
        %v5828 = vadd.f32 %v5759, 1.0
        %v5829 = vadd.f32 %v5761, 1.0
        %v5830 = vadd.f32 %v5763, 1.0
        %v5831 = vadd.f32 %v5765, 1.0
        %v5832 = vadd.f32 %v5767, 1.0
        %v5833 = vadd.f32 %v5769, 1.0
        %v5834 = vadd.f32 %v5771, 1.0
        %v5835 = vadd.f32 %v5773, 1.0
        %v5836 = vadd.f32 %v5775, 1.0
        %v5837 = vadd.f32 %v5777, 1.0
        %v5838 = vadd.f32 %v5779, 1.0
        %v5839 = vadd.f32 %v5781, 1.0
        %v5840 = vadd.f32 %v5783, 1.0
        %v5841 = vadd.f32 %v5785, 1.0
        %v5842 = vadd.f32 %v5787, 1.0
        %v5843 = vadd.f32 %v5789, 1.0
        %v5844 = vadd.f32 %v5791, 1.0
        %v5845 = vadd.f32 %v5793, 1.0
        %v5846 = vadd.f32 %v5795, 1.0
        %v5847 = vadd.f32 %v5797, 1.0
        %v5848 = vadd.f32 %v5799, 1.0
        %v5849 = vadd.f32 %v5801, 1.0
        %v5850 = vrcp.pop %v5802
        %v5851 = vmul.f32 %v5802, %v5850
        %v5852 = vsub.f32 1.0, %v5851
        %v5853 = vmul.f32 %v5850, %v5852
        %v5854 = vadd.f32 %v5850, %v5853
        %vm5855 = vweird.f32 %v5802
        %vm5856 = vweird.f32 %v5850
        %vm5857 = vmor %vm5855, %vm5856
        %v5858 = vsel %vm5857, %v5850, %v5854
        %v5859 = vand.u32 2147483647, %v5802
        %vm5860 = vcmp.eq.f32.partialorder %v5859, 8.507059e+37
        %v5861 = vand.u32 %v5802, 2147483648
        %v5862 = vor.u32 1.1754944e-38, %v5861
        %v5863 = vsel %vm5860, %v5862, %v5858
        %v5864 = vmul.f32 1.0, %v5863
        %v5865 = vrcp.pop %v5803
        %v5866 = vmul.f32 %v5803, %v5865
        %v5867 = vsub.f32 1.0, %v5866
        %v5868 = vmul.f32 %v5865, %v5867
        %v5869 = vadd.f32 %v5865, %v5868
        %vm5870 = vweird.f32 %v5803
        %vm5871 = vweird.f32 %v5865
        %vm5872 = vmor %vm5870, %vm5871
        %v5873 = vsel %vm5872, %v5865, %v5869
        %v5874 = vand.u32 2147483647, %v5803
        %vm5875 = vcmp.eq.f32.partialorder %v5874, 8.507059e+37
        %v5876 = vand.u32 %v5803, 2147483648
        %v5877 = vor.u32 1.1754944e-38, %v5876
        %v5878 = vsel %vm5875, %v5877, %v5873
        %v5879 = vmul.f32 1.0, %v5878
        %v5880 = vrcp.pop %v5804
        %v5881 = vmul.f32 %v5804, %v5880
        %v5882 = vsub.f32 1.0, %v5881
        %v5883 = vmul.f32 %v5880, %v5882
        %v5884 = vadd.f32 %v5880, %v5883
        %vm5885 = vweird.f32 %v5804
        %vm5886 = vweird.f32 %v5880
        %vm5887 = vmor %vm5885, %vm5886
        %v5888 = vsel %vm5887, %v5880, %v5884
        %v5889 = vand.u32 2147483647, %v5804
        %vm5890 = vcmp.eq.f32.partialorder %v5889, 8.507059e+37
        %v5891 = vand.u32 %v5804, 2147483648
        %v5892 = vor.u32 1.1754944e-38, %v5891
        %v5893 = vsel %vm5890, %v5892, %v5888
        %v5894 = vmul.f32 1.0, %v5893
        %v5895 = vrcp.pop %v5805
        %v5896 = vmul.f32 %v5805, %v5895
        %v5897 = vsub.f32 1.0, %v5896
        %v5898 = vmul.f32 %v5895, %v5897
        %v5899 = vadd.f32 %v5895, %v5898
        %vm5900 = vweird.f32 %v5805
        %vm5901 = vweird.f32 %v5895
        %vm5902 = vmor %vm5900, %vm5901
        %v5903 = vsel %vm5902, %v5895, %v5899
        %v5904 = vand.u32 2147483647, %v5805
        %vm5905 = vcmp.eq.f32.partialorder %v5904, 8.507059e+37
        %v5906 = vand.u32 %v5805, 2147483648
        %v5907 = vor.u32 1.1754944e-38, %v5906
        %v5908 = vsel %vm5905, %v5907, %v5903
        %v5909 = vmul.f32 1.0, %v5908
        %v5910 = vrcp.pop %v5806
        %v5911 = vmul.f32 %v5806, %v5910
        %v5912 = vsub.f32 1.0, %v5911
        %v5913 = vmul.f32 %v5910, %v5912
        %v5914 = vadd.f32 %v5910, %v5913
        %vm5915 = vweird.f32 %v5806
        %vm5916 = vweird.f32 %v5910
        %vm5917 = vmor %vm5915, %vm5916
        %v5918 = vsel %vm5917, %v5910, %v5914
        %v5919 = vand.u32 2147483647, %v5806
        %vm5920 = vcmp.eq.f32.partialorder %v5919, 8.507059e+37
        %v5921 = vand.u32 %v5806, 2147483648
        %v5922 = vor.u32 1.1754944e-38, %v5921
        %v5923 = vsel %vm5920, %v5922, %v5918
        %v5924 = vmul.f32 1.0, %v5923
        %v5925 = vrcp.pop %v5807
        %v5926 = vmul.f32 %v5807, %v5925
        %v5927 = vsub.f32 1.0, %v5926
        %v5928 = vmul.f32 %v5925, %v5927
        %v5929 = vadd.f32 %v5925, %v5928
        %vm5930 = vweird.f32 %v5807
        %vm5931 = vweird.f32 %v5925
        %vm5932 = vmor %vm5930, %vm5931
        %v5933 = vsel %vm5932, %v5925, %v5929
        %v5934 = vand.u32 2147483647, %v5807
        %vm5935 = vcmp.eq.f32.partialorder %v5934, 8.507059e+37
        %v5936 = vand.u32 %v5807, 2147483648
        %v5937 = vor.u32 1.1754944e-38, %v5936
        %v5938 = vsel %vm5935, %v5937, %v5933
        %v5939 = vmul.f32 1.0, %v5938
        %v5940 = vrcp.pop %v5808
        %v5941 = vmul.f32 %v5808, %v5940
        %v5942 = vsub.f32 1.0, %v5941
        %v5943 = vmul.f32 %v5940, %v5942
        %v5944 = vadd.f32 %v5940, %v5943
        %vm5945 = vweird.f32 %v5808
        %vm5946 = vweird.f32 %v5940
        %vm5947 = vmor %vm5945, %vm5946
        %v5948 = vsel %vm5947, %v5940, %v5944
        %v5949 = vand.u32 2147483647, %v5808
        %vm5950 = vcmp.eq.f32.partialorder %v5949, 8.507059e+37
        %v5951 = vand.u32 %v5808, 2147483648
        %v5952 = vor.u32 1.1754944e-38, %v5951
        %v5953 = vsel %vm5950, %v5952, %v5948
        %v5954 = vmul.f32 1.0, %v5953
        %v5955 = vrcp.pop %v5809
        %v5956 = vmul.f32 %v5809, %v5955
        %v5957 = vsub.f32 1.0, %v5956
        %v5958 = vmul.f32 %v5955, %v5957
        %v5959 = vadd.f32 %v5955, %v5958
        %vm5960 = vweird.f32 %v5809
        %vm5961 = vweird.f32 %v5955
        %vm5962 = vmor %vm5960, %vm5961
        %v5963 = vsel %vm5962, %v5955, %v5959
        %v5964 = vand.u32 2147483647, %v5809
        %vm5965 = vcmp.eq.f32.partialorder %v5964, 8.507059e+37
        %v5966 = vand.u32 %v5809, 2147483648
        %v5967 = vor.u32 1.1754944e-38, %v5966
        %v5968 = vsel %vm5965, %v5967, %v5963
        %v5969 = vmul.f32 1.0, %v5968
        %v5970 = vrcp.pop %v5810
        %v5971 = vmul.f32 %v5810, %v5970
        %v5972 = vsub.f32 1.0, %v5971
        %v5973 = vmul.f32 %v5970, %v5972
        %v5974 = vadd.f32 %v5970, %v5973
        %vm5975 = vweird.f32 %v5810
        %vm5976 = vweird.f32 %v5970
        %vm5977 = vmor %vm5975, %vm5976
        %v5978 = vsel %vm5977, %v5970, %v5974
        %v5979 = vand.u32 2147483647, %v5810
        %vm5980 = vcmp.eq.f32.partialorder %v5979, 8.507059e+37
        %v5981 = vand.u32 %v5810, 2147483648
        %v5982 = vor.u32 1.1754944e-38, %v5981
        %v5983 = vsel %vm5980, %v5982, %v5978
        %v5984 = vmul.f32 1.0, %v5983
        %v5985 = vrcp.pop %v5811
        %v5986 = vmul.f32 %v5811, %v5985
        %v5987 = vsub.f32 1.0, %v5986
        %v5988 = vmul.f32 %v5985, %v5987
        %v5989 = vadd.f32 %v5985, %v5988
        %vm5990 = vweird.f32 %v5811
        %vm5991 = vweird.f32 %v5985
        %vm5992 = vmor %vm5990, %vm5991
        %v5993 = vsel %vm5992, %v5985, %v5989
        %v5994 = vand.u32 2147483647, %v5811
        %vm5995 = vcmp.eq.f32.partialorder %v5994, 8.507059e+37
        %v5996 = vand.u32 %v5811, 2147483648
        %v5997 = vor.u32 1.1754944e-38, %v5996
        %v5998 = vsel %vm5995, %v5997, %v5993
        %v5999 = vmul.f32 1.0, %v5998
        %v6000 = vrcp.pop %v5812
        %v6001 = vmul.f32 %v5812, %v6000
        %v6002 = vsub.f32 1.0, %v6001
        %v6003 = vmul.f32 %v6000, %v6002
        %v6004 = vadd.f32 %v6000, %v6003
        %vm6005 = vweird.f32 %v5812
        %vm6006 = vweird.f32 %v6000
        %vm6007 = vmor %vm6005, %vm6006
        %v6008 = vsel %vm6007, %v6000, %v6004
        %v6009 = vand.u32 2147483647, %v5812
        %vm6010 = vcmp.eq.f32.partialorder %v6009, 8.507059e+37
        %v6011 = vand.u32 %v5812, 2147483648
        %v6012 = vor.u32 1.1754944e-38, %v6011
        %v6013 = vsel %vm6010, %v6012, %v6008
        %v6014 = vmul.f32 1.0, %v6013
        %v6015 = vrcp.pop %v5813
        %v6016 = vmul.f32 %v5813, %v6015
        %v6017 = vsub.f32 1.0, %v6016
        %v6018 = vmul.f32 %v6015, %v6017
        %v6019 = vadd.f32 %v6015, %v6018
        %vm6020 = vweird.f32 %v5813
        %vm6021 = vweird.f32 %v6015
        %vm6022 = vmor %vm6020, %vm6021
        %v6023 = vsel %vm6022, %v6015, %v6019
        %v6024 = vand.u32 2147483647, %v5813
        %vm6025 = vcmp.eq.f32.partialorder %v6024, 8.507059e+37
        %v6026 = vand.u32 %v5813, 2147483648
        %v6027 = vor.u32 1.1754944e-38, %v6026
        %v6028 = vsel %vm6025, %v6027, %v6023
        %v6029 = vmul.f32 1.0, %v6028
        %v6030 = vrcp.pop %v5814
        %v6031 = vmul.f32 %v5814, %v6030
        %v6032 = vsub.f32 1.0, %v6031
        %v6033 = vmul.f32 %v6030, %v6032
        %v6034 = vadd.f32 %v6030, %v6033
        %vm6035 = vweird.f32 %v5814
        %vm6036 = vweird.f32 %v6030
        %vm6037 = vmor %vm6035, %vm6036
        %v6038 = vsel %vm6037, %v6030, %v6034
        %v6039 = vand.u32 2147483647, %v5814
        %vm6040 = vcmp.eq.f32.partialorder %v6039, 8.507059e+37
        %v6041 = vand.u32 %v5814, 2147483648
        %v6042 = vor.u32 1.1754944e-38, %v6041
        %v6043 = vsel %vm6040, %v6042, %v6038
        %v6044 = vmul.f32 1.0, %v6043
        %v6045 = vrcp.pop %v5815
        %v6046 = vmul.f32 %v5815, %v6045
        %v6047 = vsub.f32 1.0, %v6046
        %v6048 = vmul.f32 %v6045, %v6047
        %v6049 = vadd.f32 %v6045, %v6048
        %vm6050 = vweird.f32 %v5815
        %vm6051 = vweird.f32 %v6045
        %vm6052 = vmor %vm6050, %vm6051
        %v6053 = vsel %vm6052, %v6045, %v6049
        %v6054 = vand.u32 2147483647, %v5815
        %vm6055 = vcmp.eq.f32.partialorder %v6054, 8.507059e+37
        %v6056 = vand.u32 %v5815, 2147483648
        %v6057 = vor.u32 1.1754944e-38, %v6056
        %v6058 = vsel %vm6055, %v6057, %v6053
        %v6059 = vmul.f32 1.0, %v6058
        %v6060 = vrcp.pop %v5816
        %v6061 = vmul.f32 %v5816, %v6060
        %v6062 = vsub.f32 1.0, %v6061
        %v6063 = vmul.f32 %v6060, %v6062
        %v6064 = vadd.f32 %v6060, %v6063
        %vm6065 = vweird.f32 %v5816
        %vm6066 = vweird.f32 %v6060
        %vm6067 = vmor %vm6065, %vm6066
        %v6068 = vsel %vm6067, %v6060, %v6064
        %v6069 = vand.u32 2147483647, %v5816
        %vm6070 = vcmp.eq.f32.partialorder %v6069, 8.507059e+37
        %v6071 = vand.u32 %v5816, 2147483648
        %v6072 = vor.u32 1.1754944e-38, %v6071
        %v6073 = vsel %vm6070, %v6072, %v6068
        %v6074 = vmul.f32 1.0, %v6073
        %v6075 = vrcp.pop %v5817
        %v6076 = vmul.f32 %v5817, %v6075
        %v6077 = vsub.f32 1.0, %v6076
        %v6078 = vmul.f32 %v6075, %v6077
        %v6079 = vadd.f32 %v6075, %v6078
        %vm6080 = vweird.f32 %v5817
        %vm6081 = vweird.f32 %v6075
        %vm6082 = vmor %vm6080, %vm6081
        %v6083 = vsel %vm6082, %v6075, %v6079
        %v6084 = vand.u32 2147483647, %v5817
        %vm6085 = vcmp.eq.f32.partialorder %v6084, 8.507059e+37
        %v6086 = vand.u32 %v5817, 2147483648
        %v6087 = vor.u32 1.1754944e-38, %v6086
        %v6088 = vsel %vm6085, %v6087, %v6083
        %v6089 = vmul.f32 1.0, %v6088
        %v6090 = vrcp.pop %v5818
        %v6091 = vmul.f32 %v5818, %v6090
        %v6092 = vsub.f32 1.0, %v6091
        %v6093 = vmul.f32 %v6090, %v6092
        %v6094 = vadd.f32 %v6090, %v6093
        %vm6095 = vweird.f32 %v5818
        %vm6096 = vweird.f32 %v6090
        %vm6097 = vmor %vm6095, %vm6096
        %v6098 = vsel %vm6097, %v6090, %v6094
        %v6099 = vand.u32 2147483647, %v5818
        %vm6100 = vcmp.eq.f32.partialorder %v6099, 8.507059e+37
        %v6101 = vand.u32 %v5818, 2147483648
        %v6102 = vor.u32 1.1754944e-38, %v6101
        %v6103 = vsel %vm6100, %v6102, %v6098
        %v6104 = vmul.f32 1.0, %v6103
        %v6105 = vrcp.pop %v5819
        %v6106 = vmul.f32 %v5819, %v6105
        %v6107 = vsub.f32 1.0, %v6106
        %v6108 = vmul.f32 %v6105, %v6107
        %v6109 = vadd.f32 %v6105, %v6108
        %vm6110 = vweird.f32 %v5819
        %vm6111 = vweird.f32 %v6105
        %vm6112 = vmor %vm6110, %vm6111
        %v6113 = vsel %vm6112, %v6105, %v6109
        %v6114 = vand.u32 2147483647, %v5819
        %vm6115 = vcmp.eq.f32.partialorder %v6114, 8.507059e+37
        %v6116 = vand.u32 %v5819, 2147483648
        %v6117 = vor.u32 1.1754944e-38, %v6116
        %v6118 = vsel %vm6115, %v6117, %v6113
        %v6119 = vmul.f32 1.0, %v6118
        %v6120 = vrcp.pop %v5820
        %v6121 = vmul.f32 %v5820, %v6120
        %v6122 = vsub.f32 1.0, %v6121
        %v6123 = vmul.f32 %v6120, %v6122
        %v6124 = vadd.f32 %v6120, %v6123
        %vm6125 = vweird.f32 %v5820
        %vm6126 = vweird.f32 %v6120
        %vm6127 = vmor %vm6125, %vm6126
        %v6128 = vsel %vm6127, %v6120, %v6124
        %v6129 = vand.u32 2147483647, %v5820
        %vm6130 = vcmp.eq.f32.partialorder %v6129, 8.507059e+37
        %v6131 = vand.u32 %v5820, 2147483648
        %v6132 = vor.u32 1.1754944e-38, %v6131
        %v6133 = vsel %vm6130, %v6132, %v6128
        %v6134 = vmul.f32 1.0, %v6133
        %v6135 = vrcp.pop %v5821
        %v6136 = vmul.f32 %v5821, %v6135
        %v6137 = vsub.f32 1.0, %v6136
        %v6138 = vmul.f32 %v6135, %v6137
        %v6139 = vadd.f32 %v6135, %v6138
        %vm6140 = vweird.f32 %v5821
        %vm6141 = vweird.f32 %v6135
        %vm6142 = vmor %vm6140, %vm6141
        %v6143 = vsel %vm6142, %v6135, %v6139
        %v6144 = vand.u32 2147483647, %v5821
        %vm6145 = vcmp.eq.f32.partialorder %v6144, 8.507059e+37
        %v6146 = vand.u32 %v5821, 2147483648
        %v6147 = vor.u32 1.1754944e-38, %v6146
        %v6148 = vsel %vm6145, %v6147, %v6143
        %v6149 = vmul.f32 1.0, %v6148
        %v6150 = vrcp.pop %v5822
        %v6151 = vmul.f32 %v5822, %v6150
        %v6152 = vsub.f32 1.0, %v6151
        %v6153 = vmul.f32 %v6150, %v6152
        %v6154 = vadd.f32 %v6150, %v6153
        %vm6155 = vweird.f32 %v5822
        %vm6156 = vweird.f32 %v6150
        %vm6157 = vmor %vm6155, %vm6156
        %v6158 = vsel %vm6157, %v6150, %v6154
        %v6159 = vand.u32 2147483647, %v5822
        %vm6160 = vcmp.eq.f32.partialorder %v6159, 8.507059e+37
        %v6161 = vand.u32 %v5822, 2147483648
        %v6162 = vor.u32 1.1754944e-38, %v6161
        %v6163 = vsel %vm6160, %v6162, %v6158
        %v6164 = vmul.f32 1.0, %v6163
        %v6165 = vrcp.pop %v5823
        %v6166 = vmul.f32 %v5823, %v6165
        %v6167 = vsub.f32 1.0, %v6166
        %v6168 = vmul.f32 %v6165, %v6167
        %v6169 = vadd.f32 %v6165, %v6168
        %vm6170 = vweird.f32 %v5823
        %vm6171 = vweird.f32 %v6165
        %vm6172 = vmor %vm6170, %vm6171
        %v6173 = vsel %vm6172, %v6165, %v6169
        %v6174 = vand.u32 2147483647, %v5823
        %vm6175 = vcmp.eq.f32.partialorder %v6174, 8.507059e+37
        %v6176 = vand.u32 %v5823, 2147483648
        %v6177 = vor.u32 1.1754944e-38, %v6176
        %v6178 = vsel %vm6175, %v6177, %v6173
        %v6179 = vmul.f32 1.0, %v6178
        %v6180 = vrcp.pop %v5824
        %v6181 = vmul.f32 %v5824, %v6180
        %v6182 = vsub.f32 1.0, %v6181
        %v6183 = vmul.f32 %v6180, %v6182
        %v6184 = vadd.f32 %v6180, %v6183
        %vm6185 = vweird.f32 %v5824
        %vm6186 = vweird.f32 %v6180
        %vm6187 = vmor %vm6185, %vm6186
        %v6188 = vsel %vm6187, %v6180, %v6184
        %v6189 = vand.u32 2147483647, %v5824
        %vm6190 = vcmp.eq.f32.partialorder %v6189, 8.507059e+37
        %v6191 = vand.u32 %v5824, 2147483648
        %v6192 = vor.u32 1.1754944e-38, %v6191
        %v6193 = vsel %vm6190, %v6192, %v6188
        %v6194 = vmul.f32 1.0, %v6193
        %v6195 = vrcp.pop %v5825
        %v6196 = vmul.f32 %v5825, %v6195
        %v6197 = vsub.f32 1.0, %v6196
        %v6198 = vmul.f32 %v6195, %v6197
        %v6199 = vadd.f32 %v6195, %v6198
        %vm6200 = vweird.f32 %v5825
        %vm6201 = vweird.f32 %v6195
        %vm6202 = vmor %vm6200, %vm6201
        %v6203 = vsel %vm6202, %v6195, %v6199
        %v6204 = vand.u32 2147483647, %v5825
        %vm6205 = vcmp.eq.f32.partialorder %v6204, 8.507059e+37
        %v6206 = vand.u32 %v5825, 2147483648
        %v6207 = vor.u32 1.1754944e-38, %v6206
        %v6208 = vsel %vm6205, %v6207, %v6203
        %v6209 = vmul.f32 1.0, %v6208
        %v6210 = vrcp.pop %v5826
        %v6211 = vmul.f32 %v5826, %v6210
        %v6212 = vsub.f32 1.0, %v6211
        %v6213 = vmul.f32 %v6210, %v6212
        %v6214 = vadd.f32 %v6210, %v6213
        %vm6215 = vweird.f32 %v5826
        %vm6216 = vweird.f32 %v6210
        %vm6217 = vmor %vm6215, %vm6216
        %v6218 = vsel %vm6217, %v6210, %v6214
        %v6219 = vand.u32 2147483647, %v5826
        %vm6220 = vcmp.eq.f32.partialorder %v6219, 8.507059e+37
        %v6221 = vand.u32 %v5826, 2147483648
        %v6222 = vor.u32 1.1754944e-38, %v6221
        %v6223 = vsel %vm6220, %v6222, %v6218
        %v6224 = vmul.f32 1.0, %v6223
        %v6225 = vrcp.pop %v5827
        %v6226 = vmul.f32 %v5827, %v6225
        %v6227 = vsub.f32 1.0, %v6226
        %v6228 = vmul.f32 %v6225, %v6227
        %v6229 = vadd.f32 %v6225, %v6228
        %vm6230 = vweird.f32 %v5827
        %vm6231 = vweird.f32 %v6225
        %vm6232 = vmor %vm6230, %vm6231
        %v6233 = vsel %vm6232, %v6225, %v6229
        %v6234 = vand.u32 2147483647, %v5827
        %vm6235 = vcmp.eq.f32.partialorder %v6234, 8.507059e+37
        %v6236 = vand.u32 %v5827, 2147483648
        %v6237 = vor.u32 1.1754944e-38, %v6236
        %v6238 = vsel %vm6235, %v6237, %v6233
        %v6239 = vmul.f32 1.0, %v6238
        %v6240 = vrcp.pop %v5828
        %v6241 = vmul.f32 %v5828, %v6240
        %v6242 = vsub.f32 1.0, %v6241
        %v6243 = vmul.f32 %v6240, %v6242
        %v6244 = vadd.f32 %v6240, %v6243
        %vm6245 = vweird.f32 %v5828
        %vm6246 = vweird.f32 %v6240
        %vm6247 = vmor %vm6245, %vm6246
        %v6248 = vsel %vm6247, %v6240, %v6244
        %v6249 = vand.u32 2147483647, %v5828
        %vm6250 = vcmp.eq.f32.partialorder %v6249, 8.507059e+37
        %v6251 = vand.u32 %v5828, 2147483648
        %v6252 = vor.u32 1.1754944e-38, %v6251
        %v6253 = vsel %vm6250, %v6252, %v6248
        %v6254 = vmul.f32 1.0, %v6253
        %v6255 = vrcp.pop %v5829
        %v6256 = vmul.f32 %v5829, %v6255
        %v6257 = vsub.f32 1.0, %v6256
        %v6258 = vmul.f32 %v6255, %v6257
        %v6259 = vadd.f32 %v6255, %v6258
        %vm6260 = vweird.f32 %v5829
        %vm6261 = vweird.f32 %v6255
        %vm6262 = vmor %vm6260, %vm6261
        %v6263 = vsel %vm6262, %v6255, %v6259
        %v6264 = vand.u32 2147483647, %v5829
        %vm6265 = vcmp.eq.f32.partialorder %v6264, 8.507059e+37
        %v6266 = vand.u32 %v5829, 2147483648
        %v6267 = vor.u32 1.1754944e-38, %v6266
        %v6268 = vsel %vm6265, %v6267, %v6263
        %v6269 = vmul.f32 1.0, %v6268
        %v6270 = vrcp.pop %v5830
        %v6271 = vmul.f32 %v5830, %v6270
        %v6272 = vsub.f32 1.0, %v6271
        %v6273 = vmul.f32 %v6270, %v6272
        %v6274 = vadd.f32 %v6270, %v6273
        %vm6275 = vweird.f32 %v5830
        %vm6276 = vweird.f32 %v6270
        %vm6277 = vmor %vm6275, %vm6276
        %v6278 = vsel %vm6277, %v6270, %v6274
        %v6279 = vand.u32 2147483647, %v5830
        %vm6280 = vcmp.eq.f32.partialorder %v6279, 8.507059e+37
        %v6281 = vand.u32 %v5830, 2147483648
        %v6282 = vor.u32 1.1754944e-38, %v6281
        %v6283 = vsel %vm6280, %v6282, %v6278
        %v6284 = vmul.f32 1.0, %v6283
        %v6285 = vrcp.pop %v5831
        %v6286 = vmul.f32 %v5831, %v6285
        %v6287 = vsub.f32 1.0, %v6286
        %v6288 = vmul.f32 %v6285, %v6287
        %v6289 = vadd.f32 %v6285, %v6288
        %vm6290 = vweird.f32 %v5831
        %vm6291 = vweird.f32 %v6285
        %vm6292 = vmor %vm6290, %vm6291
        %v6293 = vsel %vm6292, %v6285, %v6289
        %v6294 = vand.u32 2147483647, %v5831
        %vm6295 = vcmp.eq.f32.partialorder %v6294, 8.507059e+37
        %v6296 = vand.u32 %v5831, 2147483648
        %v6297 = vor.u32 1.1754944e-38, %v6296
        %v6298 = vsel %vm6295, %v6297, %v6293
        %v6299 = vmul.f32 1.0, %v6298
        %v6300 = vrcp.pop %v5832
        %v6301 = vmul.f32 %v5832, %v6300
        %v6302 = vsub.f32 1.0, %v6301
        %v6303 = vmul.f32 %v6300, %v6302
        %v6304 = vadd.f32 %v6300, %v6303
        %vm6305 = vweird.f32 %v5832
        %vm6306 = vweird.f32 %v6300
        %vm6307 = vmor %vm6305, %vm6306
        %v6308 = vsel %vm6307, %v6300, %v6304
        %v6309 = vand.u32 2147483647, %v5832
        %vm6310 = vcmp.eq.f32.partialorder %v6309, 8.507059e+37
        %v6311 = vand.u32 %v5832, 2147483648
        %v6312 = vor.u32 1.1754944e-38, %v6311
        %v6313 = vsel %vm6310, %v6312, %v6308
        %v6314 = vmul.f32 1.0, %v6313
        %v6315 = vrcp.pop %v5833
        %v6316 = vmul.f32 %v5833, %v6315
        %v6317 = vsub.f32 1.0, %v6316
        %v6318 = vmul.f32 %v6315, %v6317
        %v6319 = vadd.f32 %v6315, %v6318
        %vm6320 = vweird.f32 %v5833
        %vm6321 = vweird.f32 %v6315
        %vm6322 = vmor %vm6320, %vm6321
        %v6323 = vsel %vm6322, %v6315, %v6319
        %v6324 = vand.u32 2147483647, %v5833
        %vm6325 = vcmp.eq.f32.partialorder %v6324, 8.507059e+37
        %v6326 = vand.u32 %v5833, 2147483648
        %v6327 = vor.u32 1.1754944e-38, %v6326
        %v6328 = vsel %vm6325, %v6327, %v6323
        %v6329 = vmul.f32 1.0, %v6328
        %v6330 = vrcp.pop %v5834
        %v6331 = vmul.f32 %v5834, %v6330
        %v6332 = vsub.f32 1.0, %v6331
        %v6333 = vmul.f32 %v6330, %v6332
        %v6334 = vadd.f32 %v6330, %v6333
        %vm6335 = vweird.f32 %v5834
        %vm6336 = vweird.f32 %v6330
        %vm6337 = vmor %vm6335, %vm6336
        %v6338 = vsel %vm6337, %v6330, %v6334
        %v6339 = vand.u32 2147483647, %v5834
        %vm6340 = vcmp.eq.f32.partialorder %v6339, 8.507059e+37
        %v6341 = vand.u32 %v5834, 2147483648
        %v6342 = vor.u32 1.1754944e-38, %v6341
        %v6343 = vsel %vm6340, %v6342, %v6338
        %v6344 = vmul.f32 1.0, %v6343
        %v6345 = vrcp.pop %v5835
        %v6346 = vmul.f32 %v5835, %v6345
        %v6347 = vsub.f32 1.0, %v6346
        %v6348 = vmul.f32 %v6345, %v6347
        %v6349 = vadd.f32 %v6345, %v6348
        %vm6350 = vweird.f32 %v5835
        %vm6351 = vweird.f32 %v6345
        %vm6352 = vmor %vm6350, %vm6351
        %v6353 = vsel %vm6352, %v6345, %v6349
        %v6354 = vand.u32 2147483647, %v5835
        %vm6355 = vcmp.eq.f32.partialorder %v6354, 8.507059e+37
        %v6356 = vand.u32 %v5835, 2147483648
        %v6357 = vor.u32 1.1754944e-38, %v6356
        %v6358 = vsel %vm6355, %v6357, %v6353
        %v6359 = vmul.f32 1.0, %v6358
        %v6360 = vrcp.pop %v5836
        %v6361 = vmul.f32 %v5836, %v6360
        %v6362 = vsub.f32 1.0, %v6361
        %v6363 = vmul.f32 %v6360, %v6362
        %v6364 = vadd.f32 %v6360, %v6363
        %vm6365 = vweird.f32 %v5836
        %vm6366 = vweird.f32 %v6360
        %vm6367 = vmor %vm6365, %vm6366
        %v6368 = vsel %vm6367, %v6360, %v6364
        %v6369 = vand.u32 2147483647, %v5836
        %vm6370 = vcmp.eq.f32.partialorder %v6369, 8.507059e+37
        %v6371 = vand.u32 %v5836, 2147483648
        %v6372 = vor.u32 1.1754944e-38, %v6371
        %v6373 = vsel %vm6370, %v6372, %v6368
        %v6374 = vmul.f32 1.0, %v6373
        %v6375 = vrcp.pop %v5837
        %v6376 = vmul.f32 %v5837, %v6375
        %v6377 = vsub.f32 1.0, %v6376
        %v6378 = vmul.f32 %v6375, %v6377
        %v6379 = vadd.f32 %v6375, %v6378
        %vm6380 = vweird.f32 %v5837
        %vm6381 = vweird.f32 %v6375
        %vm6382 = vmor %vm6380, %vm6381
        %v6383 = vsel %vm6382, %v6375, %v6379
        %v6384 = vand.u32 2147483647, %v5837
        %vm6385 = vcmp.eq.f32.partialorder %v6384, 8.507059e+37
        %v6386 = vand.u32 %v5837, 2147483648
        %v6387 = vor.u32 1.1754944e-38, %v6386
        %v6388 = vsel %vm6385, %v6387, %v6383
        %v6389 = vmul.f32 1.0, %v6388
        %v6390 = vrcp.pop %v5838
        %v6391 = vmul.f32 %v5838, %v6390
        %v6392 = vsub.f32 1.0, %v6391
        %v6393 = vmul.f32 %v6390, %v6392
        %v6394 = vadd.f32 %v6390, %v6393
        %vm6395 = vweird.f32 %v5838
        %vm6396 = vweird.f32 %v6390
        %vm6397 = vmor %vm6395, %vm6396
        %v6398 = vsel %vm6397, %v6390, %v6394
        %v6399 = vand.u32 2147483647, %v5838
        %vm6400 = vcmp.eq.f32.partialorder %v6399, 8.507059e+37
        %v6401 = vand.u32 %v5838, 2147483648
        %v6402 = vor.u32 1.1754944e-38, %v6401
        %v6403 = vsel %vm6400, %v6402, %v6398
        %v6404 = vmul.f32 1.0, %v6403
        %v6405 = vrcp.pop %v5839
        %v6406 = vmul.f32 %v5839, %v6405
        %v6407 = vsub.f32 1.0, %v6406
        %v6408 = vmul.f32 %v6405, %v6407
        %v6409 = vadd.f32 %v6405, %v6408
        %vm6410 = vweird.f32 %v5839
        %vm6411 = vweird.f32 %v6405
        %vm6412 = vmor %vm6410, %vm6411
        %v6413 = vsel %vm6412, %v6405, %v6409
        %v6414 = vand.u32 2147483647, %v5839
        %vm6415 = vcmp.eq.f32.partialorder %v6414, 8.507059e+37
        %v6416 = vand.u32 %v5839, 2147483648
        %v6417 = vor.u32 1.1754944e-38, %v6416
        %v6418 = vsel %vm6415, %v6417, %v6413
        %v6419 = vmul.f32 1.0, %v6418
        %v6420 = vrcp.pop %v5840
        %v6421 = vmul.f32 %v5840, %v6420
        %v6422 = vsub.f32 1.0, %v6421
        %v6423 = vmul.f32 %v6420, %v6422
        %v6424 = vadd.f32 %v6420, %v6423
        %vm6425 = vweird.f32 %v5840
        %vm6426 = vweird.f32 %v6420
        %vm6427 = vmor %vm6425, %vm6426
        %v6428 = vsel %vm6427, %v6420, %v6424
        %v6429 = vand.u32 2147483647, %v5840
        %vm6430 = vcmp.eq.f32.partialorder %v6429, 8.507059e+37
        %v6431 = vand.u32 %v5840, 2147483648
        %v6432 = vor.u32 1.1754944e-38, %v6431
        %v6433 = vsel %vm6430, %v6432, %v6428
        %v6434 = vmul.f32 1.0, %v6433
        %v6435 = vrcp.pop %v5841
        %v6436 = vmul.f32 %v5841, %v6435
        %v6437 = vsub.f32 1.0, %v6436
        %v6438 = vmul.f32 %v6435, %v6437
        %v6439 = vadd.f32 %v6435, %v6438
        %vm6440 = vweird.f32 %v5841
        %vm6441 = vweird.f32 %v6435
        %vm6442 = vmor %vm6440, %vm6441
        %v6443 = vsel %vm6442, %v6435, %v6439
        %v6444 = vand.u32 2147483647, %v5841
        %vm6445 = vcmp.eq.f32.partialorder %v6444, 8.507059e+37
        %v6446 = vand.u32 %v5841, 2147483648
        %v6447 = vor.u32 1.1754944e-38, %v6446
        %v6448 = vsel %vm6445, %v6447, %v6443
        %v6449 = vmul.f32 1.0, %v6448
        %v6450 = vrcp.pop %v5842
        %v6451 = vmul.f32 %v5842, %v6450
        %v6452 = vsub.f32 1.0, %v6451
        %v6453 = vmul.f32 %v6450, %v6452
        %v6454 = vadd.f32 %v6450, %v6453
        %vm6455 = vweird.f32 %v5842
        %vm6456 = vweird.f32 %v6450
        %vm6457 = vmor %vm6455, %vm6456
        %v6458 = vsel %vm6457, %v6450, %v6454
        %v6459 = vand.u32 2147483647, %v5842
        %vm6460 = vcmp.eq.f32.partialorder %v6459, 8.507059e+37
        %v6461 = vand.u32 %v5842, 2147483648
        %v6462 = vor.u32 1.1754944e-38, %v6461
        %v6463 = vsel %vm6460, %v6462, %v6458
        %v6464 = vmul.f32 1.0, %v6463
        %v6465 = vrcp.pop %v5843
        %v6466 = vmul.f32 %v5843, %v6465
        %v6467 = vsub.f32 1.0, %v6466
        %v6468 = vmul.f32 %v6465, %v6467
        %v6469 = vadd.f32 %v6465, %v6468
        %vm6470 = vweird.f32 %v5843
        %vm6471 = vweird.f32 %v6465
        %vm6472 = vmor %vm6470, %vm6471
        %v6473 = vsel %vm6472, %v6465, %v6469
        %v6474 = vand.u32 2147483647, %v5843
        %vm6475 = vcmp.eq.f32.partialorder %v6474, 8.507059e+37
        %v6476 = vand.u32 %v5843, 2147483648
        %v6477 = vor.u32 1.1754944e-38, %v6476
        %v6478 = vsel %vm6475, %v6477, %v6473
        %v6479 = vmul.f32 1.0, %v6478
        %v6480 = vrcp.pop %v5844
        %v6481 = vmul.f32 %v5844, %v6480
        %v6482 = vsub.f32 1.0, %v6481
        %v6483 = vmul.f32 %v6480, %v6482
        %v6484 = vadd.f32 %v6480, %v6483
        %vm6485 = vweird.f32 %v5844
        %vm6486 = vweird.f32 %v6480
        %vm6487 = vmor %vm6485, %vm6486
        %v6488 = vsel %vm6487, %v6480, %v6484
        %v6489 = vand.u32 2147483647, %v5844
        %vm6490 = vcmp.eq.f32.partialorder %v6489, 8.507059e+37
        %v6491 = vand.u32 %v5844, 2147483648
        %v6492 = vor.u32 1.1754944e-38, %v6491
        %v6493 = vsel %vm6490, %v6492, %v6488
        %v6494 = vmul.f32 1.0, %v6493
        %v6495 = vrcp.pop %v5845
        %v6496 = vmul.f32 %v5845, %v6495
        %v6497 = vsub.f32 1.0, %v6496
        %v6498 = vmul.f32 %v6495, %v6497
        %v6499 = vadd.f32 %v6495, %v6498
        %vm6500 = vweird.f32 %v5845
        %vm6501 = vweird.f32 %v6495
        %vm6502 = vmor %vm6500, %vm6501
        %v6503 = vsel %vm6502, %v6495, %v6499
        %v6504 = vand.u32 2147483647, %v5845
        %vm6505 = vcmp.eq.f32.partialorder %v6504, 8.507059e+37
        %v6506 = vand.u32 %v5845, 2147483648
        %v6507 = vor.u32 1.1754944e-38, %v6506
        %v6508 = vsel %vm6505, %v6507, %v6503
        %v6509 = vmul.f32 1.0, %v6508
        %v6510 = vrcp.pop %v5846
        %v6511 = vmul.f32 %v5846, %v6510
        %v6512 = vsub.f32 1.0, %v6511
        %v6513 = vmul.f32 %v6510, %v6512
        %v6514 = vadd.f32 %v6510, %v6513
        %vm6515 = vweird.f32 %v5846
        %vm6516 = vweird.f32 %v6510
        %vm6517 = vmor %vm6515, %vm6516
        %v6518 = vsel %vm6517, %v6510, %v6514
        %v6519 = vand.u32 2147483647, %v5846
        %vm6520 = vcmp.eq.f32.partialorder %v6519, 8.507059e+37
        %v6521 = vand.u32 %v5846, 2147483648
        %v6522 = vor.u32 1.1754944e-38, %v6521
        %v6523 = vsel %vm6520, %v6522, %v6518
        %v6524 = vmul.f32 1.0, %v6523
        %v6525 = vrcp.pop %v5847
        %v6526 = vmul.f32 %v5847, %v6525
        %v6527 = vsub.f32 1.0, %v6526
        %v6528 = vmul.f32 %v6525, %v6527
        %v6529 = vadd.f32 %v6525, %v6528
        %vm6530 = vweird.f32 %v5847
        %vm6531 = vweird.f32 %v6525
        %vm6532 = vmor %vm6530, %vm6531
        %v6533 = vsel %vm6532, %v6525, %v6529
        %v6534 = vand.u32 2147483647, %v5847
        %vm6535 = vcmp.eq.f32.partialorder %v6534, 8.507059e+37
        %v6536 = vand.u32 %v5847, 2147483648
        %v6537 = vor.u32 1.1754944e-38, %v6536
        %v6538 = vsel %vm6535, %v6537, %v6533
        %v6539 = vmul.f32 1.0, %v6538
        %v6540 = vrcp.pop %v5848
        %v6541 = vmul.f32 %v5848, %v6540
        %v6542 = vsub.f32 1.0, %v6541
        %v6543 = vmul.f32 %v6540, %v6542
        %v6544 = vadd.f32 %v6540, %v6543
        %vm6545 = vweird.f32 %v5848
        %vm6546 = vweird.f32 %v6540
        %vm6547 = vmor %vm6545, %vm6546
        %v6548 = vsel %vm6547, %v6540, %v6544
        %v6549 = vand.u32 2147483647, %v5848
        %vm6550 = vcmp.eq.f32.partialorder %v6549, 8.507059e+37
        %v6551 = vand.u32 %v5848, 2147483648
        %v6552 = vor.u32 1.1754944e-38, %v6551
        %v6553 = vsel %vm6550, %v6552, %v6548
        %v6554 = vmul.f32 1.0, %v6553
        %v6555 = vrcp.pop %v5849
        %v6556 = vmul.f32 %v5849, %v6555
        %v6557 = vsub.f32 1.0, %v6556
        %v6558 = vmul.f32 %v6555, %v6557
        %v6559 = vadd.f32 %v6555, %v6558
        %vm6560 = vweird.f32 %v5849
        %vm6561 = vweird.f32 %v6555
        %vm6562 = vmor %vm6560, %vm6561
        %v6563 = vsel %vm6562, %v6555, %v6559
        %v6564 = vand.u32 2147483647, %v5849
        %vm6565 = vcmp.eq.f32.partialorder %v6564, 8.507059e+37
        %v6566 = vand.u32 %v5849, 2147483648
        %v6567 = vor.u32 1.1754944e-38, %v6566
        %v6568 = vsel %vm6565, %v6567, %v6563
        %v6569 = vmul.f32 1.0, %v6568
        %v6570 = vmul.f32 %v4975, %v5864
        %v6571 = vmul.f32 %v4976, %v5879
        %v6572 = vmul.f32 %v4977, %v5894
        %v6573 = vmul.f32 %v4978, %v5909
        %v6574 = vmul.f32 %v4979, %v5924
        %v6575 = vmul.f32 %v4980, %v5939
        %v6576 = vmul.f32 %v4981, %v5954
        %v6577 = vmul.f32 %v4982, %v5969
        %v6578 = vmul.f32 %v4983, %v5984
        %v6579 = vmul.f32 %v4984, %v5999
        %v6580 = vmul.f32 %v4985, %v6014
        %v6581 = vmul.f32 %v4986, %v6029
        %v6582 = vmul.f32 %v4987, %v6044
        %v6583 = vmul.f32 %v4988, %v6059
        %v6584 = vmul.f32 %v4989, %v6074
        %v6585 = vmul.f32 %v4990, %v6089
        %v6586 = vmul.f32 %v4991, %v6104
        %v6587 = vmul.f32 %v4992, %v6119
        %v6588 = vmul.f32 %v4993, %v6134
        %v6589 = vmul.f32 %v4994, %v6149
        %v6590 = vmul.f32 %v4995, %v6164
        %v6591 = vmul.f32 %v4996, %v6179
        %v6592 = vmul.f32 %v4997, %v6194
        %v6593 = vmul.f32 %v4998, %v6209
        %v6594 = vmul.f32 %v4999, %v6224
        %v6595 = vmul.f32 %v5000, %v6239
        %v6596 = vmul.f32 %v5001, %v6254
        %v6597 = vmul.f32 %v5002, %v6269
        %v6598 = vmul.f32 %v5003, %v6284
        %v6599 = vmul.f32 %v5004, %v6299
        %v6600 = vmul.f32 %v5005, %v6314
        %v6601 = vmul.f32 %v5006, %v6329
        %v6602 = vmul.f32 %v5007, %v6344
        %v6603 = vmul.f32 %v5008, %v6359
        %v6604 = vmul.f32 %v5009, %v6374
        %v6605 = vmul.f32 %v5010, %v6389
        %v6606 = vmul.f32 %v5011, %v6404
        %v6607 = vmul.f32 %v5012, %v6419
        %v6608 = vmul.f32 %v5013, %v6434
        %v6609 = vmul.f32 %v5014, %v6449
        %v6610 = vmul.f32 %v5015, %v6464
        %v6611 = vmul.f32 %v5016, %v6479
        %v6612 = vmul.f32 %v5017, %v6494
        %v6613 = vmul.f32 %v5018, %v6509
        %v6614 = vmul.f32 %v5019, %v6524
        %v6615 = vmul.f32 %v5020, %v6539
        %v6616 = vmul.f32 %v5021, %v6554
        %v6617 = vmul.f32 %v5022, %v6569
        %v6618 = vld [vmem:[#allocation8] sm:$0xff]
        %v6620 = vsel %vm5030, %v6618, 0
        %6622 = vmatpush.msra.mxu0 0.0
        %6623 = vmatpush.msra.mxu0 0.0
        %6624 = vmatpush.msra.mxu0 0.0
        %6625 = vmatpush.msra.mxu0 0.0
        %6626 = vmatpush.msra.mxu0 0.0
        %6627 = vmatpush.msra.mxu0 0.0
        %6628 = vmatpush.msra.mxu0 0.0
        %6629 = vmatpush.msra.mxu0 0.0
        %6630 = vmatpush.msra.mxu0 0.0
        %6631 = vmatpush.msra.mxu0 0.0
        %6632 = vmatpush.msra.mxu0 %v6610
        %6633 = vmatpush.msra.mxu0 %v6602
        %6634 = vmatpush.msra.mxu0 %v6594
        %6635 = vmatpush.msra.mxu0 %v6586
        %6636 = vmatpush.msra.mxu0 %v6578
        %6637 = vmatpush.msra.mxu0 %v6570
        %6638 = vmatmul.f32.gmra.mxu0 %v6620
        %v6639 = vpop.f32.mrf.mxu0
        %v6640 = vadd.f32 %v372, %v6639
        %6641 = vdwg.mxu0
        %6642 = vmatpush.msra.mxu0 0.0
        %6643 = vmatpush.msra.mxu0 0.0
        %6644 = vmatpush.msra.mxu0 0.0
        %6645 = vmatpush.msra.mxu0 0.0
        %6646 = vmatpush.msra.mxu0 0.0
        %6647 = vmatpush.msra.mxu0 0.0
        %6648 = vmatpush.msra.mxu0 0.0
        %6649 = vmatpush.msra.mxu0 0.0
        %6650 = vmatpush.msra.mxu0 0.0
        %6651 = vmatpush.msra.mxu0 0.0
        %6652 = vmatpush.msra.mxu0 %v6611
        %6653 = vmatpush.msra.mxu0 %v6603
        %6654 = vmatpush.msra.mxu0 %v6595
        %6655 = vmatpush.msra.mxu0 %v6587
        %6656 = vmatpush.msra.mxu0 %v6579
        %6657 = vmatpush.msra.mxu0 %v6571
        %6658 = vmatmul.f32.gmra.mxu0 %v6620
        %v6659 = vpop.f32.mrf.mxu0
        %v6660 = vadd.f32 %v373, %v6659
        %6661 = vdwg.mxu0
        %6662 = vmatpush.msra.mxu0 0.0
        %6663 = vmatpush.msra.mxu0 0.0
        %6664 = vmatpush.msra.mxu0 0.0
        %6665 = vmatpush.msra.mxu0 0.0
        %6666 = vmatpush.msra.mxu0 0.0
        %6667 = vmatpush.msra.mxu0 0.0
        %6668 = vmatpush.msra.mxu0 0.0
        %6669 = vmatpush.msra.mxu0 0.0
        %6670 = vmatpush.msra.mxu0 0.0
        %6671 = vmatpush.msra.mxu0 0.0
        %6672 = vmatpush.msra.mxu0 %v6612
        %6673 = vmatpush.msra.mxu0 %v6604
        %6674 = vmatpush.msra.mxu0 %v6596
        %6675 = vmatpush.msra.mxu0 %v6588
        %6676 = vmatpush.msra.mxu0 %v6580
        %6677 = vmatpush.msra.mxu0 %v6572
        %6678 = vmatmul.f32.gmra.mxu0 %v6620
        %v6679 = vpop.f32.mrf.mxu0
        %v6680 = vadd.f32 %v374, %v6679
        %6681 = vdwg.mxu0
        %6682 = vmatpush.msra.mxu0 0.0
        %6683 = vmatpush.msra.mxu0 0.0
        %6684 = vmatpush.msra.mxu0 0.0
        %6685 = vmatpush.msra.mxu0 0.0
        %6686 = vmatpush.msra.mxu0 0.0
        %6687 = vmatpush.msra.mxu0 0.0
        %6688 = vmatpush.msra.mxu0 0.0
        %6689 = vmatpush.msra.mxu0 0.0
        %6690 = vmatpush.msra.mxu0 0.0
        %6691 = vmatpush.msra.mxu0 0.0
        %6692 = vmatpush.msra.mxu0 %v6613
        %6693 = vmatpush.msra.mxu0 %v6605
        %6694 = vmatpush.msra.mxu0 %v6597
        %6695 = vmatpush.msra.mxu0 %v6589
        %6696 = vmatpush.msra.mxu0 %v6581
        %6697 = vmatpush.msra.mxu0 %v6573
        %6698 = vmatmul.f32.gmra.mxu0 %v6620
        %v6699 = vpop.f32.mrf.mxu0
        %v6700 = vadd.f32 %v375, %v6699
        %6701 = vdwg.mxu0
        %6702 = vmatpush.msra.mxu0 0.0
        %6703 = vmatpush.msra.mxu0 0.0
        %6704 = vmatpush.msra.mxu0 0.0
        %6705 = vmatpush.msra.mxu0 0.0
        %6706 = vmatpush.msra.mxu0 0.0
        %6707 = vmatpush.msra.mxu0 0.0
        %6708 = vmatpush.msra.mxu0 0.0
        %6709 = vmatpush.msra.mxu0 0.0
        %6710 = vmatpush.msra.mxu0 0.0
        %6711 = vmatpush.msra.mxu0 0.0
        %6712 = vmatpush.msra.mxu0 %v6614
        %6713 = vmatpush.msra.mxu0 %v6606
        %6714 = vmatpush.msra.mxu0 %v6598
        %6715 = vmatpush.msra.mxu0 %v6590
        %6716 = vmatpush.msra.mxu0 %v6582
        %6717 = vmatpush.msra.mxu0 %v6574
        %6718 = vmatmul.f32.gmra.mxu0 %v6620
        %v6719 = vpop.f32.mrf.mxu0
        %v6720 = vadd.f32 %v376, %v6719
        %6721 = vdwg.mxu0
        %6722 = vmatpush.msra.mxu0 0.0
        %6723 = vmatpush.msra.mxu0 0.0
        %6724 = vmatpush.msra.mxu0 0.0
        %6725 = vmatpush.msra.mxu0 0.0
        %6726 = vmatpush.msra.mxu0 0.0
        %6727 = vmatpush.msra.mxu0 0.0
        %6728 = vmatpush.msra.mxu0 0.0
        %6729 = vmatpush.msra.mxu0 0.0
        %6730 = vmatpush.msra.mxu0 0.0
        %6731 = vmatpush.msra.mxu0 0.0
        %6732 = vmatpush.msra.mxu0 %v6615
        %6733 = vmatpush.msra.mxu0 %v6607
        %6734 = vmatpush.msra.mxu0 %v6599
        %6735 = vmatpush.msra.mxu0 %v6591
        %6736 = vmatpush.msra.mxu0 %v6583
        %6737 = vmatpush.msra.mxu0 %v6575
        %6738 = vmatmul.f32.gmra.mxu0 %v6620
        %v6739 = vpop.f32.mrf.mxu0
        %v6740 = vadd.f32 %v377, %v6739
        %6741 = vdwg.mxu0
        %6742 = vmatpush.msra.mxu0 0.0
        %6743 = vmatpush.msra.mxu0 0.0
        %6744 = vmatpush.msra.mxu0 0.0
        %6745 = vmatpush.msra.mxu0 0.0
        %6746 = vmatpush.msra.mxu0 0.0
        %6747 = vmatpush.msra.mxu0 0.0
        %6748 = vmatpush.msra.mxu0 0.0
        %6749 = vmatpush.msra.mxu0 0.0
        %6750 = vmatpush.msra.mxu0 0.0
        %6751 = vmatpush.msra.mxu0 0.0
        %6752 = vmatpush.msra.mxu0 %v6616
        %6753 = vmatpush.msra.mxu0 %v6608
        %6754 = vmatpush.msra.mxu0 %v6600
        %6755 = vmatpush.msra.mxu0 %v6592
        %6756 = vmatpush.msra.mxu0 %v6584
        %6757 = vmatpush.msra.mxu0 %v6576
        %6758 = vmatmul.f32.gmra.mxu0 %v6620
        %v6759 = vpop.f32.mrf.mxu0
        %v6760 = vadd.f32 %v378, %v6759
        %6761 = vdwg.mxu0
        %6762 = vmatpush.msra.mxu0 0.0
        %6763 = vmatpush.msra.mxu0 0.0
        %6764 = vmatpush.msra.mxu0 0.0
        %6765 = vmatpush.msra.mxu0 0.0
        %6766 = vmatpush.msra.mxu0 0.0
        %6767 = vmatpush.msra.mxu0 0.0
        %6768 = vmatpush.msra.mxu0 0.0
        %6769 = vmatpush.msra.mxu0 0.0
        %6770 = vmatpush.msra.mxu0 0.0
        %6771 = vmatpush.msra.mxu0 0.0
        %6772 = vmatpush.msra.mxu0 %v6617
        %6773 = vmatpush.msra.mxu0 %v6609
        %6774 = vmatpush.msra.mxu0 %v6601
        %6775 = vmatpush.msra.mxu0 %v6593
        %6776 = vmatpush.msra.mxu0 %v6585
        %6777 = vmatpush.msra.mxu0 %v6577
        %6778 = vmatmul.f32.gmra.mxu0 %v6620
        %v6779 = vpop.f32.mrf.mxu0
        %v6780 = vadd.f32 %v379, %v6779
        %6781 = vdwg.mxu0
        %6782 = vst [vmem:[%s369] sm:$0xff] %v6640
        %6783 = vst [vmem:[%s369 + $0x8] sm:$0xff] %v6660
        %6784 = vst [vmem:[%s369 + $0x10] sm:$0xff] %v6680
        %6785 = vst [vmem:[%s369 + $0x18] sm:$0xff] %v6700
        %6786 = vst [vmem:[%s369 + $0x20] sm:$0xff] %v6720
        %6787 = vst [vmem:[%s369 + $0x28] sm:$0xff] %v6740
        %6788 = vst [vmem:[%s369 + $0x30] sm:$0xff] %v6760
        %6789 = vst [vmem:[%s369 + $0x38] sm:$0xff] %v6780
        %s6790 = sand.u32 %s208, 1
        %s6791 = scalar_lea.sflag [#allocation4], %s6790
        %s6792 = sand.u32 %s208, 1
        %s6793 = smul.addr %s6792, 64
        %s6794 = scalar_lea.vmem [#allocation10], %s6793
        // Predicated region
        $region69: #{tpu_custom_call.1} parent=51 // pred_check
          %p6795 = pneg %p218
        $region70: #{tpu_custom_call.1} parent=51 // pred_check_branch
          %6797 = sbr.rel (%p6795) target = $region72
        $region71: #{tpu_custom_call.1} parent=51 // pred_region
          %s6798 = smul.u32 8, %s27
          %6800 = vsyncadd %s6791, 0
          %s6801 = smul.addr %s6798, 8
          %s6802 = scalar_lea.hbm %s8, %s6801
          %s6804 = sshll.u32 %s6794, 4
          %s6805 = int_to_ptr.vmem [resolvable:$true] %s6804
          %s6806 = sshll.u32 %s6802, 4
          %s6807 = int_to_ptr.hbm [resolvable:$true] %s6806
          %6809 = dma.vmem_to_hbm [thread:$0]  %s6805, 1024, %s6807, %s6791
        $region72: #{tpu_custom_call.1} parent=51 // pred_fallthru
          _
      $region52: #{tpu_custom_call.1} parent=5 // pred_fallthru
        _
      %p6810 = scmp.le.s32.totalorder 2, %s22
      // Predicated region
      $region73: #{tpu_custom_call.1} parent=5 // pred_check
        %p6811 = pneg %p6810
      $region74: #{tpu_custom_call.1} parent=5 // pred_check_branch
        %6813 = sbr.rel (%p6811) target = $region76
      $region75: #{tpu_custom_call.1} parent=5 // pred_region
        %s6814 = ssub.s32 %s22, 2
        // Predicated region
        $region77: #{tpu_custom_call.1} parent=75 // pred_check
          %p6815 = pneg %p224
        $region78: #{tpu_custom_call.1} parent=75 // pred_check_branch
          %6817 = sbr.rel (%p6815) target = $region80
        $region79: #{tpu_custom_call.1} parent=75 // pred_region
          %s6818 = sand.u32 %s209, 1
          %s6819 = scalar_lea.sflag [#allocation4], %s6818
          %s6820 = sand.u32 %s209, 1
          %s6821 = smul.addr %s6820, 64
          %s6822 = scalar_lea.vmem [#allocation10], %s6821
          %6824 = dma.done %s6819, 1024
        $region80: #{tpu_custom_call.1} parent=75 // pred_fallthru
          _
      $region76: #{tpu_custom_call.1} parent=5 // pred_fallthru
        _
    $region6: #{tpu_custom_call.1} parent=1 // loop_footer
      %s26 = sadd.s32 1, %s22
    $region7: #{tpu_custom_call.1} parent=1 // loop_footer_branch
      %21 = sbr.rel target = $region3
    $region8: #{tpu_custom_call.1} parent=1 // loop_exit
      _
    %6825 = vsyncpa [#allocation3], 1
    %s6826 = scalar_lea.sflag [#allocation3], 1
    %6827 = vsyncpa %s6826, 1
    %6828 = vsyncpa [#allocation6], 1
    %6829 = vsyncpa [#allocation9], 1
    %6830 = vsyncpa [#allocation4], 1
    %s6831 = scalar_lea.sflag [#allocation4], 1
    %6832 = vsyncpa %s6831, 1

</llo_original>
